<compile_context>
chip_gen: v5e
topology: v5e:2x2
jax: 0.10.0
libtpu: 0.0.40
codegen_flags: <defaults>
</compile_context>

<pallas_src>
import jax
import jax.numpy as jnp
from jax import lax
from jax.experimental import pallas as pl

# ---------------- model dimensions (small, consistent with the module) -------
B = 8      # batch size
S = 8      # encoder sequence length
E = 32     # embedding size
H = 32     # hidden size (encoder == decoder)
V = 16     # vocab size
T = 6      # max_len (decoder steps)
GUMBEL_TEMP = 0.7
EPS = 1e-20


# ============================ fused seq2seq kernel ===========================
def seq2seq_kernel(x_emb_ref,                               # (S, B, E)
                   enc_wih_ref, enc_whh_ref, enc_b_ref,     # encoder LSTM
                   emb_dec_ref, dec_wih_ref, dec_whh_ref, dec_b_ref,
                   wlin_ref, blin_ref,                      # output projection
                   gnoise_ref,                              # (T, B, V) gumbel noise
                   out_ref, inpss_ref, prob_ref):
    f32 = jnp.float32

    # -------------------------------- encoder --------------------------------
    x_emb = x_emb_ref[...]                                   # (S, B, E)
    # Hoist the non-recurrent input projection: one big matmul for all steps.
    xg_all = jnp.dot(x_emb.reshape(S * B, E), enc_wih_ref[...],
                     preferred_element_type=f32).reshape(S, B, 4 * H)
    e_whh = enc_whh_ref[...]
    e_b = enc_b_ref[...]                                     # (1, 4H)

    h = jnp.zeros((B, H), f32)
    c = jnp.zeros((B, H), f32)
    enc_steps = []
    for t in range(S):                                       # unrolled, static
        gates = xg_all[t] + jnp.dot(h, e_whh, preferred_element_type=f32) + e_b
        ig = jax.nn.sigmoid(gates[:, 0 * H:1 * H])
        fg = jax.nn.sigmoid(gates[:, 1 * H:2 * H])
        gg = jnp.tanh(gates[:, 2 * H:3 * H])
        og = jax.nn.sigmoid(gates[:, 3 * H:4 * H])
        c = fg * c + ig * gg
        h = og * jnp.tanh(c)
        enc_steps.append(h)
    enc_bm = jnp.stack(enc_steps, axis=1)                    # (B, S, H) batch-major

    # -------------------------------- decoder --------------------------------
    # Hoist: one-hot @ Emb @ W_ih  ==  one-hot @ (Emb @ W_ih)   -> (V, 4H) once.
    emb_wih = jnp.dot(emb_dec_ref[...], dec_wih_ref[...],
                      preferred_element_type=f32)            # (V, 4H)
    d_whh = dec_whh_ref[...]
    d_b = dec_b_ref[...]
    wlin = wlin_ref[...]
    blin = blin_ref[...]
    gnoise = gnoise_ref[...]                                 # (T, B, V)

    lane = lax.broadcasted_iota(jnp.int32, (B, V), 1)
    onehot = jnp.where(lane == 0, 1.0, 0.0).astype(f32)      # initial BOS one-hot

    outs, inps, prbs = [], [], []
    for t in range(T):                                       # unrolled, static
        # decoder LSTM step (embedding lookup == one-hot @ Emb, folded above)
        gates = (jnp.dot(onehot, emb_wih, preferred_element_type=f32)
                 + jnp.dot(h, d_whh, preferred_element_type=f32) + d_b)
        ig = jax.nn.sigmoid(gates[:, 0 * H:1 * H])
        fg = jax.nn.sigmoid(gates[:, 1 * H:2 * H])
        gg = jnp.tanh(gates[:, 2 * H:3 * H])
        og = jax.nn.sigmoid(gates[:, 3 * H:4 * H])
        c = fg * c + ig * gg
        h = og * jnp.tanh(c)

        # dot-product attention over encoder outputs (batched matmuls -> MXU)
        scores = jnp.einsum('bqh,bkh->bqk', h[:, None, :], enc_bm,
                            preferred_element_type=f32)      # (B, 1, S)
        smax = jnp.max(scores, axis=-1, keepdims=True)
        w = jnp.exp(scores - smax)
        w = w / jnp.sum(w, axis=-1, keepdims=True)           # softmax over S
        ctx = jnp.einsum('bqk,bkh->bqh', w, enc_bm,
                         preferred_element_type=f32)[:, 0, :]  # (B, H)

        # output projection
        logits = jnp.dot(ctx, wlin, preferred_element_type=f32) + blin   # (B, V)
        outs.append(logits)

        # gumbel-softmax (noise precomputed outside the kernel)
        z = (logits + gnoise[t]) / GUMBEL_TEMP
        zmax = jnp.max(z, axis=-1, keepdims=True)
        ez = jnp.exp(z - zmax)
        y = ez / jnp.sum(ez, axis=-1, keepdims=True)          # gumbel_softmax_sample

        ymax = jnp.max(y, axis=-1, keepdims=True)
        first_idx = jnp.min(jnp.where(y == ymax, lane, V), axis=-1, keepdims=True)
        y_hard = (lane == first_idx).astype(f32)              # one-hot at argmax
        # TODO(synk): forward-only; a custom VJP would use stop_gradient(y_hard - y) + y.
        inps.append((y_hard - y) + y)                         # straight-through value

        # cross entropy (reduction='none') of logits vs sampled index
        lmax = jnp.max(logits, axis=-1, keepdims=True)
        lse = lmax + jnp.log(jnp.sum(jnp.exp(logits - lmax), axis=-1, keepdims=True))
        sel = jnp.sum(y_hard * logits, axis=-1, keepdims=True)
        prbs.append(lse - sel)                                # (B, 1)

        onehot = y_hard                                       # next-step input token

    # single write of each (whole-array) output block
    out_ref[...] = jnp.stack(outs, axis=0)                    # (T, B, V)
    inpss_ref[...] = jnp.stack(inps, axis=0)                  # (T, B, V)
    prob_ref[...] = jnp.stack(prbs, axis=0)                   # (T, B, 1)


def run_seq2seq(x_emb_tm, params, gnoise):
    return pl.pallas_call(
        seq2seq_kernel,
        out_shape=(jax.ShapeDtypeStruct((T, B, V), jnp.float32),
                   jax.ShapeDtypeStruct((T, B, V), jnp.float32),
                   jax.ShapeDtypeStruct((T, B, 1), jnp.float32)),
    )(x_emb_tm,
      params["enc_wih"], params["enc_whh"], params["enc_b"],
      params["emb_dec"], params["dec_wih"], params["dec_whh"], params["dec_b"],
      params["w_lin"], params["b_lin"],
      gnoise)


# ================================ glue / wrapper =============================
def init_params(key):
    def u(k, shape, scale):
        return jax.random.uniform(k, shape, jnp.float32, -scale, scale)
    ks = jax.random.split(key, 10)
    s = 1.0 / jnp.sqrt(H)
    return dict(
        emb_enc=u(ks[0], (V, E), 0.1),
        enc_wih=u(ks[1], (E, 4 * H), s),
        enc_whh=u(ks[2], (H, 4 * H), s),
        enc_b=u(ks[3], (1, 4 * H), s),
        emb_dec=u(ks[4], (V, E), 0.1),
        dec_wih=u(ks[5], (E, 4 * H), s),
        dec_whh=u(ks[6], (H, 4 * H), s),
        dec_b=u(ks[7], (1, 4 * H), s),
        w_lin=u(ks[8], (H, V), s),
        b_lin=u(ks[9], (1, V), s),
    )


def seq2seq_forward(params, x, gumbel_key):
    # encoder embedding lookup (glue) -> time-major
    x_emb = jnp.take(params["emb_enc"], x, axis=0)            # (B, S, E)
    x_emb_tm = jnp.transpose(x_emb, (1, 0, 2))                # (S, B, E)

    # gumbel noise for all decoder steps (deterministic given the key);
    # replaces the in-kernel TPU PRNG (not available in interpret mode).
    u = jax.random.uniform(gumbel_key, (T, B, V), jnp.float32)
    gnoise = -jnp.log(-jnp.log(u + EPS) + EPS)

    outputs_tm, inputs_rest_tm, probs_tm = run_seq2seq(x_emb_tm, params, gnoise)

    # inputss[0] = initial BOS one-hot, inputss[1:] = gumbel samples
    bos = jnp.zeros((1, B, V), jnp.float32).at[0, :, 0].set(1.0)
    inputss_tm = jnp.concatenate([bos, inputs_rest_tm], axis=0)   # (T+1, B, V)

    outputs = jnp.transpose(outputs_tm, (1, 0, 2))            # (B, T, V)
    inputss = jnp.transpose(inputss_tm, (1, 0, 2))            # (B, T+1, V)
    probs = jnp.transpose(probs_tm[..., 0], (1, 0))           # (B, T)
    return outputs, inputss, probs

# TODO(synk): the `gumbel == 0` branch uses host-side Python random.random()
# teacher forcing; only the deterministic `gumbel > 0` branch is implemented.


if __name__ == "__main__":
    key = jax.random.PRNGKey(0)
    pkey, xkey, gkey = jax.random.split(key, 3)
    params = init_params(pkey)
    x = jax.random.randint(xkey, (B, S), 0, V, dtype=jnp.int32)

    outputs, inputss, probs = jax.block_until_ready(
        jax.jit(seq2seq_forward)(params, x, gkey))

    assert outputs.shape == (B, T, V)
    assert inputss.shape == (B, T + 1, V)
    assert probs.shape == (B, T)
    assert bool(jnp.all(jnp.isfinite(outputs)))
    assert bool(jnp.all(jnp.isfinite(inputss)))
    assert bool(jnp.all(jnp.isfinite(probs)))
    # decoder feedback inputs must be one-hot rows
    assert bool(jnp.all(jnp.abs(jnp.sum(inputss, axis=-1) - 1.0) < 1e-4))
    print("KERNEL_OK")
</pallas_src>

<mosaic_0001>
module attributes {stable_mosaic.version = 11 : i64} {
  func.func @seq2seq_kernel(%arg0: memref<8x8x32xf32, #tpu.memory_space<vmem>>, %arg1: memref<32x128xf32, #tpu.memory_space<vmem>>, %arg2: memref<32x128xf32, #tpu.memory_space<vmem>>, %arg3: memref<1x128xf32, #tpu.memory_space<vmem>>, %arg4: memref<16x32xf32, #tpu.memory_space<vmem>>, %arg5: memref<32x128xf32, #tpu.memory_space<vmem>>, %arg6: memref<32x128xf32, #tpu.memory_space<vmem>>, %arg7: memref<1x128xf32, #tpu.memory_space<vmem>>, %arg8: memref<32x16xf32, #tpu.memory_space<vmem>>, %arg9: memref<1x16xf32, #tpu.memory_space<vmem>>, %arg10: memref<6x8x16xf32, #tpu.memory_space<vmem>>, %arg11: memref<6x8x16xf32, #tpu.memory_space<vmem>>, %arg12: memref<6x8x16xf32, #tpu.memory_space<vmem>>, %arg13: memref<6x8x1xf32, #tpu.memory_space<vmem>>) attributes {dimension_semantics = [], scalar_prefetch = 0 : i64, scratch_operands = 0 : i64, tpu.core_type = #tpu.core_type<tc>} {
    %c0 = arith.constant 0 : index
    %c0_0 = arith.constant 0 : index
    %c0_1 = arith.constant 0 : index
    %0 = vector.load %arg0[%c0, %c0_0, %c0_1] : memref<8x8x32xf32, #tpu.memory_space<vmem>>, vector<8x8x32xf32>
    %1 = vector.shape_cast %0 : vector<8x8x32xf32> to vector<64x32xf32>
    %c0_2 = arith.constant 0 : index
    %c0_3 = arith.constant 0 : index
    %2 = vector.load %arg1[%c0_2, %c0_3] : memref<32x128xf32, #tpu.memory_space<vmem>>, vector<32x128xf32>
    %cst = arith.constant dense<0.000000e+00> : vector<64x128xf32>
    %3 = tpu.matmul %1, %2, %cst {dimension_numbers = #tpu.dot_dimension_numbers<[1], [0], [0], [1], [0, 0, 1, 1], [], []>} : vector<64x32xf32>, vector<32x128xf32>, vector<64x128xf32> -> vector<64x128xf32>
    %4 = vector.shape_cast %3 : vector<64x128xf32> to vector<8x8x128xf32>
    %c0_4 = arith.constant 0 : index
    %c0_5 = arith.constant 0 : index
    %5 = vector.load %arg2[%c0_4, %c0_5] : memref<32x128xf32, #tpu.memory_space<vmem>>, vector<32x128xf32>
    %c0_6 = arith.constant 0 : index
    %c0_7 = arith.constant 0 : index
    %6 = vector.load %arg3[%c0_6, %c0_7] : memref<1x128xf32, #tpu.memory_space<vmem>>, vector<1x128xf32>
    %cst_8 = arith.constant 0.000000e+00 : f32
    %7 = vector.broadcast %cst_8 : f32 to vector<8x32xf32>
    %cst_9 = arith.constant 0.000000e+00 : f32
    %8 = vector.broadcast %cst_9 : f32 to vector<8x32xf32>
    %9 = vector.extract_strided_slice %4 {offsets = [0, 0, 0], sizes = [1, 8, 128], strides = [1, 1, 1]} : vector<8x8x128xf32> to vector<1x8x128xf32>
    %10 = vector.shape_cast %9 : vector<1x8x128xf32> to vector<8x128xf32>
    %cst_10 = arith.constant dense<0.000000e+00> : vector<8x128xf32>
    %11 = tpu.matmul %7, %5, %cst_10 {dimension_numbers = #tpu.dot_dimension_numbers<[1], [0], [0], [1], [0, 0, 1, 1], [], []>} : vector<8x32xf32>, vector<32x128xf32>, vector<8x128xf32> -> vector<8x128xf32>
    %12 = arith.addf %10, %11 : vector<8x128xf32>
    %13 = vector.broadcast %6 : vector<1x128xf32> to vector<8x128xf32>
    %14 = arith.addf %12, %13 : vector<8x128xf32>
    %15 = vector.extract_strided_slice %14 {offsets = [0, 0], sizes = [8, 32], strides = [1, 1]} : vector<8x128xf32> to vector<8x32xf32>
    %16 = arith.negf %15 : vector<8x32xf32>
    %17 = math.exp %16 : vector<8x32xf32>
    %cst_11 = arith.constant 1.000000e+00 : f32
    %18 = vector.broadcast %cst_11 : f32 to vector<8x32xf32>
    %19 = arith.addf %18, %17 : vector<8x32xf32>
    %20 = arith.divf %18, %19 : vector<8x32xf32>
    %21 = vector.extract_strided_slice %14 {offsets = [0, 32], sizes = [8, 32], strides = [1, 1]} : vector<8x128xf32> to vector<8x32xf32>
    %22 = arith.negf %21 : vector<8x32xf32>
    %23 = math.exp %22 : vector<8x32xf32>
    %cst_12 = arith.constant 1.000000e+00 : f32
    %24 = vector.broadcast %cst_12 : f32 to vector<8x32xf32>
    %25 = arith.addf %24, %23 : vector<8x32xf32>
    %26 = arith.divf %24, %25 : vector<8x32xf32>
    %27 = vector.extract_strided_slice %14 {offsets = [0, 64], sizes = [8, 32], strides = [1, 1]} : vector<8x128xf32> to vector<8x32xf32>
    %28 = math.tanh %27 : vector<8x32xf32>
    %29 = vector.extract_strided_slice %14 {offsets = [0, 96], sizes = [8, 32], strides = [1, 1]} : vector<8x128xf32> to vector<8x32xf32>
    %30 = arith.negf %29 : vector<8x32xf32>
    %31 = math.exp %30 : vector<8x32xf32>
    %cst_13 = arith.constant 1.000000e+00 : f32
    %32 = vector.broadcast %cst_13 : f32 to vector<8x32xf32>
    %33 = arith.addf %32, %31 : vector<8x32xf32>
    %34 = arith.divf %32, %33 : vector<8x32xf32>
    %35 = arith.mulf %26, %8 : vector<8x32xf32>
    %36 = arith.mulf %20, %28 : vector<8x32xf32>
    %37 = arith.addf %35, %36 : vector<8x32xf32>
    %38 = math.tanh %37 : vector<8x32xf32>
    %39 = arith.mulf %34, %38 : vector<8x32xf32>
    %40 = vector.extract_strided_slice %4 {offsets = [1, 0, 0], sizes = [1, 8, 128], strides = [1, 1, 1]} : vector<8x8x128xf32> to vector<1x8x128xf32>
    %41 = vector.shape_cast %40 : vector<1x8x128xf32> to vector<8x128xf32>
    %cst_14 = arith.constant dense<0.000000e+00> : vector<8x128xf32>
    %42 = tpu.matmul %39, %5, %cst_14 {dimension_numbers = #tpu.dot_dimension_numbers<[1], [0], [0], [1], [0, 0, 1, 1], [], []>} : vector<8x32xf32>, vector<32x128xf32>, vector<8x128xf32> -> vector<8x128xf32>
    %43 = arith.addf %41, %42 : vector<8x128xf32>
    %44 = vector.broadcast %6 : vector<1x128xf32> to vector<8x128xf32>
    %45 = arith.addf %43, %44 : vector<8x128xf32>
    %46 = vector.extract_strided_slice %45 {offsets = [0, 0], sizes = [8, 32], strides = [1, 1]} : vector<8x128xf32> to vector<8x32xf32>
    %47 = arith.negf %46 : vector<8x32xf32>
    %48 = math.exp %47 : vector<8x32xf32>
    %cst_15 = arith.constant 1.000000e+00 : f32
    %49 = vector.broadcast %cst_15 : f32 to vector<8x32xf32>
    %50 = arith.addf %49, %48 : vector<8x32xf32>
    %51 = arith.divf %49, %50 : vector<8x32xf32>
    %52 = vector.extract_strided_slice %45 {offsets = [0, 32], sizes = [8, 32], strides = [1, 1]} : vector<8x128xf32> to vector<8x32xf32>
    %53 = arith.negf %52 : vector<8x32xf32>
    %54 = math.exp %53 : vector<8x32xf32>
    %cst_16 = arith.constant 1.000000e+00 : f32
    %55 = vector.broadcast %cst_16 : f32 to vector<8x32xf32>
    %56 = arith.addf %55, %54 : vector<8x32xf32>
    %57 = arith.divf %55, %56 : vector<8x32xf32>
    %58 = vector.extract_strided_slice %45 {offsets = [0, 64], sizes = [8, 32], strides = [1, 1]} : vector<8x128xf32> to vector<8x32xf32>
    %59 = math.tanh %58 : vector<8x32xf32>
    %60 = vector.extract_strided_slice %45 {offsets = [0, 96], sizes = [8, 32], strides = [1, 1]} : vector<8x128xf32> to vector<8x32xf32>
    %61 = arith.negf %60 : vector<8x32xf32>
    %62 = math.exp %61 : vector<8x32xf32>
    %cst_17 = arith.constant 1.000000e+00 : f32
    %63 = vector.broadcast %cst_17 : f32 to vector<8x32xf32>
    %64 = arith.addf %63, %62 : vector<8x32xf32>
    %65 = arith.divf %63, %64 : vector<8x32xf32>
    %66 = arith.mulf %57, %37 : vector<8x32xf32>
    %67 = arith.mulf %51, %59 : vector<8x32xf32>
    %68 = arith.addf %66, %67 : vector<8x32xf32>
    %69 = math.tanh %68 : vector<8x32xf32>
    %70 = arith.mulf %65, %69 : vector<8x32xf32>
    %71 = vector.extract_strided_slice %4 {offsets = [2, 0, 0], sizes = [1, 8, 128], strides = [1, 1, 1]} : vector<8x8x128xf32> to vector<1x8x128xf32>
    %72 = vector.shape_cast %71 : vector<1x8x128xf32> to vector<8x128xf32>
    %cst_18 = arith.constant dense<0.000000e+00> : vector<8x128xf32>
    %73 = tpu.matmul %70, %5, %cst_18 {dimension_numbers = #tpu.dot_dimension_numbers<[1], [0], [0], [1], [0, 0, 1, 1], [], []>} : vector<8x32xf32>, vector<32x128xf32>, vector<8x128xf32> -> vector<8x128xf32>
    %74 = arith.addf %72, %73 : vector<8x128xf32>
    %75 = vector.broadcast %6 : vector<1x128xf32> to vector<8x128xf32>
    %76 = arith.addf %74, %75 : vector<8x128xf32>
    %77 = vector.extract_strided_slice %76 {offsets = [0, 0], sizes = [8, 32], strides = [1, 1]} : vector<8x128xf32> to vector<8x32xf32>
    %78 = arith.negf %77 : vector<8x32xf32>
    %79 = math.exp %78 : vector<8x32xf32>
    %cst_19 = arith.constant 1.000000e+00 : f32
    %80 = vector.broadcast %cst_19 : f32 to vector<8x32xf32>
    %81 = arith.addf %80, %79 : vector<8x32xf32>
    %82 = arith.divf %80, %81 : vector<8x32xf32>
    %83 = vector.extract_strided_slice %76 {offsets = [0, 32], sizes = [8, 32], strides = [1, 1]} : vector<8x128xf32> to vector<8x32xf32>
    %84 = arith.negf %83 : vector<8x32xf32>
    %85 = math.exp %84 : vector<8x32xf32>
    %cst_20 = arith.constant 1.000000e+00 : f32
    %86 = vector.broadcast %cst_20 : f32 to vector<8x32xf32>
    %87 = arith.addf %86, %85 : vector<8x32xf32>
    %88 = arith.divf %86, %87 : vector<8x32xf32>
    %89 = vector.extract_strided_slice %76 {offsets = [0, 64], sizes = [8, 32], strides = [1, 1]} : vector<8x128xf32> to vector<8x32xf32>
    %90 = math.tanh %89 : vector<8x32xf32>
    %91 = vector.extract_strided_slice %76 {offsets = [0, 96], sizes = [8, 32], strides = [1, 1]} : vector<8x128xf32> to vector<8x32xf32>
    %92 = arith.negf %91 : vector<8x32xf32>
    %93 = math.exp %92 : vector<8x32xf32>
    %cst_21 = arith.constant 1.000000e+00 : f32
    %94 = vector.broadcast %cst_21 : f32 to vector<8x32xf32>
    %95 = arith.addf %94, %93 : vector<8x32xf32>
    %96 = arith.divf %94, %95 : vector<8x32xf32>
    %97 = arith.mulf %88, %68 : vector<8x32xf32>
    %98 = arith.mulf %82, %90 : vector<8x32xf32>
    %99 = arith.addf %97, %98 : vector<8x32xf32>
    %100 = math.tanh %99 : vector<8x32xf32>
    %101 = arith.mulf %96, %100 : vector<8x32xf32>
    %102 = vector.extract_strided_slice %4 {offsets = [3, 0, 0], sizes = [1, 8, 128], strides = [1, 1, 1]} : vector<8x8x128xf32> to vector<1x8x128xf32>
    %103 = vector.shape_cast %102 : vector<1x8x128xf32> to vector<8x128xf32>
    %cst_22 = arith.constant dense<0.000000e+00> : vector<8x128xf32>
    %104 = tpu.matmul %101, %5, %cst_22 {dimension_numbers = #tpu.dot_dimension_numbers<[1], [0], [0], [1], [0, 0, 1, 1], [], []>} : vector<8x32xf32>, vector<32x128xf32>, vector<8x128xf32> -> vector<8x128xf32>
    %105 = arith.addf %103, %104 : vector<8x128xf32>
    %106 = vector.broadcast %6 : vector<1x128xf32> to vector<8x128xf32>
    %107 = arith.addf %105, %106 : vector<8x128xf32>
    %108 = vector.extract_strided_slice %107 {offsets = [0, 0], sizes = [8, 32], strides = [1, 1]} : vector<8x128xf32> to vector<8x32xf32>
    %109 = arith.negf %108 : vector<8x32xf32>
    %110 = math.exp %109 : vector<8x32xf32>
    %cst_23 = arith.constant 1.000000e+00 : f32
    %111 = vector.broadcast %cst_23 : f32 to vector<8x32xf32>
    %112 = arith.addf %111, %110 : vector<8x32xf32>
    %113 = arith.divf %111, %112 : vector<8x32xf32>
    %114 = vector.extract_strided_slice %107 {offsets = [0, 32], sizes = [8, 32], strides = [1, 1]} : vector<8x128xf32> to vector<8x32xf32>
    %115 = arith.negf %114 : vector<8x32xf32>
    %116 = math.exp %115 : vector<8x32xf32>
    %cst_24 = arith.constant 1.000000e+00 : f32
    %117 = vector.broadcast %cst_24 : f32 to vector<8x32xf32>
    %118 = arith.addf %117, %116 : vector<8x32xf32>
    %119 = arith.divf %117, %118 : vector<8x32xf32>
    %120 = vector.extract_strided_slice %107 {offsets = [0, 64], sizes = [8, 32], strides = [1, 1]} : vector<8x128xf32> to vector<8x32xf32>
    %121 = math.tanh %120 : vector<8x32xf32>
    %122 = vector.extract_strided_slice %107 {offsets = [0, 96], sizes = [8, 32], strides = [1, 1]} : vector<8x128xf32> to vector<8x32xf32>
    %123 = arith.negf %122 : vector<8x32xf32>
    %124 = math.exp %123 : vector<8x32xf32>
    %cst_25 = arith.constant 1.000000e+00 : f32
    %125 = vector.broadcast %cst_25 : f32 to vector<8x32xf32>
    %126 = arith.addf %125, %124 : vector<8x32xf32>
    %127 = arith.divf %125, %126 : vector<8x32xf32>
    %128 = arith.mulf %119, %99 : vector<8x32xf32>
    %129 = arith.mulf %113, %121 : vector<8x32xf32>
    %130 = arith.addf %128, %129 : vector<8x32xf32>
    %131 = math.tanh %130 : vector<8x32xf32>
    %132 = arith.mulf %127, %131 : vector<8x32xf32>
    %133 = vector.extract_strided_slice %4 {offsets = [4, 0, 0], sizes = [1, 8, 128], strides = [1, 1, 1]} : vector<8x8x128xf32> to vector<1x8x128xf32>
    %134 = vector.shape_cast %133 : vector<1x8x128xf32> to vector<8x128xf32>
    %cst_26 = arith.constant dense<0.000000e+00> : vector<8x128xf32>
    %135 = tpu.matmul %132, %5, %cst_26 {dimension_numbers = #tpu.dot_dimension_numbers<[1], [0], [0], [1], [0, 0, 1, 1], [], []>} : vector<8x32xf32>, vector<32x128xf32>, vector<8x128xf32> -> vector<8x128xf32>
    %136 = arith.addf %134, %135 : vector<8x128xf32>
    %137 = vector.broadcast %6 : vector<1x128xf32> to vector<8x128xf32>
    %138 = arith.addf %136, %137 : vector<8x128xf32>
    %139 = vector.extract_strided_slice %138 {offsets = [0, 0], sizes = [8, 32], strides = [1, 1]} : vector<8x128xf32> to vector<8x32xf32>
    %140 = arith.negf %139 : vector<8x32xf32>
    %141 = math.exp %140 : vector<8x32xf32>
    %cst_27 = arith.constant 1.000000e+00 : f32
    %142 = vector.broadcast %cst_27 : f32 to vector<8x32xf32>
    %143 = arith.addf %142, %141 : vector<8x32xf32>
    %144 = arith.divf %142, %143 : vector<8x32xf32>
    %145 = vector.extract_strided_slice %138 {offsets = [0, 32], sizes = [8, 32], strides = [1, 1]} : vector<8x128xf32> to vector<8x32xf32>
    %146 = arith.negf %145 : vector<8x32xf32>
    %147 = math.exp %146 : vector<8x32xf32>
    %cst_28 = arith.constant 1.000000e+00 : f32
    %148 = vector.broadcast %cst_28 : f32 to vector<8x32xf32>
    %149 = arith.addf %148, %147 : vector<8x32xf32>
    %150 = arith.divf %148, %149 : vector<8x32xf32>
    %151 = vector.extract_strided_slice %138 {offsets = [0, 64], sizes = [8, 32], strides = [1, 1]} : vector<8x128xf32> to vector<8x32xf32>
    %152 = math.tanh %151 : vector<8x32xf32>
    %153 = vector.extract_strided_slice %138 {offsets = [0, 96], sizes = [8, 32], strides = [1, 1]} : vector<8x128xf32> to vector<8x32xf32>
    %154 = arith.negf %153 : vector<8x32xf32>
    %155 = math.exp %154 : vector<8x32xf32>
    %cst_29 = arith.constant 1.000000e+00 : f32
    %156 = vector.broadcast %cst_29 : f32 to vector<8x32xf32>
    %157 = arith.addf %156, %155 : vector<8x32xf32>
    %158 = arith.divf %156, %157 : vector<8x32xf32>
    %159 = arith.mulf %150, %130 : vector<8x32xf32>
    %160 = arith.mulf %144, %152 : vector<8x32xf32>
    %161 = arith.addf %159, %160 : vector<8x32xf32>
    %162 = math.tanh %161 : vector<8x32xf32>
    %163 = arith.mulf %158, %162 : vector<8x32xf32>
    %164 = vector.extract_strided_slice %4 {offsets = [5, 0, 0], sizes = [1, 8, 128], strides = [1, 1, 1]} : vector<8x8x128xf32> to vector<1x8x128xf32>
    %165 = vector.shape_cast %164 : vector<1x8x128xf32> to vector<8x128xf32>
    %cst_30 = arith.constant dense<0.000000e+00> : vector<8x128xf32>
    %166 = tpu.matmul %163, %5, %cst_30 {dimension_numbers = #tpu.dot_dimension_numbers<[1], [0], [0], [1], [0, 0, 1, 1], [], []>} : vector<8x32xf32>, vector<32x128xf32>, vector<8x128xf32> -> vector<8x128xf32>
    %167 = arith.addf %165, %166 : vector<8x128xf32>
    %168 = vector.broadcast %6 : vector<1x128xf32> to vector<8x128xf32>
    %169 = arith.addf %167, %168 : vector<8x128xf32>
    %170 = vector.extract_strided_slice %169 {offsets = [0, 0], sizes = [8, 32], strides = [1, 1]} : vector<8x128xf32> to vector<8x32xf32>
    %171 = arith.negf %170 : vector<8x32xf32>
    %172 = math.exp %171 : vector<8x32xf32>
    %cst_31 = arith.constant 1.000000e+00 : f32
    %173 = vector.broadcast %cst_31 : f32 to vector<8x32xf32>
    %174 = arith.addf %173, %172 : vector<8x32xf32>
    %175 = arith.divf %173, %174 : vector<8x32xf32>
    %176 = vector.extract_strided_slice %169 {offsets = [0, 32], sizes = [8, 32], strides = [1, 1]} : vector<8x128xf32> to vector<8x32xf32>
    %177 = arith.negf %176 : vector<8x32xf32>
    %178 = math.exp %177 : vector<8x32xf32>
    %cst_32 = arith.constant 1.000000e+00 : f32
    %179 = vector.broadcast %cst_32 : f32 to vector<8x32xf32>
    %180 = arith.addf %179, %178 : vector<8x32xf32>
    %181 = arith.divf %179, %180 : vector<8x32xf32>
    %182 = vector.extract_strided_slice %169 {offsets = [0, 64], sizes = [8, 32], strides = [1, 1]} : vector<8x128xf32> to vector<8x32xf32>
    %183 = math.tanh %182 : vector<8x32xf32>
    %184 = vector.extract_strided_slice %169 {offsets = [0, 96], sizes = [8, 32], strides = [1, 1]} : vector<8x128xf32> to vector<8x32xf32>
    %185 = arith.negf %184 : vector<8x32xf32>
    %186 = math.exp %185 : vector<8x32xf32>
    %cst_33 = arith.constant 1.000000e+00 : f32
    %187 = vector.broadcast %cst_33 : f32 to vector<8x32xf32>
    %188 = arith.addf %187, %186 : vector<8x32xf32>
    %189 = arith.divf %187, %188 : vector<8x32xf32>
    %190 = arith.mulf %181, %161 : vector<8x32xf32>
    %191 = arith.mulf %175, %183 : vector<8x32xf32>
    %192 = arith.addf %190, %191 : vector<8x32xf32>
    %193 = math.tanh %192 : vector<8x32xf32>
    %194 = arith.mulf %189, %193 : vector<8x32xf32>
    %195 = vector.extract_strided_slice %4 {offsets = [6, 0, 0], sizes = [1, 8, 128], strides = [1, 1, 1]} : vector<8x8x128xf32> to vector<1x8x128xf32>
    %196 = vector.shape_cast %195 : vector<1x8x128xf32> to vector<8x128xf32>
    %cst_34 = arith.constant dense<0.000000e+00> : vector<8x128xf32>
    %197 = tpu.matmul %194, %5, %cst_34 {dimension_numbers = #tpu.dot_dimension_numbers<[1], [0], [0], [1], [0, 0, 1, 1], [], []>} : vector<8x32xf32>, vector<32x128xf32>, vector<8x128xf32> -> vector<8x128xf32>
    %198 = arith.addf %196, %197 : vector<8x128xf32>
    %199 = vector.broadcast %6 : vector<1x128xf32> to vector<8x128xf32>
    %200 = arith.addf %198, %199 : vector<8x128xf32>
    %201 = vector.extract_strided_slice %200 {offsets = [0, 0], sizes = [8, 32], strides = [1, 1]} : vector<8x128xf32> to vector<8x32xf32>
    %202 = arith.negf %201 : vector<8x32xf32>
    %203 = math.exp %202 : vector<8x32xf32>
    %cst_35 = arith.constant 1.000000e+00 : f32
    %204 = vector.broadcast %cst_35 : f32 to vector<8x32xf32>
    %205 = arith.addf %204, %203 : vector<8x32xf32>
    %206 = arith.divf %204, %205 : vector<8x32xf32>
    %207 = vector.extract_strided_slice %200 {offsets = [0, 32], sizes = [8, 32], strides = [1, 1]} : vector<8x128xf32> to vector<8x32xf32>
    %208 = arith.negf %207 : vector<8x32xf32>
    %209 = math.exp %208 : vector<8x32xf32>
    %cst_36 = arith.constant 1.000000e+00 : f32
    %210 = vector.broadcast %cst_36 : f32 to vector<8x32xf32>
    %211 = arith.addf %210, %209 : vector<8x32xf32>
    %212 = arith.divf %210, %211 : vector<8x32xf32>
    %213 = vector.extract_strided_slice %200 {offsets = [0, 64], sizes = [8, 32], strides = [1, 1]} : vector<8x128xf32> to vector<8x32xf32>
    %214 = math.tanh %213 : vector<8x32xf32>
    %215 = vector.extract_strided_slice %200 {offsets = [0, 96], sizes = [8, 32], strides = [1, 1]} : vector<8x128xf32> to vector<8x32xf32>
    %216 = arith.negf %215 : vector<8x32xf32>
    %217 = math.exp %216 : vector<8x32xf32>
    %cst_37 = arith.constant 1.000000e+00 : f32
    %218 = vector.broadcast %cst_37 : f32 to vector<8x32xf32>
    %219 = arith.addf %218, %217 : vector<8x32xf32>
    %220 = arith.divf %218, %219 : vector<8x32xf32>
    %221 = arith.mulf %212, %192 : vector<8x32xf32>
    %222 = arith.mulf %206, %214 : vector<8x32xf32>
    %223 = arith.addf %221, %222 : vector<8x32xf32>
    %224 = math.tanh %223 : vector<8x32xf32>
    %225 = arith.mulf %220, %224 : vector<8x32xf32>
    %226 = vector.extract_strided_slice %4 {offsets = [7, 0, 0], sizes = [1, 8, 128], strides = [1, 1, 1]} : vector<8x8x128xf32> to vector<1x8x128xf32>
    %227 = vector.shape_cast %226 : vector<1x8x128xf32> to vector<8x128xf32>
    %cst_38 = arith.constant dense<0.000000e+00> : vector<8x128xf32>
    %228 = tpu.matmul %225, %5, %cst_38 {dimension_numbers = #tpu.dot_dimension_numbers<[1], [0], [0], [1], [0, 0, 1, 1], [], []>} : vector<8x32xf32>, vector<32x128xf32>, vector<8x128xf32> -> vector<8x128xf32>
    %229 = arith.addf %227, %228 : vector<8x128xf32>
    %230 = vector.broadcast %6 : vector<1x128xf32> to vector<8x128xf32>
    %231 = arith.addf %229, %230 : vector<8x128xf32>
    %232 = vector.extract_strided_slice %231 {offsets = [0, 0], sizes = [8, 32], strides = [1, 1]} : vector<8x128xf32> to vector<8x32xf32>
    %233 = arith.negf %232 : vector<8x32xf32>
    %234 = math.exp %233 : vector<8x32xf32>
    %cst_39 = arith.constant 1.000000e+00 : f32
    %235 = vector.broadcast %cst_39 : f32 to vector<8x32xf32>
    %236 = arith.addf %235, %234 : vector<8x32xf32>
    %237 = arith.divf %235, %236 : vector<8x32xf32>
    %238 = vector.extract_strided_slice %231 {offsets = [0, 32], sizes = [8, 32], strides = [1, 1]} : vector<8x128xf32> to vector<8x32xf32>
    %239 = arith.negf %238 : vector<8x32xf32>
    %240 = math.exp %239 : vector<8x32xf32>
    %cst_40 = arith.constant 1.000000e+00 : f32
    %241 = vector.broadcast %cst_40 : f32 to vector<8x32xf32>
    %242 = arith.addf %241, %240 : vector<8x32xf32>
    %243 = arith.divf %241, %242 : vector<8x32xf32>
    %244 = vector.extract_strided_slice %231 {offsets = [0, 64], sizes = [8, 32], strides = [1, 1]} : vector<8x128xf32> to vector<8x32xf32>
    %245 = math.tanh %244 : vector<8x32xf32>
    %246 = vector.extract_strided_slice %231 {offsets = [0, 96], sizes = [8, 32], strides = [1, 1]} : vector<8x128xf32> to vector<8x32xf32>
    %247 = arith.negf %246 : vector<8x32xf32>
    %248 = math.exp %247 : vector<8x32xf32>
    %cst_41 = arith.constant 1.000000e+00 : f32
    %249 = vector.broadcast %cst_41 : f32 to vector<8x32xf32>
    %250 = arith.addf %249, %248 : vector<8x32xf32>
    %251 = arith.divf %249, %250 : vector<8x32xf32>
    %252 = arith.mulf %243, %223 : vector<8x32xf32>
    %253 = arith.mulf %237, %245 : vector<8x32xf32>
    %254 = arith.addf %252, %253 : vector<8x32xf32>
    %255 = math.tanh %254 : vector<8x32xf32>
    %256 = arith.mulf %251, %255 : vector<8x32xf32>
    %257 = vector.shape_cast %39 : vector<8x32xf32> to vector<8x1x32xf32>
    %258 = vector.shape_cast %70 : vector<8x32xf32> to vector<8x1x32xf32>
    %259 = vector.shape_cast %101 : vector<8x32xf32> to vector<8x1x32xf32>
    %260 = vector.shape_cast %132 : vector<8x32xf32> to vector<8x1x32xf32>
    %261 = vector.shape_cast %163 : vector<8x32xf32> to vector<8x1x32xf32>
    %262 = vector.shape_cast %194 : vector<8x32xf32> to vector<8x1x32xf32>
    %263 = vector.shape_cast %225 : vector<8x32xf32> to vector<8x1x32xf32>
    %264 = vector.shape_cast %256 : vector<8x32xf32> to vector<8x1x32xf32>
    %265 = tpu.concatenate %257, %258, %259, %260, %261, %262, %263, %264 in 1 : vector<8x1x32xf32>, vector<8x1x32xf32>, vector<8x1x32xf32>, vector<8x1x32xf32>, vector<8x1x32xf32>, vector<8x1x32xf32>, vector<8x1x32xf32>, vector<8x1x32xf32> -> vector<8x8x32xf32>
    %c0_42 = arith.constant 0 : index
    %c0_43 = arith.constant 0 : index
    %266 = vector.load %arg4[%c0_42, %c0_43] : memref<16x32xf32, #tpu.memory_space<vmem>>, vector<16x32xf32>
    %c0_44 = arith.constant 0 : index
    %c0_45 = arith.constant 0 : index
    %267 = vector.load %arg5[%c0_44, %c0_45] : memref<32x128xf32, #tpu.memory_space<vmem>>, vector<32x128xf32>
    %cst_46 = arith.constant dense<0.000000e+00> : vector<16x128xf32>
    %268 = tpu.matmul %266, %267, %cst_46 {dimension_numbers = #tpu.dot_dimension_numbers<[1], [0], [0], [1], [0, 0, 1, 1], [], []>} : vector<16x32xf32>, vector<32x128xf32>, vector<16x128xf32> -> vector<16x128xf32>
    %c0_47 = arith.constant 0 : index
    %c0_48 = arith.constant 0 : index
    %269 = vector.load %arg6[%c0_47, %c0_48] : memref<32x128xf32, #tpu.memory_space<vmem>>, vector<32x128xf32>
    %c0_49 = arith.constant 0 : index
    %c0_50 = arith.constant 0 : index
    %270 = vector.load %arg7[%c0_49, %c0_50] : memref<1x128xf32, #tpu.memory_space<vmem>>, vector<1x128xf32>
    %c0_51 = arith.constant 0 : index
    %c0_52 = arith.constant 0 : index
    %271 = vector.load %arg8[%c0_51, %c0_52] : memref<32x16xf32, #tpu.memory_space<vmem>>, vector<32x16xf32>
    %c0_53 = arith.constant 0 : index
    %c0_54 = arith.constant 0 : index
    %272 = vector.load %arg9[%c0_53, %c0_54] : memref<1x16xf32, #tpu.memory_space<vmem>>, vector<1x16xf32>
    %c0_55 = arith.constant 0 : index
    %c0_56 = arith.constant 0 : index
    %c0_57 = arith.constant 0 : index
    %273 = vector.load %arg10[%c0_55, %c0_56, %c0_57] : memref<6x8x16xf32, #tpu.memory_space<vmem>>, vector<6x8x16xf32>
    %274 = tpu.iota {dimensions = array<i32: 1>} : vector<8x16xi32>
    %c0_i32 = arith.constant 0 : i32
    %275 = vector.broadcast %c0_i32 : i32 to vector<8x16xi32>
    %276 = arith.cmpi eq, %274, %275 : vector<8x16xi32>
    %cst_58 = arith.constant 1.000000e+00 : f32
    %cst_59 = arith.constant 0.000000e+00 : f32
    %277 = vector.broadcast %cst_58 : f32 to vector<8x16xf32>
    %278 = vector.broadcast %cst_59 : f32 to vector<8x16xf32>
    %279 = arith.select %276, %277, %278 : vector<8x16xi1>, vector<8x16xf32>
    %cst_60 = arith.constant dense<0.000000e+00> : vector<8x128xf32>
    %280 = tpu.matmul %279, %268, %cst_60 {dimension_numbers = #tpu.dot_dimension_numbers<[1], [0], [0], [1], [0, 0, 1, 1], [], []>} : vector<8x16xf32>, vector<16x128xf32>, vector<8x128xf32> -> vector<8x128xf32>
    %cst_61 = arith.constant dense<0.000000e+00> : vector<8x128xf32>
    %281 = tpu.matmul %256, %269, %cst_61 {dimension_numbers = #tpu.dot_dimension_numbers<[1], [0], [0], [1], [0, 0, 1, 1], [], []>} : vector<8x32xf32>, vector<32x128xf32>, vector<8x128xf32> -> vector<8x128xf32>
    %282 = arith.addf %280, %281 : vector<8x128xf32>
    %283 = vector.broadcast %270 : vector<1x128xf32> to vector<8x128xf32>
    %284 = arith.addf %282, %283 : vector<8x128xf32>
    %285 = vector.extract_strided_slice %284 {offsets = [0, 0], sizes = [8, 32], strides = [1, 1]} : vector<8x128xf32> to vector<8x32xf32>
    %286 = arith.negf %285 : vector<8x32xf32>
    %287 = math.exp %286 : vector<8x32xf32>
    %cst_62 = arith.constant 1.000000e+00 : f32
    %288 = vector.broadcast %cst_62 : f32 to vector<8x32xf32>
    %289 = arith.addf %288, %287 : vector<8x32xf32>
    %290 = arith.divf %288, %289 : vector<8x32xf32>
    %291 = vector.extract_strided_slice %284 {offsets = [0, 32], sizes = [8, 32], strides = [1, 1]} : vector<8x128xf32> to vector<8x32xf32>
    %292 = arith.negf %291 : vector<8x32xf32>
    %293 = math.exp %292 : vector<8x32xf32>
    %cst_63 = arith.constant 1.000000e+00 : f32
    %294 = vector.broadcast %cst_63 : f32 to vector<8x32xf32>
    %295 = arith.addf %294, %293 : vector<8x32xf32>
    %296 = arith.divf %294, %295 : vector<8x32xf32>
    %297 = vector.extract_strided_slice %284 {offsets = [0, 64], sizes = [8, 32], strides = [1, 1]} : vector<8x128xf32> to vector<8x32xf32>
    %298 = math.tanh %297 : vector<8x32xf32>
    %299 = vector.extract_strided_slice %284 {offsets = [0, 96], sizes = [8, 32], strides = [1, 1]} : vector<8x128xf32> to vector<8x32xf32>
    %300 = arith.negf %299 : vector<8x32xf32>
    %301 = math.exp %300 : vector<8x32xf32>
    %cst_64 = arith.constant 1.000000e+00 : f32
    %302 = vector.broadcast %cst_64 : f32 to vector<8x32xf32>
    %303 = arith.addf %302, %301 : vector<8x32xf32>
    %304 = arith.divf %302, %303 : vector<8x32xf32>
    %305 = arith.mulf %296, %254 : vector<8x32xf32>
    %306 = arith.mulf %290, %298 : vector<8x32xf32>
    %307 = arith.addf %305, %306 : vector<8x32xf32>
    %308 = math.tanh %307 : vector<8x32xf32>
    %309 = arith.mulf %304, %308 : vector<8x32xf32>
    %310 = vector.shape_cast %309 : vector<8x32xf32> to vector<8x1x32xf32>
    "tpu.trace_start"() <{level = 10 : i32, message = "bqh,bkh->bqk"}> : () -> ()
    %cst_65 = arith.constant dense<0.000000e+00> : vector<8x1x8xf32>
    %311 = tpu.matmul %310, %265, %cst_65 {dimension_numbers = #tpu.dot_dimension_numbers<[2], [2], [1], [1], [0, 0, 0, 1, 1, 1], [0], [0]>} : vector<8x1x32xf32>, vector<8x8x32xf32>, vector<8x1x8xf32> -> vector<8x1x8xf32>
    "tpu.trace_stop"() : () -> ()
    %cst_66 = arith.constant dense<0xFF800000> : vector<8x1xf32>
    %312 = vector.multi_reduction <maximumf>, %311, %cst_66 [2] : vector<8x1x8xf32> to vector<8x1xf32>
    %313 = vector.shape_cast %312 : vector<8x1xf32> to vector<8x1x1xf32>
    %314 = vector.broadcast %313 : vector<8x1x1xf32> to vector<8x1x8xf32>
    %315 = arith.subf %311, %314 : vector<8x1x8xf32>
    %316 = math.exp %315 : vector<8x1x8xf32>
    %cst_67 = arith.constant dense<0.000000e+00> : vector<8x1xf32>
    %317 = vector.multi_reduction <add>, %316, %cst_67 [2] : vector<8x1x8xf32> to vector<8x1xf32>
    %318 = vector.shape_cast %317 : vector<8x1xf32> to vector<8x1x1xf32>
    %319 = vector.broadcast %318 : vector<8x1x1xf32> to vector<8x1x8xf32>
    %320 = arith.divf %316, %319 : vector<8x1x8xf32>
    "tpu.trace_start"() <{level = 10 : i32, message = "bqk,bkh->bqh"}> : () -> ()
    %cst_68 = arith.constant dense<0.000000e+00> : vector<8x1x32xf32>
    %321 = tpu.matmul %320, %265, %cst_68 {dimension_numbers = #tpu.dot_dimension_numbers<[2], [1], [1], [2], [0, 0, 0, 1, 1, 2], [0], [0]>} : vector<8x1x8xf32>, vector<8x8x32xf32>, vector<8x1x32xf32> -> vector<8x1x32xf32>
    "tpu.trace_stop"() : () -> ()
    %322 = vector.shape_cast %321 : vector<8x1x32xf32> to vector<8x32xf32>
    %cst_69 = arith.constant dense<0.000000e+00> : vector<8x16xf32>
    %323 = tpu.matmul %322, %271, %cst_69 {dimension_numbers = #tpu.dot_dimension_numbers<[1], [0], [0], [1], [0, 0, 1, 1], [], []>} : vector<8x32xf32>, vector<32x16xf32>, vector<8x16xf32> -> vector<8x16xf32>
    %324 = vector.broadcast %272 : vector<1x16xf32> to vector<8x16xf32>
    %325 = arith.addf %323, %324 : vector<8x16xf32>
    %326 = vector.extract_strided_slice %273 {offsets = [0, 0, 0], sizes = [1, 8, 16], strides = [1, 1, 1]} : vector<6x8x16xf32> to vector<1x8x16xf32>
    %327 = vector.shape_cast %326 : vector<1x8x16xf32> to vector<8x16xf32>
    %328 = arith.addf %325, %327 : vector<8x16xf32>
    %cst_70 = arith.constant 0.699999988 : f32
    %329 = vector.broadcast %cst_70 : f32 to vector<8x16xf32>
    %330 = arith.divf %328, %329 : vector<8x16xf32>
    %cst_71 = arith.constant dense<0xFF800000> : vector<8xf32>
    %331 = vector.multi_reduction <maximumf>, %330, %cst_71 [1] : vector<8x16xf32> to vector<8xf32>
    %332 = vector.shape_cast %331 : vector<8xf32> to vector<8x1xf32>
    %333 = vector.broadcast %332 : vector<8x1xf32> to vector<8x16xf32>
    %334 = arith.subf %330, %333 : vector<8x16xf32>
    %335 = math.exp %334 : vector<8x16xf32>
    %cst_72 = arith.constant dense<0.000000e+00> : vector<8xf32>
    %336 = vector.multi_reduction <add>, %335, %cst_72 [1] : vector<8x16xf32> to vector<8xf32>
    %337 = vector.shape_cast %336 : vector<8xf32> to vector<8x1xf32>
    %338 = vector.broadcast %337 : vector<8x1xf32> to vector<8x16xf32>
    %339 = arith.divf %335, %338 : vector<8x16xf32>
    %cst_73 = arith.constant dense<0xFF800000> : vector<8xf32>
    %340 = vector.multi_reduction <maximumf>, %339, %cst_73 [1] : vector<8x16xf32> to vector<8xf32>
    %341 = vector.shape_cast %340 : vector<8xf32> to vector<8x1xf32>
    %342 = vector.broadcast %341 : vector<8x1xf32> to vector<8x16xf32>
    %343 = arith.cmpf oeq, %339, %342 : vector<8x16xf32>
    %c16_i32 = arith.constant 16 : i32
    %344 = vector.broadcast %c16_i32 : i32 to vector<8x16xi32>
    %345 = arith.select %343, %274, %344 : vector<8x16xi1>, vector<8x16xi32>
    %cst_74 = arith.constant dense<2147483647> : vector<8xi32>
    %346 = vector.multi_reduction <minsi>, %345, %cst_74 [1] : vector<8x16xi32> to vector<8xi32>
    %347 = vector.shape_cast %346 : vector<8xi32> to vector<8x1xi32>
    %348 = vector.broadcast %347 : vector<8x1xi32> to vector<8x16xi32>
    %349 = arith.cmpi eq, %274, %348 : vector<8x16xi32>
    %350 = arith.extui %349 : vector<8x16xi1> to vector<8x16xi32>
    %351 = arith.sitofp %350 : vector<8x16xi32> to vector<8x16xf32>
    %352 = arith.subf %351, %339 : vector<8x16xf32>
    %353 = arith.addf %352, %339 : vector<8x16xf32>
    %cst_75 = arith.constant dense<0xFF800000> : vector<8xf32>
    %354 = vector.multi_reduction <maximumf>, %325, %cst_75 [1] : vector<8x16xf32> to vector<8xf32>
    %355 = vector.shape_cast %354 : vector<8xf32> to vector<8x1xf32>
    %356 = vector.broadcast %355 : vector<8x1xf32> to vector<8x16xf32>
    %357 = arith.subf %325, %356 : vector<8x16xf32>
    %358 = math.exp %357 : vector<8x16xf32>
    %cst_76 = arith.constant dense<0.000000e+00> : vector<8xf32>
    %359 = vector.multi_reduction <add>, %358, %cst_76 [1] : vector<8x16xf32> to vector<8xf32>
    %360 = vector.shape_cast %359 : vector<8xf32> to vector<8x1xf32>
    %361 = math.log %360 : vector<8x1xf32>
    %362 = arith.addf %355, %361 : vector<8x1xf32>
    %363 = arith.mulf %351, %325 : vector<8x16xf32>
    %cst_77 = arith.constant dense<0.000000e+00> : vector<8xf32>
    %364 = vector.multi_reduction <add>, %363, %cst_77 [1] : vector<8x16xf32> to vector<8xf32>
    %365 = vector.shape_cast %364 : vector<8xf32> to vector<8x1xf32>
    %366 = arith.subf %362, %365 : vector<8x1xf32>
    %cst_78 = arith.constant dense<0.000000e+00> : vector<8x128xf32>
    %367 = tpu.matmul %351, %268, %cst_78 {dimension_numbers = #tpu.dot_dimension_numbers<[1], [0], [0], [1], [0, 0, 1, 1], [], []>} : vector<8x16xf32>, vector<16x128xf32>, vector<8x128xf32> -> vector<8x128xf32>
    %cst_79 = arith.constant dense<0.000000e+00> : vector<8x128xf32>
    %368 = tpu.matmul %309, %269, %cst_79 {dimension_numbers = #tpu.dot_dimension_numbers<[1], [0], [0], [1], [0, 0, 1, 1], [], []>} : vector<8x32xf32>, vector<32x128xf32>, vector<8x128xf32> -> vector<8x128xf32>
    %369 = arith.addf %367, %368 : vector<8x128xf32>
    %370 = vector.broadcast %270 : vector<1x128xf32> to vector<8x128xf32>
    %371 = arith.addf %369, %370 : vector<8x128xf32>
    %372 = vector.extract_strided_slice %371 {offsets = [0, 0], sizes = [8, 32], strides = [1, 1]} : vector<8x128xf32> to vector<8x32xf32>
    %373 = arith.negf %372 : vector<8x32xf32>
    %374 = math.exp %373 : vector<8x32xf32>
    %cst_80 = arith.constant 1.000000e+00 : f32
    %375 = vector.broadcast %cst_80 : f32 to vector<8x32xf32>
    %376 = arith.addf %375, %374 : vector<8x32xf32>
    %377 = arith.divf %375, %376 : vector<8x32xf32>
    %378 = vector.extract_strided_slice %371 {offsets = [0, 32], sizes = [8, 32], strides = [1, 1]} : vector<8x128xf32> to vector<8x32xf32>
    %379 = arith.negf %378 : vector<8x32xf32>
    %380 = math.exp %379 : vector<8x32xf32>
    %cst_81 = arith.constant 1.000000e+00 : f32
    %381 = vector.broadcast %cst_81 : f32 to vector<8x32xf32>
    %382 = arith.addf %381, %380 : vector<8x32xf32>
    %383 = arith.divf %381, %382 : vector<8x32xf32>
    %384 = vector.extract_strided_slice %371 {offsets = [0, 64], sizes = [8, 32], strides = [1, 1]} : vector<8x128xf32> to vector<8x32xf32>
    %385 = math.tanh %384 : vector<8x32xf32>
    %386 = vector.extract_strided_slice %371 {offsets = [0, 96], sizes = [8, 32], strides = [1, 1]} : vector<8x128xf32> to vector<8x32xf32>
    %387 = arith.negf %386 : vector<8x32xf32>
    %388 = math.exp %387 : vector<8x32xf32>
    %cst_82 = arith.constant 1.000000e+00 : f32
    %389 = vector.broadcast %cst_82 : f32 to vector<8x32xf32>
    %390 = arith.addf %389, %388 : vector<8x32xf32>
    %391 = arith.divf %389, %390 : vector<8x32xf32>
    %392 = arith.mulf %383, %307 : vector<8x32xf32>
    %393 = arith.mulf %377, %385 : vector<8x32xf32>
    %394 = arith.addf %392, %393 : vector<8x32xf32>
    %395 = math.tanh %394 : vector<8x32xf32>
    %396 = arith.mulf %391, %395 : vector<8x32xf32>
    %397 = vector.shape_cast %396 : vector<8x32xf32> to vector<8x1x32xf32>
    "tpu.trace_start"() <{level = 10 : i32, message = "bqh,bkh->bqk"}> : () -> ()
    %cst_83 = arith.constant dense<0.000000e+00> : vector<8x1x8xf32>
    %398 = tpu.matmul %397, %265, %cst_83 {dimension_numbers = #tpu.dot_dimension_numbers<[2], [2], [1], [1], [0, 0, 0, 1, 1, 1], [0], [0]>} : vector<8x1x32xf32>, vector<8x8x32xf32>, vector<8x1x8xf32> -> vector<8x1x8xf32>
    "tpu.trace_stop"() : () -> ()
    %cst_84 = arith.constant dense<0xFF800000> : vector<8x1xf32>
    %399 = vector.multi_reduction <maximumf>, %398, %cst_84 [2] : vector<8x1x8xf32> to vector<8x1xf32>
    %400 = vector.shape_cast %399 : vector<8x1xf32> to vector<8x1x1xf32>
    %401 = vector.broadcast %400 : vector<8x1x1xf32> to vector<8x1x8xf32>
    %402 = arith.subf %398, %401 : vector<8x1x8xf32>
    %403 = math.exp %402 : vector<8x1x8xf32>
    %cst_85 = arith.constant dense<0.000000e+00> : vector<8x1xf32>
    %404 = vector.multi_reduction <add>, %403, %cst_85 [2] : vector<8x1x8xf32> to vector<8x1xf32>
    %405 = vector.shape_cast %404 : vector<8x1xf32> to vector<8x1x1xf32>
    %406 = vector.broadcast %405 : vector<8x1x1xf32> to vector<8x1x8xf32>
    %407 = arith.divf %403, %406 : vector<8x1x8xf32>
    "tpu.trace_start"() <{level = 10 : i32, message = "bqk,bkh->bqh"}> : () -> ()
    %cst_86 = arith.constant dense<0.000000e+00> : vector<8x1x32xf32>
    %408 = tpu.matmul %407, %265, %cst_86 {dimension_numbers = #tpu.dot_dimension_numbers<[2], [1], [1], [2], [0, 0, 0, 1, 1, 2], [0], [0]>} : vector<8x1x8xf32>, vector<8x8x32xf32>, vector<8x1x32xf32> -> vector<8x1x32xf32>
    "tpu.trace_stop"() : () -> ()
    %409 = vector.shape_cast %408 : vector<8x1x32xf32> to vector<8x32xf32>
    %cst_87 = arith.constant dense<0.000000e+00> : vector<8x16xf32>
    %410 = tpu.matmul %409, %271, %cst_87 {dimension_numbers = #tpu.dot_dimension_numbers<[1], [0], [0], [1], [0, 0, 1, 1], [], []>} : vector<8x32xf32>, vector<32x16xf32>, vector<8x16xf32> -> vector<8x16xf32>
    %411 = vector.broadcast %272 : vector<1x16xf32> to vector<8x16xf32>
    %412 = arith.addf %410, %411 : vector<8x16xf32>
    %413 = vector.extract_strided_slice %273 {offsets = [1, 0, 0], sizes = [1, 8, 16], strides = [1, 1, 1]} : vector<6x8x16xf32> to vector<1x8x16xf32>
    %414 = vector.shape_cast %413 : vector<1x8x16xf32> to vector<8x16xf32>
    %415 = arith.addf %412, %414 : vector<8x16xf32>
    %cst_88 = arith.constant 0.699999988 : f32
    %416 = vector.broadcast %cst_88 : f32 to vector<8x16xf32>
    %417 = arith.divf %415, %416 : vector<8x16xf32>
    %cst_89 = arith.constant dense<0xFF800000> : vector<8xf32>
    %418 = vector.multi_reduction <maximumf>, %417, %cst_89 [1] : vector<8x16xf32> to vector<8xf32>
    %419 = vector.shape_cast %418 : vector<8xf32> to vector<8x1xf32>
    %420 = vector.broadcast %419 : vector<8x1xf32> to vector<8x16xf32>
    %421 = arith.subf %417, %420 : vector<8x16xf32>
    %422 = math.exp %421 : vector<8x16xf32>
    %cst_90 = arith.constant dense<0.000000e+00> : vector<8xf32>
    %423 = vector.multi_reduction <add>, %422, %cst_90 [1] : vector<8x16xf32> to vector<8xf32>
    %424 = vector.shape_cast %423 : vector<8xf32> to vector<8x1xf32>
    %425 = vector.broadcast %424 : vector<8x1xf32> to vector<8x16xf32>
    %426 = arith.divf %422, %425 : vector<8x16xf32>
    %cst_91 = arith.constant dense<0xFF800000> : vector<8xf32>
    %427 = vector.multi_reduction <maximumf>, %426, %cst_91 [1] : vector<8x16xf32> to vector<8xf32>
    %428 = vector.shape_cast %427 : vector<8xf32> to vector<8x1xf32>
    %429 = vector.broadcast %428 : vector<8x1xf32> to vector<8x16xf32>
    %430 = arith.cmpf oeq, %426, %429 : vector<8x16xf32>
    %c16_i32_92 = arith.constant 16 : i32
    %431 = vector.broadcast %c16_i32_92 : i32 to vector<8x16xi32>
    %432 = arith.select %430, %274, %431 : vector<8x16xi1>, vector<8x16xi32>
    %cst_93 = arith.constant dense<2147483647> : vector<8xi32>
    %433 = vector.multi_reduction <minsi>, %432, %cst_93 [1] : vector<8x16xi32> to vector<8xi32>
    %434 = vector.shape_cast %433 : vector<8xi32> to vector<8x1xi32>
    %435 = vector.broadcast %434 : vector<8x1xi32> to vector<8x16xi32>
    %436 = arith.cmpi eq, %274, %435 : vector<8x16xi32>
    %437 = arith.extui %436 : vector<8x16xi1> to vector<8x16xi32>
    %438 = arith.sitofp %437 : vector<8x16xi32> to vector<8x16xf32>
    %439 = arith.subf %438, %426 : vector<8x16xf32>
    %440 = arith.addf %439, %426 : vector<8x16xf32>
    %cst_94 = arith.constant dense<0xFF800000> : vector<8xf32>
    %441 = vector.multi_reduction <maximumf>, %412, %cst_94 [1] : vector<8x16xf32> to vector<8xf32>
    %442 = vector.shape_cast %441 : vector<8xf32> to vector<8x1xf32>
    %443 = vector.broadcast %442 : vector<8x1xf32> to vector<8x16xf32>
    %444 = arith.subf %412, %443 : vector<8x16xf32>
    %445 = math.exp %444 : vector<8x16xf32>
    %cst_95 = arith.constant dense<0.000000e+00> : vector<8xf32>
    %446 = vector.multi_reduction <add>, %445, %cst_95 [1] : vector<8x16xf32> to vector<8xf32>
    %447 = vector.shape_cast %446 : vector<8xf32> to vector<8x1xf32>
    %448 = math.log %447 : vector<8x1xf32>
    %449 = arith.addf %442, %448 : vector<8x1xf32>
    %450 = arith.mulf %438, %412 : vector<8x16xf32>
    %cst_96 = arith.constant dense<0.000000e+00> : vector<8xf32>
    %451 = vector.multi_reduction <add>, %450, %cst_96 [1] : vector<8x16xf32> to vector<8xf32>
    %452 = vector.shape_cast %451 : vector<8xf32> to vector<8x1xf32>
    %453 = arith.subf %449, %452 : vector<8x1xf32>
    %cst_97 = arith.constant dense<0.000000e+00> : vector<8x128xf32>
    %454 = tpu.matmul %438, %268, %cst_97 {dimension_numbers = #tpu.dot_dimension_numbers<[1], [0], [0], [1], [0, 0, 1, 1], [], []>} : vector<8x16xf32>, vector<16x128xf32>, vector<8x128xf32> -> vector<8x128xf32>
    %cst_98 = arith.constant dense<0.000000e+00> : vector<8x128xf32>
    %455 = tpu.matmul %396, %269, %cst_98 {dimension_numbers = #tpu.dot_dimension_numbers<[1], [0], [0], [1], [0, 0, 1, 1], [], []>} : vector<8x32xf32>, vector<32x128xf32>, vector<8x128xf32> -> vector<8x128xf32>
    %456 = arith.addf %454, %455 : vector<8x128xf32>
    %457 = vector.broadcast %270 : vector<1x128xf32> to vector<8x128xf32>
    %458 = arith.addf %456, %457 : vector<8x128xf32>
    %459 = vector.extract_strided_slice %458 {offsets = [0, 0], sizes = [8, 32], strides = [1, 1]} : vector<8x128xf32> to vector<8x32xf32>
    %460 = arith.negf %459 : vector<8x32xf32>
    %461 = math.exp %460 : vector<8x32xf32>
    %cst_99 = arith.constant 1.000000e+00 : f32
    %462 = vector.broadcast %cst_99 : f32 to vector<8x32xf32>
    %463 = arith.addf %462, %461 : vector<8x32xf32>
    %464 = arith.divf %462, %463 : vector<8x32xf32>
    %465 = vector.extract_strided_slice %458 {offsets = [0, 32], sizes = [8, 32], strides = [1, 1]} : vector<8x128xf32> to vector<8x32xf32>
    %466 = arith.negf %465 : vector<8x32xf32>
    %467 = math.exp %466 : vector<8x32xf32>
    %cst_100 = arith.constant 1.000000e+00 : f32
    %468 = vector.broadcast %cst_100 : f32 to vector<8x32xf32>
    %469 = arith.addf %468, %467 : vector<8x32xf32>
    %470 = arith.divf %468, %469 : vector<8x32xf32>
    %471 = vector.extract_strided_slice %458 {offsets = [0, 64], sizes = [8, 32], strides = [1, 1]} : vector<8x128xf32> to vector<8x32xf32>
    %472 = math.tanh %471 : vector<8x32xf32>
    %473 = vector.extract_strided_slice %458 {offsets = [0, 96], sizes = [8, 32], strides = [1, 1]} : vector<8x128xf32> to vector<8x32xf32>
    %474 = arith.negf %473 : vector<8x32xf32>
    %475 = math.exp %474 : vector<8x32xf32>
    %cst_101 = arith.constant 1.000000e+00 : f32
    %476 = vector.broadcast %cst_101 : f32 to vector<8x32xf32>
    %477 = arith.addf %476, %475 : vector<8x32xf32>
    %478 = arith.divf %476, %477 : vector<8x32xf32>
    %479 = arith.mulf %470, %394 : vector<8x32xf32>
    %480 = arith.mulf %464, %472 : vector<8x32xf32>
    %481 = arith.addf %479, %480 : vector<8x32xf32>
    %482 = math.tanh %481 : vector<8x32xf32>
    %483 = arith.mulf %478, %482 : vector<8x32xf32>
    %484 = vector.shape_cast %483 : vector<8x32xf32> to vector<8x1x32xf32>
    "tpu.trace_start"() <{level = 10 : i32, message = "bqh,bkh->bqk"}> : () -> ()
    %cst_102 = arith.constant dense<0.000000e+00> : vector<8x1x8xf32>
    %485 = tpu.matmul %484, %265, %cst_102 {dimension_numbers = #tpu.dot_dimension_numbers<[2], [2], [1], [1], [0, 0, 0, 1, 1, 1], [0], [0]>} : vector<8x1x32xf32>, vector<8x8x32xf32>, vector<8x1x8xf32> -> vector<8x1x8xf32>
    "tpu.trace_stop"() : () -> ()
    %cst_103 = arith.constant dense<0xFF800000> : vector<8x1xf32>
    %486 = vector.multi_reduction <maximumf>, %485, %cst_103 [2] : vector<8x1x8xf32> to vector<8x1xf32>
    %487 = vector.shape_cast %486 : vector<8x1xf32> to vector<8x1x1xf32>
    %488 = vector.broadcast %487 : vector<8x1x1xf32> to vector<8x1x8xf32>
    %489 = arith.subf %485, %488 : vector<8x1x8xf32>
    %490 = math.exp %489 : vector<8x1x8xf32>
    %cst_104 = arith.constant dense<0.000000e+00> : vector<8x1xf32>
    %491 = vector.multi_reduction <add>, %490, %cst_104 [2] : vector<8x1x8xf32> to vector<8x1xf32>
    %492 = vector.shape_cast %491 : vector<8x1xf32> to vector<8x1x1xf32>
    %493 = vector.broadcast %492 : vector<8x1x1xf32> to vector<8x1x8xf32>
    %494 = arith.divf %490, %493 : vector<8x1x8xf32>
    "tpu.trace_start"() <{level = 10 : i32, message = "bqk,bkh->bqh"}> : () -> ()
    %cst_105 = arith.constant dense<0.000000e+00> : vector<8x1x32xf32>
    %495 = tpu.matmul %494, %265, %cst_105 {dimension_numbers = #tpu.dot_dimension_numbers<[2], [1], [1], [2], [0, 0, 0, 1, 1, 2], [0], [0]>} : vector<8x1x8xf32>, vector<8x8x32xf32>, vector<8x1x32xf32> -> vector<8x1x32xf32>
    "tpu.trace_stop"() : () -> ()
    %496 = vector.shape_cast %495 : vector<8x1x32xf32> to vector<8x32xf32>
    %cst_106 = arith.constant dense<0.000000e+00> : vector<8x16xf32>
    %497 = tpu.matmul %496, %271, %cst_106 {dimension_numbers = #tpu.dot_dimension_numbers<[1], [0], [0], [1], [0, 0, 1, 1], [], []>} : vector<8x32xf32>, vector<32x16xf32>, vector<8x16xf32> -> vector<8x16xf32>
    %498 = vector.broadcast %272 : vector<1x16xf32> to vector<8x16xf32>
    %499 = arith.addf %497, %498 : vector<8x16xf32>
    %500 = vector.extract_strided_slice %273 {offsets = [2, 0, 0], sizes = [1, 8, 16], strides = [1, 1, 1]} : vector<6x8x16xf32> to vector<1x8x16xf32>
    %501 = vector.shape_cast %500 : vector<1x8x16xf32> to vector<8x16xf32>
    %502 = arith.addf %499, %501 : vector<8x16xf32>
    %cst_107 = arith.constant 0.699999988 : f32
    %503 = vector.broadcast %cst_107 : f32 to vector<8x16xf32>
    %504 = arith.divf %502, %503 : vector<8x16xf32>
    %cst_108 = arith.constant dense<0xFF800000> : vector<8xf32>
    %505 = vector.multi_reduction <maximumf>, %504, %cst_108 [1] : vector<8x16xf32> to vector<8xf32>
    %506 = vector.shape_cast %505 : vector<8xf32> to vector<8x1xf32>
    %507 = vector.broadcast %506 : vector<8x1xf32> to vector<8x16xf32>
    %508 = arith.subf %504, %507 : vector<8x16xf32>
    %509 = math.exp %508 : vector<8x16xf32>
    %cst_109 = arith.constant dense<0.000000e+00> : vector<8xf32>
    %510 = vector.multi_reduction <add>, %509, %cst_109 [1] : vector<8x16xf32> to vector<8xf32>
    %511 = vector.shape_cast %510 : vector<8xf32> to vector<8x1xf32>
    %512 = vector.broadcast %511 : vector<8x1xf32> to vector<8x16xf32>
    %513 = arith.divf %509, %512 : vector<8x16xf32>
    %cst_110 = arith.constant dense<0xFF800000> : vector<8xf32>
    %514 = vector.multi_reduction <maximumf>, %513, %cst_110 [1] : vector<8x16xf32> to vector<8xf32>
    %515 = vector.shape_cast %514 : vector<8xf32> to vector<8x1xf32>
    %516 = vector.broadcast %515 : vector<8x1xf32> to vector<8x16xf32>
    %517 = arith.cmpf oeq, %513, %516 : vector<8x16xf32>
    %c16_i32_111 = arith.constant 16 : i32
    %518 = vector.broadcast %c16_i32_111 : i32 to vector<8x16xi32>
    %519 = arith.select %517, %274, %518 : vector<8x16xi1>, vector<8x16xi32>
    %cst_112 = arith.constant dense<2147483647> : vector<8xi32>
    %520 = vector.multi_reduction <minsi>, %519, %cst_112 [1] : vector<8x16xi32> to vector<8xi32>
    %521 = vector.shape_cast %520 : vector<8xi32> to vector<8x1xi32>
    %522 = vector.broadcast %521 : vector<8x1xi32> to vector<8x16xi32>
    %523 = arith.cmpi eq, %274, %522 : vector<8x16xi32>
    %524 = arith.extui %523 : vector<8x16xi1> to vector<8x16xi32>
    %525 = arith.sitofp %524 : vector<8x16xi32> to vector<8x16xf32>
    %526 = arith.subf %525, %513 : vector<8x16xf32>
    %527 = arith.addf %526, %513 : vector<8x16xf32>
    %cst_113 = arith.constant dense<0xFF800000> : vector<8xf32>
    %528 = vector.multi_reduction <maximumf>, %499, %cst_113 [1] : vector<8x16xf32> to vector<8xf32>
    %529 = vector.shape_cast %528 : vector<8xf32> to vector<8x1xf32>
    %530 = vector.broadcast %529 : vector<8x1xf32> to vector<8x16xf32>
    %531 = arith.subf %499, %530 : vector<8x16xf32>
    %532 = math.exp %531 : vector<8x16xf32>
    %cst_114 = arith.constant dense<0.000000e+00> : vector<8xf32>
    %533 = vector.multi_reduction <add>, %532, %cst_114 [1] : vector<8x16xf32> to vector<8xf32>
    %534 = vector.shape_cast %533 : vector<8xf32> to vector<8x1xf32>
    %535 = math.log %534 : vector<8x1xf32>
    %536 = arith.addf %529, %535 : vector<8x1xf32>
    %537 = arith.mulf %525, %499 : vector<8x16xf32>
    %cst_115 = arith.constant dense<0.000000e+00> : vector<8xf32>
    %538 = vector.multi_reduction <add>, %537, %cst_115 [1] : vector<8x16xf32> to vector<8xf32>
    %539 = vector.shape_cast %538 : vector<8xf32> to vector<8x1xf32>
    %540 = arith.subf %536, %539 : vector<8x1xf32>
    %cst_116 = arith.constant dense<0.000000e+00> : vector<8x128xf32>
    %541 = tpu.matmul %525, %268, %cst_116 {dimension_numbers = #tpu.dot_dimension_numbers<[1], [0], [0], [1], [0, 0, 1, 1], [], []>} : vector<8x16xf32>, vector<16x128xf32>, vector<8x128xf32> -> vector<8x128xf32>
    %cst_117 = arith.constant dense<0.000000e+00> : vector<8x128xf32>
    %542 = tpu.matmul %483, %269, %cst_117 {dimension_numbers = #tpu.dot_dimension_numbers<[1], [0], [0], [1], [0, 0, 1, 1], [], []>} : vector<8x32xf32>, vector<32x128xf32>, vector<8x128xf32> -> vector<8x128xf32>
    %543 = arith.addf %541, %542 : vector<8x128xf32>
    %544 = vector.broadcast %270 : vector<1x128xf32> to vector<8x128xf32>
    %545 = arith.addf %543, %544 : vector<8x128xf32>
    %546 = vector.extract_strided_slice %545 {offsets = [0, 0], sizes = [8, 32], strides = [1, 1]} : vector<8x128xf32> to vector<8x32xf32>
    %547 = arith.negf %546 : vector<8x32xf32>
    %548 = math.exp %547 : vector<8x32xf32>
    %cst_118 = arith.constant 1.000000e+00 : f32
    %549 = vector.broadcast %cst_118 : f32 to vector<8x32xf32>
    %550 = arith.addf %549, %548 : vector<8x32xf32>
    %551 = arith.divf %549, %550 : vector<8x32xf32>
    %552 = vector.extract_strided_slice %545 {offsets = [0, 32], sizes = [8, 32], strides = [1, 1]} : vector<8x128xf32> to vector<8x32xf32>
    %553 = arith.negf %552 : vector<8x32xf32>
    %554 = math.exp %553 : vector<8x32xf32>
    %cst_119 = arith.constant 1.000000e+00 : f32
    %555 = vector.broadcast %cst_119 : f32 to vector<8x32xf32>
    %556 = arith.addf %555, %554 : vector<8x32xf32>
    %557 = arith.divf %555, %556 : vector<8x32xf32>
    %558 = vector.extract_strided_slice %545 {offsets = [0, 64], sizes = [8, 32], strides = [1, 1]} : vector<8x128xf32> to vector<8x32xf32>
    %559 = math.tanh %558 : vector<8x32xf32>
    %560 = vector.extract_strided_slice %545 {offsets = [0, 96], sizes = [8, 32], strides = [1, 1]} : vector<8x128xf32> to vector<8x32xf32>
    %561 = arith.negf %560 : vector<8x32xf32>
    %562 = math.exp %561 : vector<8x32xf32>
    %cst_120 = arith.constant 1.000000e+00 : f32
    %563 = vector.broadcast %cst_120 : f32 to vector<8x32xf32>
    %564 = arith.addf %563, %562 : vector<8x32xf32>
    %565 = arith.divf %563, %564 : vector<8x32xf32>
    %566 = arith.mulf %557, %481 : vector<8x32xf32>
    %567 = arith.mulf %551, %559 : vector<8x32xf32>
    %568 = arith.addf %566, %567 : vector<8x32xf32>
    %569 = math.tanh %568 : vector<8x32xf32>
    %570 = arith.mulf %565, %569 : vector<8x32xf32>
    %571 = vector.shape_cast %570 : vector<8x32xf32> to vector<8x1x32xf32>
    "tpu.trace_start"() <{level = 10 : i32, message = "bqh,bkh->bqk"}> : () -> ()
    %cst_121 = arith.constant dense<0.000000e+00> : vector<8x1x8xf32>
    %572 = tpu.matmul %571, %265, %cst_121 {dimension_numbers = #tpu.dot_dimension_numbers<[2], [2], [1], [1], [0, 0, 0, 1, 1, 1], [0], [0]>} : vector<8x1x32xf32>, vector<8x8x32xf32>, vector<8x1x8xf32> -> vector<8x1x8xf32>
    "tpu.trace_stop"() : () -> ()
    %cst_122 = arith.constant dense<0xFF800000> : vector<8x1xf32>
    %573 = vector.multi_reduction <maximumf>, %572, %cst_122 [2] : vector<8x1x8xf32> to vector<8x1xf32>
    %574 = vector.shape_cast %573 : vector<8x1xf32> to vector<8x1x1xf32>
    %575 = vector.broadcast %574 : vector<8x1x1xf32> to vector<8x1x8xf32>
    %576 = arith.subf %572, %575 : vector<8x1x8xf32>
    %577 = math.exp %576 : vector<8x1x8xf32>
    %cst_123 = arith.constant dense<0.000000e+00> : vector<8x1xf32>
    %578 = vector.multi_reduction <add>, %577, %cst_123 [2] : vector<8x1x8xf32> to vector<8x1xf32>
    %579 = vector.shape_cast %578 : vector<8x1xf32> to vector<8x1x1xf32>
    %580 = vector.broadcast %579 : vector<8x1x1xf32> to vector<8x1x8xf32>
    %581 = arith.divf %577, %580 : vector<8x1x8xf32>
    "tpu.trace_start"() <{level = 10 : i32, message = "bqk,bkh->bqh"}> : () -> ()
    %cst_124 = arith.constant dense<0.000000e+00> : vector<8x1x32xf32>
    %582 = tpu.matmul %581, %265, %cst_124 {dimension_numbers = #tpu.dot_dimension_numbers<[2], [1], [1], [2], [0, 0, 0, 1, 1, 2], [0], [0]>} : vector<8x1x8xf32>, vector<8x8x32xf32>, vector<8x1x32xf32> -> vector<8x1x32xf32>
    "tpu.trace_stop"() : () -> ()
    %583 = vector.shape_cast %582 : vector<8x1x32xf32> to vector<8x32xf32>
    %cst_125 = arith.constant dense<0.000000e+00> : vector<8x16xf32>
    %584 = tpu.matmul %583, %271, %cst_125 {dimension_numbers = #tpu.dot_dimension_numbers<[1], [0], [0], [1], [0, 0, 1, 1], [], []>} : vector<8x32xf32>, vector<32x16xf32>, vector<8x16xf32> -> vector<8x16xf32>
    %585 = vector.broadcast %272 : vector<1x16xf32> to vector<8x16xf32>
    %586 = arith.addf %584, %585 : vector<8x16xf32>
    %587 = vector.extract_strided_slice %273 {offsets = [3, 0, 0], sizes = [1, 8, 16], strides = [1, 1, 1]} : vector<6x8x16xf32> to vector<1x8x16xf32>
    %588 = vector.shape_cast %587 : vector<1x8x16xf32> to vector<8x16xf32>
    %589 = arith.addf %586, %588 : vector<8x16xf32>
    %cst_126 = arith.constant 0.699999988 : f32
    %590 = vector.broadcast %cst_126 : f32 to vector<8x16xf32>
    %591 = arith.divf %589, %590 : vector<8x16xf32>
    %cst_127 = arith.constant dense<0xFF800000> : vector<8xf32>
    %592 = vector.multi_reduction <maximumf>, %591, %cst_127 [1] : vector<8x16xf32> to vector<8xf32>
    %593 = vector.shape_cast %592 : vector<8xf32> to vector<8x1xf32>
    %594 = vector.broadcast %593 : vector<8x1xf32> to vector<8x16xf32>
    %595 = arith.subf %591, %594 : vector<8x16xf32>
    %596 = math.exp %595 : vector<8x16xf32>
    %cst_128 = arith.constant dense<0.000000e+00> : vector<8xf32>
    %597 = vector.multi_reduction <add>, %596, %cst_128 [1] : vector<8x16xf32> to vector<8xf32>
    %598 = vector.shape_cast %597 : vector<8xf32> to vector<8x1xf32>
    %599 = vector.broadcast %598 : vector<8x1xf32> to vector<8x16xf32>
    %600 = arith.divf %596, %599 : vector<8x16xf32>
    %cst_129 = arith.constant dense<0xFF800000> : vector<8xf32>
    %601 = vector.multi_reduction <maximumf>, %600, %cst_129 [1] : vector<8x16xf32> to vector<8xf32>
    %602 = vector.shape_cast %601 : vector<8xf32> to vector<8x1xf32>
    %603 = vector.broadcast %602 : vector<8x1xf32> to vector<8x16xf32>
    %604 = arith.cmpf oeq, %600, %603 : vector<8x16xf32>
    %c16_i32_130 = arith.constant 16 : i32
    %605 = vector.broadcast %c16_i32_130 : i32 to vector<8x16xi32>
    %606 = arith.select %604, %274, %605 : vector<8x16xi1>, vector<8x16xi32>
    %cst_131 = arith.constant dense<2147483647> : vector<8xi32>
    %607 = vector.multi_reduction <minsi>, %606, %cst_131 [1] : vector<8x16xi32> to vector<8xi32>
    %608 = vector.shape_cast %607 : vector<8xi32> to vector<8x1xi32>
    %609 = vector.broadcast %608 : vector<8x1xi32> to vector<8x16xi32>
    %610 = arith.cmpi eq, %274, %609 : vector<8x16xi32>
    %611 = arith.extui %610 : vector<8x16xi1> to vector<8x16xi32>
    %612 = arith.sitofp %611 : vector<8x16xi32> to vector<8x16xf32>
    %613 = arith.subf %612, %600 : vector<8x16xf32>
    %614 = arith.addf %613, %600 : vector<8x16xf32>
    %cst_132 = arith.constant dense<0xFF800000> : vector<8xf32>
    %615 = vector.multi_reduction <maximumf>, %586, %cst_132 [1] : vector<8x16xf32> to vector<8xf32>
    %616 = vector.shape_cast %615 : vector<8xf32> to vector<8x1xf32>
    %617 = vector.broadcast %616 : vector<8x1xf32> to vector<8x16xf32>
    %618 = arith.subf %586, %617 : vector<8x16xf32>
    %619 = math.exp %618 : vector<8x16xf32>
    %cst_133 = arith.constant dense<0.000000e+00> : vector<8xf32>
    %620 = vector.multi_reduction <add>, %619, %cst_133 [1] : vector<8x16xf32> to vector<8xf32>
    %621 = vector.shape_cast %620 : vector<8xf32> to vector<8x1xf32>
    %622 = math.log %621 : vector<8x1xf32>
    %623 = arith.addf %616, %622 : vector<8x1xf32>
    %624 = arith.mulf %612, %586 : vector<8x16xf32>
    %cst_134 = arith.constant dense<0.000000e+00> : vector<8xf32>
    %625 = vector.multi_reduction <add>, %624, %cst_134 [1] : vector<8x16xf32> to vector<8xf32>
    %626 = vector.shape_cast %625 : vector<8xf32> to vector<8x1xf32>
    %627 = arith.subf %623, %626 : vector<8x1xf32>
    %cst_135 = arith.constant dense<0.000000e+00> : vector<8x128xf32>
    %628 = tpu.matmul %612, %268, %cst_135 {dimension_numbers = #tpu.dot_dimension_numbers<[1], [0], [0], [1], [0, 0, 1, 1], [], []>} : vector<8x16xf32>, vector<16x128xf32>, vector<8x128xf32> -> vector<8x128xf32>
    %cst_136 = arith.constant dense<0.000000e+00> : vector<8x128xf32>
    %629 = tpu.matmul %570, %269, %cst_136 {dimension_numbers = #tpu.dot_dimension_numbers<[1], [0], [0], [1], [0, 0, 1, 1], [], []>} : vector<8x32xf32>, vector<32x128xf32>, vector<8x128xf32> -> vector<8x128xf32>
    %630 = arith.addf %628, %629 : vector<8x128xf32>
    %631 = vector.broadcast %270 : vector<1x128xf32> to vector<8x128xf32>
    %632 = arith.addf %630, %631 : vector<8x128xf32>
    %633 = vector.extract_strided_slice %632 {offsets = [0, 0], sizes = [8, 32], strides = [1, 1]} : vector<8x128xf32> to vector<8x32xf32>
    %634 = arith.negf %633 : vector<8x32xf32>
    %635 = math.exp %634 : vector<8x32xf32>
    %cst_137 = arith.constant 1.000000e+00 : f32
    %636 = vector.broadcast %cst_137 : f32 to vector<8x32xf32>
    %637 = arith.addf %636, %635 : vector<8x32xf32>
    %638 = arith.divf %636, %637 : vector<8x32xf32>
    %639 = vector.extract_strided_slice %632 {offsets = [0, 32], sizes = [8, 32], strides = [1, 1]} : vector<8x128xf32> to vector<8x32xf32>
    %640 = arith.negf %639 : vector<8x32xf32>
    %641 = math.exp %640 : vector<8x32xf32>
    %cst_138 = arith.constant 1.000000e+00 : f32
    %642 = vector.broadcast %cst_138 : f32 to vector<8x32xf32>
    %643 = arith.addf %642, %641 : vector<8x32xf32>
    %644 = arith.divf %642, %643 : vector<8x32xf32>
    %645 = vector.extract_strided_slice %632 {offsets = [0, 64], sizes = [8, 32], strides = [1, 1]} : vector<8x128xf32> to vector<8x32xf32>
    %646 = math.tanh %645 : vector<8x32xf32>
    %647 = vector.extract_strided_slice %632 {offsets = [0, 96], sizes = [8, 32], strides = [1, 1]} : vector<8x128xf32> to vector<8x32xf32>
    %648 = arith.negf %647 : vector<8x32xf32>
    %649 = math.exp %648 : vector<8x32xf32>
    %cst_139 = arith.constant 1.000000e+00 : f32
    %650 = vector.broadcast %cst_139 : f32 to vector<8x32xf32>
    %651 = arith.addf %650, %649 : vector<8x32xf32>
    %652 = arith.divf %650, %651 : vector<8x32xf32>
    %653 = arith.mulf %644, %568 : vector<8x32xf32>
    %654 = arith.mulf %638, %646 : vector<8x32xf32>
    %655 = arith.addf %653, %654 : vector<8x32xf32>
    %656 = math.tanh %655 : vector<8x32xf32>
    %657 = arith.mulf %652, %656 : vector<8x32xf32>
    %658 = vector.shape_cast %657 : vector<8x32xf32> to vector<8x1x32xf32>
    "tpu.trace_start"() <{level = 10 : i32, message = "bqh,bkh->bqk"}> : () -> ()
    %cst_140 = arith.constant dense<0.000000e+00> : vector<8x1x8xf32>
    %659 = tpu.matmul %658, %265, %cst_140 {dimension_numbers = #tpu.dot_dimension_numbers<[2], [2], [1], [1], [0, 0, 0, 1, 1, 1], [0], [0]>} : vector<8x1x32xf32>, vector<8x8x32xf32>, vector<8x1x8xf32> -> vector<8x1x8xf32>
    "tpu.trace_stop"() : () -> ()
    %cst_141 = arith.constant dense<0xFF800000> : vector<8x1xf32>
    %660 = vector.multi_reduction <maximumf>, %659, %cst_141 [2] : vector<8x1x8xf32> to vector<8x1xf32>
    %661 = vector.shape_cast %660 : vector<8x1xf32> to vector<8x1x1xf32>
    %662 = vector.broadcast %661 : vector<8x1x1xf32> to vector<8x1x8xf32>
    %663 = arith.subf %659, %662 : vector<8x1x8xf32>
    %664 = math.exp %663 : vector<8x1x8xf32>
    %cst_142 = arith.constant dense<0.000000e+00> : vector<8x1xf32>
    %665 = vector.multi_reduction <add>, %664, %cst_142 [2] : vector<8x1x8xf32> to vector<8x1xf32>
    %666 = vector.shape_cast %665 : vector<8x1xf32> to vector<8x1x1xf32>
    %667 = vector.broadcast %666 : vector<8x1x1xf32> to vector<8x1x8xf32>
    %668 = arith.divf %664, %667 : vector<8x1x8xf32>
    "tpu.trace_start"() <{level = 10 : i32, message = "bqk,bkh->bqh"}> : () -> ()
    %cst_143 = arith.constant dense<0.000000e+00> : vector<8x1x32xf32>
    %669 = tpu.matmul %668, %265, %cst_143 {dimension_numbers = #tpu.dot_dimension_numbers<[2], [1], [1], [2], [0, 0, 0, 1, 1, 2], [0], [0]>} : vector<8x1x8xf32>, vector<8x8x32xf32>, vector<8x1x32xf32> -> vector<8x1x32xf32>
    "tpu.trace_stop"() : () -> ()
    %670 = vector.shape_cast %669 : vector<8x1x32xf32> to vector<8x32xf32>
    %cst_144 = arith.constant dense<0.000000e+00> : vector<8x16xf32>
    %671 = tpu.matmul %670, %271, %cst_144 {dimension_numbers = #tpu.dot_dimension_numbers<[1], [0], [0], [1], [0, 0, 1, 1], [], []>} : vector<8x32xf32>, vector<32x16xf32>, vector<8x16xf32> -> vector<8x16xf32>
    %672 = vector.broadcast %272 : vector<1x16xf32> to vector<8x16xf32>
    %673 = arith.addf %671, %672 : vector<8x16xf32>
    %674 = vector.extract_strided_slice %273 {offsets = [4, 0, 0], sizes = [1, 8, 16], strides = [1, 1, 1]} : vector<6x8x16xf32> to vector<1x8x16xf32>
    %675 = vector.shape_cast %674 : vector<1x8x16xf32> to vector<8x16xf32>
    %676 = arith.addf %673, %675 : vector<8x16xf32>
    %cst_145 = arith.constant 0.699999988 : f32
    %677 = vector.broadcast %cst_145 : f32 to vector<8x16xf32>
    %678 = arith.divf %676, %677 : vector<8x16xf32>
    %cst_146 = arith.constant dense<0xFF800000> : vector<8xf32>
    %679 = vector.multi_reduction <maximumf>, %678, %cst_146 [1] : vector<8x16xf32> to vector<8xf32>
    %680 = vector.shape_cast %679 : vector<8xf32> to vector<8x1xf32>
    %681 = vector.broadcast %680 : vector<8x1xf32> to vector<8x16xf32>
    %682 = arith.subf %678, %681 : vector<8x16xf32>
    %683 = math.exp %682 : vector<8x16xf32>
    %cst_147 = arith.constant dense<0.000000e+00> : vector<8xf32>
    %684 = vector.multi_reduction <add>, %683, %cst_147 [1] : vector<8x16xf32> to vector<8xf32>
    %685 = vector.shape_cast %684 : vector<8xf32> to vector<8x1xf32>
    %686 = vector.broadcast %685 : vector<8x1xf32> to vector<8x16xf32>
    %687 = arith.divf %683, %686 : vector<8x16xf32>
    %cst_148 = arith.constant dense<0xFF800000> : vector<8xf32>
    %688 = vector.multi_reduction <maximumf>, %687, %cst_148 [1] : vector<8x16xf32> to vector<8xf32>
    %689 = vector.shape_cast %688 : vector<8xf32> to vector<8x1xf32>
    %690 = vector.broadcast %689 : vector<8x1xf32> to vector<8x16xf32>
    %691 = arith.cmpf oeq, %687, %690 : vector<8x16xf32>
    %c16_i32_149 = arith.constant 16 : i32
    %692 = vector.broadcast %c16_i32_149 : i32 to vector<8x16xi32>
    %693 = arith.select %691, %274, %692 : vector<8x16xi1>, vector<8x16xi32>
    %cst_150 = arith.constant dense<2147483647> : vector<8xi32>
    %694 = vector.multi_reduction <minsi>, %693, %cst_150 [1] : vector<8x16xi32> to vector<8xi32>
    %695 = vector.shape_cast %694 : vector<8xi32> to vector<8x1xi32>
    %696 = vector.broadcast %695 : vector<8x1xi32> to vector<8x16xi32>
    %697 = arith.cmpi eq, %274, %696 : vector<8x16xi32>
    %698 = arith.extui %697 : vector<8x16xi1> to vector<8x16xi32>
    %699 = arith.sitofp %698 : vector<8x16xi32> to vector<8x16xf32>
    %700 = arith.subf %699, %687 : vector<8x16xf32>
    %701 = arith.addf %700, %687 : vector<8x16xf32>
    %cst_151 = arith.constant dense<0xFF800000> : vector<8xf32>
    %702 = vector.multi_reduction <maximumf>, %673, %cst_151 [1] : vector<8x16xf32> to vector<8xf32>
    %703 = vector.shape_cast %702 : vector<8xf32> to vector<8x1xf32>
    %704 = vector.broadcast %703 : vector<8x1xf32> to vector<8x16xf32>
    %705 = arith.subf %673, %704 : vector<8x16xf32>
    %706 = math.exp %705 : vector<8x16xf32>
    %cst_152 = arith.constant dense<0.000000e+00> : vector<8xf32>
    %707 = vector.multi_reduction <add>, %706, %cst_152 [1] : vector<8x16xf32> to vector<8xf32>
    %708 = vector.shape_cast %707 : vector<8xf32> to vector<8x1xf32>
    %709 = math.log %708 : vector<8x1xf32>
    %710 = arith.addf %703, %709 : vector<8x1xf32>
    %711 = arith.mulf %699, %673 : vector<8x16xf32>
    %cst_153 = arith.constant dense<0.000000e+00> : vector<8xf32>
    %712 = vector.multi_reduction <add>, %711, %cst_153 [1] : vector<8x16xf32> to vector<8xf32>
    %713 = vector.shape_cast %712 : vector<8xf32> to vector<8x1xf32>
    %714 = arith.subf %710, %713 : vector<8x1xf32>
    %cst_154 = arith.constant dense<0.000000e+00> : vector<8x128xf32>
    %715 = tpu.matmul %699, %268, %cst_154 {dimension_numbers = #tpu.dot_dimension_numbers<[1], [0], [0], [1], [0, 0, 1, 1], [], []>} : vector<8x16xf32>, vector<16x128xf32>, vector<8x128xf32> -> vector<8x128xf32>
    %cst_155 = arith.constant dense<0.000000e+00> : vector<8x128xf32>
    %716 = tpu.matmul %657, %269, %cst_155 {dimension_numbers = #tpu.dot_dimension_numbers<[1], [0], [0], [1], [0, 0, 1, 1], [], []>} : vector<8x32xf32>, vector<32x128xf32>, vector<8x128xf32> -> vector<8x128xf32>
    %717 = arith.addf %715, %716 : vector<8x128xf32>
    %718 = vector.broadcast %270 : vector<1x128xf32> to vector<8x128xf32>
    %719 = arith.addf %717, %718 : vector<8x128xf32>
    %720 = vector.extract_strided_slice %719 {offsets = [0, 0], sizes = [8, 32], strides = [1, 1]} : vector<8x128xf32> to vector<8x32xf32>
    %721 = arith.negf %720 : vector<8x32xf32>
    %722 = math.exp %721 : vector<8x32xf32>
    %cst_156 = arith.constant 1.000000e+00 : f32
    %723 = vector.broadcast %cst_156 : f32 to vector<8x32xf32>
    %724 = arith.addf %723, %722 : vector<8x32xf32>
    %725 = arith.divf %723, %724 : vector<8x32xf32>
    %726 = vector.extract_strided_slice %719 {offsets = [0, 32], sizes = [8, 32], strides = [1, 1]} : vector<8x128xf32> to vector<8x32xf32>
    %727 = arith.negf %726 : vector<8x32xf32>
    %728 = math.exp %727 : vector<8x32xf32>
    %cst_157 = arith.constant 1.000000e+00 : f32
    %729 = vector.broadcast %cst_157 : f32 to vector<8x32xf32>
    %730 = arith.addf %729, %728 : vector<8x32xf32>
    %731 = arith.divf %729, %730 : vector<8x32xf32>
    %732 = vector.extract_strided_slice %719 {offsets = [0, 64], sizes = [8, 32], strides = [1, 1]} : vector<8x128xf32> to vector<8x32xf32>
    %733 = math.tanh %732 : vector<8x32xf32>
    %734 = vector.extract_strided_slice %719 {offsets = [0, 96], sizes = [8, 32], strides = [1, 1]} : vector<8x128xf32> to vector<8x32xf32>
    %735 = arith.negf %734 : vector<8x32xf32>
    %736 = math.exp %735 : vector<8x32xf32>
    %cst_158 = arith.constant 1.000000e+00 : f32
    %737 = vector.broadcast %cst_158 : f32 to vector<8x32xf32>
    %738 = arith.addf %737, %736 : vector<8x32xf32>
    %739 = arith.divf %737, %738 : vector<8x32xf32>
    %740 = arith.mulf %731, %655 : vector<8x32xf32>
    %741 = arith.mulf %725, %733 : vector<8x32xf32>
    %742 = arith.addf %740, %741 : vector<8x32xf32>
    %743 = math.tanh %742 : vector<8x32xf32>
    %744 = arith.mulf %739, %743 : vector<8x32xf32>
    %745 = vector.shape_cast %744 : vector<8x32xf32> to vector<8x1x32xf32>
    "tpu.trace_start"() <{level = 10 : i32, message = "bqh,bkh->bqk"}> : () -> ()
    %cst_159 = arith.constant dense<0.000000e+00> : vector<8x1x8xf32>
    %746 = tpu.matmul %745, %265, %cst_159 {dimension_numbers = #tpu.dot_dimension_numbers<[2], [2], [1], [1], [0, 0, 0, 1, 1, 1], [0], [0]>} : vector<8x1x32xf32>, vector<8x8x32xf32>, vector<8x1x8xf32> -> vector<8x1x8xf32>
    "tpu.trace_stop"() : () -> ()
    %cst_160 = arith.constant dense<0xFF800000> : vector<8x1xf32>
    %747 = vector.multi_reduction <maximumf>, %746, %cst_160 [2] : vector<8x1x8xf32> to vector<8x1xf32>
    %748 = vector.shape_cast %747 : vector<8x1xf32> to vector<8x1x1xf32>
    %749 = vector.broadcast %748 : vector<8x1x1xf32> to vector<8x1x8xf32>
    %750 = arith.subf %746, %749 : vector<8x1x8xf32>
    %751 = math.exp %750 : vector<8x1x8xf32>
    %cst_161 = arith.constant dense<0.000000e+00> : vector<8x1xf32>
    %752 = vector.multi_reduction <add>, %751, %cst_161 [2] : vector<8x1x8xf32> to vector<8x1xf32>
    %753 = vector.shape_cast %752 : vector<8x1xf32> to vector<8x1x1xf32>
    %754 = vector.broadcast %753 : vector<8x1x1xf32> to vector<8x1x8xf32>
    %755 = arith.divf %751, %754 : vector<8x1x8xf32>
    "tpu.trace_start"() <{level = 10 : i32, message = "bqk,bkh->bqh"}> : () -> ()
    %cst_162 = arith.constant dense<0.000000e+00> : vector<8x1x32xf32>
    %756 = tpu.matmul %755, %265, %cst_162 {dimension_numbers = #tpu.dot_dimension_numbers<[2], [1], [1], [2], [0, 0, 0, 1, 1, 2], [0], [0]>} : vector<8x1x8xf32>, vector<8x8x32xf32>, vector<8x1x32xf32> -> vector<8x1x32xf32>
    "tpu.trace_stop"() : () -> ()
    %757 = vector.shape_cast %756 : vector<8x1x32xf32> to vector<8x32xf32>
    %cst_163 = arith.constant dense<0.000000e+00> : vector<8x16xf32>
    %758 = tpu.matmul %757, %271, %cst_163 {dimension_numbers = #tpu.dot_dimension_numbers<[1], [0], [0], [1], [0, 0, 1, 1], [], []>} : vector<8x32xf32>, vector<32x16xf32>, vector<8x16xf32> -> vector<8x16xf32>
    %759 = vector.broadcast %272 : vector<1x16xf32> to vector<8x16xf32>
    %760 = arith.addf %758, %759 : vector<8x16xf32>
    %761 = vector.extract_strided_slice %273 {offsets = [5, 0, 0], sizes = [1, 8, 16], strides = [1, 1, 1]} : vector<6x8x16xf32> to vector<1x8x16xf32>
    %762 = vector.shape_cast %761 : vector<1x8x16xf32> to vector<8x16xf32>
    %763 = arith.addf %760, %762 : vector<8x16xf32>
    %cst_164 = arith.constant 0.699999988 : f32
    %764 = vector.broadcast %cst_164 : f32 to vector<8x16xf32>
    %765 = arith.divf %763, %764 : vector<8x16xf32>
    %cst_165 = arith.constant dense<0xFF800000> : vector<8xf32>
    %766 = vector.multi_reduction <maximumf>, %765, %cst_165 [1] : vector<8x16xf32> to vector<8xf32>
    %767 = vector.shape_cast %766 : vector<8xf32> to vector<8x1xf32>
    %768 = vector.broadcast %767 : vector<8x1xf32> to vector<8x16xf32>
    %769 = arith.subf %765, %768 : vector<8x16xf32>
    %770 = math.exp %769 : vector<8x16xf32>
    %cst_166 = arith.constant dense<0.000000e+00> : vector<8xf32>
    %771 = vector.multi_reduction <add>, %770, %cst_166 [1] : vector<8x16xf32> to vector<8xf32>
    %772 = vector.shape_cast %771 : vector<8xf32> to vector<8x1xf32>
    %773 = vector.broadcast %772 : vector<8x1xf32> to vector<8x16xf32>
    %774 = arith.divf %770, %773 : vector<8x16xf32>
    %cst_167 = arith.constant dense<0xFF800000> : vector<8xf32>
    %775 = vector.multi_reduction <maximumf>, %774, %cst_167 [1] : vector<8x16xf32> to vector<8xf32>
    %776 = vector.shape_cast %775 : vector<8xf32> to vector<8x1xf32>
    %777 = vector.broadcast %776 : vector<8x1xf32> to vector<8x16xf32>
    %778 = arith.cmpf oeq, %774, %777 : vector<8x16xf32>
    %c16_i32_168 = arith.constant 16 : i32
    %779 = vector.broadcast %c16_i32_168 : i32 to vector<8x16xi32>
    %780 = arith.select %778, %274, %779 : vector<8x16xi1>, vector<8x16xi32>
    %cst_169 = arith.constant dense<2147483647> : vector<8xi32>
    %781 = vector.multi_reduction <minsi>, %780, %cst_169 [1] : vector<8x16xi32> to vector<8xi32>
    %782 = vector.shape_cast %781 : vector<8xi32> to vector<8x1xi32>
    %783 = vector.broadcast %782 : vector<8x1xi32> to vector<8x16xi32>
    %784 = arith.cmpi eq, %274, %783 : vector<8x16xi32>
    %785 = arith.extui %784 : vector<8x16xi1> to vector<8x16xi32>
    %786 = arith.sitofp %785 : vector<8x16xi32> to vector<8x16xf32>
    %787 = arith.subf %786, %774 : vector<8x16xf32>
    %788 = arith.addf %787, %774 : vector<8x16xf32>
    %cst_170 = arith.constant dense<0xFF800000> : vector<8xf32>
    %789 = vector.multi_reduction <maximumf>, %760, %cst_170 [1] : vector<8x16xf32> to vector<8xf32>
    %790 = vector.shape_cast %789 : vector<8xf32> to vector<8x1xf32>
    %791 = vector.broadcast %790 : vector<8x1xf32> to vector<8x16xf32>
    %792 = arith.subf %760, %791 : vector<8x16xf32>
    %793 = math.exp %792 : vector<8x16xf32>
    %cst_171 = arith.constant dense<0.000000e+00> : vector<8xf32>
    %794 = vector.multi_reduction <add>, %793, %cst_171 [1] : vector<8x16xf32> to vector<8xf32>
    %795 = vector.shape_cast %794 : vector<8xf32> to vector<8x1xf32>
    %796 = math.log %795 : vector<8x1xf32>
    %797 = arith.addf %790, %796 : vector<8x1xf32>
    %798 = arith.mulf %786, %760 : vector<8x16xf32>
    %cst_172 = arith.constant dense<0.000000e+00> : vector<8xf32>
    %799 = vector.multi_reduction <add>, %798, %cst_172 [1] : vector<8x16xf32> to vector<8xf32>
    %800 = vector.shape_cast %799 : vector<8xf32> to vector<8x1xf32>
    %801 = arith.subf %797, %800 : vector<8x1xf32>
    %802 = vector.shape_cast %325 : vector<8x16xf32> to vector<1x8x16xf32>
    %803 = vector.shape_cast %412 : vector<8x16xf32> to vector<1x8x16xf32>
    %804 = vector.shape_cast %499 : vector<8x16xf32> to vector<1x8x16xf32>
    %805 = vector.shape_cast %586 : vector<8x16xf32> to vector<1x8x16xf32>
    %806 = vector.shape_cast %673 : vector<8x16xf32> to vector<1x8x16xf32>
    %807 = vector.shape_cast %760 : vector<8x16xf32> to vector<1x8x16xf32>
    %808 = tpu.concatenate %802, %803, %804, %805, %806, %807 in 0 : vector<1x8x16xf32>, vector<1x8x16xf32>, vector<1x8x16xf32>, vector<1x8x16xf32>, vector<1x8x16xf32>, vector<1x8x16xf32> -> vector<6x8x16xf32>
    %c0_173 = arith.constant 0 : index
    %c0_174 = arith.constant 0 : index
    %c0_175 = arith.constant 0 : index
    %809 = vector.load %arg11[%c0_173, %c0_174, %c0_175] : memref<6x8x16xf32, #tpu.memory_space<vmem>>, vector<6x8x16xf32>
    tpu.vector_store %arg11[%c0_173, %c0_174, %c0_175], %808 {strides = array<i32>} : memref<6x8x16xf32, #tpu.memory_space<vmem>>, vector<6x8x16xf32>,
    %810 = vector.shape_cast %353 : vector<8x16xf32> to vector<1x8x16xf32>
    %811 = vector.shape_cast %440 : vector<8x16xf32> to vector<1x8x16xf32>
    %812 = vector.shape_cast %527 : vector<8x16xf32> to vector<1x8x16xf32>
    %813 = vector.shape_cast %614 : vector<8x16xf32> to vector<1x8x16xf32>
    %814 = vector.shape_cast %701 : vector<8x16xf32> to vector<1x8x16xf32>
    %815 = vector.shape_cast %788 : vector<8x16xf32> to vector<1x8x16xf32>
    %816 = tpu.concatenate %810, %811, %812, %813, %814, %815 in 0 : vector<1x8x16xf32>, vector<1x8x16xf32>, vector<1x8x16xf32>, vector<1x8x16xf32>, vector<1x8x16xf32>, vector<1x8x16xf32> -> vector<6x8x16xf32>
    %c0_176 = arith.constant 0 : index
    %c0_177 = arith.constant 0 : index
    %c0_178 = arith.constant 0 : index
    %817 = vector.load %arg12[%c0_176, %c0_177, %c0_178] : memref<6x8x16xf32, #tpu.memory_space<vmem>>, vector<6x8x16xf32>
    tpu.vector_store %arg12[%c0_176, %c0_177, %c0_178], %816 {strides = array<i32>} : memref<6x8x16xf32, #tpu.memory_space<vmem>>, vector<6x8x16xf32>,
    %818 = vector.shape_cast %366 : vector<8x1xf32> to vector<1x8x1xf32>
    %819 = vector.shape_cast %453 : vector<8x1xf32> to vector<1x8x1xf32>
    %820 = vector.shape_cast %540 : vector<8x1xf32> to vector<1x8x1xf32>
    %821 = vector.shape_cast %627 : vector<8x1xf32> to vector<1x8x1xf32>
    %822 = vector.shape_cast %714 : vector<8x1xf32> to vector<1x8x1xf32>
    %823 = vector.shape_cast %801 : vector<8x1xf32> to vector<1x8x1xf32>
    %824 = tpu.concatenate %818, %819, %820, %821, %822, %823 in 0 : vector<1x8x1xf32>, vector<1x8x1xf32>, vector<1x8x1xf32>, vector<1x8x1xf32>, vector<1x8x1xf32>, vector<1x8x1xf32> -> vector<6x8x1xf32>
    %c0_179 = arith.constant 0 : index
    %c0_180 = arith.constant 0 : index
    %c0_181 = arith.constant 0 : index
    %825 = vector.load %arg13[%c0_179, %c0_180, %c0_181] : memref<6x8x1xf32, #tpu.memory_space<vmem>>, vector<6x8x1xf32>
    tpu.vector_store %arg13[%c0_179, %c0_180, %c0_181], %824 {strides = array<i32>} : memref<6x8x1xf32, #tpu.memory_space<vmem>>, vector<6x8x1xf32>,
    return
  }
}

</mosaic_0001>

<llo_original>
// kernel: seq2seq_forward.1
$region0: #{seq2seq_forward.1}
  #allocation0 [shape = 'u32[]', space=smem, size = 0x4, offset = 0x4, fixed_abs, tag = 'smem constant byte address 0x4 - core index']
  #allocation1 [shape = 'u32[72,128]{1,0:T(1,128)}', space=vmem, size = 0x9000, scoped, tag = 'internal scratch']
  %s0 = inlined_call_operand.vmem [shape: f32[8,8,32], index: 0, kind: input, shape index: {}]
  %s1 = inlined_call_operand.vmem [shape: f32[32,128], index: 1, kind: input, shape index: {}]
  %s2 = inlined_call_operand.vmem [shape: f32[32,128], index: 2, kind: input, shape index: {}]
  %s3 = inlined_call_operand.vmem [shape: f32[1,128], index: 3, kind: input, shape index: {}]
  %s4 = inlined_call_operand.vmem [shape: f32[16,32], index: 4, kind: input, shape index: {}]
  %s5 = inlined_call_operand.vmem [shape: f32[32,128], index: 5, kind: input, shape index: {}]
  %s6 = inlined_call_operand.vmem [shape: f32[32,128], index: 6, kind: input, shape index: {}]
  %s7 = inlined_call_operand.vmem [shape: f32[1,128], index: 7, kind: input, shape index: {}]
  %s8 = inlined_call_operand.vmem [shape: f32[32,16], index: 8, kind: input, shape index: {}]
  %s9 = inlined_call_operand.vmem [shape: f32[1,16], index: 9, kind: input, shape index: {}]
  %s10 = inlined_call_operand.vmem [shape: f32[6,8,16], index: 10, kind: input, shape index: {}]
  %s11 = inlined_call_operand.hbm [shape: f32[6,8,16], index: 11, kind: output, shape index: {0}]
  %s12 = inlined_call_operand.vmem [shape: f32[6,8,16], index: 12, kind: output, shape index: {1}]
  %s13 = inlined_call_operand.vmem [shape: f32[6,8,1], index: 13, kind: output, shape index: {2}]
  %14 = xla_tuple %s11, %s12, %s13
  %s15 = sld [smem:[#allocation0]]
  $region70: #{seq2seq_forward.1} parent=0
    _
  %s17 = ssub.s32 1, %s15
  %s18 = scalar_select 0, %s17, %s15
  $region1: #{seq2seq_forward.1} parent=0
    #allocation2 [shape = 'u8[24576]{0}', space=vmem, size = 0x6000, scoped, tag = 'output window, operand 0, single buffered']
    #allocation3 [shape = 's32[1]{0}', space=sflag, size = 0x4, scoped, tag = 'scoped memory for seq2seq_forward.1']
    %19 = vsyncpa [#allocation3], 0
    // Predicated region
    $region2: #{seq2seq_forward.1} parent=1 // pred_check
      _
    $region3: #{seq2seq_forward.1} parent=1 // pred_check_branch
      %21 = sbr.rel (0) target = $region5
    $region4: #{seq2seq_forward.1} parent=1 // pred_region
      _
    $region5: #{seq2seq_forward.1} parent=1 // pred_fallthru
      _
    // Predicated region
    $region6: #{seq2seq_forward.1} parent=1 // pred_check
      _
    $region7: #{seq2seq_forward.1} parent=1 // pred_check_branch
      %23 = sbr.rel (0) target = $region9
    $region8: #{seq2seq_forward.1} parent=1 // pred_region
      _
    $region9: #{seq2seq_forward.1} parent=1 // pred_fallthru
      _
    // Predicated region
    $region10: #{seq2seq_forward.1} parent=1 // pred_check
      _
    $region11: #{seq2seq_forward.1} parent=1 // pred_check_branch
      %25 = sbr.rel (0) target = $region13
    $region12: #{seq2seq_forward.1} parent=1 // pred_region
      _
    $region13: #{seq2seq_forward.1} parent=1 // pred_fallthru
      _
    // Predicated region
    $region14: #{seq2seq_forward.1} parent=1 // pred_check
      _
    $region15: #{seq2seq_forward.1} parent=1 // pred_check_branch
      %27 = sbr.rel (0) target = $region17
    $region16: #{seq2seq_forward.1} parent=1 // pred_region
      _
    $region17: #{seq2seq_forward.1} parent=1 // pred_fallthru
      _
    // Predicated region
    $region18: #{seq2seq_forward.1} parent=1 // pred_check
      _
    $region19: #{seq2seq_forward.1} parent=1 // pred_check_branch
      %29 = sbr.rel (0) target = $region21
    $region20: #{seq2seq_forward.1} parent=1 // pred_region
      _
    $region21: #{seq2seq_forward.1} parent=1 // pred_fallthru
      _
    // Predicated region
    $region22: #{seq2seq_forward.1} parent=1 // pred_check
      _
    $region23: #{seq2seq_forward.1} parent=1 // pred_check_branch
      %31 = sbr.rel (0) target = $region25
    $region24: #{seq2seq_forward.1} parent=1 // pred_region
      _
    $region25: #{seq2seq_forward.1} parent=1 // pred_fallthru
      _
    // Predicated region
    $region26: #{seq2seq_forward.1} parent=1 // pred_check
      _
    $region27: #{seq2seq_forward.1} parent=1 // pred_check_branch
      %33 = sbr.rel (0) target = $region29
    $region28: #{seq2seq_forward.1} parent=1 // pred_region
      _
    $region29: #{seq2seq_forward.1} parent=1 // pred_fallthru
      _
    // Predicated region
    $region30: #{seq2seq_forward.1} parent=1 // pred_check
      _
    $region31: #{seq2seq_forward.1} parent=1 // pred_check_branch
      %35 = sbr.rel (0) target = $region33
    $region32: #{seq2seq_forward.1} parent=1 // pred_region
      _
    $region33: #{seq2seq_forward.1} parent=1 // pred_fallthru
      _
    // Predicated region
    $region34: #{seq2seq_forward.1} parent=1 // pred_check
      _
    $region35: #{seq2seq_forward.1} parent=1 // pred_check_branch
      %37 = sbr.rel (0) target = $region37
    $region36: #{seq2seq_forward.1} parent=1 // pred_region
      _
    $region37: #{seq2seq_forward.1} parent=1 // pred_fallthru
      _
    // Predicated region
    $region38: #{seq2seq_forward.1} parent=1 // pred_check
      _
    $region39: #{seq2seq_forward.1} parent=1 // pred_check_branch
      %39 = sbr.rel (0) target = $region41
    $region40: #{seq2seq_forward.1} parent=1 // pred_region
      _
    $region41: #{seq2seq_forward.1} parent=1 // pred_fallthru
      _
    // Predicated region
    $region42: #{seq2seq_forward.1} parent=1 // pred_check
      _
    $region43: #{seq2seq_forward.1} parent=1 // pred_check_branch
      %41 = sbr.rel (0) target = $region45
    $region44: #{seq2seq_forward.1} parent=1 // pred_region
      _
    $region45: #{seq2seq_forward.1} parent=1 // pred_fallthru
      _
    %v42 = vld [vmem:[%s0] sm:$0xff]
    %v43 = vld [vmem:[%s0 + $0x8] sm:$0xff]
    %v44 = vld [vmem:[%s0 + $0x10] sm:$0xff]
    %v45 = vld [vmem:[%s0 + $0x18] sm:$0xff]
    %v46 = vld [vmem:[%s0 + $0x20] sm:$0xff]
    %v47 = vld [vmem:[%s0 + $0x28] sm:$0xff]
    %v48 = vld [vmem:[%s0 + $0x30] sm:$0xff]
    %v49 = vld [vmem:[%s0 + $0x38] sm:$0xff]
    %v50 = vld [vmem:[%s1] sm:$0xff]
    %v51 = vld [vmem:[%s1 + $0x8] sm:$0xff]
    %v52 = vld [vmem:[%s1 + $0x10] sm:$0xff]
    %v53 = vld [vmem:[%s1 + $0x18] sm:$0xff]
    %vm54 = vcmask 261120
    %v56 = vsel %vm54, %v42, 0
    %v59 = vsel %vm54, %v43, 0
    %v62 = vsel %vm54, %v44, 0
    %v65 = vsel %vm54, %v45, 0
    %v68 = vsel %vm54, %v46, 0
    %v71 = vsel %vm54, %v47, 0
    %v74 = vsel %vm54, %v48, 0
    %v77 = vsel %vm54, %v49, 0
    %79 = vmatpush.msra.mxu0 0.0
    %80 = vmatpush.msra.mxu0 0.0
    %81 = vmatpush.msra.mxu0 0.0
    %82 = vmatpush.msra.mxu0 0.0
    %83 = vmatpush.msra.mxu0 0.0
    %84 = vmatpush.msra.mxu0 0.0
    %85 = vmatpush.msra.mxu0 0.0
    %86 = vmatpush.msra.mxu0 0.0
    %87 = vmatpush.msra.mxu0 0.0
    %88 = vmatpush.msra.mxu0 0.0
    %89 = vmatpush.msra.mxu0 0.0
    %90 = vmatpush.msra.mxu0 0.0
    %91 = vmatpush.msra.mxu0 %v53
    %92 = vmatpush.msra.mxu0 %v52
    %93 = vmatpush.msra.mxu0 %v51
    %94 = vmatpush.msra.mxu0 %v50
    %95 = vmatmul.f32.gmra.mxu0 %v56
    %v96 = vpop.f32.mrf.mxu0
    %v97 = vadd.f32 0.0, %v96
    %98 = vmatmul.f32.gmra.mxu0 %v59
    %v99 = vpop.f32.mrf.mxu0
    %v100 = vadd.f32 0.0, %v99
    %101 = vmatmul.f32.gmra.mxu0 %v62
    %v102 = vpop.f32.mrf.mxu0
    %v103 = vadd.f32 0.0, %v102
    %104 = vmatmul.f32.gmra.mxu0 %v65
    %v105 = vpop.f32.mrf.mxu0
    %v106 = vadd.f32 0.0, %v105
    %107 = vmatmul.f32.gmra.mxu0 %v68
    %v108 = vpop.f32.mrf.mxu0
    %v109 = vadd.f32 0.0, %v108
    %110 = vmatmul.f32.gmra.mxu0 %v71
    %v111 = vpop.f32.mrf.mxu0
    %v112 = vadd.f32 0.0, %v111
    %113 = vmatmul.f32.gmra.mxu0 %v74
    %v114 = vpop.f32.mrf.mxu0
    %v115 = vadd.f32 0.0, %v114
    %116 = vmatmul.f32.gmra.mxu0 %v77
    %v117 = vpop.f32.mrf.mxu0
    %v118 = vadd.f32 0.0, %v117
    %119 = vdwg.mxu0
    %v120 = vld [vmem:[%s2] sm:$0xff]
    %v121 = vld [vmem:[%s2 + $0x8] sm:$0xff]
    %v122 = vld [vmem:[%s2 + $0x10] sm:$0xff]
    %v123 = vld [vmem:[%s2 + $0x18] sm:$0xff]
    %v124 = vld [vmem:[%s3] sm:$0x1]
    %v126 = vsel %vm54, 0.0, 0
    %128 = vmatpush.msra.mxu0 0.0
    %129 = vmatpush.msra.mxu0 0.0
    %130 = vmatpush.msra.mxu0 0.0
    %131 = vmatpush.msra.mxu0 0.0
    %132 = vmatpush.msra.mxu0 0.0
    %133 = vmatpush.msra.mxu0 0.0
    %134 = vmatpush.msra.mxu0 0.0
    %135 = vmatpush.msra.mxu0 0.0
    %136 = vmatpush.msra.mxu0 0.0
    %137 = vmatpush.msra.mxu0 0.0
    %138 = vmatpush.msra.mxu0 0.0
    %139 = vmatpush.msra.mxu0 0.0
    %140 = vmatpush.msra.mxu0 %v123
    %141 = vmatpush.msra.mxu0 %v122
    %142 = vmatpush.msra.mxu0 %v121
    %143 = vmatpush.msra.mxu0 %v120
    %144 = vmatmul.f32.gmra.mxu0 %v126
    %v145 = vpop.f32.mrf.mxu0
    %v146 = vadd.f32 0.0, %v145
    %147 = vdwg.mxu0
    %v148 = vadd.f32 %v97, %v146
    %v150 = vperm.slane %v124, 0
    %v152 = vadd.f32 %v148, %v150
    %v153 = vxor.u32 %v152, 2147483648
    %v154 = vmul.f32 %v153, 1.442695
    %v155 = vpow.pop %v154
    %v156 = vadd.f32 %v155, 1.0
    %v157 = vrcp.pop %v156
    %v158 = vmul.f32 %v156, %v157
    %v159 = vsub.f32 1.0, %v158
    %v160 = vmul.f32 %v157, %v159
    %v161 = vadd.f32 %v157, %v160
    %vm162 = vweird.f32 %v156
    %vm163 = vweird.f32 %v157
    %vm164 = vmor %vm162, %vm163
    %v165 = vsel %vm164, %v157, %v161
    %v166 = vand.u32 2147483647, %v156
    %vm167 = vcmp.eq.f32.partialorder %v166, 8.507059e+37
    %v168 = vand.u32 %v156, 2147483648
    %v169 = vor.u32 1.1754944e-38, %v168
    %v170 = vsel %vm167, %v169, %v165
    %v171 = vmul.f32 1.0, %v170
    %v172 = vtanh.pop %v152
    %v173 = vmul.f32 %v171, 0.0
    %175 = vrot.lane.b32.xlu0 %v172, 64
    %v176 = vpop.permute.xlu0 %175
    %v178 = vmul.f32 %v171, %v176
    %180 = vrot.lane.b32.xlu0 %v178, 32
    %v181 = vpop.permute.xlu0 %180
    %v183 = vadd.f32 %v173, %v181
    %v184 = vtanh.pop %v183
    %186 = vrot.lane.b32.xlu0 %v184, 64
    %v187 = vpop.permute.xlu0 %186
    %v189 = vmul.f32 %v171, %v187
    %191 = vrot.lane.b32.xlu0 %v189, 32
    %v192 = vpop.permute.xlu0 %191
    %v193 = vsel %vm54, %v192, 0
    %195 = vmatpush.msra.mxu0 0.0
    %196 = vmatpush.msra.mxu0 0.0
    %197 = vmatpush.msra.mxu0 0.0
    %198 = vmatpush.msra.mxu0 0.0
    %199 = vmatpush.msra.mxu0 0.0
    %200 = vmatpush.msra.mxu0 0.0
    %201 = vmatpush.msra.mxu0 0.0
    %202 = vmatpush.msra.mxu0 0.0
    %203 = vmatpush.msra.mxu0 0.0
    %204 = vmatpush.msra.mxu0 0.0
    %205 = vmatpush.msra.mxu0 0.0
    %206 = vmatpush.msra.mxu0 0.0
    %207 = vmatpush.msra.mxu0 %v123
    %208 = vmatpush.msra.mxu0 %v122
    %209 = vmatpush.msra.mxu0 %v121
    %210 = vmatpush.msra.mxu0 %v120
    %211 = vmatmul.f32.gmra.mxu0 %v193
    %v212 = vpop.f32.mrf.mxu0
    %v213 = vadd.f32 0.0, %v212
    %214 = vdwg.mxu0
    %v215 = vadd.f32 %v100, %v213
    %v216 = vadd.f32 %v215, %v150
    %v217 = vxor.u32 %v216, 2147483648
    %v218 = vmul.f32 %v217, 1.442695
    %v219 = vpow.pop %v218
    %v220 = vadd.f32 %v219, 1.0
    %v221 = vrcp.pop %v220
    %v222 = vmul.f32 %v220, %v221
    %v223 = vsub.f32 1.0, %v222
    %v224 = vmul.f32 %v221, %v223
    %v225 = vadd.f32 %v221, %v224
    %vm226 = vweird.f32 %v220
    %vm227 = vweird.f32 %v221
    %vm228 = vmor %vm226, %vm227
    %v229 = vsel %vm228, %v221, %v225
    %v230 = vand.u32 2147483647, %v220
    %vm231 = vcmp.eq.f32.partialorder %v230, 8.507059e+37
    %v232 = vand.u32 %v220, 2147483648
    %v233 = vor.u32 1.1754944e-38, %v232
    %v234 = vsel %vm231, %v233, %v229
    %v235 = vmul.f32 1.0, %v234
    %v236 = vtanh.pop %v216
    %v237 = vmul.f32 %v235, %v183
    %239 = vrot.lane.b32.xlu0 %v236, 64
    %v240 = vpop.permute.xlu0 %239
    %v242 = vmul.f32 %v235, %v240
    %244 = vrot.lane.b32.xlu0 %v242, 32
    %v245 = vpop.permute.xlu0 %244
    %v247 = vadd.f32 %v237, %v245
    %v248 = vtanh.pop %v247
    %250 = vrot.lane.b32.xlu0 %v248, 64
    %v251 = vpop.permute.xlu0 %250
    %v253 = vmul.f32 %v235, %v251
    %255 = vrot.lane.b32.xlu0 %v253, 32
    %v256 = vpop.permute.xlu0 %255
    %v257 = vsel %vm54, %v256, 0
    %259 = vmatpush.msra.mxu0 0.0
    %260 = vmatpush.msra.mxu0 0.0
    %261 = vmatpush.msra.mxu0 0.0
    %262 = vmatpush.msra.mxu0 0.0
    %263 = vmatpush.msra.mxu0 0.0
    %264 = vmatpush.msra.mxu0 0.0
    %265 = vmatpush.msra.mxu0 0.0
    %266 = vmatpush.msra.mxu0 0.0
    %267 = vmatpush.msra.mxu0 0.0
    %268 = vmatpush.msra.mxu0 0.0
    %269 = vmatpush.msra.mxu0 0.0
    %270 = vmatpush.msra.mxu0 0.0
    %271 = vmatpush.msra.mxu0 %v123
    %272 = vmatpush.msra.mxu0 %v122
    %273 = vmatpush.msra.mxu0 %v121
    %274 = vmatpush.msra.mxu0 %v120
    %275 = vmatmul.f32.gmra.mxu0 %v257
    %v276 = vpop.f32.mrf.mxu0
    %v277 = vadd.f32 0.0, %v276
    %278 = vdwg.mxu0
    %v279 = vadd.f32 %v103, %v277
    %v280 = vadd.f32 %v279, %v150
    %v281 = vxor.u32 %v280, 2147483648
    %v282 = vmul.f32 %v281, 1.442695
    %v283 = vpow.pop %v282
    %v284 = vadd.f32 %v283, 1.0
    %v285 = vrcp.pop %v284
    %v286 = vmul.f32 %v284, %v285
    %v287 = vsub.f32 1.0, %v286
    %v288 = vmul.f32 %v285, %v287
    %v289 = vadd.f32 %v285, %v288
    %vm290 = vweird.f32 %v284
    %vm291 = vweird.f32 %v285
    %vm292 = vmor %vm290, %vm291
    %v293 = vsel %vm292, %v285, %v289
    %v294 = vand.u32 2147483647, %v284
    %vm295 = vcmp.eq.f32.partialorder %v294, 8.507059e+37
    %v296 = vand.u32 %v284, 2147483648
    %v297 = vor.u32 1.1754944e-38, %v296
    %v298 = vsel %vm295, %v297, %v293
    %v299 = vmul.f32 1.0, %v298
    %v300 = vtanh.pop %v280
    %v301 = vmul.f32 %v299, %v247
    %303 = vrot.lane.b32.xlu0 %v300, 64
    %v304 = vpop.permute.xlu0 %303
    %v306 = vmul.f32 %v299, %v304
    %308 = vrot.lane.b32.xlu0 %v306, 32
    %v309 = vpop.permute.xlu0 %308
    %v311 = vadd.f32 %v301, %v309
    %v312 = vtanh.pop %v311
    %314 = vrot.lane.b32.xlu0 %v312, 64
    %v315 = vpop.permute.xlu0 %314
    %v317 = vmul.f32 %v299, %v315
    %319 = vrot.lane.b32.xlu0 %v317, 32
    %v320 = vpop.permute.xlu0 %319
    %v321 = vsel %vm54, %v320, 0
    %323 = vmatpush.msra.mxu0 0.0
    %324 = vmatpush.msra.mxu0 0.0
    %325 = vmatpush.msra.mxu0 0.0
    %326 = vmatpush.msra.mxu0 0.0
    %327 = vmatpush.msra.mxu0 0.0
    %328 = vmatpush.msra.mxu0 0.0
    %329 = vmatpush.msra.mxu0 0.0
    %330 = vmatpush.msra.mxu0 0.0
    %331 = vmatpush.msra.mxu0 0.0
    %332 = vmatpush.msra.mxu0 0.0
    %333 = vmatpush.msra.mxu0 0.0
    %334 = vmatpush.msra.mxu0 0.0
    %335 = vmatpush.msra.mxu0 %v123
    %336 = vmatpush.msra.mxu0 %v122
    %337 = vmatpush.msra.mxu0 %v121
    %338 = vmatpush.msra.mxu0 %v120
    %339 = vmatmul.f32.gmra.mxu0 %v321
    %v340 = vpop.f32.mrf.mxu0
    %v341 = vadd.f32 0.0, %v340
    %342 = vdwg.mxu0
    %v343 = vadd.f32 %v106, %v341
    %v344 = vadd.f32 %v343, %v150
    %v345 = vxor.u32 %v344, 2147483648
    %v346 = vmul.f32 %v345, 1.442695
    %v347 = vpow.pop %v346
    %v348 = vadd.f32 %v347, 1.0
    %v349 = vrcp.pop %v348
    %v350 = vmul.f32 %v348, %v349
    %v351 = vsub.f32 1.0, %v350
    %v352 = vmul.f32 %v349, %v351
    %v353 = vadd.f32 %v349, %v352
    %vm354 = vweird.f32 %v348
    %vm355 = vweird.f32 %v349
    %vm356 = vmor %vm354, %vm355
    %v357 = vsel %vm356, %v349, %v353
    %v358 = vand.u32 2147483647, %v348
    %vm359 = vcmp.eq.f32.partialorder %v358, 8.507059e+37
    %v360 = vand.u32 %v348, 2147483648
    %v361 = vor.u32 1.1754944e-38, %v360
    %v362 = vsel %vm359, %v361, %v357
    %v363 = vmul.f32 1.0, %v362
    %v364 = vtanh.pop %v344
    %v365 = vmul.f32 %v363, %v311
    %367 = vrot.lane.b32.xlu0 %v364, 64
    %v368 = vpop.permute.xlu0 %367
    %v370 = vmul.f32 %v363, %v368
    %372 = vrot.lane.b32.xlu0 %v370, 32
    %v373 = vpop.permute.xlu0 %372
    %v375 = vadd.f32 %v365, %v373
    %v376 = vtanh.pop %v375
    %378 = vrot.lane.b32.xlu0 %v376, 64
    %v379 = vpop.permute.xlu0 %378
    %v381 = vmul.f32 %v363, %v379
    %383 = vrot.lane.b32.xlu0 %v381, 32
    %v384 = vpop.permute.xlu0 %383
    %v385 = vsel %vm54, %v384, 0
    %387 = vmatpush.msra.mxu0 0.0
    %388 = vmatpush.msra.mxu0 0.0
    %389 = vmatpush.msra.mxu0 0.0
    %390 = vmatpush.msra.mxu0 0.0
    %391 = vmatpush.msra.mxu0 0.0
    %392 = vmatpush.msra.mxu0 0.0
    %393 = vmatpush.msra.mxu0 0.0
    %394 = vmatpush.msra.mxu0 0.0
    %395 = vmatpush.msra.mxu0 0.0
    %396 = vmatpush.msra.mxu0 0.0
    %397 = vmatpush.msra.mxu0 0.0
    %398 = vmatpush.msra.mxu0 0.0
    %399 = vmatpush.msra.mxu0 %v123
    %400 = vmatpush.msra.mxu0 %v122
    %401 = vmatpush.msra.mxu0 %v121
    %402 = vmatpush.msra.mxu0 %v120
    %403 = vmatmul.f32.gmra.mxu0 %v385
    %v404 = vpop.f32.mrf.mxu0
    %v405 = vadd.f32 0.0, %v404
    %406 = vdwg.mxu0
    %v407 = vadd.f32 %v109, %v405
    %v408 = vadd.f32 %v407, %v150
    %v409 = vxor.u32 %v408, 2147483648
    %v410 = vmul.f32 %v409, 1.442695
    %v411 = vpow.pop %v410
    %v412 = vadd.f32 %v411, 1.0
    %v413 = vrcp.pop %v412
    %v414 = vmul.f32 %v412, %v413
    %v415 = vsub.f32 1.0, %v414
    %v416 = vmul.f32 %v413, %v415
    %v417 = vadd.f32 %v413, %v416
    %vm418 = vweird.f32 %v412
    %vm419 = vweird.f32 %v413
    %vm420 = vmor %vm418, %vm419
    %v421 = vsel %vm420, %v413, %v417
    %v422 = vand.u32 2147483647, %v412
    %vm423 = vcmp.eq.f32.partialorder %v422, 8.507059e+37
    %v424 = vand.u32 %v412, 2147483648
    %v425 = vor.u32 1.1754944e-38, %v424
    %v426 = vsel %vm423, %v425, %v421
    %v427 = vmul.f32 1.0, %v426
    %v428 = vtanh.pop %v408
    %v429 = vmul.f32 %v427, %v375
    %431 = vrot.lane.b32.xlu0 %v428, 64
    %v432 = vpop.permute.xlu0 %431
    %v434 = vmul.f32 %v427, %v432
    %436 = vrot.lane.b32.xlu0 %v434, 32
    %v437 = vpop.permute.xlu0 %436
    %v439 = vadd.f32 %v429, %v437
    %v440 = vtanh.pop %v439
    %442 = vrot.lane.b32.xlu0 %v440, 64
    %v443 = vpop.permute.xlu0 %442
    %v445 = vmul.f32 %v427, %v443
    %447 = vrot.lane.b32.xlu0 %v445, 32
    %v448 = vpop.permute.xlu0 %447
    %v449 = vsel %vm54, %v448, 0
    %451 = vmatpush.msra.mxu0 0.0
    %452 = vmatpush.msra.mxu0 0.0
    %453 = vmatpush.msra.mxu0 0.0
    %454 = vmatpush.msra.mxu0 0.0
    %455 = vmatpush.msra.mxu0 0.0
    %456 = vmatpush.msra.mxu0 0.0
    %457 = vmatpush.msra.mxu0 0.0
    %458 = vmatpush.msra.mxu0 0.0
    %459 = vmatpush.msra.mxu0 0.0
    %460 = vmatpush.msra.mxu0 0.0
    %461 = vmatpush.msra.mxu0 0.0
    %462 = vmatpush.msra.mxu0 0.0
    %463 = vmatpush.msra.mxu0 %v123
    %464 = vmatpush.msra.mxu0 %v122
    %465 = vmatpush.msra.mxu0 %v121
    %466 = vmatpush.msra.mxu0 %v120
    %467 = vmatmul.f32.gmra.mxu0 %v449
    %v468 = vpop.f32.mrf.mxu0
    %v469 = vadd.f32 0.0, %v468
    %470 = vdwg.mxu0
    %v471 = vadd.f32 %v112, %v469
    %v472 = vadd.f32 %v471, %v150
    %v473 = vxor.u32 %v472, 2147483648
    %v474 = vmul.f32 %v473, 1.442695
    %v475 = vpow.pop %v474
    %v476 = vadd.f32 %v475, 1.0
    %v477 = vrcp.pop %v476
    %v478 = vmul.f32 %v476, %v477
    %v479 = vsub.f32 1.0, %v478
    %v480 = vmul.f32 %v477, %v479
    %v481 = vadd.f32 %v477, %v480
    %vm482 = vweird.f32 %v476
    %vm483 = vweird.f32 %v477
    %vm484 = vmor %vm482, %vm483
    %v485 = vsel %vm484, %v477, %v481
    %v486 = vand.u32 2147483647, %v476
    %vm487 = vcmp.eq.f32.partialorder %v486, 8.507059e+37
    %v488 = vand.u32 %v476, 2147483648
    %v489 = vor.u32 1.1754944e-38, %v488
    %v490 = vsel %vm487, %v489, %v485
    %v491 = vmul.f32 1.0, %v490
    %v492 = vtanh.pop %v472
    %v493 = vmul.f32 %v491, %v439
    %495 = vrot.lane.b32.xlu0 %v492, 64
    %v496 = vpop.permute.xlu0 %495
    %v498 = vmul.f32 %v491, %v496
    %500 = vrot.lane.b32.xlu0 %v498, 32
    %v501 = vpop.permute.xlu0 %500
    %v503 = vadd.f32 %v493, %v501
    %v504 = vtanh.pop %v503
    %506 = vrot.lane.b32.xlu0 %v504, 64
    %v507 = vpop.permute.xlu0 %506
    %v509 = vmul.f32 %v491, %v507
    %511 = vrot.lane.b32.xlu0 %v509, 32
    %v512 = vpop.permute.xlu0 %511
    %v513 = vsel %vm54, %v512, 0
    %515 = vmatpush.msra.mxu0 0.0
    %516 = vmatpush.msra.mxu0 0.0
    %517 = vmatpush.msra.mxu0 0.0
    %518 = vmatpush.msra.mxu0 0.0
    %519 = vmatpush.msra.mxu0 0.0
    %520 = vmatpush.msra.mxu0 0.0
    %521 = vmatpush.msra.mxu0 0.0
    %522 = vmatpush.msra.mxu0 0.0
    %523 = vmatpush.msra.mxu0 0.0
    %524 = vmatpush.msra.mxu0 0.0
    %525 = vmatpush.msra.mxu0 0.0
    %526 = vmatpush.msra.mxu0 0.0
    %527 = vmatpush.msra.mxu0 %v123
    %528 = vmatpush.msra.mxu0 %v122
    %529 = vmatpush.msra.mxu0 %v121
    %530 = vmatpush.msra.mxu0 %v120
    %531 = vmatmul.f32.gmra.mxu0 %v513
    %v532 = vpop.f32.mrf.mxu0
    %v533 = vadd.f32 0.0, %v532
    %534 = vdwg.mxu0
    %v535 = vadd.f32 %v115, %v533
    %v536 = vadd.f32 %v535, %v150
    %v537 = vxor.u32 %v536, 2147483648
    %v538 = vmul.f32 %v537, 1.442695
    %v539 = vpow.pop %v538
    %v540 = vadd.f32 %v539, 1.0
    %v541 = vrcp.pop %v540
    %v542 = vmul.f32 %v540, %v541
    %v543 = vsub.f32 1.0, %v542
    %v544 = vmul.f32 %v541, %v543
    %v545 = vadd.f32 %v541, %v544
    %vm546 = vweird.f32 %v540
    %vm547 = vweird.f32 %v541
    %vm548 = vmor %vm546, %vm547
    %v549 = vsel %vm548, %v541, %v545
    %v550 = vand.u32 2147483647, %v540
    %vm551 = vcmp.eq.f32.partialorder %v550, 8.507059e+37
    %v552 = vand.u32 %v540, 2147483648
    %v553 = vor.u32 1.1754944e-38, %v552
    %v554 = vsel %vm551, %v553, %v549
    %v555 = vmul.f32 1.0, %v554
    %v556 = vtanh.pop %v536
    %v557 = vmul.f32 %v555, %v503
    %559 = vrot.lane.b32.xlu0 %v556, 64
    %v560 = vpop.permute.xlu0 %559
    %v562 = vmul.f32 %v555, %v560
    %564 = vrot.lane.b32.xlu0 %v562, 32
    %v565 = vpop.permute.xlu0 %564
    %v567 = vadd.f32 %v557, %v565
    %v568 = vtanh.pop %v567
    %570 = vrot.lane.b32.xlu0 %v568, 64
    %v571 = vpop.permute.xlu0 %570
    %v573 = vmul.f32 %v555, %v571
    %575 = vrot.lane.b32.xlu0 %v573, 32
    %v576 = vpop.permute.xlu0 %575
    %v577 = vsel %vm54, %v576, 0
    %579 = vmatpush.msra.mxu0 0.0
    %580 = vmatpush.msra.mxu0 0.0
    %581 = vmatpush.msra.mxu0 0.0
    %582 = vmatpush.msra.mxu0 0.0
    %583 = vmatpush.msra.mxu0 0.0
    %584 = vmatpush.msra.mxu0 0.0
    %585 = vmatpush.msra.mxu0 0.0
    %586 = vmatpush.msra.mxu0 0.0
    %587 = vmatpush.msra.mxu0 0.0
    %588 = vmatpush.msra.mxu0 0.0
    %589 = vmatpush.msra.mxu0 0.0
    %590 = vmatpush.msra.mxu0 0.0
    %591 = vmatpush.msra.mxu0 %v123
    %592 = vmatpush.msra.mxu0 %v122
    %593 = vmatpush.msra.mxu0 %v121
    %594 = vmatpush.msra.mxu0 %v120
    %595 = vmatmul.f32.gmra.mxu0 %v577
    %v596 = vpop.f32.mrf.mxu0
    %v597 = vadd.f32 0.0, %v596
    %598 = vdwg.mxu0
    %v599 = vadd.f32 %v118, %v597
    %v600 = vadd.f32 %v599, %v150
    %v601 = vxor.u32 %v600, 2147483648
    %v602 = vmul.f32 %v601, 1.442695
    %v603 = vpow.pop %v602
    %v604 = vadd.f32 %v603, 1.0
    %v605 = vrcp.pop %v604
    %v606 = vmul.f32 %v604, %v605
    %v607 = vsub.f32 1.0, %v606
    %v608 = vmul.f32 %v605, %v607
    %v609 = vadd.f32 %v605, %v608
    %vm610 = vweird.f32 %v604
    %vm611 = vweird.f32 %v605
    %vm612 = vmor %vm610, %vm611
    %v613 = vsel %vm612, %v605, %v609
    %v614 = vand.u32 2147483647, %v604
    %vm615 = vcmp.eq.f32.partialorder %v614, 8.507059e+37
    %v616 = vand.u32 %v604, 2147483648
    %v617 = vor.u32 1.1754944e-38, %v616
    %v618 = vsel %vm615, %v617, %v613
    %v619 = vmul.f32 1.0, %v618
    %v620 = vtanh.pop %v600
    %v621 = vmul.f32 %v619, %v567
    %623 = vrot.lane.b32.xlu0 %v620, 64
    %v624 = vpop.permute.xlu0 %623
    %v626 = vmul.f32 %v619, %v624
    %628 = vrot.lane.b32.xlu0 %v626, 32
    %v629 = vpop.permute.xlu0 %628
    %v631 = vadd.f32 %v621, %v629
    %v632 = vtanh.pop %v631
    %634 = vrot.lane.b32.xlu0 %v632, 64
    %v635 = vpop.permute.xlu0 %634
    %v637 = vmul.f32 %v619, %v635
    %v638 = vrot.slane %v189, 1
    %v639 = vrot.slane %v189, 2
    %v640 = vrot.slane %v189, 3
    %v641 = vrot.slane %v189, 4
    %v642 = vrot.slane %v189, 5
    %v643 = vrot.slane %v189, 6
    %v644 = vrot.slane %v189, 7
    %v652 = vrot.slane %v253, 1
    %v653 = vrot.slane %v253, 2
    %v654 = vrot.slane %v253, 3
    %v655 = vrot.slane %v253, 4
    %v656 = vrot.slane %v253, 5
    %v657 = vrot.slane %v253, 6
    %v658 = vrot.slane %v253, 7
    %v659 = vrot.slane %v317, 1
    %v660 = vrot.slane %v317, 2
    %v661 = vrot.slane %v317, 3
    %v662 = vrot.slane %v317, 4
    %v663 = vrot.slane %v317, 5
    %v664 = vrot.slane %v317, 6
    %v665 = vrot.slane %v317, 7
    %v666 = vrot.slane %v381, 1
    %v667 = vrot.slane %v381, 2
    %v668 = vrot.slane %v381, 3
    %v669 = vrot.slane %v381, 4
    %v670 = vrot.slane %v381, 5
    %v671 = vrot.slane %v381, 6
    %v672 = vrot.slane %v381, 7
    %v673 = vrot.slane %v445, 1
    %v674 = vrot.slane %v445, 2
    %v675 = vrot.slane %v445, 3
    %v676 = vrot.slane %v445, 4
    %v677 = vrot.slane %v445, 5
    %v678 = vrot.slane %v445, 6
    %v679 = vrot.slane %v445, 7
    %v680 = vrot.slane %v509, 1
    %v681 = vrot.slane %v509, 2
    %v682 = vrot.slane %v509, 3
    %v683 = vrot.slane %v509, 4
    %v684 = vrot.slane %v509, 5
    %v685 = vrot.slane %v509, 6
    %v686 = vrot.slane %v509, 7
    %v687 = vrot.slane %v573, 1
    %v688 = vrot.slane %v573, 2
    %v689 = vrot.slane %v573, 3
    %v690 = vrot.slane %v573, 4
    %v691 = vrot.slane %v573, 5
    %v692 = vrot.slane %v573, 6
    %v693 = vrot.slane %v573, 7
    %v695 = vrot.slane %v637, 1
    %v696 = vrot.slane %v637, 2
    %v697 = vrot.slane %v637, 3
    %v698 = vrot.slane %v637, 4
    %v699 = vrot.slane %v637, 5
    %v700 = vrot.slane %v637, 6
    %v701 = vrot.slane %v637, 7
    %v702 = vperm.slane %v253, 0
    %v703 = vperm.slane %v652, 0
    %v704 = vperm.slane %v653, 0
    %v705 = vperm.slane %v654, 0
    %v706 = vperm.slane %v655, 0
    %v707 = vperm.slane %v656, 0
    %v708 = vperm.slane %v657, 0
    %v709 = vperm.slane %v658, 0
    %v718 = vperm.slane %v317, 0
    %v719 = vperm.slane %v659, 0
    %v720 = vperm.slane %v660, 0
    %v721 = vperm.slane %v661, 0
    %v722 = vperm.slane %v662, 0
    %v723 = vperm.slane %v663, 0
    %v724 = vperm.slane %v664, 0
    %v725 = vperm.slane %v665, 0
    %v734 = vperm.slane %v381, 0
    %v735 = vperm.slane %v666, 0
    %v736 = vperm.slane %v667, 0
    %v737 = vperm.slane %v668, 0
    %v738 = vperm.slane %v669, 0
    %v739 = vperm.slane %v670, 0
    %v740 = vperm.slane %v671, 0
    %v741 = vperm.slane %v672, 0
    %v750 = vperm.slane %v445, 0
    %v751 = vperm.slane %v673, 0
    %v752 = vperm.slane %v674, 0
    %v753 = vperm.slane %v675, 0
    %v754 = vperm.slane %v676, 0
    %v755 = vperm.slane %v677, 0
    %v756 = vperm.slane %v678, 0
    %v757 = vperm.slane %v679, 0
    %v766 = vperm.slane %v509, 0
    %v767 = vperm.slane %v680, 0
    %v768 = vperm.slane %v681, 0
    %v769 = vperm.slane %v682, 0
    %v770 = vperm.slane %v683, 0
    %v771 = vperm.slane %v684, 0
    %v772 = vperm.slane %v685, 0
    %v773 = vperm.slane %v686, 0
    %v782 = vperm.slane %v573, 0
    %v783 = vperm.slane %v687, 0
    %v784 = vperm.slane %v688, 0
    %v785 = vperm.slane %v689, 0
    %v786 = vperm.slane %v690, 0
    %v787 = vperm.slane %v691, 0
    %v788 = vperm.slane %v692, 0
    %v789 = vperm.slane %v693, 0
    %v798 = vperm.slane %v637, 0
    %v799 = vperm.slane %v695, 0
    %v800 = vperm.slane %v696, 0
    %v801 = vperm.slane %v697, 0
    %v802 = vperm.slane %v698, 0
    %v803 = vperm.slane %v699, 0
    %v804 = vperm.slane %v700, 0
    %v805 = vperm.slane %v701, 0
    %vm814 = vcmask 1040384
    %v815 = vsel %vm814, %v189, %v702
    %v816 = vsel %vm814, %v638, %v703
    %v817 = vsel %vm814, %v639, %v704
    %v818 = vsel %vm814, %v640, %v705
    %v819 = vsel %vm814, %v641, %v706
    %v820 = vsel %vm814, %v642, %v707
    %v821 = vsel %vm814, %v643, %v708
    %v822 = vsel %vm814, %v644, %v709
    %vm823 = vcmask 1041408
    %v824 = vsel %vm823, %v815, %v718
    %v825 = vsel %vm823, %v816, %v719
    %v826 = vsel %vm823, %v817, %v720
    %v827 = vsel %vm823, %v818, %v721
    %v828 = vsel %vm823, %v819, %v722
    %v829 = vsel %vm823, %v820, %v723
    %v830 = vsel %vm823, %v821, %v724
    %v831 = vsel %vm823, %v822, %v725
    %vm832 = vcmask 1042432
    %v833 = vsel %vm832, %v824, %v734
    %v834 = vsel %vm832, %v825, %v735
    %v835 = vsel %vm832, %v826, %v736
    %v836 = vsel %vm832, %v827, %v737
    %v837 = vsel %vm832, %v828, %v738
    %v838 = vsel %vm832, %v829, %v739
    %v839 = vsel %vm832, %v830, %v740
    %v840 = vsel %vm832, %v831, %v741
    %vm841 = vcmask 1043456
    %v842 = vsel %vm841, %v833, %v750
    %v843 = vsel %vm841, %v834, %v751
    %v844 = vsel %vm841, %v835, %v752
    %v845 = vsel %vm841, %v836, %v753
    %v846 = vsel %vm841, %v837, %v754
    %v847 = vsel %vm841, %v838, %v755
    %v848 = vsel %vm841, %v839, %v756
    %v849 = vsel %vm841, %v840, %v757
    %vm850 = vcmask 1044480
    %v851 = vsel %vm850, %v842, %v766
    %v852 = vsel %vm850, %v843, %v767
    %v853 = vsel %vm850, %v844, %v768
    %v854 = vsel %vm850, %v845, %v769
    %v855 = vsel %vm850, %v846, %v770
    %v856 = vsel %vm850, %v847, %v771
    %v857 = vsel %vm850, %v848, %v772
    %v858 = vsel %vm850, %v849, %v773
    %vm859 = vcmask 1045504
    %v860 = vsel %vm859, %v851, %v782
    %v861 = vsel %vm859, %v852, %v783
    %v862 = vsel %vm859, %v853, %v784
    %v863 = vsel %vm859, %v854, %v785
    %v864 = vsel %vm859, %v855, %v786
    %v865 = vsel %vm859, %v856, %v787
    %v866 = vsel %vm859, %v857, %v788
    %v867 = vsel %vm859, %v858, %v789
    %vm868 = vcmask 1046528
    %v869 = vsel %vm868, %v860, %v798
    %v870 = vsel %vm868, %v861, %v799
    %v871 = vsel %vm868, %v862, %v800
    %v872 = vsel %vm868, %v863, %v801
    %v873 = vsel %vm868, %v864, %v802
    %v874 = vsel %vm868, %v865, %v803
    %v875 = vsel %vm868, %v866, %v804
    %v876 = vsel %vm868, %v867, %v805
    %v877 = vld [vmem:[%s4] sm:$0xff]
    %v878 = vld [vmem:[%s4 + $0x8] sm:$0xff]
    %v879 = vld [vmem:[%s5] sm:$0xff]
    %v880 = vld [vmem:[%s5 + $0x8] sm:$0xff]
    %v881 = vld [vmem:[%s5 + $0x10] sm:$0xff]
    %v882 = vld [vmem:[%s5 + $0x18] sm:$0xff]
    %v884 = vsel %vm54, %v877, 0
    %v887 = vsel %vm54, %v878, 0
    %889 = vmatpush.msra.mxu0 0.0
    %890 = vmatpush.msra.mxu0 0.0
    %891 = vmatpush.msra.mxu0 0.0
    %892 = vmatpush.msra.mxu0 0.0
    %893 = vmatpush.msra.mxu0 0.0
    %894 = vmatpush.msra.mxu0 0.0
    %895 = vmatpush.msra.mxu0 0.0
    %896 = vmatpush.msra.mxu0 0.0
    %897 = vmatpush.msra.mxu0 0.0
    %898 = vmatpush.msra.mxu0 0.0
    %899 = vmatpush.msra.mxu0 0.0
    %900 = vmatpush.msra.mxu0 0.0
    %901 = vmatpush.msra.mxu0 %v882
    %902 = vmatpush.msra.mxu0 %v881
    %903 = vmatpush.msra.mxu0 %v880
    %904 = vmatpush.msra.mxu0 %v879
    %905 = vmatmul.f32.gmra.mxu0 %v884
    %v906 = vpop.f32.mrf.mxu0
    %v907 = vadd.f32 0.0, %v906
    %908 = vmatmul.f32.gmra.mxu0 %v887
    %v909 = vpop.f32.mrf.mxu0
    %v910 = vadd.f32 0.0, %v909
    %911 = vdwg.mxu0
    %v912 = vld [vmem:[%s6] sm:$0xff]
    %v913 = vld [vmem:[%s6 + $0x8] sm:$0xff]
    %v914 = vld [vmem:[%s6 + $0x10] sm:$0xff]
    %v915 = vld [vmem:[%s6 + $0x18] sm:$0xff]
    %v916 = vld [vmem:[%s7] sm:$0x1]
    %v917 = vld [vmem:[%s8] sm:$0xff]
    %v918 = vld [vmem:[%s8 + $0x8] sm:$0xff]
    %v919 = vld [vmem:[%s8 + $0x10] sm:$0xff]
    %v920 = vld [vmem:[%s8 + $0x18] sm:$0xff]
    %v921 = vld [vmem:[%s9] sm:$0x1]
    %v922 = vld [vmem:[%s10] sm:$0xff]
    %v923 = vld [vmem:[%s10 + $0x8] sm:$0xff]
    %v924 = vld [vmem:[%s10 + $0x10] sm:$0xff]
    %v925 = vld [vmem:[%s10 + $0x18] sm:$0xff]
    %v926 = vld [vmem:[%s10 + $0x20] sm:$0xff]
    %v927 = vld [vmem:[%s10 + $0x28] sm:$0xff]
    %v928 = vlaneseq
    %v929 = vand.u32 %v928, 127
    %vm930 = vcmp.eq.s32.totalorder %v929, 0
    %v931 = vsel %vm930, 1.0, 0.0
    %932 = vrot.lane.b32.xlu0 %v637, 32
    %v933 = vpop.permute.xlu0 %932
    %v934 = vsel %vm54, %v933, 0
    %936 = vmatpush.msra.mxu0 0.0
    %937 = vmatpush.msra.mxu0 0.0
    %938 = vmatpush.msra.mxu0 0.0
    %939 = vmatpush.msra.mxu0 0.0
    %940 = vmatpush.msra.mxu0 0.0
    %941 = vmatpush.msra.mxu0 0.0
    %942 = vmatpush.msra.mxu0 0.0
    %943 = vmatpush.msra.mxu0 0.0
    %944 = vmatpush.msra.mxu0 0.0
    %945 = vmatpush.msra.mxu0 0.0
    %946 = vmatpush.msra.mxu0 0.0
    %947 = vmatpush.msra.mxu0 0.0
    %948 = vmatpush.msra.mxu0 %v915
    %949 = vmatpush.msra.mxu0 %v914
    %950 = vmatpush.msra.mxu0 %v913
    %951 = vmatpush.msra.mxu0 %v912
    %952 = vmatmul.f32.gmra.mxu0 %v934
    %v953 = vpop.f32.mrf.mxu0
    %v954 = vadd.f32 0.0, %v953
    %955 = vdwg.mxu0
    %vm956 = vcmask 130048
    %v958 = vsel %vm956, %v931, 0
    %960 = vmatpush.msra.mxu0 0.0
    %961 = vmatpush.msra.mxu0 0.0
    %962 = vmatpush.msra.mxu0 0.0
    %963 = vmatpush.msra.mxu0 0.0
    %964 = vmatpush.msra.mxu0 0.0
    %965 = vmatpush.msra.mxu0 0.0
    %966 = vmatpush.msra.mxu0 0.0
    %967 = vmatpush.msra.mxu0 0.0
    %968 = vmatpush.msra.mxu0 0.0
    %969 = vmatpush.msra.mxu0 0.0
    %970 = vmatpush.msra.mxu0 0.0
    %971 = vmatpush.msra.mxu0 0.0
    %972 = vmatpush.msra.mxu0 0.0
    %973 = vmatpush.msra.mxu0 0.0
    %974 = vmatpush.msra.mxu0 %v910
    %975 = vmatpush.msra.mxu0 %v907
    %976 = vmatmul.f32.gmra.mxu0 %v958
    %v977 = vpop.f32.mrf.mxu0
    %v978 = vadd.f32 %v954, %v977
    %979 = vdwg.mxu0
    %v981 = vperm.slane %v916, 0
    %v983 = vadd.f32 %v978, %v981
    %v984 = vxor.u32 %v983, 2147483648
    %v985 = vmul.f32 %v984, 1.442695
    %v986 = vpow.pop %v985
    %v987 = vadd.f32 %v986, 1.0
    %v988 = vrcp.pop %v987
    %v989 = vmul.f32 %v987, %v988
    %v990 = vsub.f32 1.0, %v989
    %v991 = vmul.f32 %v988, %v990
    %v992 = vadd.f32 %v988, %v991
    %vm993 = vweird.f32 %v987
    %vm994 = vweird.f32 %v988
    %vm995 = vmor %vm993, %vm994
    %v996 = vsel %vm995, %v988, %v992
    %v997 = vand.u32 2147483647, %v987
    %vm998 = vcmp.eq.f32.partialorder %v997, 8.507059e+37
    %v999 = vand.u32 %v987, 2147483648
    %v1000 = vor.u32 1.1754944e-38, %v999
    %v1001 = vsel %vm998, %v1000, %v996
    %v1002 = vmul.f32 1.0, %v1001
    %v1003 = vtanh.pop %v983
    %v1004 = vmul.f32 %v1002, %v631
    %1006 = vrot.lane.b32.xlu0 %v1003, 64
    %v1007 = vpop.permute.xlu0 %1006
    %v1009 = vmul.f32 %v1002, %v1007
    %1011 = vrot.lane.b32.xlu0 %v1009, 32
    %v1012 = vpop.permute.xlu0 %1011
    %v1014 = vadd.f32 %v1004, %v1012
    %v1015 = vtanh.pop %v1014
    %1017 = vrot.lane.b32.xlu0 %v1015, 64
    %v1018 = vpop.permute.xlu0 %1017
    %v1020 = vmul.f32 %v1002, %v1018
    %v1022 = vrot.slane %v1020, 1
    %v1023 = vrot.slane %v1020, 2
    %v1024 = vrot.slane %v1020, 3
    %v1025 = vrot.slane %v1020, 4
    %v1026 = vrot.slane %v1020, 5
    %v1027 = vrot.slane %v1020, 6
    %v1028 = vrot.slane %v1020, 7
    %v1029 = vperm.slane %v1020, 0
    %1030 = vrot.lane.b32.xlu0 %v1029, 32
    %v1031 = vpop.permute.xlu0 %1030
    %1033 = vrot.lane.b32.xlu0 %v869, 32
    %v1034 = vpop.permute.xlu0 %1033
    %v1035 = vsel %vm54, %v1031, 0
    %v1037 = vsel %vm54, %v1034, 0
    %1039 = vmatpush.xpose.msra.mxu0 0.0
    %1040 = vmatpush.xpose.msra.mxu0 0.0
    %1041 = vmatpush.xpose.msra.mxu0 0.0
    %1042 = vmatpush.xpose.msra.mxu0 0.0
    %1043 = vmatpush.xpose.msra.mxu0 0.0
    %1044 = vmatpush.xpose.msra.mxu0 0.0
    %1045 = vmatpush.xpose.msra.mxu0 0.0
    %1046 = vmatpush.xpose.msra.mxu0 0.0
    %1047 = vmatpush.xpose.msra.mxu0 0.0
    %1048 = vmatpush.xpose.msra.mxu0 0.0
    %1049 = vmatpush.xpose.msra.mxu0 0.0
    %1050 = vmatpush.xpose.msra.mxu0 0.0
    %1051 = vmatpush.xpose.msra.mxu0 0.0
    %1052 = vmatpush.xpose.msra.mxu0 0.0
    %1053 = vmatpush.xpose.msra.mxu0 0.0
    %1054 = vmatpush.xpose.msra.mxu0 %v1037
    %1055 = vmatmul.f32.gmra.mxu0 %v1035
    %v1056 = vpop.f32.mrf.mxu0
    %v1057 = vadd.f32 0.0, %v1056
    %1058 = vdwg.mxu0
    %v1059 = vperm.slane %v1022, 0
    %1060 = vrot.lane.b32.xlu0 %v1059, 32
    %v1061 = vpop.permute.xlu0 %1060
    %1063 = vrot.lane.b32.xlu0 %v870, 32
    %v1064 = vpop.permute.xlu0 %1063
    %v1065 = vsel %vm54, %v1061, 0
    %v1067 = vsel %vm54, %v1064, 0
    %1069 = vmatpush.xpose.msra.mxu0 0.0
    %1070 = vmatpush.xpose.msra.mxu0 0.0
    %1071 = vmatpush.xpose.msra.mxu0 0.0
    %1072 = vmatpush.xpose.msra.mxu0 0.0
    %1073 = vmatpush.xpose.msra.mxu0 0.0
    %1074 = vmatpush.xpose.msra.mxu0 0.0
    %1075 = vmatpush.xpose.msra.mxu0 0.0
    %1076 = vmatpush.xpose.msra.mxu0 0.0
    %1077 = vmatpush.xpose.msra.mxu0 0.0
    %1078 = vmatpush.xpose.msra.mxu0 0.0
    %1079 = vmatpush.xpose.msra.mxu0 0.0
    %1080 = vmatpush.xpose.msra.mxu0 0.0
    %1081 = vmatpush.xpose.msra.mxu0 0.0
    %1082 = vmatpush.xpose.msra.mxu0 0.0
    %1083 = vmatpush.xpose.msra.mxu0 0.0
    %1084 = vmatpush.xpose.msra.mxu0 %v1067
    %1085 = vmatmul.f32.gmra.mxu0 %v1065
    %v1086 = vpop.f32.mrf.mxu0
    %v1087 = vadd.f32 0.0, %v1086
    %1088 = vdwg.mxu0
    %v1089 = vperm.slane %v1023, 0
    %1090 = vrot.lane.b32.xlu0 %v1089, 32
    %v1091 = vpop.permute.xlu0 %1090
    %1093 = vrot.lane.b32.xlu0 %v871, 32
    %v1094 = vpop.permute.xlu0 %1093
    %v1095 = vsel %vm54, %v1091, 0
    %v1097 = vsel %vm54, %v1094, 0
    %1099 = vmatpush.xpose.msra.mxu0 0.0
    %1100 = vmatpush.xpose.msra.mxu0 0.0
    %1101 = vmatpush.xpose.msra.mxu0 0.0
    %1102 = vmatpush.xpose.msra.mxu0 0.0
    %1103 = vmatpush.xpose.msra.mxu0 0.0
    %1104 = vmatpush.xpose.msra.mxu0 0.0
    %1105 = vmatpush.xpose.msra.mxu0 0.0
    %1106 = vmatpush.xpose.msra.mxu0 0.0
    %1107 = vmatpush.xpose.msra.mxu0 0.0
    %1108 = vmatpush.xpose.msra.mxu0 0.0
    %1109 = vmatpush.xpose.msra.mxu0 0.0
    %1110 = vmatpush.xpose.msra.mxu0 0.0
    %1111 = vmatpush.xpose.msra.mxu0 0.0
    %1112 = vmatpush.xpose.msra.mxu0 0.0
    %1113 = vmatpush.xpose.msra.mxu0 0.0
    %1114 = vmatpush.xpose.msra.mxu0 %v1097
    %1115 = vmatmul.f32.gmra.mxu0 %v1095
    %v1116 = vpop.f32.mrf.mxu0
    %v1117 = vadd.f32 0.0, %v1116
    %1118 = vdwg.mxu0
    %v1119 = vperm.slane %v1024, 0
    %1120 = vrot.lane.b32.xlu0 %v1119, 32
    %v1121 = vpop.permute.xlu0 %1120
    %1123 = vrot.lane.b32.xlu0 %v872, 32
    %v1124 = vpop.permute.xlu0 %1123
    %v1125 = vsel %vm54, %v1121, 0
    %v1127 = vsel %vm54, %v1124, 0
    %1129 = vmatpush.xpose.msra.mxu0 0.0
    %1130 = vmatpush.xpose.msra.mxu0 0.0
    %1131 = vmatpush.xpose.msra.mxu0 0.0
    %1132 = vmatpush.xpose.msra.mxu0 0.0
    %1133 = vmatpush.xpose.msra.mxu0 0.0
    %1134 = vmatpush.xpose.msra.mxu0 0.0
    %1135 = vmatpush.xpose.msra.mxu0 0.0
    %1136 = vmatpush.xpose.msra.mxu0 0.0
    %1137 = vmatpush.xpose.msra.mxu0 0.0
    %1138 = vmatpush.xpose.msra.mxu0 0.0
    %1139 = vmatpush.xpose.msra.mxu0 0.0
    %1140 = vmatpush.xpose.msra.mxu0 0.0
    %1141 = vmatpush.xpose.msra.mxu0 0.0
    %1142 = vmatpush.xpose.msra.mxu0 0.0
    %1143 = vmatpush.xpose.msra.mxu0 0.0
    %1144 = vmatpush.xpose.msra.mxu0 %v1127
    %1145 = vmatmul.f32.gmra.mxu0 %v1125
    %v1146 = vpop.f32.mrf.mxu0
    %v1147 = vadd.f32 0.0, %v1146
    %1148 = vdwg.mxu0
    %v1149 = vperm.slane %v1025, 0
    %1150 = vrot.lane.b32.xlu0 %v1149, 32
    %v1151 = vpop.permute.xlu0 %1150
    %1153 = vrot.lane.b32.xlu0 %v873, 32
    %v1154 = vpop.permute.xlu0 %1153
    %v1155 = vsel %vm54, %v1151, 0
    %v1157 = vsel %vm54, %v1154, 0
    %1159 = vmatpush.xpose.msra.mxu0 0.0
    %1160 = vmatpush.xpose.msra.mxu0 0.0
    %1161 = vmatpush.xpose.msra.mxu0 0.0
    %1162 = vmatpush.xpose.msra.mxu0 0.0
    %1163 = vmatpush.xpose.msra.mxu0 0.0
    %1164 = vmatpush.xpose.msra.mxu0 0.0
    %1165 = vmatpush.xpose.msra.mxu0 0.0
    %1166 = vmatpush.xpose.msra.mxu0 0.0
    %1167 = vmatpush.xpose.msra.mxu0 0.0
    %1168 = vmatpush.xpose.msra.mxu0 0.0
    %1169 = vmatpush.xpose.msra.mxu0 0.0
    %1170 = vmatpush.xpose.msra.mxu0 0.0
    %1171 = vmatpush.xpose.msra.mxu0 0.0
    %1172 = vmatpush.xpose.msra.mxu0 0.0
    %1173 = vmatpush.xpose.msra.mxu0 0.0
    %1174 = vmatpush.xpose.msra.mxu0 %v1157
    %1175 = vmatmul.f32.gmra.mxu0 %v1155
    %v1176 = vpop.f32.mrf.mxu0
    %v1177 = vadd.f32 0.0, %v1176
    %1178 = vdwg.mxu0
    %v1179 = vperm.slane %v1026, 0
    %1180 = vrot.lane.b32.xlu0 %v1179, 32
    %v1181 = vpop.permute.xlu0 %1180
    %1183 = vrot.lane.b32.xlu0 %v874, 32
    %v1184 = vpop.permute.xlu0 %1183
    %v1185 = vsel %vm54, %v1181, 0
    %v1187 = vsel %vm54, %v1184, 0
    %1189 = vmatpush.xpose.msra.mxu0 0.0
    %1190 = vmatpush.xpose.msra.mxu0 0.0
    %1191 = vmatpush.xpose.msra.mxu0 0.0
    %1192 = vmatpush.xpose.msra.mxu0 0.0
    %1193 = vmatpush.xpose.msra.mxu0 0.0
    %1194 = vmatpush.xpose.msra.mxu0 0.0
    %1195 = vmatpush.xpose.msra.mxu0 0.0
    %1196 = vmatpush.xpose.msra.mxu0 0.0
    %1197 = vmatpush.xpose.msra.mxu0 0.0
    %1198 = vmatpush.xpose.msra.mxu0 0.0
    %1199 = vmatpush.xpose.msra.mxu0 0.0
    %1200 = vmatpush.xpose.msra.mxu0 0.0
    %1201 = vmatpush.xpose.msra.mxu0 0.0
    %1202 = vmatpush.xpose.msra.mxu0 0.0
    %1203 = vmatpush.xpose.msra.mxu0 0.0
    %1204 = vmatpush.xpose.msra.mxu0 %v1187
    %1205 = vmatmul.f32.gmra.mxu0 %v1185
    %v1206 = vpop.f32.mrf.mxu0
    %v1207 = vadd.f32 0.0, %v1206
    %1208 = vdwg.mxu0
    %v1209 = vperm.slane %v1027, 0
    %1210 = vrot.lane.b32.xlu0 %v1209, 32
    %v1211 = vpop.permute.xlu0 %1210
    %1213 = vrot.lane.b32.xlu0 %v875, 32
    %v1214 = vpop.permute.xlu0 %1213
    %v1215 = vsel %vm54, %v1211, 0
    %v1217 = vsel %vm54, %v1214, 0
    %1219 = vmatpush.xpose.msra.mxu0 0.0
    %1220 = vmatpush.xpose.msra.mxu0 0.0
    %1221 = vmatpush.xpose.msra.mxu0 0.0
    %1222 = vmatpush.xpose.msra.mxu0 0.0
    %1223 = vmatpush.xpose.msra.mxu0 0.0
    %1224 = vmatpush.xpose.msra.mxu0 0.0
    %1225 = vmatpush.xpose.msra.mxu0 0.0
    %1226 = vmatpush.xpose.msra.mxu0 0.0
    %1227 = vmatpush.xpose.msra.mxu0 0.0
    %1228 = vmatpush.xpose.msra.mxu0 0.0
    %1229 = vmatpush.xpose.msra.mxu0 0.0
    %1230 = vmatpush.xpose.msra.mxu0 0.0
    %1231 = vmatpush.xpose.msra.mxu0 0.0
    %1232 = vmatpush.xpose.msra.mxu0 0.0
    %1233 = vmatpush.xpose.msra.mxu0 0.0
    %1234 = vmatpush.xpose.msra.mxu0 %v1217
    %1235 = vmatmul.f32.gmra.mxu0 %v1215
    %v1236 = vpop.f32.mrf.mxu0
    %v1237 = vadd.f32 0.0, %v1236
    %1238 = vdwg.mxu0
    %v1239 = vperm.slane %v1028, 0
    %1240 = vrot.lane.b32.xlu0 %v1239, 32
    %v1241 = vpop.permute.xlu0 %1240
    %1243 = vrot.lane.b32.xlu0 %v876, 32
    %v1244 = vpop.permute.xlu0 %1243
    %v1245 = vsel %vm54, %v1241, 0
    %v1247 = vsel %vm54, %v1244, 0
    %1249 = vmatpush.xpose.msra.mxu0 0.0
    %1250 = vmatpush.xpose.msra.mxu0 0.0
    %1251 = vmatpush.xpose.msra.mxu0 0.0
    %1252 = vmatpush.xpose.msra.mxu0 0.0
    %1253 = vmatpush.xpose.msra.mxu0 0.0
    %1254 = vmatpush.xpose.msra.mxu0 0.0
    %1255 = vmatpush.xpose.msra.mxu0 0.0
    %1256 = vmatpush.xpose.msra.mxu0 0.0
    %1257 = vmatpush.xpose.msra.mxu0 0.0
    %1258 = vmatpush.xpose.msra.mxu0 0.0
    %1259 = vmatpush.xpose.msra.mxu0 0.0
    %1260 = vmatpush.xpose.msra.mxu0 0.0
    %1261 = vmatpush.xpose.msra.mxu0 0.0
    %1262 = vmatpush.xpose.msra.mxu0 0.0
    %1263 = vmatpush.xpose.msra.mxu0 0.0
    %1264 = vmatpush.xpose.msra.mxu0 %v1247
    %1265 = vmatmul.f32.gmra.mxu0 %v1245
    %v1266 = vpop.f32.mrf.mxu0
    %v1267 = vadd.f32 0.0, %v1266
    %1268 = vdwg.mxu0
    %vm1269 = vcmask 57344
    %v1270 = vsel %vm1269, %v1057, -inf
    %1271 = vmax.xlane.f32.xlu0 %v1270
    %v1272 = vpop.xlane.xlu0 %1271
    %v1273 = vsel %vm1269, %v1087, -inf
    %1274 = vmax.xlane.f32.xlu0 %v1273
    %v1275 = vpop.xlane.xlu0 %1274
    %v1276 = vsel %vm1269, %v1117, -inf
    %1277 = vmax.xlane.f32.xlu0 %v1276
    %v1278 = vpop.xlane.xlu0 %1277
    %v1279 = vsel %vm1269, %v1147, -inf
    %1280 = vmax.xlane.f32.xlu0 %v1279
    %v1281 = vpop.xlane.xlu0 %1280
    %v1282 = vsel %vm1269, %v1177, -inf
    %1283 = vmax.xlane.f32.xlu0 %v1282
    %v1284 = vpop.xlane.xlu0 %1283
    %v1285 = vsel %vm1269, %v1207, -inf
    %1286 = vmax.xlane.f32.xlu0 %v1285
    %v1287 = vpop.xlane.xlu0 %1286
    %v1288 = vsel %vm1269, %v1237, -inf
    %1289 = vmax.xlane.f32.xlu0 %v1288
    %v1290 = vpop.xlane.xlu0 %1289
    %v1291 = vsel %vm1269, %v1267, -inf
    %1292 = vmax.xlane.f32.xlu0 %v1291
    %v1293 = vpop.xlane.xlu0 %1292
    %v1294 = vsub.f32 %v1057, %v1272
    %v1295 = vsub.f32 %v1087, %v1275
    %v1296 = vsub.f32 %v1117, %v1278
    %v1297 = vsub.f32 %v1147, %v1281
    %v1298 = vsub.f32 %v1177, %v1284
    %v1299 = vsub.f32 %v1207, %v1287
    %v1300 = vsub.f32 %v1237, %v1290
    %v1301 = vsub.f32 %v1267, %v1293
    %v1302 = vmul.f32 %v1294, 1.442695
    %v1303 = vpow.pop %v1302
    %v1304 = vmul.f32 %v1295, 1.442695
    %v1305 = vpow.pop %v1304
    %v1306 = vmul.f32 %v1296, 1.442695
    %v1307 = vpow.pop %v1306
    %v1308 = vmul.f32 %v1297, 1.442695
    %v1309 = vpow.pop %v1308
    %v1310 = vmul.f32 %v1298, 1.442695
    %v1311 = vpow.pop %v1310
    %v1312 = vmul.f32 %v1299, 1.442695
    %v1313 = vpow.pop %v1312
    %v1314 = vmul.f32 %v1300, 1.442695
    %v1315 = vpow.pop %v1314
    %v1316 = vmul.f32 %v1301, 1.442695
    %v1317 = vpow.pop %v1316
    %v1318 = vsel %vm1269, %v1303, 0.0
    %1319 = vadd.xlane.f32.xlu0 %v1318
    %v1320 = vpop.xlane.xlu0 %1319
    %v1321 = vsel %vm1269, %v1305, 0.0
    %1322 = vadd.xlane.f32.xlu0 %v1321
    %v1323 = vpop.xlane.xlu0 %1322
    %v1324 = vsel %vm1269, %v1307, 0.0
    %1325 = vadd.xlane.f32.xlu0 %v1324
    %v1326 = vpop.xlane.xlu0 %1325
    %v1327 = vsel %vm1269, %v1309, 0.0
    %1328 = vadd.xlane.f32.xlu0 %v1327
    %v1329 = vpop.xlane.xlu0 %1328
    %v1330 = vsel %vm1269, %v1311, 0.0
    %1331 = vadd.xlane.f32.xlu0 %v1330
    %v1332 = vpop.xlane.xlu0 %1331
    %v1333 = vsel %vm1269, %v1313, 0.0
    %1334 = vadd.xlane.f32.xlu0 %v1333
    %v1335 = vpop.xlane.xlu0 %1334
    %v1336 = vsel %vm1269, %v1315, 0.0
    %1337 = vadd.xlane.f32.xlu0 %v1336
    %v1338 = vpop.xlane.xlu0 %1337
    %v1339 = vsel %vm1269, %v1317, 0.0
    %1340 = vadd.xlane.f32.xlu0 %v1339
    %v1341 = vpop.xlane.xlu0 %1340
    %v1342 = vrcp.pop %v1320
    %v1343 = vmul.f32 %v1320, %v1342
    %v1344 = vsub.f32 1.0, %v1343
    %v1345 = vmul.f32 %v1342, %v1344
    %v1346 = vadd.f32 %v1342, %v1345
    %vm1347 = vweird.f32 %v1320
    %vm1348 = vweird.f32 %v1342
    %vm1349 = vmor %vm1347, %vm1348
    %v1350 = vsel %vm1349, %v1342, %v1346
    %v1351 = vand.u32 2147483647, %v1320
    %vm1352 = vcmp.eq.f32.partialorder %v1351, 8.507059e+37
    %v1353 = vand.u32 %v1320, 2147483648
    %v1354 = vor.u32 1.1754944e-38, %v1353
    %v1355 = vsel %vm1352, %v1354, %v1350
    %v1356 = vmul.f32 %v1303, %v1355
    %v1357 = vrcp.pop %v1323
    %v1358 = vmul.f32 %v1323, %v1357
    %v1359 = vsub.f32 1.0, %v1358
    %v1360 = vmul.f32 %v1357, %v1359
    %v1361 = vadd.f32 %v1357, %v1360
    %vm1362 = vweird.f32 %v1323
    %vm1363 = vweird.f32 %v1357
    %vm1364 = vmor %vm1362, %vm1363
    %v1365 = vsel %vm1364, %v1357, %v1361
    %v1366 = vand.u32 2147483647, %v1323
    %vm1367 = vcmp.eq.f32.partialorder %v1366, 8.507059e+37
    %v1368 = vand.u32 %v1323, 2147483648
    %v1369 = vor.u32 1.1754944e-38, %v1368
    %v1370 = vsel %vm1367, %v1369, %v1365
    %v1371 = vmul.f32 %v1305, %v1370
    %v1372 = vrcp.pop %v1326
    %v1373 = vmul.f32 %v1326, %v1372
    %v1374 = vsub.f32 1.0, %v1373
    %v1375 = vmul.f32 %v1372, %v1374
    %v1376 = vadd.f32 %v1372, %v1375
    %vm1377 = vweird.f32 %v1326
    %vm1378 = vweird.f32 %v1372
    %vm1379 = vmor %vm1377, %vm1378
    %v1380 = vsel %vm1379, %v1372, %v1376
    %v1381 = vand.u32 2147483647, %v1326
    %vm1382 = vcmp.eq.f32.partialorder %v1381, 8.507059e+37
    %v1383 = vand.u32 %v1326, 2147483648
    %v1384 = vor.u32 1.1754944e-38, %v1383
    %v1385 = vsel %vm1382, %v1384, %v1380
    %v1386 = vmul.f32 %v1307, %v1385
    %v1387 = vrcp.pop %v1329
    %v1388 = vmul.f32 %v1329, %v1387
    %v1389 = vsub.f32 1.0, %v1388
    %v1390 = vmul.f32 %v1387, %v1389
    %v1391 = vadd.f32 %v1387, %v1390
    %vm1392 = vweird.f32 %v1329
    %vm1393 = vweird.f32 %v1387
    %vm1394 = vmor %vm1392, %vm1393
    %v1395 = vsel %vm1394, %v1387, %v1391
    %v1396 = vand.u32 2147483647, %v1329
    %vm1397 = vcmp.eq.f32.partialorder %v1396, 8.507059e+37
    %v1398 = vand.u32 %v1329, 2147483648
    %v1399 = vor.u32 1.1754944e-38, %v1398
    %v1400 = vsel %vm1397, %v1399, %v1395
    %v1401 = vmul.f32 %v1309, %v1400
    %v1402 = vrcp.pop %v1332
    %v1403 = vmul.f32 %v1332, %v1402
    %v1404 = vsub.f32 1.0, %v1403
    %v1405 = vmul.f32 %v1402, %v1404
    %v1406 = vadd.f32 %v1402, %v1405
    %vm1407 = vweird.f32 %v1332
    %vm1408 = vweird.f32 %v1402
    %vm1409 = vmor %vm1407, %vm1408
    %v1410 = vsel %vm1409, %v1402, %v1406
    %v1411 = vand.u32 2147483647, %v1332
    %vm1412 = vcmp.eq.f32.partialorder %v1411, 8.507059e+37
    %v1413 = vand.u32 %v1332, 2147483648
    %v1414 = vor.u32 1.1754944e-38, %v1413
    %v1415 = vsel %vm1412, %v1414, %v1410
    %v1416 = vmul.f32 %v1311, %v1415
    %v1417 = vrcp.pop %v1335
    %v1418 = vmul.f32 %v1335, %v1417
    %v1419 = vsub.f32 1.0, %v1418
    %v1420 = vmul.f32 %v1417, %v1419
    %v1421 = vadd.f32 %v1417, %v1420
    %vm1422 = vweird.f32 %v1335
    %vm1423 = vweird.f32 %v1417
    %vm1424 = vmor %vm1422, %vm1423
    %v1425 = vsel %vm1424, %v1417, %v1421
    %v1426 = vand.u32 2147483647, %v1335
    %vm1427 = vcmp.eq.f32.partialorder %v1426, 8.507059e+37
    %v1428 = vand.u32 %v1335, 2147483648
    %v1429 = vor.u32 1.1754944e-38, %v1428
    %v1430 = vsel %vm1427, %v1429, %v1425
    %v1431 = vmul.f32 %v1313, %v1430
    %v1432 = vrcp.pop %v1338
    %v1433 = vmul.f32 %v1338, %v1432
    %v1434 = vsub.f32 1.0, %v1433
    %v1435 = vmul.f32 %v1432, %v1434
    %v1436 = vadd.f32 %v1432, %v1435
    %vm1437 = vweird.f32 %v1338
    %vm1438 = vweird.f32 %v1432
    %vm1439 = vmor %vm1437, %vm1438
    %v1440 = vsel %vm1439, %v1432, %v1436
    %v1441 = vand.u32 2147483647, %v1338
    %vm1442 = vcmp.eq.f32.partialorder %v1441, 8.507059e+37
    %v1443 = vand.u32 %v1338, 2147483648
    %v1444 = vor.u32 1.1754944e-38, %v1443
    %v1445 = vsel %vm1442, %v1444, %v1440
    %v1446 = vmul.f32 %v1315, %v1445
    %v1447 = vrcp.pop %v1341
    %v1448 = vmul.f32 %v1341, %v1447
    %v1449 = vsub.f32 1.0, %v1448
    %v1450 = vmul.f32 %v1447, %v1449
    %v1451 = vadd.f32 %v1447, %v1450
    %vm1452 = vweird.f32 %v1341
    %vm1453 = vweird.f32 %v1447
    %vm1454 = vmor %vm1452, %vm1453
    %v1455 = vsel %vm1454, %v1447, %v1451
    %v1456 = vand.u32 2147483647, %v1341
    %vm1457 = vcmp.eq.f32.partialorder %v1456, 8.507059e+37
    %v1458 = vand.u32 %v1341, 2147483648
    %v1459 = vor.u32 1.1754944e-38, %v1458
    %v1460 = vsel %vm1457, %v1459, %v1455
    %v1461 = vmul.f32 %v1317, %v1460
    %vm1463 = vcmask 64512
    %v1465 = vsel %vm1463, %v1356, 0
    %1467 = vmatpush.msra.mxu0 0.0
    %1468 = vmatpush.msra.mxu0 0.0
    %1469 = vmatpush.msra.mxu0 0.0
    %1470 = vmatpush.msra.mxu0 0.0
    %1471 = vmatpush.msra.mxu0 0.0
    %1472 = vmatpush.msra.mxu0 0.0
    %1473 = vmatpush.msra.mxu0 0.0
    %1474 = vmatpush.msra.mxu0 0.0
    %1475 = vmatpush.msra.mxu0 0.0
    %1476 = vmatpush.msra.mxu0 0.0
    %1477 = vmatpush.msra.mxu0 0.0
    %1478 = vmatpush.msra.mxu0 0.0
    %1479 = vmatpush.msra.mxu0 0.0
    %1480 = vmatpush.msra.mxu0 0.0
    %1481 = vmatpush.msra.mxu0 0.0
    %1482 = vmatpush.msra.mxu0 %v1034
    %1483 = vmatmul.f32.gmra.mxu0 %v1465
    %v1484 = vpop.f32.mrf.mxu0
    %v1485 = vadd.f32 0.0, %v1484
    %1486 = vdwg.mxu0
    %v1489 = vsel %vm1463, %v1371, 0
    %1491 = vmatpush.msra.mxu0 0.0
    %1492 = vmatpush.msra.mxu0 0.0
    %1493 = vmatpush.msra.mxu0 0.0
    %1494 = vmatpush.msra.mxu0 0.0
    %1495 = vmatpush.msra.mxu0 0.0
    %1496 = vmatpush.msra.mxu0 0.0
    %1497 = vmatpush.msra.mxu0 0.0
    %1498 = vmatpush.msra.mxu0 0.0
    %1499 = vmatpush.msra.mxu0 0.0
    %1500 = vmatpush.msra.mxu0 0.0
    %1501 = vmatpush.msra.mxu0 0.0
    %1502 = vmatpush.msra.mxu0 0.0
    %1503 = vmatpush.msra.mxu0 0.0
    %1504 = vmatpush.msra.mxu0 0.0
    %1505 = vmatpush.msra.mxu0 0.0
    %1506 = vmatpush.msra.mxu0 %v1064
    %1507 = vmatmul.f32.gmra.mxu0 %v1489
    %v1508 = vpop.f32.mrf.mxu0
    %v1509 = vadd.f32 0.0, %v1508
    %1510 = vdwg.mxu0
    %v1513 = vsel %vm1463, %v1386, 0
    %1515 = vmatpush.msra.mxu0 0.0
    %1516 = vmatpush.msra.mxu0 0.0
    %1517 = vmatpush.msra.mxu0 0.0
    %1518 = vmatpush.msra.mxu0 0.0
    %1519 = vmatpush.msra.mxu0 0.0
    %1520 = vmatpush.msra.mxu0 0.0
    %1521 = vmatpush.msra.mxu0 0.0
    %1522 = vmatpush.msra.mxu0 0.0
    %1523 = vmatpush.msra.mxu0 0.0
    %1524 = vmatpush.msra.mxu0 0.0
    %1525 = vmatpush.msra.mxu0 0.0
    %1526 = vmatpush.msra.mxu0 0.0
    %1527 = vmatpush.msra.mxu0 0.0
    %1528 = vmatpush.msra.mxu0 0.0
    %1529 = vmatpush.msra.mxu0 0.0
    %1530 = vmatpush.msra.mxu0 %v1094
    %1531 = vmatmul.f32.gmra.mxu0 %v1513
    %v1532 = vpop.f32.mrf.mxu0
    %v1533 = vadd.f32 0.0, %v1532
    %1534 = vdwg.mxu0
    %v1537 = vsel %vm1463, %v1401, 0
    %1539 = vmatpush.msra.mxu0 0.0
    %1540 = vmatpush.msra.mxu0 0.0
    %1541 = vmatpush.msra.mxu0 0.0
    %1542 = vmatpush.msra.mxu0 0.0
    %1543 = vmatpush.msra.mxu0 0.0
    %1544 = vmatpush.msra.mxu0 0.0
    %1545 = vmatpush.msra.mxu0 0.0
    %1546 = vmatpush.msra.mxu0 0.0
    %1547 = vmatpush.msra.mxu0 0.0
    %1548 = vmatpush.msra.mxu0 0.0
    %1549 = vmatpush.msra.mxu0 0.0
    %1550 = vmatpush.msra.mxu0 0.0
    %1551 = vmatpush.msra.mxu0 0.0
    %1552 = vmatpush.msra.mxu0 0.0
    %1553 = vmatpush.msra.mxu0 0.0
    %1554 = vmatpush.msra.mxu0 %v1124
    %1555 = vmatmul.f32.gmra.mxu0 %v1537
    %v1556 = vpop.f32.mrf.mxu0
    %v1557 = vadd.f32 0.0, %v1556
    %1558 = vdwg.mxu0
    %v1561 = vsel %vm1463, %v1416, 0
    %1563 = vmatpush.msra.mxu0 0.0
    %1564 = vmatpush.msra.mxu0 0.0
    %1565 = vmatpush.msra.mxu0 0.0
    %1566 = vmatpush.msra.mxu0 0.0
    %1567 = vmatpush.msra.mxu0 0.0
    %1568 = vmatpush.msra.mxu0 0.0
    %1569 = vmatpush.msra.mxu0 0.0
    %1570 = vmatpush.msra.mxu0 0.0
    %1571 = vmatpush.msra.mxu0 0.0
    %1572 = vmatpush.msra.mxu0 0.0
    %1573 = vmatpush.msra.mxu0 0.0
    %1574 = vmatpush.msra.mxu0 0.0
    %1575 = vmatpush.msra.mxu0 0.0
    %1576 = vmatpush.msra.mxu0 0.0
    %1577 = vmatpush.msra.mxu0 0.0
    %1578 = vmatpush.msra.mxu0 %v1154
    %1579 = vmatmul.f32.gmra.mxu0 %v1561
    %v1580 = vpop.f32.mrf.mxu0
    %v1581 = vadd.f32 0.0, %v1580
    %1582 = vdwg.mxu0
    %v1585 = vsel %vm1463, %v1431, 0
    %1587 = vmatpush.msra.mxu0 0.0
    %1588 = vmatpush.msra.mxu0 0.0
    %1589 = vmatpush.msra.mxu0 0.0
    %1590 = vmatpush.msra.mxu0 0.0
    %1591 = vmatpush.msra.mxu0 0.0
    %1592 = vmatpush.msra.mxu0 0.0
    %1593 = vmatpush.msra.mxu0 0.0
    %1594 = vmatpush.msra.mxu0 0.0
    %1595 = vmatpush.msra.mxu0 0.0
    %1596 = vmatpush.msra.mxu0 0.0
    %1597 = vmatpush.msra.mxu0 0.0
    %1598 = vmatpush.msra.mxu0 0.0
    %1599 = vmatpush.msra.mxu0 0.0
    %1600 = vmatpush.msra.mxu0 0.0
    %1601 = vmatpush.msra.mxu0 0.0
    %1602 = vmatpush.msra.mxu0 %v1184
    %1603 = vmatmul.f32.gmra.mxu0 %v1585
    %v1604 = vpop.f32.mrf.mxu0
    %v1605 = vadd.f32 0.0, %v1604
    %1606 = vdwg.mxu0
    %v1609 = vsel %vm1463, %v1446, 0
    %1611 = vmatpush.msra.mxu0 0.0
    %1612 = vmatpush.msra.mxu0 0.0
    %1613 = vmatpush.msra.mxu0 0.0
    %1614 = vmatpush.msra.mxu0 0.0
    %1615 = vmatpush.msra.mxu0 0.0
    %1616 = vmatpush.msra.mxu0 0.0
    %1617 = vmatpush.msra.mxu0 0.0
    %1618 = vmatpush.msra.mxu0 0.0
    %1619 = vmatpush.msra.mxu0 0.0
    %1620 = vmatpush.msra.mxu0 0.0
    %1621 = vmatpush.msra.mxu0 0.0
    %1622 = vmatpush.msra.mxu0 0.0
    %1623 = vmatpush.msra.mxu0 0.0
    %1624 = vmatpush.msra.mxu0 0.0
    %1625 = vmatpush.msra.mxu0 0.0
    %1626 = vmatpush.msra.mxu0 %v1214
    %1627 = vmatmul.f32.gmra.mxu0 %v1609
    %v1628 = vpop.f32.mrf.mxu0
    %v1629 = vadd.f32 0.0, %v1628
    %1630 = vdwg.mxu0
    %v1633 = vsel %vm1463, %v1461, 0
    %1635 = vmatpush.msra.mxu0 0.0
    %1636 = vmatpush.msra.mxu0 0.0
    %1637 = vmatpush.msra.mxu0 0.0
    %1638 = vmatpush.msra.mxu0 0.0
    %1639 = vmatpush.msra.mxu0 0.0
    %1640 = vmatpush.msra.mxu0 0.0
    %1641 = vmatpush.msra.mxu0 0.0
    %1642 = vmatpush.msra.mxu0 0.0
    %1643 = vmatpush.msra.mxu0 0.0
    %1644 = vmatpush.msra.mxu0 0.0
    %1645 = vmatpush.msra.mxu0 0.0
    %1646 = vmatpush.msra.mxu0 0.0
    %1647 = vmatpush.msra.mxu0 0.0
    %1648 = vmatpush.msra.mxu0 0.0
    %1649 = vmatpush.msra.mxu0 0.0
    %1650 = vmatpush.msra.mxu0 %v1244
    %1651 = vmatmul.f32.gmra.mxu0 %v1633
    %v1652 = vpop.f32.mrf.mxu0
    %v1653 = vadd.f32 0.0, %v1652
    %1654 = vdwg.mxu0
    %v1656 = vperm.slane %v921, 0
    %v1666 = vrot.slane %v1509, 7
    %vm1667 = vcmask 1041409
    %v1668 = vsel %vm1667, %v1666, %v1485
    %v1669 = vrot.slane %v1533, 6
    %vm1670 = vcmask 1042434
    %v1671 = vsel %vm1670, %v1669, %v1668
    %v1672 = vrot.slane %v1557, 5
    %vm1673 = vcmask 1043459
    %v1674 = vsel %vm1673, %v1672, %v1671
    %v1675 = vrot.slane %v1581, 4
    %vm1676 = vcmask 1044484
    %v1677 = vsel %vm1676, %v1675, %v1674
    %v1678 = vrot.slane %v1605, 3
    %vm1679 = vcmask 1045509
    %v1680 = vsel %vm1679, %v1678, %v1677
    %v1681 = vrot.slane %v1629, 2
    %vm1682 = vcmask 1046534
    %v1683 = vsel %vm1682, %v1681, %v1680
    %v1684 = vrot.slane %v1653, 1
    %vm1685 = vcmask 1047559
    %v1686 = vsel %vm1685, %v1684, %v1683
    %v1687 = vsel %vm54, %v1686, 0
    %1689 = vmatpush.msra.mxu0 0.0
    %1690 = vmatpush.msra.mxu0 0.0
    %1691 = vmatpush.msra.mxu0 0.0
    %1692 = vmatpush.msra.mxu0 0.0
    %1693 = vmatpush.msra.mxu0 0.0
    %1694 = vmatpush.msra.mxu0 0.0
    %1695 = vmatpush.msra.mxu0 0.0
    %1696 = vmatpush.msra.mxu0 0.0
    %1697 = vmatpush.msra.mxu0 0.0
    %1698 = vmatpush.msra.mxu0 0.0
    %1699 = vmatpush.msra.mxu0 0.0
    %1700 = vmatpush.msra.mxu0 0.0
    %1701 = vmatpush.msra.mxu0 %v920
    %1702 = vmatpush.msra.mxu0 %v919
    %1703 = vmatpush.msra.mxu0 %v918
    %1704 = vmatpush.msra.mxu0 %v917
    %1705 = vmatmul.f32.gmra.mxu0 %v1687
    %v1706 = vpop.f32.mrf.mxu0
    %v1707 = vadd.f32 %v1656, %v1706
    %1708 = vdwg.mxu0
    %v1709 = vadd.f32 %v1707, %v922
    %v1710 = vrcp.pop 0.7
    %v1711 = vmul.f32 0.7, %v1710
    %v1712 = vsub.f32 1.0, %v1711
    %v1713 = vmul.f32 %v1710, %v1712
    %v1714 = vadd.f32 %v1710, %v1713
    %vm1715 = vweird.f32 %v1710
    %v1716 = vsel %vm1715, %v1710, %v1714
    %v1717 = vmul.f32 %v1709, %v1716
    %v1718 = vsel %vm956, %v1717, -inf
    %1719 = vmax.xlane.f32.xlu0 %v1718
    %v1720 = vpop.xlane.xlu0 %1719
    %v1721 = vsub.f32 %v1717, %v1720
    %v1722 = vmul.f32 %v1721, 1.442695
    %v1723 = vpow.pop %v1722
    %v1724 = vsel %vm956, %v1723, 0.0
    %1725 = vadd.xlane.f32.xlu0 %v1724
    %v1726 = vpop.xlane.xlu0 %1725
    %v1727 = vrcp.pop %v1726
    %v1728 = vmul.f32 %v1726, %v1727
    %v1729 = vsub.f32 1.0, %v1728
    %v1730 = vmul.f32 %v1727, %v1729
    %v1731 = vadd.f32 %v1727, %v1730
    %vm1732 = vweird.f32 %v1726
    %vm1733 = vweird.f32 %v1727
    %vm1734 = vmor %vm1732, %vm1733
    %v1735 = vsel %vm1734, %v1727, %v1731
    %v1736 = vand.u32 2147483647, %v1726
    %vm1737 = vcmp.eq.f32.partialorder %v1736, 8.507059e+37
    %v1738 = vand.u32 %v1726, 2147483648
    %v1739 = vor.u32 1.1754944e-38, %v1738
    %v1740 = vsel %vm1737, %v1739, %v1735
    %v1741 = vmul.f32 %v1723, %v1740
    %v1742 = vsel %vm956, %v1741, -inf
    %1743 = vmax.xlane.f32.xlu0 %v1742
    %v1744 = vpop.xlane.xlu0 %1743
    %vm1745 = vcmp.eq.f32.partialorder %v1741, %v1744
    %v1746 = vsel %vm1745, %v929, 16
    %v1747 = vsel %vm956, %v1746, 2147483647
    %v1748 = vand.u32 %v1747, 65535
    %v1749 = vshra.s32 %v1747, 16
    %v1750 = vcvt.s32.f32 %v1748
    %v1751 = vcvt.s32.f32 %v1749
    %1752 = vmin.xlane.f32.xlu0 %v1751
    %v1753 = vpop.xlane.xlu0 %1752
    %vm1754 = vcmp.eq.f32.partialorder %v1751, %v1753
    %v1755 = vsel %vm1754, %v1750, inf
    %1756 = vmin.xlane.f32.xlu0 %v1755
    %v1757 = vpop.xlane.xlu0 %1756
    %v1758 = vcvt.f32.s32 %v1757
    %v1759 = vcvt.f32.s32 %v1753
    %v1760 = vshll.u32 %v1759, 16
    %v1761 = vadd.s32 %v1760, %v1758
    %vm1762 = vcmp.eq.s32.totalorder %v929, %v1761
    %v1763 = vsel %vm1762, 1, 0
    %v1764 = vcvt.s32.f32 %v1763
    %v1765 = vsub.f32 %v1764, %v1741
    %v1766 = vadd.f32 %v1765, %v1741
    %v1767 = vsel %vm956, %v1707, -inf
    %1768 = vmax.xlane.f32.xlu0 %v1767
    %v1769 = vpop.xlane.xlu0 %1768
    %v1770 = vsub.f32 %v1707, %v1769
    %v1771 = vmul.f32 %v1770, 1.442695
    %v1772 = vpow.pop %v1771
    %v1773 = vsel %vm956, %v1772, 0.0
    %1774 = vadd.xlane.f32.xlu0 %v1773
    %v1775 = vpop.xlane.xlu0 %1774
    %v1776 = vlog2.pop %v1775
    %v1777 = vmul.f32 %v1776, 0.6931472
    %v1778 = vadd.f32 %v1769, %v1777
    %v1779 = vmul.f32 %v1764, %v1707
    %v1780 = vsel %vm956, %v1779, 0.0
    %1781 = vadd.xlane.f32.xlu0 %v1780
    %v1782 = vpop.xlane.xlu0 %1781
    %v1783 = vsub.f32 %v1778, %v1782
    %1784 = vrot.lane.b32.xlu0 %v1020, 32
    %v1785 = vpop.permute.xlu0 %1784
    %v1786 = vsel %vm54, %v1785, 0
    %1788 = vmatpush.msra.mxu0 0.0
    %1789 = vmatpush.msra.mxu0 0.0
    %1790 = vmatpush.msra.mxu0 0.0
    %1791 = vmatpush.msra.mxu0 0.0
    %1792 = vmatpush.msra.mxu0 0.0
    %1793 = vmatpush.msra.mxu0 0.0
    %1794 = vmatpush.msra.mxu0 0.0
    %1795 = vmatpush.msra.mxu0 0.0
    %1796 = vmatpush.msra.mxu0 0.0
    %1797 = vmatpush.msra.mxu0 0.0
    %1798 = vmatpush.msra.mxu0 0.0
    %1799 = vmatpush.msra.mxu0 0.0
    %1800 = vmatpush.msra.mxu0 %v915
    %1801 = vmatpush.msra.mxu0 %v914
    %1802 = vmatpush.msra.mxu0 %v913
    %1803 = vmatpush.msra.mxu0 %v912
    %1804 = vmatmul.f32.gmra.mxu0 %v1786
    %v1805 = vpop.f32.mrf.mxu0
    %v1806 = vadd.f32 0.0, %v1805
    %1807 = vdwg.mxu0
    %v1809 = vsel %vm956, %v1764, 0
    %1811 = vmatpush.msra.mxu0 0.0
    %1812 = vmatpush.msra.mxu0 0.0
    %1813 = vmatpush.msra.mxu0 0.0
    %1814 = vmatpush.msra.mxu0 0.0
    %1815 = vmatpush.msra.mxu0 0.0
    %1816 = vmatpush.msra.mxu0 0.0
    %1817 = vmatpush.msra.mxu0 0.0
    %1818 = vmatpush.msra.mxu0 0.0
    %1819 = vmatpush.msra.mxu0 0.0
    %1820 = vmatpush.msra.mxu0 0.0
    %1821 = vmatpush.msra.mxu0 0.0
    %1822 = vmatpush.msra.mxu0 0.0
    %1823 = vmatpush.msra.mxu0 0.0
    %1824 = vmatpush.msra.mxu0 0.0
    %1825 = vmatpush.msra.mxu0 %v910
    %1826 = vmatpush.msra.mxu0 %v907
    %1827 = vmatmul.f32.gmra.mxu0 %v1809
    %v1828 = vpop.f32.mrf.mxu0
    %v1829 = vadd.f32 %v1806, %v1828
    %1830 = vdwg.mxu0
    %v1831 = vadd.f32 %v1829, %v981
    %v1832 = vxor.u32 %v1831, 2147483648
    %v1833 = vmul.f32 %v1832, 1.442695
    %v1834 = vpow.pop %v1833
    %v1835 = vadd.f32 %v1834, 1.0
    %v1836 = vrcp.pop %v1835
    %v1837 = vmul.f32 %v1835, %v1836
    %v1838 = vsub.f32 1.0, %v1837
    %v1839 = vmul.f32 %v1836, %v1838
    %v1840 = vadd.f32 %v1836, %v1839
    %vm1841 = vweird.f32 %v1835
    %vm1842 = vweird.f32 %v1836
    %vm1843 = vmor %vm1841, %vm1842
    %v1844 = vsel %vm1843, %v1836, %v1840
    %v1845 = vand.u32 2147483647, %v1835
    %vm1846 = vcmp.eq.f32.partialorder %v1845, 8.507059e+37
    %v1847 = vand.u32 %v1835, 2147483648
    %v1848 = vor.u32 1.1754944e-38, %v1847
    %v1849 = vsel %vm1846, %v1848, %v1844
    %v1850 = vmul.f32 1.0, %v1849
    %v1851 = vtanh.pop %v1831
    %v1852 = vmul.f32 %v1850, %v1014
    %1854 = vrot.lane.b32.xlu0 %v1851, 64
    %v1855 = vpop.permute.xlu0 %1854
    %v1857 = vmul.f32 %v1850, %v1855
    %1859 = vrot.lane.b32.xlu0 %v1857, 32
    %v1860 = vpop.permute.xlu0 %1859
    %v1862 = vadd.f32 %v1852, %v1860
    %v1863 = vtanh.pop %v1862
    %1865 = vrot.lane.b32.xlu0 %v1863, 64
    %v1866 = vpop.permute.xlu0 %1865
    %v1868 = vmul.f32 %v1850, %v1866
    %v1870 = vrot.slane %v1868, 1
    %v1871 = vrot.slane %v1868, 2
    %v1872 = vrot.slane %v1868, 3
    %v1873 = vrot.slane %v1868, 4
    %v1874 = vrot.slane %v1868, 5
    %v1875 = vrot.slane %v1868, 6
    %v1876 = vrot.slane %v1868, 7
    %v1877 = vperm.slane %v1868, 0
    %1878 = vrot.lane.b32.xlu0 %v1877, 32
    %v1879 = vpop.permute.xlu0 %1878
    %v1880 = vsel %vm54, %v1879, 0
    %1882 = vmatpush.xpose.msra.mxu0 0.0
    %1883 = vmatpush.xpose.msra.mxu0 0.0
    %1884 = vmatpush.xpose.msra.mxu0 0.0
    %1885 = vmatpush.xpose.msra.mxu0 0.0
    %1886 = vmatpush.xpose.msra.mxu0 0.0
    %1887 = vmatpush.xpose.msra.mxu0 0.0
    %1888 = vmatpush.xpose.msra.mxu0 0.0
    %1889 = vmatpush.xpose.msra.mxu0 0.0
    %1890 = vmatpush.xpose.msra.mxu0 0.0
    %1891 = vmatpush.xpose.msra.mxu0 0.0
    %1892 = vmatpush.xpose.msra.mxu0 0.0
    %1893 = vmatpush.xpose.msra.mxu0 0.0
    %1894 = vmatpush.xpose.msra.mxu0 0.0
    %1895 = vmatpush.xpose.msra.mxu0 0.0
    %1896 = vmatpush.xpose.msra.mxu0 0.0
    %1897 = vmatpush.xpose.msra.mxu0 %v1037
    %1898 = vmatmul.f32.gmra.mxu0 %v1880
    %v1899 = vpop.f32.mrf.mxu0
    %v1900 = vadd.f32 0.0, %v1899
    %1901 = vdwg.mxu0
    %v1902 = vperm.slane %v1870, 0
    %1903 = vrot.lane.b32.xlu0 %v1902, 32
    %v1904 = vpop.permute.xlu0 %1903
    %v1905 = vsel %vm54, %v1904, 0
    %1907 = vmatpush.xpose.msra.mxu0 0.0
    %1908 = vmatpush.xpose.msra.mxu0 0.0
    %1909 = vmatpush.xpose.msra.mxu0 0.0
    %1910 = vmatpush.xpose.msra.mxu0 0.0
    %1911 = vmatpush.xpose.msra.mxu0 0.0
    %1912 = vmatpush.xpose.msra.mxu0 0.0
    %1913 = vmatpush.xpose.msra.mxu0 0.0
    %1914 = vmatpush.xpose.msra.mxu0 0.0
    %1915 = vmatpush.xpose.msra.mxu0 0.0
    %1916 = vmatpush.xpose.msra.mxu0 0.0
    %1917 = vmatpush.xpose.msra.mxu0 0.0
    %1918 = vmatpush.xpose.msra.mxu0 0.0
    %1919 = vmatpush.xpose.msra.mxu0 0.0
    %1920 = vmatpush.xpose.msra.mxu0 0.0
    %1921 = vmatpush.xpose.msra.mxu0 0.0
    %1922 = vmatpush.xpose.msra.mxu0 %v1067
    %1923 = vmatmul.f32.gmra.mxu0 %v1905
    %v1924 = vpop.f32.mrf.mxu0
    %v1925 = vadd.f32 0.0, %v1924
    %1926 = vdwg.mxu0
    %v1927 = vperm.slane %v1871, 0
    %1928 = vrot.lane.b32.xlu0 %v1927, 32
    %v1929 = vpop.permute.xlu0 %1928
    %v1930 = vsel %vm54, %v1929, 0
    %1932 = vmatpush.xpose.msra.mxu0 0.0
    %1933 = vmatpush.xpose.msra.mxu0 0.0
    %1934 = vmatpush.xpose.msra.mxu0 0.0
    %1935 = vmatpush.xpose.msra.mxu0 0.0
    %1936 = vmatpush.xpose.msra.mxu0 0.0
    %1937 = vmatpush.xpose.msra.mxu0 0.0
    %1938 = vmatpush.xpose.msra.mxu0 0.0
    %1939 = vmatpush.xpose.msra.mxu0 0.0
    %1940 = vmatpush.xpose.msra.mxu0 0.0
    %1941 = vmatpush.xpose.msra.mxu0 0.0
    %1942 = vmatpush.xpose.msra.mxu0 0.0
    %1943 = vmatpush.xpose.msra.mxu0 0.0
    %1944 = vmatpush.xpose.msra.mxu0 0.0
    %1945 = vmatpush.xpose.msra.mxu0 0.0
    %1946 = vmatpush.xpose.msra.mxu0 0.0
    %1947 = vmatpush.xpose.msra.mxu0 %v1097
    %1948 = vmatmul.f32.gmra.mxu0 %v1930
    %v1949 = vpop.f32.mrf.mxu0
    %v1950 = vadd.f32 0.0, %v1949
    %1951 = vdwg.mxu0
    %v1952 = vperm.slane %v1872, 0
    %1953 = vrot.lane.b32.xlu0 %v1952, 32
    %v1954 = vpop.permute.xlu0 %1953
    %v1955 = vsel %vm54, %v1954, 0
    %1957 = vmatpush.xpose.msra.mxu0 0.0
    %1958 = vmatpush.xpose.msra.mxu0 0.0
    %1959 = vmatpush.xpose.msra.mxu0 0.0
    %1960 = vmatpush.xpose.msra.mxu0 0.0
    %1961 = vmatpush.xpose.msra.mxu0 0.0
    %1962 = vmatpush.xpose.msra.mxu0 0.0
    %1963 = vmatpush.xpose.msra.mxu0 0.0
    %1964 = vmatpush.xpose.msra.mxu0 0.0
    %1965 = vmatpush.xpose.msra.mxu0 0.0
    %1966 = vmatpush.xpose.msra.mxu0 0.0
    %1967 = vmatpush.xpose.msra.mxu0 0.0
    %1968 = vmatpush.xpose.msra.mxu0 0.0
    %1969 = vmatpush.xpose.msra.mxu0 0.0
    %1970 = vmatpush.xpose.msra.mxu0 0.0
    %1971 = vmatpush.xpose.msra.mxu0 0.0
    %1972 = vmatpush.xpose.msra.mxu0 %v1127
    %1973 = vmatmul.f32.gmra.mxu0 %v1955
    %v1974 = vpop.f32.mrf.mxu0
    %v1975 = vadd.f32 0.0, %v1974
    %1976 = vdwg.mxu0
    %v1977 = vperm.slane %v1873, 0
    %1978 = vrot.lane.b32.xlu0 %v1977, 32
    %v1979 = vpop.permute.xlu0 %1978
    %v1980 = vsel %vm54, %v1979, 0
    %1982 = vmatpush.xpose.msra.mxu0 0.0
    %1983 = vmatpush.xpose.msra.mxu0 0.0
    %1984 = vmatpush.xpose.msra.mxu0 0.0
    %1985 = vmatpush.xpose.msra.mxu0 0.0
    %1986 = vmatpush.xpose.msra.mxu0 0.0
    %1987 = vmatpush.xpose.msra.mxu0 0.0
    %1988 = vmatpush.xpose.msra.mxu0 0.0
    %1989 = vmatpush.xpose.msra.mxu0 0.0
    %1990 = vmatpush.xpose.msra.mxu0 0.0
    %1991 = vmatpush.xpose.msra.mxu0 0.0
    %1992 = vmatpush.xpose.msra.mxu0 0.0
    %1993 = vmatpush.xpose.msra.mxu0 0.0
    %1994 = vmatpush.xpose.msra.mxu0 0.0
    %1995 = vmatpush.xpose.msra.mxu0 0.0
    %1996 = vmatpush.xpose.msra.mxu0 0.0
    %1997 = vmatpush.xpose.msra.mxu0 %v1157
    %1998 = vmatmul.f32.gmra.mxu0 %v1980
    %v1999 = vpop.f32.mrf.mxu0
    %v2000 = vadd.f32 0.0, %v1999
    %2001 = vdwg.mxu0
    %v2002 = vperm.slane %v1874, 0
    %2003 = vrot.lane.b32.xlu0 %v2002, 32
    %v2004 = vpop.permute.xlu0 %2003
    %v2005 = vsel %vm54, %v2004, 0
    %2007 = vmatpush.xpose.msra.mxu0 0.0
    %2008 = vmatpush.xpose.msra.mxu0 0.0
    %2009 = vmatpush.xpose.msra.mxu0 0.0
    %2010 = vmatpush.xpose.msra.mxu0 0.0
    %2011 = vmatpush.xpose.msra.mxu0 0.0
    %2012 = vmatpush.xpose.msra.mxu0 0.0
    %2013 = vmatpush.xpose.msra.mxu0 0.0
    %2014 = vmatpush.xpose.msra.mxu0 0.0
    %2015 = vmatpush.xpose.msra.mxu0 0.0
    %2016 = vmatpush.xpose.msra.mxu0 0.0
    %2017 = vmatpush.xpose.msra.mxu0 0.0
    %2018 = vmatpush.xpose.msra.mxu0 0.0
    %2019 = vmatpush.xpose.msra.mxu0 0.0
    %2020 = vmatpush.xpose.msra.mxu0 0.0
    %2021 = vmatpush.xpose.msra.mxu0 0.0
    %2022 = vmatpush.xpose.msra.mxu0 %v1187
    %2023 = vmatmul.f32.gmra.mxu0 %v2005
    %v2024 = vpop.f32.mrf.mxu0
    %v2025 = vadd.f32 0.0, %v2024
    %2026 = vdwg.mxu0
    %v2027 = vperm.slane %v1875, 0
    %2028 = vrot.lane.b32.xlu0 %v2027, 32
    %v2029 = vpop.permute.xlu0 %2028
    %v2030 = vsel %vm54, %v2029, 0
    %2032 = vmatpush.xpose.msra.mxu0 0.0
    %2033 = vmatpush.xpose.msra.mxu0 0.0
    %2034 = vmatpush.xpose.msra.mxu0 0.0
    %2035 = vmatpush.xpose.msra.mxu0 0.0
    %2036 = vmatpush.xpose.msra.mxu0 0.0
    %2037 = vmatpush.xpose.msra.mxu0 0.0
    %2038 = vmatpush.xpose.msra.mxu0 0.0
    %2039 = vmatpush.xpose.msra.mxu0 0.0
    %2040 = vmatpush.xpose.msra.mxu0 0.0
    %2041 = vmatpush.xpose.msra.mxu0 0.0
    %2042 = vmatpush.xpose.msra.mxu0 0.0
    %2043 = vmatpush.xpose.msra.mxu0 0.0
    %2044 = vmatpush.xpose.msra.mxu0 0.0
    %2045 = vmatpush.xpose.msra.mxu0 0.0
    %2046 = vmatpush.xpose.msra.mxu0 0.0
    %2047 = vmatpush.xpose.msra.mxu0 %v1217
    %2048 = vmatmul.f32.gmra.mxu0 %v2030
    %v2049 = vpop.f32.mrf.mxu0
    %v2050 = vadd.f32 0.0, %v2049
    %2051 = vdwg.mxu0
    %v2052 = vperm.slane %v1876, 0
    %2053 = vrot.lane.b32.xlu0 %v2052, 32
    %v2054 = vpop.permute.xlu0 %2053
    %v2055 = vsel %vm54, %v2054, 0
    %2057 = vmatpush.xpose.msra.mxu0 0.0
    %2058 = vmatpush.xpose.msra.mxu0 0.0
    %2059 = vmatpush.xpose.msra.mxu0 0.0
    %2060 = vmatpush.xpose.msra.mxu0 0.0
    %2061 = vmatpush.xpose.msra.mxu0 0.0
    %2062 = vmatpush.xpose.msra.mxu0 0.0
    %2063 = vmatpush.xpose.msra.mxu0 0.0
    %2064 = vmatpush.xpose.msra.mxu0 0.0
    %2065 = vmatpush.xpose.msra.mxu0 0.0
    %2066 = vmatpush.xpose.msra.mxu0 0.0
    %2067 = vmatpush.xpose.msra.mxu0 0.0
    %2068 = vmatpush.xpose.msra.mxu0 0.0
    %2069 = vmatpush.xpose.msra.mxu0 0.0
    %2070 = vmatpush.xpose.msra.mxu0 0.0
    %2071 = vmatpush.xpose.msra.mxu0 0.0
    %2072 = vmatpush.xpose.msra.mxu0 %v1247
    %2073 = vmatmul.f32.gmra.mxu0 %v2055
    %v2074 = vpop.f32.mrf.mxu0
    %v2075 = vadd.f32 0.0, %v2074
    %2076 = vdwg.mxu0
    %v2077 = vsel %vm1269, %v1900, -inf
    %2078 = vmax.xlane.f32.xlu0 %v2077
    %v2079 = vpop.xlane.xlu0 %2078
    %v2080 = vsel %vm1269, %v1925, -inf
    %2081 = vmax.xlane.f32.xlu0 %v2080
    %v2082 = vpop.xlane.xlu0 %2081
    %v2083 = vsel %vm1269, %v1950, -inf
    %2084 = vmax.xlane.f32.xlu0 %v2083
    %v2085 = vpop.xlane.xlu0 %2084
    %v2086 = vsel %vm1269, %v1975, -inf
    %2087 = vmax.xlane.f32.xlu0 %v2086
    %v2088 = vpop.xlane.xlu0 %2087
    %v2089 = vsel %vm1269, %v2000, -inf
    %2090 = vmax.xlane.f32.xlu0 %v2089
    %v2091 = vpop.xlane.xlu0 %2090
    %v2092 = vsel %vm1269, %v2025, -inf
    %2093 = vmax.xlane.f32.xlu0 %v2092
    %v2094 = vpop.xlane.xlu0 %2093
    %v2095 = vsel %vm1269, %v2050, -inf
    %2096 = vmax.xlane.f32.xlu0 %v2095
    %v2097 = vpop.xlane.xlu0 %2096
    %v2098 = vsel %vm1269, %v2075, -inf
    %2099 = vmax.xlane.f32.xlu0 %v2098
    %v2100 = vpop.xlane.xlu0 %2099
    %v2101 = vsub.f32 %v1900, %v2079
    %v2102 = vsub.f32 %v1925, %v2082
    %v2103 = vsub.f32 %v1950, %v2085
    %v2104 = vsub.f32 %v1975, %v2088
    %v2105 = vsub.f32 %v2000, %v2091
    %v2106 = vsub.f32 %v2025, %v2094
    %v2107 = vsub.f32 %v2050, %v2097
    %v2108 = vsub.f32 %v2075, %v2100
    %v2109 = vmul.f32 %v2101, 1.442695
    %v2110 = vpow.pop %v2109
    %v2111 = vmul.f32 %v2102, 1.442695
    %v2112 = vpow.pop %v2111
    %v2113 = vmul.f32 %v2103, 1.442695
    %v2114 = vpow.pop %v2113
    %v2115 = vmul.f32 %v2104, 1.442695
    %v2116 = vpow.pop %v2115
    %v2117 = vmul.f32 %v2105, 1.442695
    %v2118 = vpow.pop %v2117
    %v2119 = vmul.f32 %v2106, 1.442695
    %v2120 = vpow.pop %v2119
    %v2121 = vmul.f32 %v2107, 1.442695
    %v2122 = vpow.pop %v2121
    %v2123 = vmul.f32 %v2108, 1.442695
    %v2124 = vpow.pop %v2123
    %v2125 = vsel %vm1269, %v2110, 0.0
    %2126 = vadd.xlane.f32.xlu0 %v2125
    %v2127 = vpop.xlane.xlu0 %2126
    %v2128 = vsel %vm1269, %v2112, 0.0
    %2129 = vadd.xlane.f32.xlu0 %v2128
    %v2130 = vpop.xlane.xlu0 %2129
    %v2131 = vsel %vm1269, %v2114, 0.0
    %2132 = vadd.xlane.f32.xlu0 %v2131
    %v2133 = vpop.xlane.xlu0 %2132
    %v2134 = vsel %vm1269, %v2116, 0.0
    %2135 = vadd.xlane.f32.xlu0 %v2134
    %v2136 = vpop.xlane.xlu0 %2135
    %v2137 = vsel %vm1269, %v2118, 0.0
    %2138 = vadd.xlane.f32.xlu0 %v2137
    %v2139 = vpop.xlane.xlu0 %2138
    %v2140 = vsel %vm1269, %v2120, 0.0
    %2141 = vadd.xlane.f32.xlu0 %v2140
    %v2142 = vpop.xlane.xlu0 %2141
    %v2143 = vsel %vm1269, %v2122, 0.0
    %2144 = vadd.xlane.f32.xlu0 %v2143
    %v2145 = vpop.xlane.xlu0 %2144
    %v2146 = vsel %vm1269, %v2124, 0.0
    %2147 = vadd.xlane.f32.xlu0 %v2146
    %v2148 = vpop.xlane.xlu0 %2147
    %v2149 = vrcp.pop %v2127
    %v2150 = vmul.f32 %v2127, %v2149
    %v2151 = vsub.f32 1.0, %v2150
    %v2152 = vmul.f32 %v2149, %v2151
    %v2153 = vadd.f32 %v2149, %v2152
    %vm2154 = vweird.f32 %v2127
    %vm2155 = vweird.f32 %v2149
    %vm2156 = vmor %vm2154, %vm2155
    %v2157 = vsel %vm2156, %v2149, %v2153
    %v2158 = vand.u32 2147483647, %v2127
    %vm2159 = vcmp.eq.f32.partialorder %v2158, 8.507059e+37
    %v2160 = vand.u32 %v2127, 2147483648
    %v2161 = vor.u32 1.1754944e-38, %v2160
    %v2162 = vsel %vm2159, %v2161, %v2157
    %v2163 = vmul.f32 %v2110, %v2162
    %v2164 = vrcp.pop %v2130
    %v2165 = vmul.f32 %v2130, %v2164
    %v2166 = vsub.f32 1.0, %v2165
    %v2167 = vmul.f32 %v2164, %v2166
    %v2168 = vadd.f32 %v2164, %v2167
    %vm2169 = vweird.f32 %v2130
    %vm2170 = vweird.f32 %v2164
    %vm2171 = vmor %vm2169, %vm2170
    %v2172 = vsel %vm2171, %v2164, %v2168
    %v2173 = vand.u32 2147483647, %v2130
    %vm2174 = vcmp.eq.f32.partialorder %v2173, 8.507059e+37
    %v2175 = vand.u32 %v2130, 2147483648
    %v2176 = vor.u32 1.1754944e-38, %v2175
    %v2177 = vsel %vm2174, %v2176, %v2172
    %v2178 = vmul.f32 %v2112, %v2177
    %v2179 = vrcp.pop %v2133
    %v2180 = vmul.f32 %v2133, %v2179
    %v2181 = vsub.f32 1.0, %v2180
    %v2182 = vmul.f32 %v2179, %v2181
    %v2183 = vadd.f32 %v2179, %v2182
    %vm2184 = vweird.f32 %v2133
    %vm2185 = vweird.f32 %v2179
    %vm2186 = vmor %vm2184, %vm2185
    %v2187 = vsel %vm2186, %v2179, %v2183
    %v2188 = vand.u32 2147483647, %v2133
    %vm2189 = vcmp.eq.f32.partialorder %v2188, 8.507059e+37
    %v2190 = vand.u32 %v2133, 2147483648
    %v2191 = vor.u32 1.1754944e-38, %v2190
    %v2192 = vsel %vm2189, %v2191, %v2187
    %v2193 = vmul.f32 %v2114, %v2192
    %v2194 = vrcp.pop %v2136
    %v2195 = vmul.f32 %v2136, %v2194
    %v2196 = vsub.f32 1.0, %v2195
    %v2197 = vmul.f32 %v2194, %v2196
    %v2198 = vadd.f32 %v2194, %v2197
    %vm2199 = vweird.f32 %v2136
    %vm2200 = vweird.f32 %v2194
    %vm2201 = vmor %vm2199, %vm2200
    %v2202 = vsel %vm2201, %v2194, %v2198
    %v2203 = vand.u32 2147483647, %v2136
    %vm2204 = vcmp.eq.f32.partialorder %v2203, 8.507059e+37
    %v2205 = vand.u32 %v2136, 2147483648
    %v2206 = vor.u32 1.1754944e-38, %v2205
    %v2207 = vsel %vm2204, %v2206, %v2202
    %v2208 = vmul.f32 %v2116, %v2207
    %v2209 = vrcp.pop %v2139
    %v2210 = vmul.f32 %v2139, %v2209
    %v2211 = vsub.f32 1.0, %v2210
    %v2212 = vmul.f32 %v2209, %v2211
    %v2213 = vadd.f32 %v2209, %v2212
    %vm2214 = vweird.f32 %v2139
    %vm2215 = vweird.f32 %v2209
    %vm2216 = vmor %vm2214, %vm2215
    %v2217 = vsel %vm2216, %v2209, %v2213
    %v2218 = vand.u32 2147483647, %v2139
    %vm2219 = vcmp.eq.f32.partialorder %v2218, 8.507059e+37
    %v2220 = vand.u32 %v2139, 2147483648
    %v2221 = vor.u32 1.1754944e-38, %v2220
    %v2222 = vsel %vm2219, %v2221, %v2217
    %v2223 = vmul.f32 %v2118, %v2222
    %v2224 = vrcp.pop %v2142
    %v2225 = vmul.f32 %v2142, %v2224
    %v2226 = vsub.f32 1.0, %v2225
    %v2227 = vmul.f32 %v2224, %v2226
    %v2228 = vadd.f32 %v2224, %v2227
    %vm2229 = vweird.f32 %v2142
    %vm2230 = vweird.f32 %v2224
    %vm2231 = vmor %vm2229, %vm2230
    %v2232 = vsel %vm2231, %v2224, %v2228
    %v2233 = vand.u32 2147483647, %v2142
    %vm2234 = vcmp.eq.f32.partialorder %v2233, 8.507059e+37
    %v2235 = vand.u32 %v2142, 2147483648
    %v2236 = vor.u32 1.1754944e-38, %v2235
    %v2237 = vsel %vm2234, %v2236, %v2232
    %v2238 = vmul.f32 %v2120, %v2237
    %v2239 = vrcp.pop %v2145
    %v2240 = vmul.f32 %v2145, %v2239
    %v2241 = vsub.f32 1.0, %v2240
    %v2242 = vmul.f32 %v2239, %v2241
    %v2243 = vadd.f32 %v2239, %v2242
    %vm2244 = vweird.f32 %v2145
    %vm2245 = vweird.f32 %v2239
    %vm2246 = vmor %vm2244, %vm2245
    %v2247 = vsel %vm2246, %v2239, %v2243
    %v2248 = vand.u32 2147483647, %v2145
    %vm2249 = vcmp.eq.f32.partialorder %v2248, 8.507059e+37
    %v2250 = vand.u32 %v2145, 2147483648
    %v2251 = vor.u32 1.1754944e-38, %v2250
    %v2252 = vsel %vm2249, %v2251, %v2247
    %v2253 = vmul.f32 %v2122, %v2252
    %v2254 = vrcp.pop %v2148
    %v2255 = vmul.f32 %v2148, %v2254
    %v2256 = vsub.f32 1.0, %v2255
    %v2257 = vmul.f32 %v2254, %v2256
    %v2258 = vadd.f32 %v2254, %v2257
    %vm2259 = vweird.f32 %v2148
    %vm2260 = vweird.f32 %v2254
    %vm2261 = vmor %vm2259, %vm2260
    %v2262 = vsel %vm2261, %v2254, %v2258
    %v2263 = vand.u32 2147483647, %v2148
    %vm2264 = vcmp.eq.f32.partialorder %v2263, 8.507059e+37
    %v2265 = vand.u32 %v2148, 2147483648
    %v2266 = vor.u32 1.1754944e-38, %v2265
    %v2267 = vsel %vm2264, %v2266, %v2262
    %v2268 = vmul.f32 %v2124, %v2267
    %v2270 = vsel %vm1463, %v2163, 0
    %2272 = vmatpush.msra.mxu0 0.0
    %2273 = vmatpush.msra.mxu0 0.0
    %2274 = vmatpush.msra.mxu0 0.0
    %2275 = vmatpush.msra.mxu0 0.0
    %2276 = vmatpush.msra.mxu0 0.0
    %2277 = vmatpush.msra.mxu0 0.0
    %2278 = vmatpush.msra.mxu0 0.0
    %2279 = vmatpush.msra.mxu0 0.0
    %2280 = vmatpush.msra.mxu0 0.0
    %2281 = vmatpush.msra.mxu0 0.0
    %2282 = vmatpush.msra.mxu0 0.0
    %2283 = vmatpush.msra.mxu0 0.0
    %2284 = vmatpush.msra.mxu0 0.0
    %2285 = vmatpush.msra.mxu0 0.0
    %2286 = vmatpush.msra.mxu0 0.0
    %2287 = vmatpush.msra.mxu0 %v1034
    %2288 = vmatmul.f32.gmra.mxu0 %v2270
    %v2289 = vpop.f32.mrf.mxu0
    %v2290 = vadd.f32 0.0, %v2289
    %2291 = vdwg.mxu0
    %v2293 = vsel %vm1463, %v2178, 0
    %2295 = vmatpush.msra.mxu0 0.0
    %2296 = vmatpush.msra.mxu0 0.0
    %2297 = vmatpush.msra.mxu0 0.0
    %2298 = vmatpush.msra.mxu0 0.0
    %2299 = vmatpush.msra.mxu0 0.0
    %2300 = vmatpush.msra.mxu0 0.0
    %2301 = vmatpush.msra.mxu0 0.0
    %2302 = vmatpush.msra.mxu0 0.0
    %2303 = vmatpush.msra.mxu0 0.0
    %2304 = vmatpush.msra.mxu0 0.0
    %2305 = vmatpush.msra.mxu0 0.0
    %2306 = vmatpush.msra.mxu0 0.0
    %2307 = vmatpush.msra.mxu0 0.0
    %2308 = vmatpush.msra.mxu0 0.0
    %2309 = vmatpush.msra.mxu0 0.0
    %2310 = vmatpush.msra.mxu0 %v1064
    %2311 = vmatmul.f32.gmra.mxu0 %v2293
    %v2312 = vpop.f32.mrf.mxu0
    %v2313 = vadd.f32 0.0, %v2312
    %2314 = vdwg.mxu0
    %v2316 = vsel %vm1463, %v2193, 0
    %2318 = vmatpush.msra.mxu0 0.0
    %2319 = vmatpush.msra.mxu0 0.0
    %2320 = vmatpush.msra.mxu0 0.0
    %2321 = vmatpush.msra.mxu0 0.0
    %2322 = vmatpush.msra.mxu0 0.0
    %2323 = vmatpush.msra.mxu0 0.0
    %2324 = vmatpush.msra.mxu0 0.0
    %2325 = vmatpush.msra.mxu0 0.0
    %2326 = vmatpush.msra.mxu0 0.0
    %2327 = vmatpush.msra.mxu0 0.0
    %2328 = vmatpush.msra.mxu0 0.0
    %2329 = vmatpush.msra.mxu0 0.0
    %2330 = vmatpush.msra.mxu0 0.0
    %2331 = vmatpush.msra.mxu0 0.0
    %2332 = vmatpush.msra.mxu0 0.0
    %2333 = vmatpush.msra.mxu0 %v1094
    %2334 = vmatmul.f32.gmra.mxu0 %v2316
    %v2335 = vpop.f32.mrf.mxu0
    %v2336 = vadd.f32 0.0, %v2335
    %2337 = vdwg.mxu0
    %v2339 = vsel %vm1463, %v2208, 0
    %2341 = vmatpush.msra.mxu0 0.0
    %2342 = vmatpush.msra.mxu0 0.0
    %2343 = vmatpush.msra.mxu0 0.0
    %2344 = vmatpush.msra.mxu0 0.0
    %2345 = vmatpush.msra.mxu0 0.0
    %2346 = vmatpush.msra.mxu0 0.0
    %2347 = vmatpush.msra.mxu0 0.0
    %2348 = vmatpush.msra.mxu0 0.0
    %2349 = vmatpush.msra.mxu0 0.0
    %2350 = vmatpush.msra.mxu0 0.0
    %2351 = vmatpush.msra.mxu0 0.0
    %2352 = vmatpush.msra.mxu0 0.0
    %2353 = vmatpush.msra.mxu0 0.0
    %2354 = vmatpush.msra.mxu0 0.0
    %2355 = vmatpush.msra.mxu0 0.0
    %2356 = vmatpush.msra.mxu0 %v1124
    %2357 = vmatmul.f32.gmra.mxu0 %v2339
    %v2358 = vpop.f32.mrf.mxu0
    %v2359 = vadd.f32 0.0, %v2358
    %2360 = vdwg.mxu0
    %v2362 = vsel %vm1463, %v2223, 0
    %2364 = vmatpush.msra.mxu0 0.0
    %2365 = vmatpush.msra.mxu0 0.0
    %2366 = vmatpush.msra.mxu0 0.0
    %2367 = vmatpush.msra.mxu0 0.0
    %2368 = vmatpush.msra.mxu0 0.0
    %2369 = vmatpush.msra.mxu0 0.0
    %2370 = vmatpush.msra.mxu0 0.0
    %2371 = vmatpush.msra.mxu0 0.0
    %2372 = vmatpush.msra.mxu0 0.0
    %2373 = vmatpush.msra.mxu0 0.0
    %2374 = vmatpush.msra.mxu0 0.0
    %2375 = vmatpush.msra.mxu0 0.0
    %2376 = vmatpush.msra.mxu0 0.0
    %2377 = vmatpush.msra.mxu0 0.0
    %2378 = vmatpush.msra.mxu0 0.0
    %2379 = vmatpush.msra.mxu0 %v1154
    %2380 = vmatmul.f32.gmra.mxu0 %v2362
    %v2381 = vpop.f32.mrf.mxu0
    %v2382 = vadd.f32 0.0, %v2381
    %2383 = vdwg.mxu0
    %v2385 = vsel %vm1463, %v2238, 0
    %2387 = vmatpush.msra.mxu0 0.0
    %2388 = vmatpush.msra.mxu0 0.0
    %2389 = vmatpush.msra.mxu0 0.0
    %2390 = vmatpush.msra.mxu0 0.0
    %2391 = vmatpush.msra.mxu0 0.0
    %2392 = vmatpush.msra.mxu0 0.0
    %2393 = vmatpush.msra.mxu0 0.0
    %2394 = vmatpush.msra.mxu0 0.0
    %2395 = vmatpush.msra.mxu0 0.0
    %2396 = vmatpush.msra.mxu0 0.0
    %2397 = vmatpush.msra.mxu0 0.0
    %2398 = vmatpush.msra.mxu0 0.0
    %2399 = vmatpush.msra.mxu0 0.0
    %2400 = vmatpush.msra.mxu0 0.0
    %2401 = vmatpush.msra.mxu0 0.0
    %2402 = vmatpush.msra.mxu0 %v1184
    %2403 = vmatmul.f32.gmra.mxu0 %v2385
    %v2404 = vpop.f32.mrf.mxu0
    %v2405 = vadd.f32 0.0, %v2404
    %2406 = vdwg.mxu0
    %v2408 = vsel %vm1463, %v2253, 0
    %2410 = vmatpush.msra.mxu0 0.0
    %2411 = vmatpush.msra.mxu0 0.0
    %2412 = vmatpush.msra.mxu0 0.0
    %2413 = vmatpush.msra.mxu0 0.0
    %2414 = vmatpush.msra.mxu0 0.0
    %2415 = vmatpush.msra.mxu0 0.0
    %2416 = vmatpush.msra.mxu0 0.0
    %2417 = vmatpush.msra.mxu0 0.0
    %2418 = vmatpush.msra.mxu0 0.0
    %2419 = vmatpush.msra.mxu0 0.0
    %2420 = vmatpush.msra.mxu0 0.0
    %2421 = vmatpush.msra.mxu0 0.0
    %2422 = vmatpush.msra.mxu0 0.0
    %2423 = vmatpush.msra.mxu0 0.0
    %2424 = vmatpush.msra.mxu0 0.0
    %2425 = vmatpush.msra.mxu0 %v1214
    %2426 = vmatmul.f32.gmra.mxu0 %v2408
    %v2427 = vpop.f32.mrf.mxu0
    %v2428 = vadd.f32 0.0, %v2427
    %2429 = vdwg.mxu0
    %v2431 = vsel %vm1463, %v2268, 0
    %2433 = vmatpush.msra.mxu0 0.0
    %2434 = vmatpush.msra.mxu0 0.0
    %2435 = vmatpush.msra.mxu0 0.0
    %2436 = vmatpush.msra.mxu0 0.0
    %2437 = vmatpush.msra.mxu0 0.0
    %2438 = vmatpush.msra.mxu0 0.0
    %2439 = vmatpush.msra.mxu0 0.0
    %2440 = vmatpush.msra.mxu0 0.0
    %2441 = vmatpush.msra.mxu0 0.0
    %2442 = vmatpush.msra.mxu0 0.0
    %2443 = vmatpush.msra.mxu0 0.0
    %2444 = vmatpush.msra.mxu0 0.0
    %2445 = vmatpush.msra.mxu0 0.0
    %2446 = vmatpush.msra.mxu0 0.0
    %2447 = vmatpush.msra.mxu0 0.0
    %2448 = vmatpush.msra.mxu0 %v1244
    %2449 = vmatmul.f32.gmra.mxu0 %v2431
    %v2450 = vpop.f32.mrf.mxu0
    %v2451 = vadd.f32 0.0, %v2450
    %2452 = vdwg.mxu0
    %v2461 = vrot.slane %v2313, 7
    %v2462 = vsel %vm1667, %v2461, %v2290
    %v2463 = vrot.slane %v2336, 6
    %v2464 = vsel %vm1670, %v2463, %v2462
    %v2465 = vrot.slane %v2359, 5
    %v2466 = vsel %vm1673, %v2465, %v2464
    %v2467 = vrot.slane %v2382, 4
    %v2468 = vsel %vm1676, %v2467, %v2466
    %v2469 = vrot.slane %v2405, 3
    %v2470 = vsel %vm1679, %v2469, %v2468
    %v2471 = vrot.slane %v2428, 2
    %v2472 = vsel %vm1682, %v2471, %v2470
    %v2473 = vrot.slane %v2451, 1
    %v2474 = vsel %vm1685, %v2473, %v2472
    %v2475 = vsel %vm54, %v2474, 0
    %2477 = vmatpush.msra.mxu0 0.0
    %2478 = vmatpush.msra.mxu0 0.0
    %2479 = vmatpush.msra.mxu0 0.0
    %2480 = vmatpush.msra.mxu0 0.0
    %2481 = vmatpush.msra.mxu0 0.0
    %2482 = vmatpush.msra.mxu0 0.0
    %2483 = vmatpush.msra.mxu0 0.0
    %2484 = vmatpush.msra.mxu0 0.0
    %2485 = vmatpush.msra.mxu0 0.0
    %2486 = vmatpush.msra.mxu0 0.0
    %2487 = vmatpush.msra.mxu0 0.0
    %2488 = vmatpush.msra.mxu0 0.0
    %2489 = vmatpush.msra.mxu0 %v920
    %2490 = vmatpush.msra.mxu0 %v919
    %2491 = vmatpush.msra.mxu0 %v918
    %2492 = vmatpush.msra.mxu0 %v917
    %2493 = vmatmul.f32.gmra.mxu0 %v2475
    %v2494 = vpop.f32.mrf.mxu0
    %v2495 = vadd.f32 %v1656, %v2494
    %2496 = vdwg.mxu0
    %v2497 = vadd.f32 %v2495, %v923
    %v2498 = vmul.f32 %v2497, %v1716
    %v2499 = vsel %vm956, %v2498, -inf
    %2500 = vmax.xlane.f32.xlu0 %v2499
    %v2501 = vpop.xlane.xlu0 %2500
    %v2502 = vsub.f32 %v2498, %v2501
    %v2503 = vmul.f32 %v2502, 1.442695
    %v2504 = vpow.pop %v2503
    %v2505 = vsel %vm956, %v2504, 0.0
    %2506 = vadd.xlane.f32.xlu0 %v2505
    %v2507 = vpop.xlane.xlu0 %2506
    %v2508 = vrcp.pop %v2507
    %v2509 = vmul.f32 %v2507, %v2508
    %v2510 = vsub.f32 1.0, %v2509
    %v2511 = vmul.f32 %v2508, %v2510
    %v2512 = vadd.f32 %v2508, %v2511
    %vm2513 = vweird.f32 %v2507
    %vm2514 = vweird.f32 %v2508
    %vm2515 = vmor %vm2513, %vm2514
    %v2516 = vsel %vm2515, %v2508, %v2512
    %v2517 = vand.u32 2147483647, %v2507
    %vm2518 = vcmp.eq.f32.partialorder %v2517, 8.507059e+37
    %v2519 = vand.u32 %v2507, 2147483648
    %v2520 = vor.u32 1.1754944e-38, %v2519
    %v2521 = vsel %vm2518, %v2520, %v2516
    %v2522 = vmul.f32 %v2504, %v2521
    %v2523 = vsel %vm956, %v2522, -inf
    %2524 = vmax.xlane.f32.xlu0 %v2523
    %v2525 = vpop.xlane.xlu0 %2524
    %vm2526 = vcmp.eq.f32.partialorder %v2522, %v2525
    %v2527 = vsel %vm2526, %v929, 16
    %v2528 = vsel %vm956, %v2527, 2147483647
    %v2529 = vand.u32 %v2528, 65535
    %v2530 = vshra.s32 %v2528, 16
    %v2531 = vcvt.s32.f32 %v2529
    %v2532 = vcvt.s32.f32 %v2530
    %2533 = vmin.xlane.f32.xlu0 %v2532
    %v2534 = vpop.xlane.xlu0 %2533
    %vm2535 = vcmp.eq.f32.partialorder %v2532, %v2534
    %v2536 = vsel %vm2535, %v2531, inf
    %2537 = vmin.xlane.f32.xlu0 %v2536
    %v2538 = vpop.xlane.xlu0 %2537
    %v2539 = vcvt.f32.s32 %v2538
    %v2540 = vcvt.f32.s32 %v2534
    %v2541 = vshll.u32 %v2540, 16
    %v2542 = vadd.s32 %v2541, %v2539
    %vm2543 = vcmp.eq.s32.totalorder %v929, %v2542
    %v2544 = vsel %vm2543, 1, 0
    %v2545 = vcvt.s32.f32 %v2544
    %v2546 = vsub.f32 %v2545, %v2522
    %v2547 = vadd.f32 %v2546, %v2522
    %v2548 = vsel %vm956, %v2495, -inf
    %2549 = vmax.xlane.f32.xlu0 %v2548
    %v2550 = vpop.xlane.xlu0 %2549
    %v2551 = vsub.f32 %v2495, %v2550
    %v2552 = vmul.f32 %v2551, 1.442695
    %v2553 = vpow.pop %v2552
    %v2554 = vsel %vm956, %v2553, 0.0
    %2555 = vadd.xlane.f32.xlu0 %v2554
    %v2556 = vpop.xlane.xlu0 %2555
    %v2557 = vlog2.pop %v2556
    %v2558 = vmul.f32 %v2557, 0.6931472
    %v2559 = vadd.f32 %v2550, %v2558
    %v2560 = vmul.f32 %v2545, %v2495
    %v2561 = vsel %vm956, %v2560, 0.0
    %2562 = vadd.xlane.f32.xlu0 %v2561
    %v2563 = vpop.xlane.xlu0 %2562
    %v2564 = vsub.f32 %v2559, %v2563
    %2565 = vrot.lane.b32.xlu0 %v1868, 32
    %v2566 = vpop.permute.xlu0 %2565
    %v2567 = vsel %vm54, %v2566, 0
    %2569 = vmatpush.msra.mxu0 0.0
    %2570 = vmatpush.msra.mxu0 0.0
    %2571 = vmatpush.msra.mxu0 0.0
    %2572 = vmatpush.msra.mxu0 0.0
    %2573 = vmatpush.msra.mxu0 0.0
    %2574 = vmatpush.msra.mxu0 0.0
    %2575 = vmatpush.msra.mxu0 0.0
    %2576 = vmatpush.msra.mxu0 0.0
    %2577 = vmatpush.msra.mxu0 0.0
    %2578 = vmatpush.msra.mxu0 0.0
    %2579 = vmatpush.msra.mxu0 0.0
    %2580 = vmatpush.msra.mxu0 0.0
    %2581 = vmatpush.msra.mxu0 %v915
    %2582 = vmatpush.msra.mxu0 %v914
    %2583 = vmatpush.msra.mxu0 %v913
    %2584 = vmatpush.msra.mxu0 %v912
    %2585 = vmatmul.f32.gmra.mxu0 %v2567
    %v2586 = vpop.f32.mrf.mxu0
    %v2587 = vadd.f32 0.0, %v2586
    %2588 = vdwg.mxu0
    %v2590 = vsel %vm956, %v2545, 0
    %2592 = vmatpush.msra.mxu0 0.0
    %2593 = vmatpush.msra.mxu0 0.0
    %2594 = vmatpush.msra.mxu0 0.0
    %2595 = vmatpush.msra.mxu0 0.0
    %2596 = vmatpush.msra.mxu0 0.0
    %2597 = vmatpush.msra.mxu0 0.0
    %2598 = vmatpush.msra.mxu0 0.0
    %2599 = vmatpush.msra.mxu0 0.0
    %2600 = vmatpush.msra.mxu0 0.0
    %2601 = vmatpush.msra.mxu0 0.0
    %2602 = vmatpush.msra.mxu0 0.0
    %2603 = vmatpush.msra.mxu0 0.0
    %2604 = vmatpush.msra.mxu0 0.0
    %2605 = vmatpush.msra.mxu0 0.0
    %2606 = vmatpush.msra.mxu0 %v910
    %2607 = vmatpush.msra.mxu0 %v907
    %2608 = vmatmul.f32.gmra.mxu0 %v2590
    %v2609 = vpop.f32.mrf.mxu0
    %v2610 = vadd.f32 %v2587, %v2609
    %2611 = vdwg.mxu0
    %v2612 = vadd.f32 %v2610, %v981
    %v2613 = vxor.u32 %v2612, 2147483648
    %v2614 = vmul.f32 %v2613, 1.442695
    %v2615 = vpow.pop %v2614
    %v2616 = vadd.f32 %v2615, 1.0
    %v2617 = vrcp.pop %v2616
    %v2618 = vmul.f32 %v2616, %v2617
    %v2619 = vsub.f32 1.0, %v2618
    %v2620 = vmul.f32 %v2617, %v2619
    %v2621 = vadd.f32 %v2617, %v2620
    %vm2622 = vweird.f32 %v2616
    %vm2623 = vweird.f32 %v2617
    %vm2624 = vmor %vm2622, %vm2623
    %v2625 = vsel %vm2624, %v2617, %v2621
    %v2626 = vand.u32 2147483647, %v2616
    %vm2627 = vcmp.eq.f32.partialorder %v2626, 8.507059e+37
    %v2628 = vand.u32 %v2616, 2147483648
    %v2629 = vor.u32 1.1754944e-38, %v2628
    %v2630 = vsel %vm2627, %v2629, %v2625
    %v2631 = vmul.f32 1.0, %v2630
    %v2632 = vtanh.pop %v2612
    %v2633 = vmul.f32 %v2631, %v1862
    %2635 = vrot.lane.b32.xlu0 %v2632, 64
    %v2636 = vpop.permute.xlu0 %2635
    %v2638 = vmul.f32 %v2631, %v2636
    %2640 = vrot.lane.b32.xlu0 %v2638, 32
    %v2641 = vpop.permute.xlu0 %2640
    %v2643 = vadd.f32 %v2633, %v2641
    %v2644 = vtanh.pop %v2643
    %2646 = vrot.lane.b32.xlu0 %v2644, 64
    %v2647 = vpop.permute.xlu0 %2646
    %v2649 = vmul.f32 %v2631, %v2647
    %v2651 = vrot.slane %v2649, 1
    %v2652 = vrot.slane %v2649, 2
    %v2653 = vrot.slane %v2649, 3
    %v2654 = vrot.slane %v2649, 4
    %v2655 = vrot.slane %v2649, 5
    %v2656 = vrot.slane %v2649, 6
    %v2657 = vrot.slane %v2649, 7
    %v2658 = vperm.slane %v2649, 0
    %2659 = vrot.lane.b32.xlu0 %v2658, 32
    %v2660 = vpop.permute.xlu0 %2659
    %v2661 = vsel %vm54, %v2660, 0
    %2663 = vmatpush.xpose.msra.mxu0 0.0
    %2664 = vmatpush.xpose.msra.mxu0 0.0
    %2665 = vmatpush.xpose.msra.mxu0 0.0
    %2666 = vmatpush.xpose.msra.mxu0 0.0
    %2667 = vmatpush.xpose.msra.mxu0 0.0
    %2668 = vmatpush.xpose.msra.mxu0 0.0
    %2669 = vmatpush.xpose.msra.mxu0 0.0
    %2670 = vmatpush.xpose.msra.mxu0 0.0
    %2671 = vmatpush.xpose.msra.mxu0 0.0
    %2672 = vmatpush.xpose.msra.mxu0 0.0
    %2673 = vmatpush.xpose.msra.mxu0 0.0
    %2674 = vmatpush.xpose.msra.mxu0 0.0
    %2675 = vmatpush.xpose.msra.mxu0 0.0
    %2676 = vmatpush.xpose.msra.mxu0 0.0
    %2677 = vmatpush.xpose.msra.mxu0 0.0
    %2678 = vmatpush.xpose.msra.mxu0 %v1037
    %2679 = vmatmul.f32.gmra.mxu0 %v2661
    %v2680 = vpop.f32.mrf.mxu0
    %v2681 = vadd.f32 0.0, %v2680
    %2682 = vdwg.mxu0
    %v2683 = vperm.slane %v2651, 0
    %2684 = vrot.lane.b32.xlu0 %v2683, 32
    %v2685 = vpop.permute.xlu0 %2684
    %v2686 = vsel %vm54, %v2685, 0
    %2688 = vmatpush.xpose.msra.mxu0 0.0
    %2689 = vmatpush.xpose.msra.mxu0 0.0
    %2690 = vmatpush.xpose.msra.mxu0 0.0
    %2691 = vmatpush.xpose.msra.mxu0 0.0
    %2692 = vmatpush.xpose.msra.mxu0 0.0
    %2693 = vmatpush.xpose.msra.mxu0 0.0
    %2694 = vmatpush.xpose.msra.mxu0 0.0
    %2695 = vmatpush.xpose.msra.mxu0 0.0
    %2696 = vmatpush.xpose.msra.mxu0 0.0
    %2697 = vmatpush.xpose.msra.mxu0 0.0
    %2698 = vmatpush.xpose.msra.mxu0 0.0
    %2699 = vmatpush.xpose.msra.mxu0 0.0
    %2700 = vmatpush.xpose.msra.mxu0 0.0
    %2701 = vmatpush.xpose.msra.mxu0 0.0
    %2702 = vmatpush.xpose.msra.mxu0 0.0
    %2703 = vmatpush.xpose.msra.mxu0 %v1067
    %2704 = vmatmul.f32.gmra.mxu0 %v2686
    %v2705 = vpop.f32.mrf.mxu0
    %v2706 = vadd.f32 0.0, %v2705
    %2707 = vdwg.mxu0
    %v2708 = vperm.slane %v2652, 0
    %2709 = vrot.lane.b32.xlu0 %v2708, 32
    %v2710 = vpop.permute.xlu0 %2709
    %v2711 = vsel %vm54, %v2710, 0
    %2713 = vmatpush.xpose.msra.mxu0 0.0
    %2714 = vmatpush.xpose.msra.mxu0 0.0
    %2715 = vmatpush.xpose.msra.mxu0 0.0
    %2716 = vmatpush.xpose.msra.mxu0 0.0
    %2717 = vmatpush.xpose.msra.mxu0 0.0
    %2718 = vmatpush.xpose.msra.mxu0 0.0
    %2719 = vmatpush.xpose.msra.mxu0 0.0
    %2720 = vmatpush.xpose.msra.mxu0 0.0
    %2721 = vmatpush.xpose.msra.mxu0 0.0
    %2722 = vmatpush.xpose.msra.mxu0 0.0
    %2723 = vmatpush.xpose.msra.mxu0 0.0
    %2724 = vmatpush.xpose.msra.mxu0 0.0
    %2725 = vmatpush.xpose.msra.mxu0 0.0
    %2726 = vmatpush.xpose.msra.mxu0 0.0
    %2727 = vmatpush.xpose.msra.mxu0 0.0
    %2728 = vmatpush.xpose.msra.mxu0 %v1097
    %2729 = vmatmul.f32.gmra.mxu0 %v2711
    %v2730 = vpop.f32.mrf.mxu0
    %v2731 = vadd.f32 0.0, %v2730
    %2732 = vdwg.mxu0
    %v2733 = vperm.slane %v2653, 0
    %2734 = vrot.lane.b32.xlu0 %v2733, 32
    %v2735 = vpop.permute.xlu0 %2734
    %v2736 = vsel %vm54, %v2735, 0
    %2738 = vmatpush.xpose.msra.mxu0 0.0
    %2739 = vmatpush.xpose.msra.mxu0 0.0
    %2740 = vmatpush.xpose.msra.mxu0 0.0
    %2741 = vmatpush.xpose.msra.mxu0 0.0
    %2742 = vmatpush.xpose.msra.mxu0 0.0
    %2743 = vmatpush.xpose.msra.mxu0 0.0
    %2744 = vmatpush.xpose.msra.mxu0 0.0
    %2745 = vmatpush.xpose.msra.mxu0 0.0
    %2746 = vmatpush.xpose.msra.mxu0 0.0
    %2747 = vmatpush.xpose.msra.mxu0 0.0
    %2748 = vmatpush.xpose.msra.mxu0 0.0
    %2749 = vmatpush.xpose.msra.mxu0 0.0
    %2750 = vmatpush.xpose.msra.mxu0 0.0
    %2751 = vmatpush.xpose.msra.mxu0 0.0
    %2752 = vmatpush.xpose.msra.mxu0 0.0
    %2753 = vmatpush.xpose.msra.mxu0 %v1127
    %2754 = vmatmul.f32.gmra.mxu0 %v2736
    %v2755 = vpop.f32.mrf.mxu0
    %v2756 = vadd.f32 0.0, %v2755
    %2757 = vdwg.mxu0
    %v2758 = vperm.slane %v2654, 0
    %2759 = vrot.lane.b32.xlu0 %v2758, 32
    %v2760 = vpop.permute.xlu0 %2759
    %v2761 = vsel %vm54, %v2760, 0
    %2763 = vmatpush.xpose.msra.mxu0 0.0
    %2764 = vmatpush.xpose.msra.mxu0 0.0
    %2765 = vmatpush.xpose.msra.mxu0 0.0
    %2766 = vmatpush.xpose.msra.mxu0 0.0
    %2767 = vmatpush.xpose.msra.mxu0 0.0
    %2768 = vmatpush.xpose.msra.mxu0 0.0
    %2769 = vmatpush.xpose.msra.mxu0 0.0
    %2770 = vmatpush.xpose.msra.mxu0 0.0
    %2771 = vmatpush.xpose.msra.mxu0 0.0
    %2772 = vmatpush.xpose.msra.mxu0 0.0
    %2773 = vmatpush.xpose.msra.mxu0 0.0
    %2774 = vmatpush.xpose.msra.mxu0 0.0
    %2775 = vmatpush.xpose.msra.mxu0 0.0
    %2776 = vmatpush.xpose.msra.mxu0 0.0
    %2777 = vmatpush.xpose.msra.mxu0 0.0
    %2778 = vmatpush.xpose.msra.mxu0 %v1157
    %2779 = vmatmul.f32.gmra.mxu0 %v2761
    %v2780 = vpop.f32.mrf.mxu0
    %v2781 = vadd.f32 0.0, %v2780
    %2782 = vdwg.mxu0
    %v2783 = vperm.slane %v2655, 0
    %2784 = vrot.lane.b32.xlu0 %v2783, 32
    %v2785 = vpop.permute.xlu0 %2784
    %v2786 = vsel %vm54, %v2785, 0
    %2788 = vmatpush.xpose.msra.mxu0 0.0
    %2789 = vmatpush.xpose.msra.mxu0 0.0
    %2790 = vmatpush.xpose.msra.mxu0 0.0
    %2791 = vmatpush.xpose.msra.mxu0 0.0
    %2792 = vmatpush.xpose.msra.mxu0 0.0
    %2793 = vmatpush.xpose.msra.mxu0 0.0
    %2794 = vmatpush.xpose.msra.mxu0 0.0
    %2795 = vmatpush.xpose.msra.mxu0 0.0
    %2796 = vmatpush.xpose.msra.mxu0 0.0
    %2797 = vmatpush.xpose.msra.mxu0 0.0
    %2798 = vmatpush.xpose.msra.mxu0 0.0
    %2799 = vmatpush.xpose.msra.mxu0 0.0
    %2800 = vmatpush.xpose.msra.mxu0 0.0
    %2801 = vmatpush.xpose.msra.mxu0 0.0
    %2802 = vmatpush.xpose.msra.mxu0 0.0
    %2803 = vmatpush.xpose.msra.mxu0 %v1187
    %2804 = vmatmul.f32.gmra.mxu0 %v2786
    %v2805 = vpop.f32.mrf.mxu0
    %v2806 = vadd.f32 0.0, %v2805
    %2807 = vdwg.mxu0
    %v2808 = vperm.slane %v2656, 0
    %2809 = vrot.lane.b32.xlu0 %v2808, 32
    %v2810 = vpop.permute.xlu0 %2809
    %v2811 = vsel %vm54, %v2810, 0
    %2813 = vmatpush.xpose.msra.mxu0 0.0
    %2814 = vmatpush.xpose.msra.mxu0 0.0
    %2815 = vmatpush.xpose.msra.mxu0 0.0
    %2816 = vmatpush.xpose.msra.mxu0 0.0
    %2817 = vmatpush.xpose.msra.mxu0 0.0
    %2818 = vmatpush.xpose.msra.mxu0 0.0
    %2819 = vmatpush.xpose.msra.mxu0 0.0
    %2820 = vmatpush.xpose.msra.mxu0 0.0
    %2821 = vmatpush.xpose.msra.mxu0 0.0
    %2822 = vmatpush.xpose.msra.mxu0 0.0
    %2823 = vmatpush.xpose.msra.mxu0 0.0
    %2824 = vmatpush.xpose.msra.mxu0 0.0
    %2825 = vmatpush.xpose.msra.mxu0 0.0
    %2826 = vmatpush.xpose.msra.mxu0 0.0
    %2827 = vmatpush.xpose.msra.mxu0 0.0
    %2828 = vmatpush.xpose.msra.mxu0 %v1217
    %2829 = vmatmul.f32.gmra.mxu0 %v2811
    %v2830 = vpop.f32.mrf.mxu0
    %v2831 = vadd.f32 0.0, %v2830
    %2832 = vdwg.mxu0
    %v2833 = vperm.slane %v2657, 0
    %2834 = vrot.lane.b32.xlu0 %v2833, 32
    %v2835 = vpop.permute.xlu0 %2834
    %v2836 = vsel %vm54, %v2835, 0
    %2838 = vmatpush.xpose.msra.mxu0 0.0
    %2839 = vmatpush.xpose.msra.mxu0 0.0
    %2840 = vmatpush.xpose.msra.mxu0 0.0
    %2841 = vmatpush.xpose.msra.mxu0 0.0
    %2842 = vmatpush.xpose.msra.mxu0 0.0
    %2843 = vmatpush.xpose.msra.mxu0 0.0
    %2844 = vmatpush.xpose.msra.mxu0 0.0
    %2845 = vmatpush.xpose.msra.mxu0 0.0
    %2846 = vmatpush.xpose.msra.mxu0 0.0
    %2847 = vmatpush.xpose.msra.mxu0 0.0
    %2848 = vmatpush.xpose.msra.mxu0 0.0
    %2849 = vmatpush.xpose.msra.mxu0 0.0
    %2850 = vmatpush.xpose.msra.mxu0 0.0
    %2851 = vmatpush.xpose.msra.mxu0 0.0
    %2852 = vmatpush.xpose.msra.mxu0 0.0
    %2853 = vmatpush.xpose.msra.mxu0 %v1247
    %2854 = vmatmul.f32.gmra.mxu0 %v2836
    %v2855 = vpop.f32.mrf.mxu0
    %v2856 = vadd.f32 0.0, %v2855
    %2857 = vdwg.mxu0
    %v2858 = vsel %vm1269, %v2681, -inf
    %2859 = vmax.xlane.f32.xlu0 %v2858
    %v2860 = vpop.xlane.xlu0 %2859
    %v2861 = vsel %vm1269, %v2706, -inf
    %2862 = vmax.xlane.f32.xlu0 %v2861
    %v2863 = vpop.xlane.xlu0 %2862
    %v2864 = vsel %vm1269, %v2731, -inf
    %2865 = vmax.xlane.f32.xlu0 %v2864
    %v2866 = vpop.xlane.xlu0 %2865
    %v2867 = vsel %vm1269, %v2756, -inf
    %2868 = vmax.xlane.f32.xlu0 %v2867
    %v2869 = vpop.xlane.xlu0 %2868
    %v2870 = vsel %vm1269, %v2781, -inf
    %2871 = vmax.xlane.f32.xlu0 %v2870
    %v2872 = vpop.xlane.xlu0 %2871
    %v2873 = vsel %vm1269, %v2806, -inf
    %2874 = vmax.xlane.f32.xlu0 %v2873
    %v2875 = vpop.xlane.xlu0 %2874
    %v2876 = vsel %vm1269, %v2831, -inf
    %2877 = vmax.xlane.f32.xlu0 %v2876
    %v2878 = vpop.xlane.xlu0 %2877
    %v2879 = vsel %vm1269, %v2856, -inf
    %2880 = vmax.xlane.f32.xlu0 %v2879
    %v2881 = vpop.xlane.xlu0 %2880
    %v2882 = vsub.f32 %v2681, %v2860
    %v2883 = vsub.f32 %v2706, %v2863
    %v2884 = vsub.f32 %v2731, %v2866
    %v2885 = vsub.f32 %v2756, %v2869
    %v2886 = vsub.f32 %v2781, %v2872
    %v2887 = vsub.f32 %v2806, %v2875
    %v2888 = vsub.f32 %v2831, %v2878
    %v2889 = vsub.f32 %v2856, %v2881
    %v2890 = vmul.f32 %v2882, 1.442695
    %v2891 = vpow.pop %v2890
    %v2892 = vmul.f32 %v2883, 1.442695
    %v2893 = vpow.pop %v2892
    %v2894 = vmul.f32 %v2884, 1.442695
    %v2895 = vpow.pop %v2894
    %v2896 = vmul.f32 %v2885, 1.442695
    %v2897 = vpow.pop %v2896
    %v2898 = vmul.f32 %v2886, 1.442695
    %v2899 = vpow.pop %v2898
    %v2900 = vmul.f32 %v2887, 1.442695
    %v2901 = vpow.pop %v2900
    %v2902 = vmul.f32 %v2888, 1.442695
    %v2903 = vpow.pop %v2902
    %v2904 = vmul.f32 %v2889, 1.442695
    %v2905 = vpow.pop %v2904
    %v2906 = vsel %vm1269, %v2891, 0.0
    %2907 = vadd.xlane.f32.xlu0 %v2906
    %v2908 = vpop.xlane.xlu0 %2907
    %v2909 = vsel %vm1269, %v2893, 0.0
    %2910 = vadd.xlane.f32.xlu0 %v2909
    %v2911 = vpop.xlane.xlu0 %2910
    %v2912 = vsel %vm1269, %v2895, 0.0
    %2913 = vadd.xlane.f32.xlu0 %v2912
    %v2914 = vpop.xlane.xlu0 %2913
    %v2915 = vsel %vm1269, %v2897, 0.0
    %2916 = vadd.xlane.f32.xlu0 %v2915
    %v2917 = vpop.xlane.xlu0 %2916
    %v2918 = vsel %vm1269, %v2899, 0.0
    %2919 = vadd.xlane.f32.xlu0 %v2918
    %v2920 = vpop.xlane.xlu0 %2919
    %v2921 = vsel %vm1269, %v2901, 0.0
    %2922 = vadd.xlane.f32.xlu0 %v2921
    %v2923 = vpop.xlane.xlu0 %2922
    %v2924 = vsel %vm1269, %v2903, 0.0
    %2925 = vadd.xlane.f32.xlu0 %v2924
    %v2926 = vpop.xlane.xlu0 %2925
    %v2927 = vsel %vm1269, %v2905, 0.0
    %2928 = vadd.xlane.f32.xlu0 %v2927
    %v2929 = vpop.xlane.xlu0 %2928
    %v2930 = vrcp.pop %v2908
    %v2931 = vmul.f32 %v2908, %v2930
    %v2932 = vsub.f32 1.0, %v2931
    %v2933 = vmul.f32 %v2930, %v2932
    %v2934 = vadd.f32 %v2930, %v2933
    %vm2935 = vweird.f32 %v2908
    %vm2936 = vweird.f32 %v2930
    %vm2937 = vmor %vm2935, %vm2936
    %v2938 = vsel %vm2937, %v2930, %v2934
    %v2939 = vand.u32 2147483647, %v2908
    %vm2940 = vcmp.eq.f32.partialorder %v2939, 8.507059e+37
    %v2941 = vand.u32 %v2908, 2147483648
    %v2942 = vor.u32 1.1754944e-38, %v2941
    %v2943 = vsel %vm2940, %v2942, %v2938
    %v2944 = vmul.f32 %v2891, %v2943
    %v2945 = vrcp.pop %v2911
    %v2946 = vmul.f32 %v2911, %v2945
    %v2947 = vsub.f32 1.0, %v2946
    %v2948 = vmul.f32 %v2945, %v2947
    %v2949 = vadd.f32 %v2945, %v2948
    %vm2950 = vweird.f32 %v2911
    %vm2951 = vweird.f32 %v2945
    %vm2952 = vmor %vm2950, %vm2951
    %v2953 = vsel %vm2952, %v2945, %v2949
    %v2954 = vand.u32 2147483647, %v2911
    %vm2955 = vcmp.eq.f32.partialorder %v2954, 8.507059e+37
    %v2956 = vand.u32 %v2911, 2147483648
    %v2957 = vor.u32 1.1754944e-38, %v2956
    %v2958 = vsel %vm2955, %v2957, %v2953
    %v2959 = vmul.f32 %v2893, %v2958
    %v2960 = vrcp.pop %v2914
    %v2961 = vmul.f32 %v2914, %v2960
    %v2962 = vsub.f32 1.0, %v2961
    %v2963 = vmul.f32 %v2960, %v2962
    %v2964 = vadd.f32 %v2960, %v2963
    %vm2965 = vweird.f32 %v2914
    %vm2966 = vweird.f32 %v2960
    %vm2967 = vmor %vm2965, %vm2966
    %v2968 = vsel %vm2967, %v2960, %v2964
    %v2969 = vand.u32 2147483647, %v2914
    %vm2970 = vcmp.eq.f32.partialorder %v2969, 8.507059e+37
    %v2971 = vand.u32 %v2914, 2147483648
    %v2972 = vor.u32 1.1754944e-38, %v2971
    %v2973 = vsel %vm2970, %v2972, %v2968
    %v2974 = vmul.f32 %v2895, %v2973
    %v2975 = vrcp.pop %v2917
    %v2976 = vmul.f32 %v2917, %v2975
    %v2977 = vsub.f32 1.0, %v2976
    %v2978 = vmul.f32 %v2975, %v2977
    %v2979 = vadd.f32 %v2975, %v2978
    %vm2980 = vweird.f32 %v2917
    %vm2981 = vweird.f32 %v2975
    %vm2982 = vmor %vm2980, %vm2981
    %v2983 = vsel %vm2982, %v2975, %v2979
    %v2984 = vand.u32 2147483647, %v2917
    %vm2985 = vcmp.eq.f32.partialorder %v2984, 8.507059e+37
    %v2986 = vand.u32 %v2917, 2147483648
    %v2987 = vor.u32 1.1754944e-38, %v2986
    %v2988 = vsel %vm2985, %v2987, %v2983
    %v2989 = vmul.f32 %v2897, %v2988
    %v2990 = vrcp.pop %v2920
    %v2991 = vmul.f32 %v2920, %v2990
    %v2992 = vsub.f32 1.0, %v2991
    %v2993 = vmul.f32 %v2990, %v2992
    %v2994 = vadd.f32 %v2990, %v2993
    %vm2995 = vweird.f32 %v2920
    %vm2996 = vweird.f32 %v2990
    %vm2997 = vmor %vm2995, %vm2996
    %v2998 = vsel %vm2997, %v2990, %v2994
    %v2999 = vand.u32 2147483647, %v2920
    %vm3000 = vcmp.eq.f32.partialorder %v2999, 8.507059e+37
    %v3001 = vand.u32 %v2920, 2147483648
    %v3002 = vor.u32 1.1754944e-38, %v3001
    %v3003 = vsel %vm3000, %v3002, %v2998
    %v3004 = vmul.f32 %v2899, %v3003
    %v3005 = vrcp.pop %v2923
    %v3006 = vmul.f32 %v2923, %v3005
    %v3007 = vsub.f32 1.0, %v3006
    %v3008 = vmul.f32 %v3005, %v3007
    %v3009 = vadd.f32 %v3005, %v3008
    %vm3010 = vweird.f32 %v2923
    %vm3011 = vweird.f32 %v3005
    %vm3012 = vmor %vm3010, %vm3011
    %v3013 = vsel %vm3012, %v3005, %v3009
    %v3014 = vand.u32 2147483647, %v2923
    %vm3015 = vcmp.eq.f32.partialorder %v3014, 8.507059e+37
    %v3016 = vand.u32 %v2923, 2147483648
    %v3017 = vor.u32 1.1754944e-38, %v3016
    %v3018 = vsel %vm3015, %v3017, %v3013
    %v3019 = vmul.f32 %v2901, %v3018
    %v3020 = vrcp.pop %v2926
    %v3021 = vmul.f32 %v2926, %v3020
    %v3022 = vsub.f32 1.0, %v3021
    %v3023 = vmul.f32 %v3020, %v3022
    %v3024 = vadd.f32 %v3020, %v3023
    %vm3025 = vweird.f32 %v2926
    %vm3026 = vweird.f32 %v3020
    %vm3027 = vmor %vm3025, %vm3026
    %v3028 = vsel %vm3027, %v3020, %v3024
    %v3029 = vand.u32 2147483647, %v2926
    %vm3030 = vcmp.eq.f32.partialorder %v3029, 8.507059e+37
    %v3031 = vand.u32 %v2926, 2147483648
    %v3032 = vor.u32 1.1754944e-38, %v3031
    %v3033 = vsel %vm3030, %v3032, %v3028
    %v3034 = vmul.f32 %v2903, %v3033
    %v3035 = vrcp.pop %v2929
    %v3036 = vmul.f32 %v2929, %v3035
    %v3037 = vsub.f32 1.0, %v3036
    %v3038 = vmul.f32 %v3035, %v3037
    %v3039 = vadd.f32 %v3035, %v3038
    %vm3040 = vweird.f32 %v2929
    %vm3041 = vweird.f32 %v3035
    %vm3042 = vmor %vm3040, %vm3041
    %v3043 = vsel %vm3042, %v3035, %v3039
    %v3044 = vand.u32 2147483647, %v2929
    %vm3045 = vcmp.eq.f32.partialorder %v3044, 8.507059e+37
    %v3046 = vand.u32 %v2929, 2147483648
    %v3047 = vor.u32 1.1754944e-38, %v3046
    %v3048 = vsel %vm3045, %v3047, %v3043
    %v3049 = vmul.f32 %v2905, %v3048
    %v3051 = vsel %vm1463, %v2944, 0
    %3053 = vmatpush.msra.mxu0 0.0
    %3054 = vmatpush.msra.mxu0 0.0
    %3055 = vmatpush.msra.mxu0 0.0
    %3056 = vmatpush.msra.mxu0 0.0
    %3057 = vmatpush.msra.mxu0 0.0
    %3058 = vmatpush.msra.mxu0 0.0
    %3059 = vmatpush.msra.mxu0 0.0
    %3060 = vmatpush.msra.mxu0 0.0
    %3061 = vmatpush.msra.mxu0 0.0
    %3062 = vmatpush.msra.mxu0 0.0
    %3063 = vmatpush.msra.mxu0 0.0
    %3064 = vmatpush.msra.mxu0 0.0
    %3065 = vmatpush.msra.mxu0 0.0
    %3066 = vmatpush.msra.mxu0 0.0
    %3067 = vmatpush.msra.mxu0 0.0
    %3068 = vmatpush.msra.mxu0 %v1034
    %3069 = vmatmul.f32.gmra.mxu0 %v3051
    %v3070 = vpop.f32.mrf.mxu0
    %v3071 = vadd.f32 0.0, %v3070
    %3072 = vdwg.mxu0
    %v3074 = vsel %vm1463, %v2959, 0
    %3076 = vmatpush.msra.mxu0 0.0
    %3077 = vmatpush.msra.mxu0 0.0
    %3078 = vmatpush.msra.mxu0 0.0
    %3079 = vmatpush.msra.mxu0 0.0
    %3080 = vmatpush.msra.mxu0 0.0
    %3081 = vmatpush.msra.mxu0 0.0
    %3082 = vmatpush.msra.mxu0 0.0
    %3083 = vmatpush.msra.mxu0 0.0
    %3084 = vmatpush.msra.mxu0 0.0
    %3085 = vmatpush.msra.mxu0 0.0
    %3086 = vmatpush.msra.mxu0 0.0
    %3087 = vmatpush.msra.mxu0 0.0
    %3088 = vmatpush.msra.mxu0 0.0
    %3089 = vmatpush.msra.mxu0 0.0
    %3090 = vmatpush.msra.mxu0 0.0
    %3091 = vmatpush.msra.mxu0 %v1064
    %3092 = vmatmul.f32.gmra.mxu0 %v3074
    %v3093 = vpop.f32.mrf.mxu0
    %v3094 = vadd.f32 0.0, %v3093
    %3095 = vdwg.mxu0
    %v3097 = vsel %vm1463, %v2974, 0
    %3099 = vmatpush.msra.mxu0 0.0
    %3100 = vmatpush.msra.mxu0 0.0
    %3101 = vmatpush.msra.mxu0 0.0
    %3102 = vmatpush.msra.mxu0 0.0
    %3103 = vmatpush.msra.mxu0 0.0
    %3104 = vmatpush.msra.mxu0 0.0
    %3105 = vmatpush.msra.mxu0 0.0
    %3106 = vmatpush.msra.mxu0 0.0
    %3107 = vmatpush.msra.mxu0 0.0
    %3108 = vmatpush.msra.mxu0 0.0
    %3109 = vmatpush.msra.mxu0 0.0
    %3110 = vmatpush.msra.mxu0 0.0
    %3111 = vmatpush.msra.mxu0 0.0
    %3112 = vmatpush.msra.mxu0 0.0
    %3113 = vmatpush.msra.mxu0 0.0
    %3114 = vmatpush.msra.mxu0 %v1094
    %3115 = vmatmul.f32.gmra.mxu0 %v3097
    %v3116 = vpop.f32.mrf.mxu0
    %v3117 = vadd.f32 0.0, %v3116
    %3118 = vdwg.mxu0
    %v3120 = vsel %vm1463, %v2989, 0
    %3122 = vmatpush.msra.mxu0 0.0
    %3123 = vmatpush.msra.mxu0 0.0
    %3124 = vmatpush.msra.mxu0 0.0
    %3125 = vmatpush.msra.mxu0 0.0
    %3126 = vmatpush.msra.mxu0 0.0
    %3127 = vmatpush.msra.mxu0 0.0
    %3128 = vmatpush.msra.mxu0 0.0
    %3129 = vmatpush.msra.mxu0 0.0
    %3130 = vmatpush.msra.mxu0 0.0
    %3131 = vmatpush.msra.mxu0 0.0
    %3132 = vmatpush.msra.mxu0 0.0
    %3133 = vmatpush.msra.mxu0 0.0
    %3134 = vmatpush.msra.mxu0 0.0
    %3135 = vmatpush.msra.mxu0 0.0
    %3136 = vmatpush.msra.mxu0 0.0
    %3137 = vmatpush.msra.mxu0 %v1124
    %3138 = vmatmul.f32.gmra.mxu0 %v3120
    %v3139 = vpop.f32.mrf.mxu0
    %v3140 = vadd.f32 0.0, %v3139
    %3141 = vdwg.mxu0
    %v3143 = vsel %vm1463, %v3004, 0
    %3145 = vmatpush.msra.mxu0 0.0
    %3146 = vmatpush.msra.mxu0 0.0
    %3147 = vmatpush.msra.mxu0 0.0
    %3148 = vmatpush.msra.mxu0 0.0
    %3149 = vmatpush.msra.mxu0 0.0
    %3150 = vmatpush.msra.mxu0 0.0
    %3151 = vmatpush.msra.mxu0 0.0
    %3152 = vmatpush.msra.mxu0 0.0
    %3153 = vmatpush.msra.mxu0 0.0
    %3154 = vmatpush.msra.mxu0 0.0
    %3155 = vmatpush.msra.mxu0 0.0
    %3156 = vmatpush.msra.mxu0 0.0
    %3157 = vmatpush.msra.mxu0 0.0
    %3158 = vmatpush.msra.mxu0 0.0
    %3159 = vmatpush.msra.mxu0 0.0
    %3160 = vmatpush.msra.mxu0 %v1154
    %3161 = vmatmul.f32.gmra.mxu0 %v3143
    %v3162 = vpop.f32.mrf.mxu0
    %v3163 = vadd.f32 0.0, %v3162
    %3164 = vdwg.mxu0
    %v3166 = vsel %vm1463, %v3019, 0
    %3168 = vmatpush.msra.mxu0 0.0
    %3169 = vmatpush.msra.mxu0 0.0
    %3170 = vmatpush.msra.mxu0 0.0
    %3171 = vmatpush.msra.mxu0 0.0
    %3172 = vmatpush.msra.mxu0 0.0
    %3173 = vmatpush.msra.mxu0 0.0
    %3174 = vmatpush.msra.mxu0 0.0
    %3175 = vmatpush.msra.mxu0 0.0
    %3176 = vmatpush.msra.mxu0 0.0
    %3177 = vmatpush.msra.mxu0 0.0
    %3178 = vmatpush.msra.mxu0 0.0
    %3179 = vmatpush.msra.mxu0 0.0
    %3180 = vmatpush.msra.mxu0 0.0
    %3181 = vmatpush.msra.mxu0 0.0
    %3182 = vmatpush.msra.mxu0 0.0
    %3183 = vmatpush.msra.mxu0 %v1184
    %3184 = vmatmul.f32.gmra.mxu0 %v3166
    %v3185 = vpop.f32.mrf.mxu0
    %v3186 = vadd.f32 0.0, %v3185
    %3187 = vdwg.mxu0
    %v3189 = vsel %vm1463, %v3034, 0
    %3191 = vmatpush.msra.mxu0 0.0
    %3192 = vmatpush.msra.mxu0 0.0
    %3193 = vmatpush.msra.mxu0 0.0
    %3194 = vmatpush.msra.mxu0 0.0
    %3195 = vmatpush.msra.mxu0 0.0
    %3196 = vmatpush.msra.mxu0 0.0
    %3197 = vmatpush.msra.mxu0 0.0
    %3198 = vmatpush.msra.mxu0 0.0
    %3199 = vmatpush.msra.mxu0 0.0
    %3200 = vmatpush.msra.mxu0 0.0
    %3201 = vmatpush.msra.mxu0 0.0
    %3202 = vmatpush.msra.mxu0 0.0
    %3203 = vmatpush.msra.mxu0 0.0
    %3204 = vmatpush.msra.mxu0 0.0
    %3205 = vmatpush.msra.mxu0 0.0
    %3206 = vmatpush.msra.mxu0 %v1214
    %3207 = vmatmul.f32.gmra.mxu0 %v3189
    %v3208 = vpop.f32.mrf.mxu0
    %v3209 = vadd.f32 0.0, %v3208
    %3210 = vdwg.mxu0
    %v3212 = vsel %vm1463, %v3049, 0
    %3214 = vmatpush.msra.mxu0 0.0
    %3215 = vmatpush.msra.mxu0 0.0
    %3216 = vmatpush.msra.mxu0 0.0
    %3217 = vmatpush.msra.mxu0 0.0
    %3218 = vmatpush.msra.mxu0 0.0
    %3219 = vmatpush.msra.mxu0 0.0
    %3220 = vmatpush.msra.mxu0 0.0
    %3221 = vmatpush.msra.mxu0 0.0
    %3222 = vmatpush.msra.mxu0 0.0
    %3223 = vmatpush.msra.mxu0 0.0
    %3224 = vmatpush.msra.mxu0 0.0
    %3225 = vmatpush.msra.mxu0 0.0
    %3226 = vmatpush.msra.mxu0 0.0
    %3227 = vmatpush.msra.mxu0 0.0
    %3228 = vmatpush.msra.mxu0 0.0
    %3229 = vmatpush.msra.mxu0 %v1244
    %3230 = vmatmul.f32.gmra.mxu0 %v3212
    %v3231 = vpop.f32.mrf.mxu0
    %v3232 = vadd.f32 0.0, %v3231
    %3233 = vdwg.mxu0
    %v3242 = vrot.slane %v3094, 7
    %v3243 = vsel %vm1667, %v3242, %v3071
    %v3244 = vrot.slane %v3117, 6
    %v3245 = vsel %vm1670, %v3244, %v3243
    %v3246 = vrot.slane %v3140, 5
    %v3247 = vsel %vm1673, %v3246, %v3245
    %v3248 = vrot.slane %v3163, 4
    %v3249 = vsel %vm1676, %v3248, %v3247
    %v3250 = vrot.slane %v3186, 3
    %v3251 = vsel %vm1679, %v3250, %v3249
    %v3252 = vrot.slane %v3209, 2
    %v3253 = vsel %vm1682, %v3252, %v3251
    %v3254 = vrot.slane %v3232, 1
    %v3255 = vsel %vm1685, %v3254, %v3253
    %v3256 = vsel %vm54, %v3255, 0
    %3258 = vmatpush.msra.mxu0 0.0
    %3259 = vmatpush.msra.mxu0 0.0
    %3260 = vmatpush.msra.mxu0 0.0
    %3261 = vmatpush.msra.mxu0 0.0
    %3262 = vmatpush.msra.mxu0 0.0
    %3263 = vmatpush.msra.mxu0 0.0
    %3264 = vmatpush.msra.mxu0 0.0
    %3265 = vmatpush.msra.mxu0 0.0
    %3266 = vmatpush.msra.mxu0 0.0
    %3267 = vmatpush.msra.mxu0 0.0
    %3268 = vmatpush.msra.mxu0 0.0
    %3269 = vmatpush.msra.mxu0 0.0
    %3270 = vmatpush.msra.mxu0 %v920
    %3271 = vmatpush.msra.mxu0 %v919
    %3272 = vmatpush.msra.mxu0 %v918
    %3273 = vmatpush.msra.mxu0 %v917
    %3274 = vmatmul.f32.gmra.mxu0 %v3256
    %v3275 = vpop.f32.mrf.mxu0
    %v3276 = vadd.f32 %v1656, %v3275
    %3277 = vdwg.mxu0
    %v3278 = vadd.f32 %v3276, %v924
    %v3279 = vmul.f32 %v3278, %v1716
    %v3280 = vsel %vm956, %v3279, -inf
    %3281 = vmax.xlane.f32.xlu0 %v3280
    %v3282 = vpop.xlane.xlu0 %3281
    %v3283 = vsub.f32 %v3279, %v3282
    %v3284 = vmul.f32 %v3283, 1.442695
    %v3285 = vpow.pop %v3284
    %v3286 = vsel %vm956, %v3285, 0.0
    %3287 = vadd.xlane.f32.xlu0 %v3286
    %v3288 = vpop.xlane.xlu0 %3287
    %v3289 = vrcp.pop %v3288
    %v3290 = vmul.f32 %v3288, %v3289
    %v3291 = vsub.f32 1.0, %v3290
    %v3292 = vmul.f32 %v3289, %v3291
    %v3293 = vadd.f32 %v3289, %v3292
    %vm3294 = vweird.f32 %v3288
    %vm3295 = vweird.f32 %v3289
    %vm3296 = vmor %vm3294, %vm3295
    %v3297 = vsel %vm3296, %v3289, %v3293
    %v3298 = vand.u32 2147483647, %v3288
    %vm3299 = vcmp.eq.f32.partialorder %v3298, 8.507059e+37
    %v3300 = vand.u32 %v3288, 2147483648
    %v3301 = vor.u32 1.1754944e-38, %v3300
    %v3302 = vsel %vm3299, %v3301, %v3297
    %v3303 = vmul.f32 %v3285, %v3302
    %v3304 = vsel %vm956, %v3303, -inf
    %3305 = vmax.xlane.f32.xlu0 %v3304
    %v3306 = vpop.xlane.xlu0 %3305
    %vm3307 = vcmp.eq.f32.partialorder %v3303, %v3306
    %v3308 = vsel %vm3307, %v929, 16
    %v3309 = vsel %vm956, %v3308, 2147483647
    %v3310 = vand.u32 %v3309, 65535
    %v3311 = vshra.s32 %v3309, 16
    %v3312 = vcvt.s32.f32 %v3310
    %v3313 = vcvt.s32.f32 %v3311
    %3314 = vmin.xlane.f32.xlu0 %v3313
    %v3315 = vpop.xlane.xlu0 %3314
    %vm3316 = vcmp.eq.f32.partialorder %v3313, %v3315
    %v3317 = vsel %vm3316, %v3312, inf
    %3318 = vmin.xlane.f32.xlu0 %v3317
    %v3319 = vpop.xlane.xlu0 %3318
    %v3320 = vcvt.f32.s32 %v3319
    %v3321 = vcvt.f32.s32 %v3315
    %v3322 = vshll.u32 %v3321, 16
    %v3323 = vadd.s32 %v3322, %v3320
    %vm3324 = vcmp.eq.s32.totalorder %v929, %v3323
    %v3325 = vsel %vm3324, 1, 0
    %v3326 = vcvt.s32.f32 %v3325
    %v3327 = vsub.f32 %v3326, %v3303
    %v3328 = vadd.f32 %v3327, %v3303
    %v3329 = vsel %vm956, %v3276, -inf
    %3330 = vmax.xlane.f32.xlu0 %v3329
    %v3331 = vpop.xlane.xlu0 %3330
    %v3332 = vsub.f32 %v3276, %v3331
    %v3333 = vmul.f32 %v3332, 1.442695
    %v3334 = vpow.pop %v3333
    %v3335 = vsel %vm956, %v3334, 0.0
    %3336 = vadd.xlane.f32.xlu0 %v3335
    %v3337 = vpop.xlane.xlu0 %3336
    %v3338 = vlog2.pop %v3337
    %v3339 = vmul.f32 %v3338, 0.6931472
    %v3340 = vadd.f32 %v3331, %v3339
    %v3341 = vmul.f32 %v3326, %v3276
    %v3342 = vsel %vm956, %v3341, 0.0
    %3343 = vadd.xlane.f32.xlu0 %v3342
    %v3344 = vpop.xlane.xlu0 %3343
    %v3345 = vsub.f32 %v3340, %v3344
    %3346 = vrot.lane.b32.xlu0 %v2649, 32
    %v3347 = vpop.permute.xlu0 %3346
    %v3348 = vsel %vm54, %v3347, 0
    %3350 = vmatpush.msra.mxu0 0.0
    %3351 = vmatpush.msra.mxu0 0.0
    %3352 = vmatpush.msra.mxu0 0.0
    %3353 = vmatpush.msra.mxu0 0.0
    %3354 = vmatpush.msra.mxu0 0.0
    %3355 = vmatpush.msra.mxu0 0.0
    %3356 = vmatpush.msra.mxu0 0.0
    %3357 = vmatpush.msra.mxu0 0.0
    %3358 = vmatpush.msra.mxu0 0.0
    %3359 = vmatpush.msra.mxu0 0.0
    %3360 = vmatpush.msra.mxu0 0.0
    %3361 = vmatpush.msra.mxu0 0.0
    %3362 = vmatpush.msra.mxu0 %v915
    %3363 = vmatpush.msra.mxu0 %v914
    %3364 = vmatpush.msra.mxu0 %v913
    %3365 = vmatpush.msra.mxu0 %v912
    %3366 = vmatmul.f32.gmra.mxu0 %v3348
    %v3367 = vpop.f32.mrf.mxu0
    %v3368 = vadd.f32 0.0, %v3367
    %3369 = vdwg.mxu0
    %v3371 = vsel %vm956, %v3326, 0
    %3373 = vmatpush.msra.mxu0 0.0
    %3374 = vmatpush.msra.mxu0 0.0
    %3375 = vmatpush.msra.mxu0 0.0
    %3376 = vmatpush.msra.mxu0 0.0
    %3377 = vmatpush.msra.mxu0 0.0
    %3378 = vmatpush.msra.mxu0 0.0
    %3379 = vmatpush.msra.mxu0 0.0
    %3380 = vmatpush.msra.mxu0 0.0
    %3381 = vmatpush.msra.mxu0 0.0
    %3382 = vmatpush.msra.mxu0 0.0
    %3383 = vmatpush.msra.mxu0 0.0
    %3384 = vmatpush.msra.mxu0 0.0
    %3385 = vmatpush.msra.mxu0 0.0
    %3386 = vmatpush.msra.mxu0 0.0
    %3387 = vmatpush.msra.mxu0 %v910
    %3388 = vmatpush.msra.mxu0 %v907
    %3389 = vmatmul.f32.gmra.mxu0 %v3371
    %v3390 = vpop.f32.mrf.mxu0
    %v3391 = vadd.f32 %v3368, %v3390
    %3392 = vdwg.mxu0
    %v3393 = vadd.f32 %v3391, %v981
    %v3394 = vxor.u32 %v3393, 2147483648
    %v3395 = vmul.f32 %v3394, 1.442695
    %v3396 = vpow.pop %v3395
    %v3397 = vadd.f32 %v3396, 1.0
    %v3398 = vrcp.pop %v3397
    %v3399 = vmul.f32 %v3397, %v3398
    %v3400 = vsub.f32 1.0, %v3399
    %v3401 = vmul.f32 %v3398, %v3400
    %v3402 = vadd.f32 %v3398, %v3401
    %vm3403 = vweird.f32 %v3397
    %vm3404 = vweird.f32 %v3398
    %vm3405 = vmor %vm3403, %vm3404
    %v3406 = vsel %vm3405, %v3398, %v3402
    %v3407 = vand.u32 2147483647, %v3397
    %vm3408 = vcmp.eq.f32.partialorder %v3407, 8.507059e+37
    %v3409 = vand.u32 %v3397, 2147483648
    %v3410 = vor.u32 1.1754944e-38, %v3409
    %v3411 = vsel %vm3408, %v3410, %v3406
    %v3412 = vmul.f32 1.0, %v3411
    %v3413 = vtanh.pop %v3393
    %v3414 = vmul.f32 %v3412, %v2643
    %3416 = vrot.lane.b32.xlu0 %v3413, 64
    %v3417 = vpop.permute.xlu0 %3416
    %v3419 = vmul.f32 %v3412, %v3417
    %3421 = vrot.lane.b32.xlu0 %v3419, 32
    %v3422 = vpop.permute.xlu0 %3421
    %v3424 = vadd.f32 %v3414, %v3422
    %v3425 = vtanh.pop %v3424
    %3427 = vrot.lane.b32.xlu0 %v3425, 64
    %v3428 = vpop.permute.xlu0 %3427
    %v3430 = vmul.f32 %v3412, %v3428
    %v3432 = vrot.slane %v3430, 1
    %v3433 = vrot.slane %v3430, 2
    %v3434 = vrot.slane %v3430, 3
    %v3435 = vrot.slane %v3430, 4
    %v3436 = vrot.slane %v3430, 5
    %v3437 = vrot.slane %v3430, 6
    %v3438 = vrot.slane %v3430, 7
    %v3439 = vperm.slane %v3430, 0
    %3440 = vrot.lane.b32.xlu0 %v3439, 32
    %v3441 = vpop.permute.xlu0 %3440
    %v3442 = vsel %vm54, %v3441, 0
    %3444 = vmatpush.xpose.msra.mxu0 0.0
    %3445 = vmatpush.xpose.msra.mxu0 0.0
    %3446 = vmatpush.xpose.msra.mxu0 0.0
    %3447 = vmatpush.xpose.msra.mxu0 0.0
    %3448 = vmatpush.xpose.msra.mxu0 0.0
    %3449 = vmatpush.xpose.msra.mxu0 0.0
    %3450 = vmatpush.xpose.msra.mxu0 0.0
    %3451 = vmatpush.xpose.msra.mxu0 0.0
    %3452 = vmatpush.xpose.msra.mxu0 0.0
    %3453 = vmatpush.xpose.msra.mxu0 0.0
    %3454 = vmatpush.xpose.msra.mxu0 0.0
    %3455 = vmatpush.xpose.msra.mxu0 0.0
    %3456 = vmatpush.xpose.msra.mxu0 0.0
    %3457 = vmatpush.xpose.msra.mxu0 0.0
    %3458 = vmatpush.xpose.msra.mxu0 0.0
    %3459 = vmatpush.xpose.msra.mxu0 %v1037
    %3460 = vmatmul.f32.gmra.mxu0 %v3442
    %v3461 = vpop.f32.mrf.mxu0
    %v3462 = vadd.f32 0.0, %v3461
    %3463 = vdwg.mxu0
    %v3464 = vperm.slane %v3432, 0
    %3465 = vrot.lane.b32.xlu0 %v3464, 32
    %v3466 = vpop.permute.xlu0 %3465
    %v3467 = vsel %vm54, %v3466, 0
    %3469 = vmatpush.xpose.msra.mxu0 0.0
    %3470 = vmatpush.xpose.msra.mxu0 0.0
    %3471 = vmatpush.xpose.msra.mxu0 0.0
    %3472 = vmatpush.xpose.msra.mxu0 0.0
    %3473 = vmatpush.xpose.msra.mxu0 0.0
    %3474 = vmatpush.xpose.msra.mxu0 0.0
    %3475 = vmatpush.xpose.msra.mxu0 0.0
    %3476 = vmatpush.xpose.msra.mxu0 0.0
    %3477 = vmatpush.xpose.msra.mxu0 0.0
    %3478 = vmatpush.xpose.msra.mxu0 0.0
    %3479 = vmatpush.xpose.msra.mxu0 0.0
    %3480 = vmatpush.xpose.msra.mxu0 0.0
    %3481 = vmatpush.xpose.msra.mxu0 0.0
    %3482 = vmatpush.xpose.msra.mxu0 0.0
    %3483 = vmatpush.xpose.msra.mxu0 0.0
    %3484 = vmatpush.xpose.msra.mxu0 %v1067
    %3485 = vmatmul.f32.gmra.mxu0 %v3467
    %v3486 = vpop.f32.mrf.mxu0
    %v3487 = vadd.f32 0.0, %v3486
    %3488 = vdwg.mxu0
    %v3489 = vperm.slane %v3433, 0
    %3490 = vrot.lane.b32.xlu0 %v3489, 32
    %v3491 = vpop.permute.xlu0 %3490
    %v3492 = vsel %vm54, %v3491, 0
    %3494 = vmatpush.xpose.msra.mxu0 0.0
    %3495 = vmatpush.xpose.msra.mxu0 0.0
    %3496 = vmatpush.xpose.msra.mxu0 0.0
    %3497 = vmatpush.xpose.msra.mxu0 0.0
    %3498 = vmatpush.xpose.msra.mxu0 0.0
    %3499 = vmatpush.xpose.msra.mxu0 0.0
    %3500 = vmatpush.xpose.msra.mxu0 0.0
    %3501 = vmatpush.xpose.msra.mxu0 0.0
    %3502 = vmatpush.xpose.msra.mxu0 0.0
    %3503 = vmatpush.xpose.msra.mxu0 0.0
    %3504 = vmatpush.xpose.msra.mxu0 0.0
    %3505 = vmatpush.xpose.msra.mxu0 0.0
    %3506 = vmatpush.xpose.msra.mxu0 0.0
    %3507 = vmatpush.xpose.msra.mxu0 0.0
    %3508 = vmatpush.xpose.msra.mxu0 0.0
    %3509 = vmatpush.xpose.msra.mxu0 %v1097
    %3510 = vmatmul.f32.gmra.mxu0 %v3492
    %v3511 = vpop.f32.mrf.mxu0
    %v3512 = vadd.f32 0.0, %v3511
    %3513 = vdwg.mxu0
    %v3514 = vperm.slane %v3434, 0
    %3515 = vrot.lane.b32.xlu0 %v3514, 32
    %v3516 = vpop.permute.xlu0 %3515
    %v3517 = vsel %vm54, %v3516, 0
    %3519 = vmatpush.xpose.msra.mxu0 0.0
    %3520 = vmatpush.xpose.msra.mxu0 0.0
    %3521 = vmatpush.xpose.msra.mxu0 0.0
    %3522 = vmatpush.xpose.msra.mxu0 0.0
    %3523 = vmatpush.xpose.msra.mxu0 0.0
    %3524 = vmatpush.xpose.msra.mxu0 0.0
    %3525 = vmatpush.xpose.msra.mxu0 0.0
    %3526 = vmatpush.xpose.msra.mxu0 0.0
    %3527 = vmatpush.xpose.msra.mxu0 0.0
    %3528 = vmatpush.xpose.msra.mxu0 0.0
    %3529 = vmatpush.xpose.msra.mxu0 0.0
    %3530 = vmatpush.xpose.msra.mxu0 0.0
    %3531 = vmatpush.xpose.msra.mxu0 0.0
    %3532 = vmatpush.xpose.msra.mxu0 0.0
    %3533 = vmatpush.xpose.msra.mxu0 0.0
    %3534 = vmatpush.xpose.msra.mxu0 %v1127
    %3535 = vmatmul.f32.gmra.mxu0 %v3517
    %v3536 = vpop.f32.mrf.mxu0
    %v3537 = vadd.f32 0.0, %v3536
    %3538 = vdwg.mxu0
    %v3539 = vperm.slane %v3435, 0
    %3540 = vrot.lane.b32.xlu0 %v3539, 32
    %v3541 = vpop.permute.xlu0 %3540
    %v3542 = vsel %vm54, %v3541, 0
    %3544 = vmatpush.xpose.msra.mxu0 0.0
    %3545 = vmatpush.xpose.msra.mxu0 0.0
    %3546 = vmatpush.xpose.msra.mxu0 0.0
    %3547 = vmatpush.xpose.msra.mxu0 0.0
    %3548 = vmatpush.xpose.msra.mxu0 0.0
    %3549 = vmatpush.xpose.msra.mxu0 0.0
    %3550 = vmatpush.xpose.msra.mxu0 0.0
    %3551 = vmatpush.xpose.msra.mxu0 0.0
    %3552 = vmatpush.xpose.msra.mxu0 0.0
    %3553 = vmatpush.xpose.msra.mxu0 0.0
    %3554 = vmatpush.xpose.msra.mxu0 0.0
    %3555 = vmatpush.xpose.msra.mxu0 0.0
    %3556 = vmatpush.xpose.msra.mxu0 0.0
    %3557 = vmatpush.xpose.msra.mxu0 0.0
    %3558 = vmatpush.xpose.msra.mxu0 0.0
    %3559 = vmatpush.xpose.msra.mxu0 %v1157
    %3560 = vmatmul.f32.gmra.mxu0 %v3542
    %v3561 = vpop.f32.mrf.mxu0
    %v3562 = vadd.f32 0.0, %v3561
    %3563 = vdwg.mxu0
    %v3564 = vperm.slane %v3436, 0
    %3565 = vrot.lane.b32.xlu0 %v3564, 32
    %v3566 = vpop.permute.xlu0 %3565
    %v3567 = vsel %vm54, %v3566, 0
    %3569 = vmatpush.xpose.msra.mxu0 0.0
    %3570 = vmatpush.xpose.msra.mxu0 0.0
    %3571 = vmatpush.xpose.msra.mxu0 0.0
    %3572 = vmatpush.xpose.msra.mxu0 0.0
    %3573 = vmatpush.xpose.msra.mxu0 0.0
    %3574 = vmatpush.xpose.msra.mxu0 0.0
    %3575 = vmatpush.xpose.msra.mxu0 0.0
    %3576 = vmatpush.xpose.msra.mxu0 0.0
    %3577 = vmatpush.xpose.msra.mxu0 0.0
    %3578 = vmatpush.xpose.msra.mxu0 0.0
    %3579 = vmatpush.xpose.msra.mxu0 0.0
    %3580 = vmatpush.xpose.msra.mxu0 0.0
    %3581 = vmatpush.xpose.msra.mxu0 0.0
    %3582 = vmatpush.xpose.msra.mxu0 0.0
    %3583 = vmatpush.xpose.msra.mxu0 0.0
    %3584 = vmatpush.xpose.msra.mxu0 %v1187
    %3585 = vmatmul.f32.gmra.mxu0 %v3567
    %v3586 = vpop.f32.mrf.mxu0
    %v3587 = vadd.f32 0.0, %v3586
    %3588 = vdwg.mxu0
    %v3589 = vperm.slane %v3437, 0
    %3590 = vrot.lane.b32.xlu0 %v3589, 32
    %v3591 = vpop.permute.xlu0 %3590
    %v3592 = vsel %vm54, %v3591, 0
    %3594 = vmatpush.xpose.msra.mxu0 0.0
    %3595 = vmatpush.xpose.msra.mxu0 0.0
    %3596 = vmatpush.xpose.msra.mxu0 0.0
    %3597 = vmatpush.xpose.msra.mxu0 0.0
    %3598 = vmatpush.xpose.msra.mxu0 0.0
    %3599 = vmatpush.xpose.msra.mxu0 0.0
    %3600 = vmatpush.xpose.msra.mxu0 0.0
    %3601 = vmatpush.xpose.msra.mxu0 0.0
    %3602 = vmatpush.xpose.msra.mxu0 0.0
    %3603 = vmatpush.xpose.msra.mxu0 0.0
    %3604 = vmatpush.xpose.msra.mxu0 0.0
    %3605 = vmatpush.xpose.msra.mxu0 0.0
    %3606 = vmatpush.xpose.msra.mxu0 0.0
    %3607 = vmatpush.xpose.msra.mxu0 0.0
    %3608 = vmatpush.xpose.msra.mxu0 0.0
    %3609 = vmatpush.xpose.msra.mxu0 %v1217
    %3610 = vmatmul.f32.gmra.mxu0 %v3592
    %v3611 = vpop.f32.mrf.mxu0
    %v3612 = vadd.f32 0.0, %v3611
    %3613 = vdwg.mxu0
    %v3614 = vperm.slane %v3438, 0
    %3615 = vrot.lane.b32.xlu0 %v3614, 32
    %v3616 = vpop.permute.xlu0 %3615
    %v3617 = vsel %vm54, %v3616, 0
    %3619 = vmatpush.xpose.msra.mxu0 0.0
    %3620 = vmatpush.xpose.msra.mxu0 0.0
    %3621 = vmatpush.xpose.msra.mxu0 0.0
    %3622 = vmatpush.xpose.msra.mxu0 0.0
    %3623 = vmatpush.xpose.msra.mxu0 0.0
    %3624 = vmatpush.xpose.msra.mxu0 0.0
    %3625 = vmatpush.xpose.msra.mxu0 0.0
    %3626 = vmatpush.xpose.msra.mxu0 0.0
    %3627 = vmatpush.xpose.msra.mxu0 0.0
    %3628 = vmatpush.xpose.msra.mxu0 0.0
    %3629 = vmatpush.xpose.msra.mxu0 0.0
    %3630 = vmatpush.xpose.msra.mxu0 0.0
    %3631 = vmatpush.xpose.msra.mxu0 0.0
    %3632 = vmatpush.xpose.msra.mxu0 0.0
    %3633 = vmatpush.xpose.msra.mxu0 0.0
    %3634 = vmatpush.xpose.msra.mxu0 %v1247
    %3635 = vmatmul.f32.gmra.mxu0 %v3617
    %v3636 = vpop.f32.mrf.mxu0
    %v3637 = vadd.f32 0.0, %v3636
    %3638 = vdwg.mxu0
    %v3639 = vsel %vm1269, %v3462, -inf
    %3640 = vmax.xlane.f32.xlu0 %v3639
    %v3641 = vpop.xlane.xlu0 %3640
    %v3642 = vsel %vm1269, %v3487, -inf
    %3643 = vmax.xlane.f32.xlu0 %v3642
    %v3644 = vpop.xlane.xlu0 %3643
    %v3645 = vsel %vm1269, %v3512, -inf
    %3646 = vmax.xlane.f32.xlu0 %v3645
    %v3647 = vpop.xlane.xlu0 %3646
    %v3648 = vsel %vm1269, %v3537, -inf
    %3649 = vmax.xlane.f32.xlu0 %v3648
    %v3650 = vpop.xlane.xlu0 %3649
    %v3651 = vsel %vm1269, %v3562, -inf
    %3652 = vmax.xlane.f32.xlu0 %v3651
    %v3653 = vpop.xlane.xlu0 %3652
    %v3654 = vsel %vm1269, %v3587, -inf
    %3655 = vmax.xlane.f32.xlu0 %v3654
    %v3656 = vpop.xlane.xlu0 %3655
    %v3657 = vsel %vm1269, %v3612, -inf
    %3658 = vmax.xlane.f32.xlu0 %v3657
    %v3659 = vpop.xlane.xlu0 %3658
    %v3660 = vsel %vm1269, %v3637, -inf
    %3661 = vmax.xlane.f32.xlu0 %v3660
    %v3662 = vpop.xlane.xlu0 %3661
    %v3663 = vsub.f32 %v3462, %v3641
    %v3664 = vsub.f32 %v3487, %v3644
    %v3665 = vsub.f32 %v3512, %v3647
    %v3666 = vsub.f32 %v3537, %v3650
    %v3667 = vsub.f32 %v3562, %v3653
    %v3668 = vsub.f32 %v3587, %v3656
    %v3669 = vsub.f32 %v3612, %v3659
    %v3670 = vsub.f32 %v3637, %v3662
    %v3671 = vmul.f32 %v3663, 1.442695
    %v3672 = vpow.pop %v3671
    %v3673 = vmul.f32 %v3664, 1.442695
    %v3674 = vpow.pop %v3673
    %v3675 = vmul.f32 %v3665, 1.442695
    %v3676 = vpow.pop %v3675
    %v3677 = vmul.f32 %v3666, 1.442695
    %v3678 = vpow.pop %v3677
    %v3679 = vmul.f32 %v3667, 1.442695
    %v3680 = vpow.pop %v3679
    %v3681 = vmul.f32 %v3668, 1.442695
    %v3682 = vpow.pop %v3681
    %v3683 = vmul.f32 %v3669, 1.442695
    %v3684 = vpow.pop %v3683
    %v3685 = vmul.f32 %v3670, 1.442695
    %v3686 = vpow.pop %v3685
    %v3687 = vsel %vm1269, %v3672, 0.0
    %3688 = vadd.xlane.f32.xlu0 %v3687
    %v3689 = vpop.xlane.xlu0 %3688
    %v3690 = vsel %vm1269, %v3674, 0.0
    %3691 = vadd.xlane.f32.xlu0 %v3690
    %v3692 = vpop.xlane.xlu0 %3691
    %v3693 = vsel %vm1269, %v3676, 0.0
    %3694 = vadd.xlane.f32.xlu0 %v3693
    %v3695 = vpop.xlane.xlu0 %3694
    %v3696 = vsel %vm1269, %v3678, 0.0
    %3697 = vadd.xlane.f32.xlu0 %v3696
    %v3698 = vpop.xlane.xlu0 %3697
    %v3699 = vsel %vm1269, %v3680, 0.0
    %3700 = vadd.xlane.f32.xlu0 %v3699
    %v3701 = vpop.xlane.xlu0 %3700
    %v3702 = vsel %vm1269, %v3682, 0.0
    %3703 = vadd.xlane.f32.xlu0 %v3702
    %v3704 = vpop.xlane.xlu0 %3703
    %v3705 = vsel %vm1269, %v3684, 0.0
    %3706 = vadd.xlane.f32.xlu0 %v3705
    %v3707 = vpop.xlane.xlu0 %3706
    %v3708 = vsel %vm1269, %v3686, 0.0
    %3709 = vadd.xlane.f32.xlu0 %v3708
    %v3710 = vpop.xlane.xlu0 %3709
    %v3711 = vrcp.pop %v3689
    %v3712 = vmul.f32 %v3689, %v3711
    %v3713 = vsub.f32 1.0, %v3712
    %v3714 = vmul.f32 %v3711, %v3713
    %v3715 = vadd.f32 %v3711, %v3714
    %vm3716 = vweird.f32 %v3689
    %vm3717 = vweird.f32 %v3711
    %vm3718 = vmor %vm3716, %vm3717
    %v3719 = vsel %vm3718, %v3711, %v3715
    %v3720 = vand.u32 2147483647, %v3689
    %vm3721 = vcmp.eq.f32.partialorder %v3720, 8.507059e+37
    %v3722 = vand.u32 %v3689, 2147483648
    %v3723 = vor.u32 1.1754944e-38, %v3722
    %v3724 = vsel %vm3721, %v3723, %v3719
    %v3725 = vmul.f32 %v3672, %v3724
    %v3726 = vrcp.pop %v3692
    %v3727 = vmul.f32 %v3692, %v3726
    %v3728 = vsub.f32 1.0, %v3727
    %v3729 = vmul.f32 %v3726, %v3728
    %v3730 = vadd.f32 %v3726, %v3729
    %vm3731 = vweird.f32 %v3692
    %vm3732 = vweird.f32 %v3726
    %vm3733 = vmor %vm3731, %vm3732
    %v3734 = vsel %vm3733, %v3726, %v3730
    %v3735 = vand.u32 2147483647, %v3692
    %vm3736 = vcmp.eq.f32.partialorder %v3735, 8.507059e+37
    %v3737 = vand.u32 %v3692, 2147483648
    %v3738 = vor.u32 1.1754944e-38, %v3737
    %v3739 = vsel %vm3736, %v3738, %v3734
    %v3740 = vmul.f32 %v3674, %v3739
    %v3741 = vrcp.pop %v3695
    %v3742 = vmul.f32 %v3695, %v3741
    %v3743 = vsub.f32 1.0, %v3742
    %v3744 = vmul.f32 %v3741, %v3743
    %v3745 = vadd.f32 %v3741, %v3744
    %vm3746 = vweird.f32 %v3695
    %vm3747 = vweird.f32 %v3741
    %vm3748 = vmor %vm3746, %vm3747
    %v3749 = vsel %vm3748, %v3741, %v3745
    %v3750 = vand.u32 2147483647, %v3695
    %vm3751 = vcmp.eq.f32.partialorder %v3750, 8.507059e+37
    %v3752 = vand.u32 %v3695, 2147483648
    %v3753 = vor.u32 1.1754944e-38, %v3752
    %v3754 = vsel %vm3751, %v3753, %v3749
    %v3755 = vmul.f32 %v3676, %v3754
    %v3756 = vrcp.pop %v3698
    %v3757 = vmul.f32 %v3698, %v3756
    %v3758 = vsub.f32 1.0, %v3757
    %v3759 = vmul.f32 %v3756, %v3758
    %v3760 = vadd.f32 %v3756, %v3759
    %vm3761 = vweird.f32 %v3698
    %vm3762 = vweird.f32 %v3756
    %vm3763 = vmor %vm3761, %vm3762
    %v3764 = vsel %vm3763, %v3756, %v3760
    %v3765 = vand.u32 2147483647, %v3698
    %vm3766 = vcmp.eq.f32.partialorder %v3765, 8.507059e+37
    %v3767 = vand.u32 %v3698, 2147483648
    %v3768 = vor.u32 1.1754944e-38, %v3767
    %v3769 = vsel %vm3766, %v3768, %v3764
    %v3770 = vmul.f32 %v3678, %v3769
    %v3771 = vrcp.pop %v3701
    %v3772 = vmul.f32 %v3701, %v3771
    %v3773 = vsub.f32 1.0, %v3772
    %v3774 = vmul.f32 %v3771, %v3773
    %v3775 = vadd.f32 %v3771, %v3774
    %vm3776 = vweird.f32 %v3701
    %vm3777 = vweird.f32 %v3771
    %vm3778 = vmor %vm3776, %vm3777
    %v3779 = vsel %vm3778, %v3771, %v3775
    %v3780 = vand.u32 2147483647, %v3701
    %vm3781 = vcmp.eq.f32.partialorder %v3780, 8.507059e+37
    %v3782 = vand.u32 %v3701, 2147483648
    %v3783 = vor.u32 1.1754944e-38, %v3782
    %v3784 = vsel %vm3781, %v3783, %v3779
    %v3785 = vmul.f32 %v3680, %v3784
    %v3786 = vrcp.pop %v3704
    %v3787 = vmul.f32 %v3704, %v3786
    %v3788 = vsub.f32 1.0, %v3787
    %v3789 = vmul.f32 %v3786, %v3788
    %v3790 = vadd.f32 %v3786, %v3789
    %vm3791 = vweird.f32 %v3704
    %vm3792 = vweird.f32 %v3786
    %vm3793 = vmor %vm3791, %vm3792
    %v3794 = vsel %vm3793, %v3786, %v3790
    %v3795 = vand.u32 2147483647, %v3704
    %vm3796 = vcmp.eq.f32.partialorder %v3795, 8.507059e+37
    %v3797 = vand.u32 %v3704, 2147483648
    %v3798 = vor.u32 1.1754944e-38, %v3797
    %v3799 = vsel %vm3796, %v3798, %v3794
    %v3800 = vmul.f32 %v3682, %v3799
    %v3801 = vrcp.pop %v3707
    %v3802 = vmul.f32 %v3707, %v3801
    %v3803 = vsub.f32 1.0, %v3802
    %v3804 = vmul.f32 %v3801, %v3803
    %v3805 = vadd.f32 %v3801, %v3804
    %vm3806 = vweird.f32 %v3707
    %vm3807 = vweird.f32 %v3801
    %vm3808 = vmor %vm3806, %vm3807
    %v3809 = vsel %vm3808, %v3801, %v3805
    %v3810 = vand.u32 2147483647, %v3707
    %vm3811 = vcmp.eq.f32.partialorder %v3810, 8.507059e+37
    %v3812 = vand.u32 %v3707, 2147483648
    %v3813 = vor.u32 1.1754944e-38, %v3812
    %v3814 = vsel %vm3811, %v3813, %v3809
    %v3815 = vmul.f32 %v3684, %v3814
    %v3816 = vrcp.pop %v3710
    %v3817 = vmul.f32 %v3710, %v3816
    %v3818 = vsub.f32 1.0, %v3817
    %v3819 = vmul.f32 %v3816, %v3818
    %v3820 = vadd.f32 %v3816, %v3819
    %vm3821 = vweird.f32 %v3710
    %vm3822 = vweird.f32 %v3816
    %vm3823 = vmor %vm3821, %vm3822
    %v3824 = vsel %vm3823, %v3816, %v3820
    %v3825 = vand.u32 2147483647, %v3710
    %vm3826 = vcmp.eq.f32.partialorder %v3825, 8.507059e+37
    %v3827 = vand.u32 %v3710, 2147483648
    %v3828 = vor.u32 1.1754944e-38, %v3827
    %v3829 = vsel %vm3826, %v3828, %v3824
    %v3830 = vmul.f32 %v3686, %v3829
    %v3832 = vsel %vm1463, %v3725, 0
    %3834 = vmatpush.msra.mxu0 0.0
    %3835 = vmatpush.msra.mxu0 0.0
    %3836 = vmatpush.msra.mxu0 0.0
    %3837 = vmatpush.msra.mxu0 0.0
    %3838 = vmatpush.msra.mxu0 0.0
    %3839 = vmatpush.msra.mxu0 0.0
    %3840 = vmatpush.msra.mxu0 0.0
    %3841 = vmatpush.msra.mxu0 0.0
    %3842 = vmatpush.msra.mxu0 0.0
    %3843 = vmatpush.msra.mxu0 0.0
    %3844 = vmatpush.msra.mxu0 0.0
    %3845 = vmatpush.msra.mxu0 0.0
    %3846 = vmatpush.msra.mxu0 0.0
    %3847 = vmatpush.msra.mxu0 0.0
    %3848 = vmatpush.msra.mxu0 0.0
    %3849 = vmatpush.msra.mxu0 %v1034
    %3850 = vmatmul.f32.gmra.mxu0 %v3832
    %v3851 = vpop.f32.mrf.mxu0
    %v3852 = vadd.f32 0.0, %v3851
    %3853 = vdwg.mxu0
    %v3855 = vsel %vm1463, %v3740, 0
    %3857 = vmatpush.msra.mxu0 0.0
    %3858 = vmatpush.msra.mxu0 0.0
    %3859 = vmatpush.msra.mxu0 0.0
    %3860 = vmatpush.msra.mxu0 0.0
    %3861 = vmatpush.msra.mxu0 0.0
    %3862 = vmatpush.msra.mxu0 0.0
    %3863 = vmatpush.msra.mxu0 0.0
    %3864 = vmatpush.msra.mxu0 0.0
    %3865 = vmatpush.msra.mxu0 0.0
    %3866 = vmatpush.msra.mxu0 0.0
    %3867 = vmatpush.msra.mxu0 0.0
    %3868 = vmatpush.msra.mxu0 0.0
    %3869 = vmatpush.msra.mxu0 0.0
    %3870 = vmatpush.msra.mxu0 0.0
    %3871 = vmatpush.msra.mxu0 0.0
    %3872 = vmatpush.msra.mxu0 %v1064
    %3873 = vmatmul.f32.gmra.mxu0 %v3855
    %v3874 = vpop.f32.mrf.mxu0
    %v3875 = vadd.f32 0.0, %v3874
    %3876 = vdwg.mxu0
    %v3878 = vsel %vm1463, %v3755, 0
    %3880 = vmatpush.msra.mxu0 0.0
    %3881 = vmatpush.msra.mxu0 0.0
    %3882 = vmatpush.msra.mxu0 0.0
    %3883 = vmatpush.msra.mxu0 0.0
    %3884 = vmatpush.msra.mxu0 0.0
    %3885 = vmatpush.msra.mxu0 0.0
    %3886 = vmatpush.msra.mxu0 0.0
    %3887 = vmatpush.msra.mxu0 0.0
    %3888 = vmatpush.msra.mxu0 0.0
    %3889 = vmatpush.msra.mxu0 0.0
    %3890 = vmatpush.msra.mxu0 0.0
    %3891 = vmatpush.msra.mxu0 0.0
    %3892 = vmatpush.msra.mxu0 0.0
    %3893 = vmatpush.msra.mxu0 0.0
    %3894 = vmatpush.msra.mxu0 0.0
    %3895 = vmatpush.msra.mxu0 %v1094
    %3896 = vmatmul.f32.gmra.mxu0 %v3878
    %v3897 = vpop.f32.mrf.mxu0
    %v3898 = vadd.f32 0.0, %v3897
    %3899 = vdwg.mxu0
    %v3901 = vsel %vm1463, %v3770, 0
    %3903 = vmatpush.msra.mxu0 0.0
    %3904 = vmatpush.msra.mxu0 0.0
    %3905 = vmatpush.msra.mxu0 0.0
    %3906 = vmatpush.msra.mxu0 0.0
    %3907 = vmatpush.msra.mxu0 0.0
    %3908 = vmatpush.msra.mxu0 0.0
    %3909 = vmatpush.msra.mxu0 0.0
    %3910 = vmatpush.msra.mxu0 0.0
    %3911 = vmatpush.msra.mxu0 0.0
    %3912 = vmatpush.msra.mxu0 0.0
    %3913 = vmatpush.msra.mxu0 0.0
    %3914 = vmatpush.msra.mxu0 0.0
    %3915 = vmatpush.msra.mxu0 0.0
    %3916 = vmatpush.msra.mxu0 0.0
    %3917 = vmatpush.msra.mxu0 0.0
    %3918 = vmatpush.msra.mxu0 %v1124
    %3919 = vmatmul.f32.gmra.mxu0 %v3901
    %v3920 = vpop.f32.mrf.mxu0
    %v3921 = vadd.f32 0.0, %v3920
    %3922 = vdwg.mxu0
    %v3924 = vsel %vm1463, %v3785, 0
    %3926 = vmatpush.msra.mxu0 0.0
    %3927 = vmatpush.msra.mxu0 0.0
    %3928 = vmatpush.msra.mxu0 0.0
    %3929 = vmatpush.msra.mxu0 0.0
    %3930 = vmatpush.msra.mxu0 0.0
    %3931 = vmatpush.msra.mxu0 0.0
    %3932 = vmatpush.msra.mxu0 0.0
    %3933 = vmatpush.msra.mxu0 0.0
    %3934 = vmatpush.msra.mxu0 0.0
    %3935 = vmatpush.msra.mxu0 0.0
    %3936 = vmatpush.msra.mxu0 0.0
    %3937 = vmatpush.msra.mxu0 0.0
    %3938 = vmatpush.msra.mxu0 0.0
    %3939 = vmatpush.msra.mxu0 0.0
    %3940 = vmatpush.msra.mxu0 0.0
    %3941 = vmatpush.msra.mxu0 %v1154
    %3942 = vmatmul.f32.gmra.mxu0 %v3924
    %v3943 = vpop.f32.mrf.mxu0
    %v3944 = vadd.f32 0.0, %v3943
    %3945 = vdwg.mxu0
    %v3947 = vsel %vm1463, %v3800, 0
    %3949 = vmatpush.msra.mxu0 0.0
    %3950 = vmatpush.msra.mxu0 0.0
    %3951 = vmatpush.msra.mxu0 0.0
    %3952 = vmatpush.msra.mxu0 0.0
    %3953 = vmatpush.msra.mxu0 0.0
    %3954 = vmatpush.msra.mxu0 0.0
    %3955 = vmatpush.msra.mxu0 0.0
    %3956 = vmatpush.msra.mxu0 0.0
    %3957 = vmatpush.msra.mxu0 0.0
    %3958 = vmatpush.msra.mxu0 0.0
    %3959 = vmatpush.msra.mxu0 0.0
    %3960 = vmatpush.msra.mxu0 0.0
    %3961 = vmatpush.msra.mxu0 0.0
    %3962 = vmatpush.msra.mxu0 0.0
    %3963 = vmatpush.msra.mxu0 0.0
    %3964 = vmatpush.msra.mxu0 %v1184
    %3965 = vmatmul.f32.gmra.mxu0 %v3947
    %v3966 = vpop.f32.mrf.mxu0
    %v3967 = vadd.f32 0.0, %v3966
    %3968 = vdwg.mxu0
    %v3970 = vsel %vm1463, %v3815, 0
    %3972 = vmatpush.msra.mxu0 0.0
    %3973 = vmatpush.msra.mxu0 0.0
    %3974 = vmatpush.msra.mxu0 0.0
    %3975 = vmatpush.msra.mxu0 0.0
    %3976 = vmatpush.msra.mxu0 0.0
    %3977 = vmatpush.msra.mxu0 0.0
    %3978 = vmatpush.msra.mxu0 0.0
    %3979 = vmatpush.msra.mxu0 0.0
    %3980 = vmatpush.msra.mxu0 0.0
    %3981 = vmatpush.msra.mxu0 0.0
    %3982 = vmatpush.msra.mxu0 0.0
    %3983 = vmatpush.msra.mxu0 0.0
    %3984 = vmatpush.msra.mxu0 0.0
    %3985 = vmatpush.msra.mxu0 0.0
    %3986 = vmatpush.msra.mxu0 0.0
    %3987 = vmatpush.msra.mxu0 %v1214
    %3988 = vmatmul.f32.gmra.mxu0 %v3970
    %v3989 = vpop.f32.mrf.mxu0
    %v3990 = vadd.f32 0.0, %v3989
    %3991 = vdwg.mxu0
    %v3993 = vsel %vm1463, %v3830, 0
    %3995 = vmatpush.msra.mxu0 0.0
    %3996 = vmatpush.msra.mxu0 0.0
    %3997 = vmatpush.msra.mxu0 0.0
    %3998 = vmatpush.msra.mxu0 0.0
    %3999 = vmatpush.msra.mxu0 0.0
    %4000 = vmatpush.msra.mxu0 0.0
    %4001 = vmatpush.msra.mxu0 0.0
    %4002 = vmatpush.msra.mxu0 0.0
    %4003 = vmatpush.msra.mxu0 0.0
    %4004 = vmatpush.msra.mxu0 0.0
    %4005 = vmatpush.msra.mxu0 0.0
    %4006 = vmatpush.msra.mxu0 0.0
    %4007 = vmatpush.msra.mxu0 0.0
    %4008 = vmatpush.msra.mxu0 0.0
    %4009 = vmatpush.msra.mxu0 0.0
    %4010 = vmatpush.msra.mxu0 %v1244
    %4011 = vmatmul.f32.gmra.mxu0 %v3993
    %v4012 = vpop.f32.mrf.mxu0
    %v4013 = vadd.f32 0.0, %v4012
    %4014 = vdwg.mxu0
    %v4023 = vrot.slane %v3875, 7
    %v4024 = vsel %vm1667, %v4023, %v3852
    %v4025 = vrot.slane %v3898, 6
    %v4026 = vsel %vm1670, %v4025, %v4024
    %v4027 = vrot.slane %v3921, 5
    %v4028 = vsel %vm1673, %v4027, %v4026
    %v4029 = vrot.slane %v3944, 4
    %v4030 = vsel %vm1676, %v4029, %v4028
    %v4031 = vrot.slane %v3967, 3
    %v4032 = vsel %vm1679, %v4031, %v4030
    %v4033 = vrot.slane %v3990, 2
    %v4034 = vsel %vm1682, %v4033, %v4032
    %v4035 = vrot.slane %v4013, 1
    %v4036 = vsel %vm1685, %v4035, %v4034
    %v4037 = vsel %vm54, %v4036, 0
    %4039 = vmatpush.msra.mxu0 0.0
    %4040 = vmatpush.msra.mxu0 0.0
    %4041 = vmatpush.msra.mxu0 0.0
    %4042 = vmatpush.msra.mxu0 0.0
    %4043 = vmatpush.msra.mxu0 0.0
    %4044 = vmatpush.msra.mxu0 0.0
    %4045 = vmatpush.msra.mxu0 0.0
    %4046 = vmatpush.msra.mxu0 0.0
    %4047 = vmatpush.msra.mxu0 0.0
    %4048 = vmatpush.msra.mxu0 0.0
    %4049 = vmatpush.msra.mxu0 0.0
    %4050 = vmatpush.msra.mxu0 0.0
    %4051 = vmatpush.msra.mxu0 %v920
    %4052 = vmatpush.msra.mxu0 %v919
    %4053 = vmatpush.msra.mxu0 %v918
    %4054 = vmatpush.msra.mxu0 %v917
    %4055 = vmatmul.f32.gmra.mxu0 %v4037
    %v4056 = vpop.f32.mrf.mxu0
    %v4057 = vadd.f32 %v1656, %v4056
    %4058 = vdwg.mxu0
    %v4059 = vadd.f32 %v4057, %v925
    %v4060 = vmul.f32 %v4059, %v1716
    %v4061 = vsel %vm956, %v4060, -inf
    %4062 = vmax.xlane.f32.xlu0 %v4061
    %v4063 = vpop.xlane.xlu0 %4062
    %v4064 = vsub.f32 %v4060, %v4063
    %v4065 = vmul.f32 %v4064, 1.442695
    %v4066 = vpow.pop %v4065
    %v4067 = vsel %vm956, %v4066, 0.0
    %4068 = vadd.xlane.f32.xlu0 %v4067
    %v4069 = vpop.xlane.xlu0 %4068
    %v4070 = vrcp.pop %v4069
    %v4071 = vmul.f32 %v4069, %v4070
    %v4072 = vsub.f32 1.0, %v4071
    %v4073 = vmul.f32 %v4070, %v4072
    %v4074 = vadd.f32 %v4070, %v4073
    %vm4075 = vweird.f32 %v4069
    %vm4076 = vweird.f32 %v4070
    %vm4077 = vmor %vm4075, %vm4076
    %v4078 = vsel %vm4077, %v4070, %v4074
    %v4079 = vand.u32 2147483647, %v4069
    %vm4080 = vcmp.eq.f32.partialorder %v4079, 8.507059e+37
    %v4081 = vand.u32 %v4069, 2147483648
    %v4082 = vor.u32 1.1754944e-38, %v4081
    %v4083 = vsel %vm4080, %v4082, %v4078
    %v4084 = vmul.f32 %v4066, %v4083
    %v4085 = vsel %vm956, %v4084, -inf
    %4086 = vmax.xlane.f32.xlu0 %v4085
    %v4087 = vpop.xlane.xlu0 %4086
    %vm4088 = vcmp.eq.f32.partialorder %v4084, %v4087
    %v4089 = vsel %vm4088, %v929, 16
    %v4090 = vsel %vm956, %v4089, 2147483647
    %v4091 = vand.u32 %v4090, 65535
    %v4092 = vshra.s32 %v4090, 16
    %v4093 = vcvt.s32.f32 %v4091
    %v4094 = vcvt.s32.f32 %v4092
    %4095 = vmin.xlane.f32.xlu0 %v4094
    %v4096 = vpop.xlane.xlu0 %4095
    %vm4097 = vcmp.eq.f32.partialorder %v4094, %v4096
    %v4098 = vsel %vm4097, %v4093, inf
    %4099 = vmin.xlane.f32.xlu0 %v4098
    %v4100 = vpop.xlane.xlu0 %4099
    %v4101 = vcvt.f32.s32 %v4100
    %v4102 = vcvt.f32.s32 %v4096
    %v4103 = vshll.u32 %v4102, 16
    %v4104 = vadd.s32 %v4103, %v4101
    %vm4105 = vcmp.eq.s32.totalorder %v929, %v4104
    %v4106 = vsel %vm4105, 1, 0
    %v4107 = vcvt.s32.f32 %v4106
    %v4108 = vsub.f32 %v4107, %v4084
    %v4109 = vadd.f32 %v4108, %v4084
    %v4110 = vsel %vm956, %v4057, -inf
    %4111 = vmax.xlane.f32.xlu0 %v4110
    %v4112 = vpop.xlane.xlu0 %4111
    %v4113 = vsub.f32 %v4057, %v4112
    %v4114 = vmul.f32 %v4113, 1.442695
    %v4115 = vpow.pop %v4114
    %v4116 = vsel %vm956, %v4115, 0.0
    %4117 = vadd.xlane.f32.xlu0 %v4116
    %v4118 = vpop.xlane.xlu0 %4117
    %v4119 = vlog2.pop %v4118
    %v4120 = vmul.f32 %v4119, 0.6931472
    %v4121 = vadd.f32 %v4112, %v4120
    %v4122 = vmul.f32 %v4107, %v4057
    %v4123 = vsel %vm956, %v4122, 0.0
    %4124 = vadd.xlane.f32.xlu0 %v4123
    %v4125 = vpop.xlane.xlu0 %4124
    %v4126 = vsub.f32 %v4121, %v4125
    %4127 = vrot.lane.b32.xlu0 %v3430, 32
    %v4128 = vpop.permute.xlu0 %4127
    %v4129 = vsel %vm54, %v4128, 0
    %4131 = vmatpush.msra.mxu0 0.0
    %4132 = vmatpush.msra.mxu0 0.0
    %4133 = vmatpush.msra.mxu0 0.0
    %4134 = vmatpush.msra.mxu0 0.0
    %4135 = vmatpush.msra.mxu0 0.0
    %4136 = vmatpush.msra.mxu0 0.0
    %4137 = vmatpush.msra.mxu0 0.0
    %4138 = vmatpush.msra.mxu0 0.0
    %4139 = vmatpush.msra.mxu0 0.0
    %4140 = vmatpush.msra.mxu0 0.0
    %4141 = vmatpush.msra.mxu0 0.0
    %4142 = vmatpush.msra.mxu0 0.0
    %4143 = vmatpush.msra.mxu0 %v915
    %4144 = vmatpush.msra.mxu0 %v914
    %4145 = vmatpush.msra.mxu0 %v913
    %4146 = vmatpush.msra.mxu0 %v912
    %4147 = vmatmul.f32.gmra.mxu0 %v4129
    %v4148 = vpop.f32.mrf.mxu0
    %v4149 = vadd.f32 0.0, %v4148
    %4150 = vdwg.mxu0
    %v4152 = vsel %vm956, %v4107, 0
    %4154 = vmatpush.msra.mxu0 0.0
    %4155 = vmatpush.msra.mxu0 0.0
    %4156 = vmatpush.msra.mxu0 0.0
    %4157 = vmatpush.msra.mxu0 0.0
    %4158 = vmatpush.msra.mxu0 0.0
    %4159 = vmatpush.msra.mxu0 0.0
    %4160 = vmatpush.msra.mxu0 0.0
    %4161 = vmatpush.msra.mxu0 0.0
    %4162 = vmatpush.msra.mxu0 0.0
    %4163 = vmatpush.msra.mxu0 0.0
    %4164 = vmatpush.msra.mxu0 0.0
    %4165 = vmatpush.msra.mxu0 0.0
    %4166 = vmatpush.msra.mxu0 0.0
    %4167 = vmatpush.msra.mxu0 0.0
    %4168 = vmatpush.msra.mxu0 %v910
    %4169 = vmatpush.msra.mxu0 %v907
    %4170 = vmatmul.f32.gmra.mxu0 %v4152
    %v4171 = vpop.f32.mrf.mxu0
    %v4172 = vadd.f32 %v4149, %v4171
    %4173 = vdwg.mxu0
    %v4174 = vadd.f32 %v4172, %v981
    %v4175 = vxor.u32 %v4174, 2147483648
    %v4176 = vmul.f32 %v4175, 1.442695
    %v4177 = vpow.pop %v4176
    %v4178 = vadd.f32 %v4177, 1.0
    %v4179 = vrcp.pop %v4178
    %v4180 = vmul.f32 %v4178, %v4179
    %v4181 = vsub.f32 1.0, %v4180
    %v4182 = vmul.f32 %v4179, %v4181
    %v4183 = vadd.f32 %v4179, %v4182
    %vm4184 = vweird.f32 %v4178
    %vm4185 = vweird.f32 %v4179
    %vm4186 = vmor %vm4184, %vm4185
    %v4187 = vsel %vm4186, %v4179, %v4183
    %v4188 = vand.u32 2147483647, %v4178
    %vm4189 = vcmp.eq.f32.partialorder %v4188, 8.507059e+37
    %v4190 = vand.u32 %v4178, 2147483648
    %v4191 = vor.u32 1.1754944e-38, %v4190
    %v4192 = vsel %vm4189, %v4191, %v4187
    %v4193 = vmul.f32 1.0, %v4192
    %v4194 = vtanh.pop %v4174
    %v4195 = vmul.f32 %v4193, %v3424
    %4197 = vrot.lane.b32.xlu0 %v4194, 64
    %v4198 = vpop.permute.xlu0 %4197
    %v4200 = vmul.f32 %v4193, %v4198
    %4202 = vrot.lane.b32.xlu0 %v4200, 32
    %v4203 = vpop.permute.xlu0 %4202
    %v4205 = vadd.f32 %v4195, %v4203
    %v4206 = vtanh.pop %v4205
    %4208 = vrot.lane.b32.xlu0 %v4206, 64
    %v4209 = vpop.permute.xlu0 %4208
    %v4211 = vmul.f32 %v4193, %v4209
    %v4213 = vrot.slane %v4211, 1
    %v4214 = vrot.slane %v4211, 2
    %v4215 = vrot.slane %v4211, 3
    %v4216 = vrot.slane %v4211, 4
    %v4217 = vrot.slane %v4211, 5
    %v4218 = vrot.slane %v4211, 6
    %v4219 = vrot.slane %v4211, 7
    %v4220 = vperm.slane %v4211, 0
    %4221 = vrot.lane.b32.xlu0 %v4220, 32
    %v4222 = vpop.permute.xlu0 %4221
    %v4223 = vsel %vm54, %v4222, 0
    %4225 = vmatpush.xpose.msra.mxu0 0.0
    %4226 = vmatpush.xpose.msra.mxu0 0.0
    %4227 = vmatpush.xpose.msra.mxu0 0.0
    %4228 = vmatpush.xpose.msra.mxu0 0.0
    %4229 = vmatpush.xpose.msra.mxu0 0.0
    %4230 = vmatpush.xpose.msra.mxu0 0.0
    %4231 = vmatpush.xpose.msra.mxu0 0.0
    %4232 = vmatpush.xpose.msra.mxu0 0.0
    %4233 = vmatpush.xpose.msra.mxu0 0.0
    %4234 = vmatpush.xpose.msra.mxu0 0.0
    %4235 = vmatpush.xpose.msra.mxu0 0.0
    %4236 = vmatpush.xpose.msra.mxu0 0.0
    %4237 = vmatpush.xpose.msra.mxu0 0.0
    %4238 = vmatpush.xpose.msra.mxu0 0.0
    %4239 = vmatpush.xpose.msra.mxu0 0.0
    %4240 = vmatpush.xpose.msra.mxu0 %v1037
    %4241 = vmatmul.f32.gmra.mxu0 %v4223
    %v4242 = vpop.f32.mrf.mxu0
    %v4243 = vadd.f32 0.0, %v4242
    %4244 = vdwg.mxu0
    %v4245 = vperm.slane %v4213, 0
    %4246 = vrot.lane.b32.xlu0 %v4245, 32
    %v4247 = vpop.permute.xlu0 %4246
    %v4248 = vsel %vm54, %v4247, 0
    %4250 = vmatpush.xpose.msra.mxu0 0.0
    %4251 = vmatpush.xpose.msra.mxu0 0.0
    %4252 = vmatpush.xpose.msra.mxu0 0.0
    %4253 = vmatpush.xpose.msra.mxu0 0.0
    %4254 = vmatpush.xpose.msra.mxu0 0.0
    %4255 = vmatpush.xpose.msra.mxu0 0.0
    %4256 = vmatpush.xpose.msra.mxu0 0.0
    %4257 = vmatpush.xpose.msra.mxu0 0.0
    %4258 = vmatpush.xpose.msra.mxu0 0.0
    %4259 = vmatpush.xpose.msra.mxu0 0.0
    %4260 = vmatpush.xpose.msra.mxu0 0.0
    %4261 = vmatpush.xpose.msra.mxu0 0.0
    %4262 = vmatpush.xpose.msra.mxu0 0.0
    %4263 = vmatpush.xpose.msra.mxu0 0.0
    %4264 = vmatpush.xpose.msra.mxu0 0.0
    %4265 = vmatpush.xpose.msra.mxu0 %v1067
    %4266 = vmatmul.f32.gmra.mxu0 %v4248
    %v4267 = vpop.f32.mrf.mxu0
    %v4268 = vadd.f32 0.0, %v4267
    %4269 = vdwg.mxu0
    %v4270 = vperm.slane %v4214, 0
    %4271 = vrot.lane.b32.xlu0 %v4270, 32
    %v4272 = vpop.permute.xlu0 %4271
    %v4273 = vsel %vm54, %v4272, 0
    %4275 = vmatpush.xpose.msra.mxu0 0.0
    %4276 = vmatpush.xpose.msra.mxu0 0.0
    %4277 = vmatpush.xpose.msra.mxu0 0.0
    %4278 = vmatpush.xpose.msra.mxu0 0.0
    %4279 = vmatpush.xpose.msra.mxu0 0.0
    %4280 = vmatpush.xpose.msra.mxu0 0.0
    %4281 = vmatpush.xpose.msra.mxu0 0.0
    %4282 = vmatpush.xpose.msra.mxu0 0.0
    %4283 = vmatpush.xpose.msra.mxu0 0.0
    %4284 = vmatpush.xpose.msra.mxu0 0.0
    %4285 = vmatpush.xpose.msra.mxu0 0.0
    %4286 = vmatpush.xpose.msra.mxu0 0.0
    %4287 = vmatpush.xpose.msra.mxu0 0.0
    %4288 = vmatpush.xpose.msra.mxu0 0.0
    %4289 = vmatpush.xpose.msra.mxu0 0.0
    %4290 = vmatpush.xpose.msra.mxu0 %v1097
    %4291 = vmatmul.f32.gmra.mxu0 %v4273
    %v4292 = vpop.f32.mrf.mxu0
    %v4293 = vadd.f32 0.0, %v4292
    %4294 = vdwg.mxu0
    %v4295 = vperm.slane %v4215, 0
    %4296 = vrot.lane.b32.xlu0 %v4295, 32
    %v4297 = vpop.permute.xlu0 %4296
    %v4298 = vsel %vm54, %v4297, 0
    %4300 = vmatpush.xpose.msra.mxu0 0.0
    %4301 = vmatpush.xpose.msra.mxu0 0.0
    %4302 = vmatpush.xpose.msra.mxu0 0.0
    %4303 = vmatpush.xpose.msra.mxu0 0.0
    %4304 = vmatpush.xpose.msra.mxu0 0.0
    %4305 = vmatpush.xpose.msra.mxu0 0.0
    %4306 = vmatpush.xpose.msra.mxu0 0.0
    %4307 = vmatpush.xpose.msra.mxu0 0.0
    %4308 = vmatpush.xpose.msra.mxu0 0.0
    %4309 = vmatpush.xpose.msra.mxu0 0.0
    %4310 = vmatpush.xpose.msra.mxu0 0.0
    %4311 = vmatpush.xpose.msra.mxu0 0.0
    %4312 = vmatpush.xpose.msra.mxu0 0.0
    %4313 = vmatpush.xpose.msra.mxu0 0.0
    %4314 = vmatpush.xpose.msra.mxu0 0.0
    %4315 = vmatpush.xpose.msra.mxu0 %v1127
    %4316 = vmatmul.f32.gmra.mxu0 %v4298
    %v4317 = vpop.f32.mrf.mxu0
    %v4318 = vadd.f32 0.0, %v4317
    %4319 = vdwg.mxu0
    %v4320 = vperm.slane %v4216, 0
    %4321 = vrot.lane.b32.xlu0 %v4320, 32
    %v4322 = vpop.permute.xlu0 %4321
    %v4323 = vsel %vm54, %v4322, 0
    %4325 = vmatpush.xpose.msra.mxu0 0.0
    %4326 = vmatpush.xpose.msra.mxu0 0.0
    %4327 = vmatpush.xpose.msra.mxu0 0.0
    %4328 = vmatpush.xpose.msra.mxu0 0.0
    %4329 = vmatpush.xpose.msra.mxu0 0.0
    %4330 = vmatpush.xpose.msra.mxu0 0.0
    %4331 = vmatpush.xpose.msra.mxu0 0.0
    %4332 = vmatpush.xpose.msra.mxu0 0.0
    %4333 = vmatpush.xpose.msra.mxu0 0.0
    %4334 = vmatpush.xpose.msra.mxu0 0.0
    %4335 = vmatpush.xpose.msra.mxu0 0.0
    %4336 = vmatpush.xpose.msra.mxu0 0.0
    %4337 = vmatpush.xpose.msra.mxu0 0.0
    %4338 = vmatpush.xpose.msra.mxu0 0.0
    %4339 = vmatpush.xpose.msra.mxu0 0.0
    %4340 = vmatpush.xpose.msra.mxu0 %v1157
    %4341 = vmatmul.f32.gmra.mxu0 %v4323
    %v4342 = vpop.f32.mrf.mxu0
    %v4343 = vadd.f32 0.0, %v4342
    %4344 = vdwg.mxu0
    %v4345 = vperm.slane %v4217, 0
    %4346 = vrot.lane.b32.xlu0 %v4345, 32
    %v4347 = vpop.permute.xlu0 %4346
    %v4348 = vsel %vm54, %v4347, 0
    %4350 = vmatpush.xpose.msra.mxu0 0.0
    %4351 = vmatpush.xpose.msra.mxu0 0.0
    %4352 = vmatpush.xpose.msra.mxu0 0.0
    %4353 = vmatpush.xpose.msra.mxu0 0.0
    %4354 = vmatpush.xpose.msra.mxu0 0.0
    %4355 = vmatpush.xpose.msra.mxu0 0.0
    %4356 = vmatpush.xpose.msra.mxu0 0.0
    %4357 = vmatpush.xpose.msra.mxu0 0.0
    %4358 = vmatpush.xpose.msra.mxu0 0.0
    %4359 = vmatpush.xpose.msra.mxu0 0.0
    %4360 = vmatpush.xpose.msra.mxu0 0.0
    %4361 = vmatpush.xpose.msra.mxu0 0.0
    %4362 = vmatpush.xpose.msra.mxu0 0.0
    %4363 = vmatpush.xpose.msra.mxu0 0.0
    %4364 = vmatpush.xpose.msra.mxu0 0.0
    %4365 = vmatpush.xpose.msra.mxu0 %v1187
    %4366 = vmatmul.f32.gmra.mxu0 %v4348
    %v4367 = vpop.f32.mrf.mxu0
    %v4368 = vadd.f32 0.0, %v4367
    %4369 = vdwg.mxu0
    %v4370 = vperm.slane %v4218, 0
    %4371 = vrot.lane.b32.xlu0 %v4370, 32
    %v4372 = vpop.permute.xlu0 %4371
    %v4373 = vsel %vm54, %v4372, 0
    %4375 = vmatpush.xpose.msra.mxu0 0.0
    %4376 = vmatpush.xpose.msra.mxu0 0.0
    %4377 = vmatpush.xpose.msra.mxu0 0.0
    %4378 = vmatpush.xpose.msra.mxu0 0.0
    %4379 = vmatpush.xpose.msra.mxu0 0.0
    %4380 = vmatpush.xpose.msra.mxu0 0.0
    %4381 = vmatpush.xpose.msra.mxu0 0.0
    %4382 = vmatpush.xpose.msra.mxu0 0.0
    %4383 = vmatpush.xpose.msra.mxu0 0.0
    %4384 = vmatpush.xpose.msra.mxu0 0.0
    %4385 = vmatpush.xpose.msra.mxu0 0.0
    %4386 = vmatpush.xpose.msra.mxu0 0.0
    %4387 = vmatpush.xpose.msra.mxu0 0.0
    %4388 = vmatpush.xpose.msra.mxu0 0.0
    %4389 = vmatpush.xpose.msra.mxu0 0.0
    %4390 = vmatpush.xpose.msra.mxu0 %v1217
    %4391 = vmatmul.f32.gmra.mxu0 %v4373
    %v4392 = vpop.f32.mrf.mxu0
    %v4393 = vadd.f32 0.0, %v4392
    %4394 = vdwg.mxu0
    %v4395 = vperm.slane %v4219, 0
    %4396 = vrot.lane.b32.xlu0 %v4395, 32
    %v4397 = vpop.permute.xlu0 %4396
    %v4398 = vsel %vm54, %v4397, 0
    %4400 = vmatpush.xpose.msra.mxu0 0.0
    %4401 = vmatpush.xpose.msra.mxu0 0.0
    %4402 = vmatpush.xpose.msra.mxu0 0.0
    %4403 = vmatpush.xpose.msra.mxu0 0.0
    %4404 = vmatpush.xpose.msra.mxu0 0.0
    %4405 = vmatpush.xpose.msra.mxu0 0.0
    %4406 = vmatpush.xpose.msra.mxu0 0.0
    %4407 = vmatpush.xpose.msra.mxu0 0.0
    %4408 = vmatpush.xpose.msra.mxu0 0.0
    %4409 = vmatpush.xpose.msra.mxu0 0.0
    %4410 = vmatpush.xpose.msra.mxu0 0.0
    %4411 = vmatpush.xpose.msra.mxu0 0.0
    %4412 = vmatpush.xpose.msra.mxu0 0.0
    %4413 = vmatpush.xpose.msra.mxu0 0.0
    %4414 = vmatpush.xpose.msra.mxu0 0.0
    %4415 = vmatpush.xpose.msra.mxu0 %v1247
    %4416 = vmatmul.f32.gmra.mxu0 %v4398
    %v4417 = vpop.f32.mrf.mxu0
    %v4418 = vadd.f32 0.0, %v4417
    %4419 = vdwg.mxu0
    %v4420 = vsel %vm1269, %v4243, -inf
    %4421 = vmax.xlane.f32.xlu0 %v4420
    %v4422 = vpop.xlane.xlu0 %4421
    %v4423 = vsel %vm1269, %v4268, -inf
    %4424 = vmax.xlane.f32.xlu0 %v4423
    %v4425 = vpop.xlane.xlu0 %4424
    %v4426 = vsel %vm1269, %v4293, -inf
    %4427 = vmax.xlane.f32.xlu0 %v4426
    %v4428 = vpop.xlane.xlu0 %4427
    %v4429 = vsel %vm1269, %v4318, -inf
    %4430 = vmax.xlane.f32.xlu0 %v4429
    %v4431 = vpop.xlane.xlu0 %4430
    %v4432 = vsel %vm1269, %v4343, -inf
    %4433 = vmax.xlane.f32.xlu0 %v4432
    %v4434 = vpop.xlane.xlu0 %4433
    %v4435 = vsel %vm1269, %v4368, -inf
    %4436 = vmax.xlane.f32.xlu0 %v4435
    %v4437 = vpop.xlane.xlu0 %4436
    %v4438 = vsel %vm1269, %v4393, -inf
    %4439 = vmax.xlane.f32.xlu0 %v4438
    %v4440 = vpop.xlane.xlu0 %4439
    %v4441 = vsel %vm1269, %v4418, -inf
    %4442 = vmax.xlane.f32.xlu0 %v4441
    %v4443 = vpop.xlane.xlu0 %4442
    %v4444 = vsub.f32 %v4243, %v4422
    %v4445 = vsub.f32 %v4268, %v4425
    %v4446 = vsub.f32 %v4293, %v4428
    %v4447 = vsub.f32 %v4318, %v4431
    %v4448 = vsub.f32 %v4343, %v4434
    %v4449 = vsub.f32 %v4368, %v4437
    %v4450 = vsub.f32 %v4393, %v4440
    %v4451 = vsub.f32 %v4418, %v4443
    %v4452 = vmul.f32 %v4444, 1.442695
    %v4453 = vpow.pop %v4452
    %v4454 = vmul.f32 %v4445, 1.442695
    %v4455 = vpow.pop %v4454
    %v4456 = vmul.f32 %v4446, 1.442695
    %v4457 = vpow.pop %v4456
    %v4458 = vmul.f32 %v4447, 1.442695
    %v4459 = vpow.pop %v4458
    %v4460 = vmul.f32 %v4448, 1.442695
    %v4461 = vpow.pop %v4460
    %v4462 = vmul.f32 %v4449, 1.442695
    %v4463 = vpow.pop %v4462
    %v4464 = vmul.f32 %v4450, 1.442695
    %v4465 = vpow.pop %v4464
    %v4466 = vmul.f32 %v4451, 1.442695
    %v4467 = vpow.pop %v4466
    %v4468 = vsel %vm1269, %v4453, 0.0
    %4469 = vadd.xlane.f32.xlu0 %v4468
    %v4470 = vpop.xlane.xlu0 %4469
    %v4471 = vsel %vm1269, %v4455, 0.0
    %4472 = vadd.xlane.f32.xlu0 %v4471
    %v4473 = vpop.xlane.xlu0 %4472
    %v4474 = vsel %vm1269, %v4457, 0.0
    %4475 = vadd.xlane.f32.xlu0 %v4474
    %v4476 = vpop.xlane.xlu0 %4475
    %v4477 = vsel %vm1269, %v4459, 0.0
    %4478 = vadd.xlane.f32.xlu0 %v4477
    %v4479 = vpop.xlane.xlu0 %4478
    %v4480 = vsel %vm1269, %v4461, 0.0
    %4481 = vadd.xlane.f32.xlu0 %v4480
    %v4482 = vpop.xlane.xlu0 %4481
    %v4483 = vsel %vm1269, %v4463, 0.0
    %4484 = vadd.xlane.f32.xlu0 %v4483
    %v4485 = vpop.xlane.xlu0 %4484
    %v4486 = vsel %vm1269, %v4465, 0.0
    %4487 = vadd.xlane.f32.xlu0 %v4486
    %v4488 = vpop.xlane.xlu0 %4487
    %v4489 = vsel %vm1269, %v4467, 0.0
    %4490 = vadd.xlane.f32.xlu0 %v4489
    %v4491 = vpop.xlane.xlu0 %4490
    %v4492 = vrcp.pop %v4470
    %v4493 = vmul.f32 %v4470, %v4492
    %v4494 = vsub.f32 1.0, %v4493
    %v4495 = vmul.f32 %v4492, %v4494
    %v4496 = vadd.f32 %v4492, %v4495
    %vm4497 = vweird.f32 %v4470
    %vm4498 = vweird.f32 %v4492
    %vm4499 = vmor %vm4497, %vm4498
    %v4500 = vsel %vm4499, %v4492, %v4496
    %v4501 = vand.u32 2147483647, %v4470
    %vm4502 = vcmp.eq.f32.partialorder %v4501, 8.507059e+37
    %v4503 = vand.u32 %v4470, 2147483648
    %v4504 = vor.u32 1.1754944e-38, %v4503
    %v4505 = vsel %vm4502, %v4504, %v4500
    %v4506 = vmul.f32 %v4453, %v4505
    %v4507 = vrcp.pop %v4473
    %v4508 = vmul.f32 %v4473, %v4507
    %v4509 = vsub.f32 1.0, %v4508
    %v4510 = vmul.f32 %v4507, %v4509
    %v4511 = vadd.f32 %v4507, %v4510
    %vm4512 = vweird.f32 %v4473
    %vm4513 = vweird.f32 %v4507
    %vm4514 = vmor %vm4512, %vm4513
    %v4515 = vsel %vm4514, %v4507, %v4511
    %v4516 = vand.u32 2147483647, %v4473
    %vm4517 = vcmp.eq.f32.partialorder %v4516, 8.507059e+37
    %v4518 = vand.u32 %v4473, 2147483648
    %v4519 = vor.u32 1.1754944e-38, %v4518
    %v4520 = vsel %vm4517, %v4519, %v4515
    %v4521 = vmul.f32 %v4455, %v4520
    %v4522 = vrcp.pop %v4476
    %v4523 = vmul.f32 %v4476, %v4522
    %v4524 = vsub.f32 1.0, %v4523
    %v4525 = vmul.f32 %v4522, %v4524
    %v4526 = vadd.f32 %v4522, %v4525
    %vm4527 = vweird.f32 %v4476
    %vm4528 = vweird.f32 %v4522
    %vm4529 = vmor %vm4527, %vm4528
    %v4530 = vsel %vm4529, %v4522, %v4526
    %v4531 = vand.u32 2147483647, %v4476
    %vm4532 = vcmp.eq.f32.partialorder %v4531, 8.507059e+37
    %v4533 = vand.u32 %v4476, 2147483648
    %v4534 = vor.u32 1.1754944e-38, %v4533
    %v4535 = vsel %vm4532, %v4534, %v4530
    %v4536 = vmul.f32 %v4457, %v4535
    %v4537 = vrcp.pop %v4479
    %v4538 = vmul.f32 %v4479, %v4537
    %v4539 = vsub.f32 1.0, %v4538
    %v4540 = vmul.f32 %v4537, %v4539
    %v4541 = vadd.f32 %v4537, %v4540
    %vm4542 = vweird.f32 %v4479
    %vm4543 = vweird.f32 %v4537
    %vm4544 = vmor %vm4542, %vm4543
    %v4545 = vsel %vm4544, %v4537, %v4541
    %v4546 = vand.u32 2147483647, %v4479
    %vm4547 = vcmp.eq.f32.partialorder %v4546, 8.507059e+37
    %v4548 = vand.u32 %v4479, 2147483648
    %v4549 = vor.u32 1.1754944e-38, %v4548
    %v4550 = vsel %vm4547, %v4549, %v4545
    %v4551 = vmul.f32 %v4459, %v4550
    %v4552 = vrcp.pop %v4482
    %v4553 = vmul.f32 %v4482, %v4552
    %v4554 = vsub.f32 1.0, %v4553
    %v4555 = vmul.f32 %v4552, %v4554
    %v4556 = vadd.f32 %v4552, %v4555
    %vm4557 = vweird.f32 %v4482
    %vm4558 = vweird.f32 %v4552
    %vm4559 = vmor %vm4557, %vm4558
    %v4560 = vsel %vm4559, %v4552, %v4556
    %v4561 = vand.u32 2147483647, %v4482
    %vm4562 = vcmp.eq.f32.partialorder %v4561, 8.507059e+37
    %v4563 = vand.u32 %v4482, 2147483648
    %v4564 = vor.u32 1.1754944e-38, %v4563
    %v4565 = vsel %vm4562, %v4564, %v4560
    %v4566 = vmul.f32 %v4461, %v4565
    %v4567 = vrcp.pop %v4485
    %v4568 = vmul.f32 %v4485, %v4567
    %v4569 = vsub.f32 1.0, %v4568
    %v4570 = vmul.f32 %v4567, %v4569
    %v4571 = vadd.f32 %v4567, %v4570
    %vm4572 = vweird.f32 %v4485
    %vm4573 = vweird.f32 %v4567
    %vm4574 = vmor %vm4572, %vm4573
    %v4575 = vsel %vm4574, %v4567, %v4571
    %v4576 = vand.u32 2147483647, %v4485
    %vm4577 = vcmp.eq.f32.partialorder %v4576, 8.507059e+37
    %v4578 = vand.u32 %v4485, 2147483648
    %v4579 = vor.u32 1.1754944e-38, %v4578
    %v4580 = vsel %vm4577, %v4579, %v4575
    %v4581 = vmul.f32 %v4463, %v4580
    %v4582 = vrcp.pop %v4488
    %v4583 = vmul.f32 %v4488, %v4582
    %v4584 = vsub.f32 1.0, %v4583
    %v4585 = vmul.f32 %v4582, %v4584
    %v4586 = vadd.f32 %v4582, %v4585
    %vm4587 = vweird.f32 %v4488
    %vm4588 = vweird.f32 %v4582
    %vm4589 = vmor %vm4587, %vm4588
    %v4590 = vsel %vm4589, %v4582, %v4586
    %v4591 = vand.u32 2147483647, %v4488
    %vm4592 = vcmp.eq.f32.partialorder %v4591, 8.507059e+37
    %v4593 = vand.u32 %v4488, 2147483648
    %v4594 = vor.u32 1.1754944e-38, %v4593
    %v4595 = vsel %vm4592, %v4594, %v4590
    %v4596 = vmul.f32 %v4465, %v4595
    %v4597 = vrcp.pop %v4491
    %v4598 = vmul.f32 %v4491, %v4597
    %v4599 = vsub.f32 1.0, %v4598
    %v4600 = vmul.f32 %v4597, %v4599
    %v4601 = vadd.f32 %v4597, %v4600
    %vm4602 = vweird.f32 %v4491
    %vm4603 = vweird.f32 %v4597
    %vm4604 = vmor %vm4602, %vm4603
    %v4605 = vsel %vm4604, %v4597, %v4601
    %v4606 = vand.u32 2147483647, %v4491
    %vm4607 = vcmp.eq.f32.partialorder %v4606, 8.507059e+37
    %v4608 = vand.u32 %v4491, 2147483648
    %v4609 = vor.u32 1.1754944e-38, %v4608
    %v4610 = vsel %vm4607, %v4609, %v4605
    %v4611 = vmul.f32 %v4467, %v4610
    %v4613 = vsel %vm1463, %v4506, 0
    %4615 = vmatpush.msra.mxu0 0.0
    %4616 = vmatpush.msra.mxu0 0.0
    %4617 = vmatpush.msra.mxu0 0.0
    %4618 = vmatpush.msra.mxu0 0.0
    %4619 = vmatpush.msra.mxu0 0.0
    %4620 = vmatpush.msra.mxu0 0.0
    %4621 = vmatpush.msra.mxu0 0.0
    %4622 = vmatpush.msra.mxu0 0.0
    %4623 = vmatpush.msra.mxu0 0.0
    %4624 = vmatpush.msra.mxu0 0.0
    %4625 = vmatpush.msra.mxu0 0.0
    %4626 = vmatpush.msra.mxu0 0.0
    %4627 = vmatpush.msra.mxu0 0.0
    %4628 = vmatpush.msra.mxu0 0.0
    %4629 = vmatpush.msra.mxu0 0.0
    %4630 = vmatpush.msra.mxu0 %v1034
    %4631 = vmatmul.f32.gmra.mxu0 %v4613
    %v4632 = vpop.f32.mrf.mxu0
    %v4633 = vadd.f32 0.0, %v4632
    %4634 = vdwg.mxu0
    %v4636 = vsel %vm1463, %v4521, 0
    %4638 = vmatpush.msra.mxu0 0.0
    %4639 = vmatpush.msra.mxu0 0.0
    %4640 = vmatpush.msra.mxu0 0.0
    %4641 = vmatpush.msra.mxu0 0.0
    %4642 = vmatpush.msra.mxu0 0.0
    %4643 = vmatpush.msra.mxu0 0.0
    %4644 = vmatpush.msra.mxu0 0.0
    %4645 = vmatpush.msra.mxu0 0.0
    %4646 = vmatpush.msra.mxu0 0.0
    %4647 = vmatpush.msra.mxu0 0.0
    %4648 = vmatpush.msra.mxu0 0.0
    %4649 = vmatpush.msra.mxu0 0.0
    %4650 = vmatpush.msra.mxu0 0.0
    %4651 = vmatpush.msra.mxu0 0.0
    %4652 = vmatpush.msra.mxu0 0.0
    %4653 = vmatpush.msra.mxu0 %v1064
    %4654 = vmatmul.f32.gmra.mxu0 %v4636
    %v4655 = vpop.f32.mrf.mxu0
    %v4656 = vadd.f32 0.0, %v4655
    %4657 = vdwg.mxu0
    %v4659 = vsel %vm1463, %v4536, 0
    %4661 = vmatpush.msra.mxu0 0.0
    %4662 = vmatpush.msra.mxu0 0.0
    %4663 = vmatpush.msra.mxu0 0.0
    %4664 = vmatpush.msra.mxu0 0.0
    %4665 = vmatpush.msra.mxu0 0.0
    %4666 = vmatpush.msra.mxu0 0.0
    %4667 = vmatpush.msra.mxu0 0.0
    %4668 = vmatpush.msra.mxu0 0.0
    %4669 = vmatpush.msra.mxu0 0.0
    %4670 = vmatpush.msra.mxu0 0.0
    %4671 = vmatpush.msra.mxu0 0.0
    %4672 = vmatpush.msra.mxu0 0.0
    %4673 = vmatpush.msra.mxu0 0.0
    %4674 = vmatpush.msra.mxu0 0.0
    %4675 = vmatpush.msra.mxu0 0.0
    %4676 = vmatpush.msra.mxu0 %v1094
    %4677 = vmatmul.f32.gmra.mxu0 %v4659
    %v4678 = vpop.f32.mrf.mxu0
    %v4679 = vadd.f32 0.0, %v4678
    %4680 = vdwg.mxu0
    %v4682 = vsel %vm1463, %v4551, 0
    %4684 = vmatpush.msra.mxu0 0.0
    %4685 = vmatpush.msra.mxu0 0.0
    %4686 = vmatpush.msra.mxu0 0.0
    %4687 = vmatpush.msra.mxu0 0.0
    %4688 = vmatpush.msra.mxu0 0.0
    %4689 = vmatpush.msra.mxu0 0.0
    %4690 = vmatpush.msra.mxu0 0.0
    %4691 = vmatpush.msra.mxu0 0.0
    %4692 = vmatpush.msra.mxu0 0.0
    %4693 = vmatpush.msra.mxu0 0.0
    %4694 = vmatpush.msra.mxu0 0.0
    %4695 = vmatpush.msra.mxu0 0.0
    %4696 = vmatpush.msra.mxu0 0.0
    %4697 = vmatpush.msra.mxu0 0.0
    %4698 = vmatpush.msra.mxu0 0.0
    %4699 = vmatpush.msra.mxu0 %v1124
    %4700 = vmatmul.f32.gmra.mxu0 %v4682
    %v4701 = vpop.f32.mrf.mxu0
    %v4702 = vadd.f32 0.0, %v4701
    %4703 = vdwg.mxu0
    %v4705 = vsel %vm1463, %v4566, 0
    %4707 = vmatpush.msra.mxu0 0.0
    %4708 = vmatpush.msra.mxu0 0.0
    %4709 = vmatpush.msra.mxu0 0.0
    %4710 = vmatpush.msra.mxu0 0.0
    %4711 = vmatpush.msra.mxu0 0.0
    %4712 = vmatpush.msra.mxu0 0.0
    %4713 = vmatpush.msra.mxu0 0.0
    %4714 = vmatpush.msra.mxu0 0.0
    %4715 = vmatpush.msra.mxu0 0.0
    %4716 = vmatpush.msra.mxu0 0.0
    %4717 = vmatpush.msra.mxu0 0.0
    %4718 = vmatpush.msra.mxu0 0.0
    %4719 = vmatpush.msra.mxu0 0.0
    %4720 = vmatpush.msra.mxu0 0.0
    %4721 = vmatpush.msra.mxu0 0.0
    %4722 = vmatpush.msra.mxu0 %v1154
    %4723 = vmatmul.f32.gmra.mxu0 %v4705
    %v4724 = vpop.f32.mrf.mxu0
    %v4725 = vadd.f32 0.0, %v4724
    %4726 = vdwg.mxu0
    %v4728 = vsel %vm1463, %v4581, 0
    %4730 = vmatpush.msra.mxu0 0.0
    %4731 = vmatpush.msra.mxu0 0.0
    %4732 = vmatpush.msra.mxu0 0.0
    %4733 = vmatpush.msra.mxu0 0.0
    %4734 = vmatpush.msra.mxu0 0.0
    %4735 = vmatpush.msra.mxu0 0.0
    %4736 = vmatpush.msra.mxu0 0.0
    %4737 = vmatpush.msra.mxu0 0.0
    %4738 = vmatpush.msra.mxu0 0.0
    %4739 = vmatpush.msra.mxu0 0.0
    %4740 = vmatpush.msra.mxu0 0.0
    %4741 = vmatpush.msra.mxu0 0.0
    %4742 = vmatpush.msra.mxu0 0.0
    %4743 = vmatpush.msra.mxu0 0.0
    %4744 = vmatpush.msra.mxu0 0.0
    %4745 = vmatpush.msra.mxu0 %v1184
    %4746 = vmatmul.f32.gmra.mxu0 %v4728
    %v4747 = vpop.f32.mrf.mxu0
    %v4748 = vadd.f32 0.0, %v4747
    %4749 = vdwg.mxu0
    %v4751 = vsel %vm1463, %v4596, 0
    %4753 = vmatpush.msra.mxu0 0.0
    %4754 = vmatpush.msra.mxu0 0.0
    %4755 = vmatpush.msra.mxu0 0.0
    %4756 = vmatpush.msra.mxu0 0.0
    %4757 = vmatpush.msra.mxu0 0.0
    %4758 = vmatpush.msra.mxu0 0.0
    %4759 = vmatpush.msra.mxu0 0.0
    %4760 = vmatpush.msra.mxu0 0.0
    %4761 = vmatpush.msra.mxu0 0.0
    %4762 = vmatpush.msra.mxu0 0.0
    %4763 = vmatpush.msra.mxu0 0.0
    %4764 = vmatpush.msra.mxu0 0.0
    %4765 = vmatpush.msra.mxu0 0.0
    %4766 = vmatpush.msra.mxu0 0.0
    %4767 = vmatpush.msra.mxu0 0.0
    %4768 = vmatpush.msra.mxu0 %v1214
    %4769 = vmatmul.f32.gmra.mxu0 %v4751
    %v4770 = vpop.f32.mrf.mxu0
    %v4771 = vadd.f32 0.0, %v4770
    %4772 = vdwg.mxu0
    %v4774 = vsel %vm1463, %v4611, 0
    %4776 = vmatpush.msra.mxu0 0.0
    %4777 = vmatpush.msra.mxu0 0.0
    %4778 = vmatpush.msra.mxu0 0.0
    %4779 = vmatpush.msra.mxu0 0.0
    %4780 = vmatpush.msra.mxu0 0.0
    %4781 = vmatpush.msra.mxu0 0.0
    %4782 = vmatpush.msra.mxu0 0.0
    %4783 = vmatpush.msra.mxu0 0.0
    %4784 = vmatpush.msra.mxu0 0.0
    %4785 = vmatpush.msra.mxu0 0.0
    %4786 = vmatpush.msra.mxu0 0.0
    %4787 = vmatpush.msra.mxu0 0.0
    %4788 = vmatpush.msra.mxu0 0.0
    %4789 = vmatpush.msra.mxu0 0.0
    %4790 = vmatpush.msra.mxu0 0.0
    %4791 = vmatpush.msra.mxu0 %v1244
    %4792 = vmatmul.f32.gmra.mxu0 %v4774
    %v4793 = vpop.f32.mrf.mxu0
    %v4794 = vadd.f32 0.0, %v4793
    %4795 = vdwg.mxu0
    %v4804 = vrot.slane %v4656, 7
    %v4805 = vsel %vm1667, %v4804, %v4633
    %v4806 = vrot.slane %v4679, 6
    %v4807 = vsel %vm1670, %v4806, %v4805
    %v4808 = vrot.slane %v4702, 5
    %v4809 = vsel %vm1673, %v4808, %v4807
    %v4810 = vrot.slane %v4725, 4
    %v4811 = vsel %vm1676, %v4810, %v4809
    %v4812 = vrot.slane %v4748, 3
    %v4813 = vsel %vm1679, %v4812, %v4811
    %v4814 = vrot.slane %v4771, 2
    %v4815 = vsel %vm1682, %v4814, %v4813
    %v4816 = vrot.slane %v4794, 1
    %v4817 = vsel %vm1685, %v4816, %v4815
    %v4818 = vsel %vm54, %v4817, 0
    %4820 = vmatpush.msra.mxu0 0.0
    %4821 = vmatpush.msra.mxu0 0.0
    %4822 = vmatpush.msra.mxu0 0.0
    %4823 = vmatpush.msra.mxu0 0.0
    %4824 = vmatpush.msra.mxu0 0.0
    %4825 = vmatpush.msra.mxu0 0.0
    %4826 = vmatpush.msra.mxu0 0.0
    %4827 = vmatpush.msra.mxu0 0.0
    %4828 = vmatpush.msra.mxu0 0.0
    %4829 = vmatpush.msra.mxu0 0.0
    %4830 = vmatpush.msra.mxu0 0.0
    %4831 = vmatpush.msra.mxu0 0.0
    %4832 = vmatpush.msra.mxu0 %v920
    %4833 = vmatpush.msra.mxu0 %v919
    %4834 = vmatpush.msra.mxu0 %v918
    %4835 = vmatpush.msra.mxu0 %v917
    %4836 = vmatmul.f32.gmra.mxu0 %v4818
    %v4837 = vpop.f32.mrf.mxu0
    %v4838 = vadd.f32 %v1656, %v4837
    %4839 = vdwg.mxu0
    %v4840 = vadd.f32 %v4838, %v926
    %v4841 = vmul.f32 %v4840, %v1716
    %v4842 = vsel %vm956, %v4841, -inf
    %4843 = vmax.xlane.f32.xlu0 %v4842
    %v4844 = vpop.xlane.xlu0 %4843
    %v4845 = vsub.f32 %v4841, %v4844
    %v4846 = vmul.f32 %v4845, 1.442695
    %v4847 = vpow.pop %v4846
    %v4848 = vsel %vm956, %v4847, 0.0
    %4849 = vadd.xlane.f32.xlu0 %v4848
    %v4850 = vpop.xlane.xlu0 %4849
    %v4851 = vrcp.pop %v4850
    %v4852 = vmul.f32 %v4850, %v4851
    %v4853 = vsub.f32 1.0, %v4852
    %v4854 = vmul.f32 %v4851, %v4853
    %v4855 = vadd.f32 %v4851, %v4854
    %vm4856 = vweird.f32 %v4850
    %vm4857 = vweird.f32 %v4851
    %vm4858 = vmor %vm4856, %vm4857
    %v4859 = vsel %vm4858, %v4851, %v4855
    %v4860 = vand.u32 2147483647, %v4850
    %vm4861 = vcmp.eq.f32.partialorder %v4860, 8.507059e+37
    %v4862 = vand.u32 %v4850, 2147483648
    %v4863 = vor.u32 1.1754944e-38, %v4862
    %v4864 = vsel %vm4861, %v4863, %v4859
    %v4865 = vmul.f32 %v4847, %v4864
    %v4866 = vsel %vm956, %v4865, -inf
    %4867 = vmax.xlane.f32.xlu0 %v4866
    %v4868 = vpop.xlane.xlu0 %4867
    %vm4869 = vcmp.eq.f32.partialorder %v4865, %v4868
    %v4870 = vsel %vm4869, %v929, 16
    %v4871 = vsel %vm956, %v4870, 2147483647
    %v4872 = vand.u32 %v4871, 65535
    %v4873 = vshra.s32 %v4871, 16
    %v4874 = vcvt.s32.f32 %v4872
    %v4875 = vcvt.s32.f32 %v4873
    %4876 = vmin.xlane.f32.xlu0 %v4875
    %v4877 = vpop.xlane.xlu0 %4876
    %vm4878 = vcmp.eq.f32.partialorder %v4875, %v4877
    %v4879 = vsel %vm4878, %v4874, inf
    %4880 = vmin.xlane.f32.xlu0 %v4879
    %v4881 = vpop.xlane.xlu0 %4880
    %v4882 = vcvt.f32.s32 %v4881
    %v4883 = vcvt.f32.s32 %v4877
    %v4884 = vshll.u32 %v4883, 16
    %v4885 = vadd.s32 %v4884, %v4882
    %vm4886 = vcmp.eq.s32.totalorder %v929, %v4885
    %v4887 = vsel %vm4886, 1, 0
    %v4888 = vcvt.s32.f32 %v4887
    %v4889 = vsub.f32 %v4888, %v4865
    %v4890 = vadd.f32 %v4889, %v4865
    %v4891 = vsel %vm956, %v4838, -inf
    %4892 = vmax.xlane.f32.xlu0 %v4891
    %v4893 = vpop.xlane.xlu0 %4892
    %v4894 = vsub.f32 %v4838, %v4893
    %v4895 = vmul.f32 %v4894, 1.442695
    %v4896 = vpow.pop %v4895
    %v4897 = vsel %vm956, %v4896, 0.0
    %4898 = vadd.xlane.f32.xlu0 %v4897
    %v4899 = vpop.xlane.xlu0 %4898
    %v4900 = vlog2.pop %v4899
    %v4901 = vmul.f32 %v4900, 0.6931472
    %v4902 = vadd.f32 %v4893, %v4901
    %v4903 = vmul.f32 %v4888, %v4838
    %v4904 = vsel %vm956, %v4903, 0.0
    %4905 = vadd.xlane.f32.xlu0 %v4904
    %v4906 = vpop.xlane.xlu0 %4905
    %v4907 = vsub.f32 %v4902, %v4906
    %4908 = vrot.lane.b32.xlu0 %v4211, 32
    %v4909 = vpop.permute.xlu0 %4908
    %v4910 = vsel %vm54, %v4909, 0
    %4912 = vmatpush.msra.mxu0 0.0
    %4913 = vmatpush.msra.mxu0 0.0
    %4914 = vmatpush.msra.mxu0 0.0
    %4915 = vmatpush.msra.mxu0 0.0
    %4916 = vmatpush.msra.mxu0 0.0
    %4917 = vmatpush.msra.mxu0 0.0
    %4918 = vmatpush.msra.mxu0 0.0
    %4919 = vmatpush.msra.mxu0 0.0
    %4920 = vmatpush.msra.mxu0 0.0
    %4921 = vmatpush.msra.mxu0 0.0
    %4922 = vmatpush.msra.mxu0 0.0
    %4923 = vmatpush.msra.mxu0 0.0
    %4924 = vmatpush.msra.mxu0 %v915
    %4925 = vmatpush.msra.mxu0 %v914
    %4926 = vmatpush.msra.mxu0 %v913
    %4927 = vmatpush.msra.mxu0 %v912
    %4928 = vmatmul.f32.gmra.mxu0 %v4910
    %v4929 = vpop.f32.mrf.mxu0
    %v4930 = vadd.f32 0.0, %v4929
    %4931 = vdwg.mxu0
    %v4933 = vsel %vm956, %v4888, 0
    %4935 = vmatpush.msra.mxu0 0.0
    %4936 = vmatpush.msra.mxu0 0.0
    %4937 = vmatpush.msra.mxu0 0.0
    %4938 = vmatpush.msra.mxu0 0.0
    %4939 = vmatpush.msra.mxu0 0.0
    %4940 = vmatpush.msra.mxu0 0.0
    %4941 = vmatpush.msra.mxu0 0.0
    %4942 = vmatpush.msra.mxu0 0.0
    %4943 = vmatpush.msra.mxu0 0.0
    %4944 = vmatpush.msra.mxu0 0.0
    %4945 = vmatpush.msra.mxu0 0.0
    %4946 = vmatpush.msra.mxu0 0.0
    %4947 = vmatpush.msra.mxu0 0.0
    %4948 = vmatpush.msra.mxu0 0.0
    %4949 = vmatpush.msra.mxu0 %v910
    %4950 = vmatpush.msra.mxu0 %v907
    %4951 = vmatmul.f32.gmra.mxu0 %v4933
    %v4952 = vpop.f32.mrf.mxu0
    %v4953 = vadd.f32 %v4930, %v4952
    %4954 = vdwg.mxu0
    %v4955 = vadd.f32 %v4953, %v981
    %v4956 = vxor.u32 %v4955, 2147483648
    %v4957 = vmul.f32 %v4956, 1.442695
    %v4958 = vpow.pop %v4957
    %v4959 = vadd.f32 %v4958, 1.0
    %v4960 = vrcp.pop %v4959
    %v4961 = vmul.f32 %v4959, %v4960
    %v4962 = vsub.f32 1.0, %v4961
    %v4963 = vmul.f32 %v4960, %v4962
    %v4964 = vadd.f32 %v4960, %v4963
    %vm4965 = vweird.f32 %v4959
    %vm4966 = vweird.f32 %v4960
    %vm4967 = vmor %vm4965, %vm4966
    %v4968 = vsel %vm4967, %v4960, %v4964
    %v4969 = vand.u32 2147483647, %v4959
    %vm4970 = vcmp.eq.f32.partialorder %v4969, 8.507059e+37
    %v4971 = vand.u32 %v4959, 2147483648
    %v4972 = vor.u32 1.1754944e-38, %v4971
    %v4973 = vsel %vm4970, %v4972, %v4968
    %v4974 = vmul.f32 1.0, %v4973
    %v4975 = vtanh.pop %v4955
    %v4976 = vmul.f32 %v4974, %v4205
    %4978 = vrot.lane.b32.xlu0 %v4975, 64
    %v4979 = vpop.permute.xlu0 %4978
    %v4981 = vmul.f32 %v4974, %v4979
    %4983 = vrot.lane.b32.xlu0 %v4981, 32
    %v4984 = vpop.permute.xlu0 %4983
    %v4986 = vadd.f32 %v4976, %v4984
    %v4987 = vtanh.pop %v4986
    %4989 = vrot.lane.b32.xlu0 %v4987, 64
    %v4990 = vpop.permute.xlu0 %4989
    %v4992 = vmul.f32 %v4974, %v4990
    %v4994 = vrot.slane %v4992, 1
    %v4995 = vrot.slane %v4992, 2
    %v4996 = vrot.slane %v4992, 3
    %v4997 = vrot.slane %v4992, 4
    %v4998 = vrot.slane %v4992, 5
    %v4999 = vrot.slane %v4992, 6
    %v5000 = vrot.slane %v4992, 7
    %v5001 = vperm.slane %v4992, 0
    %5002 = vrot.lane.b32.xlu0 %v5001, 32
    %v5003 = vpop.permute.xlu0 %5002
    %v5004 = vsel %vm54, %v5003, 0
    %5006 = vmatpush.xpose.msra.mxu0 0.0
    %5007 = vmatpush.xpose.msra.mxu0 0.0
    %5008 = vmatpush.xpose.msra.mxu0 0.0
    %5009 = vmatpush.xpose.msra.mxu0 0.0
    %5010 = vmatpush.xpose.msra.mxu0 0.0
    %5011 = vmatpush.xpose.msra.mxu0 0.0
    %5012 = vmatpush.xpose.msra.mxu0 0.0
    %5013 = vmatpush.xpose.msra.mxu0 0.0
    %5014 = vmatpush.xpose.msra.mxu0 0.0
    %5015 = vmatpush.xpose.msra.mxu0 0.0
    %5016 = vmatpush.xpose.msra.mxu0 0.0
    %5017 = vmatpush.xpose.msra.mxu0 0.0
    %5018 = vmatpush.xpose.msra.mxu0 0.0
    %5019 = vmatpush.xpose.msra.mxu0 0.0
    %5020 = vmatpush.xpose.msra.mxu0 0.0
    %5021 = vmatpush.xpose.msra.mxu0 %v1037
    %5022 = vmatmul.f32.gmra.mxu0 %v5004
    %v5023 = vpop.f32.mrf.mxu0
    %v5024 = vadd.f32 0.0, %v5023
    %5025 = vdwg.mxu0
    %v5026 = vperm.slane %v4994, 0
    %5027 = vrot.lane.b32.xlu0 %v5026, 32
    %v5028 = vpop.permute.xlu0 %5027
    %v5029 = vsel %vm54, %v5028, 0
    %5031 = vmatpush.xpose.msra.mxu0 0.0
    %5032 = vmatpush.xpose.msra.mxu0 0.0
    %5033 = vmatpush.xpose.msra.mxu0 0.0
    %5034 = vmatpush.xpose.msra.mxu0 0.0
    %5035 = vmatpush.xpose.msra.mxu0 0.0
    %5036 = vmatpush.xpose.msra.mxu0 0.0
    %5037 = vmatpush.xpose.msra.mxu0 0.0
    %5038 = vmatpush.xpose.msra.mxu0 0.0
    %5039 = vmatpush.xpose.msra.mxu0 0.0
    %5040 = vmatpush.xpose.msra.mxu0 0.0
    %5041 = vmatpush.xpose.msra.mxu0 0.0
    %5042 = vmatpush.xpose.msra.mxu0 0.0
    %5043 = vmatpush.xpose.msra.mxu0 0.0
    %5044 = vmatpush.xpose.msra.mxu0 0.0
    %5045 = vmatpush.xpose.msra.mxu0 0.0
    %5046 = vmatpush.xpose.msra.mxu0 %v1067
    %5047 = vmatmul.f32.gmra.mxu0 %v5029
    %v5048 = vpop.f32.mrf.mxu0
    %v5049 = vadd.f32 0.0, %v5048
    %5050 = vdwg.mxu0
    %v5051 = vperm.slane %v4995, 0
    %5052 = vrot.lane.b32.xlu0 %v5051, 32
    %v5053 = vpop.permute.xlu0 %5052
    %v5054 = vsel %vm54, %v5053, 0
    %5056 = vmatpush.xpose.msra.mxu0 0.0
    %5057 = vmatpush.xpose.msra.mxu0 0.0
    %5058 = vmatpush.xpose.msra.mxu0 0.0
    %5059 = vmatpush.xpose.msra.mxu0 0.0
    %5060 = vmatpush.xpose.msra.mxu0 0.0
    %5061 = vmatpush.xpose.msra.mxu0 0.0
    %5062 = vmatpush.xpose.msra.mxu0 0.0
    %5063 = vmatpush.xpose.msra.mxu0 0.0
    %5064 = vmatpush.xpose.msra.mxu0 0.0
    %5065 = vmatpush.xpose.msra.mxu0 0.0
    %5066 = vmatpush.xpose.msra.mxu0 0.0
    %5067 = vmatpush.xpose.msra.mxu0 0.0
    %5068 = vmatpush.xpose.msra.mxu0 0.0
    %5069 = vmatpush.xpose.msra.mxu0 0.0
    %5070 = vmatpush.xpose.msra.mxu0 0.0
    %5071 = vmatpush.xpose.msra.mxu0 %v1097
    %5072 = vmatmul.f32.gmra.mxu0 %v5054
    %v5073 = vpop.f32.mrf.mxu0
    %v5074 = vadd.f32 0.0, %v5073
    %5075 = vdwg.mxu0
    %v5076 = vperm.slane %v4996, 0
    %5077 = vrot.lane.b32.xlu0 %v5076, 32
    %v5078 = vpop.permute.xlu0 %5077
    %v5079 = vsel %vm54, %v5078, 0
    %5081 = vmatpush.xpose.msra.mxu0 0.0
    %5082 = vmatpush.xpose.msra.mxu0 0.0
    %5083 = vmatpush.xpose.msra.mxu0 0.0
    %5084 = vmatpush.xpose.msra.mxu0 0.0
    %5085 = vmatpush.xpose.msra.mxu0 0.0
    %5086 = vmatpush.xpose.msra.mxu0 0.0
    %5087 = vmatpush.xpose.msra.mxu0 0.0
    %5088 = vmatpush.xpose.msra.mxu0 0.0
    %5089 = vmatpush.xpose.msra.mxu0 0.0
    %5090 = vmatpush.xpose.msra.mxu0 0.0
    %5091 = vmatpush.xpose.msra.mxu0 0.0
    %5092 = vmatpush.xpose.msra.mxu0 0.0
    %5093 = vmatpush.xpose.msra.mxu0 0.0
    %5094 = vmatpush.xpose.msra.mxu0 0.0
    %5095 = vmatpush.xpose.msra.mxu0 0.0
    %5096 = vmatpush.xpose.msra.mxu0 %v1127
    %5097 = vmatmul.f32.gmra.mxu0 %v5079
    %v5098 = vpop.f32.mrf.mxu0
    %v5099 = vadd.f32 0.0, %v5098
    %5100 = vdwg.mxu0
    %v5101 = vperm.slane %v4997, 0
    %5102 = vrot.lane.b32.xlu0 %v5101, 32
    %v5103 = vpop.permute.xlu0 %5102
    %v5104 = vsel %vm54, %v5103, 0
    %5106 = vmatpush.xpose.msra.mxu0 0.0
    %5107 = vmatpush.xpose.msra.mxu0 0.0
    %5108 = vmatpush.xpose.msra.mxu0 0.0
    %5109 = vmatpush.xpose.msra.mxu0 0.0
    %5110 = vmatpush.xpose.msra.mxu0 0.0
    %5111 = vmatpush.xpose.msra.mxu0 0.0
    %5112 = vmatpush.xpose.msra.mxu0 0.0
    %5113 = vmatpush.xpose.msra.mxu0 0.0
    %5114 = vmatpush.xpose.msra.mxu0 0.0
    %5115 = vmatpush.xpose.msra.mxu0 0.0
    %5116 = vmatpush.xpose.msra.mxu0 0.0
    %5117 = vmatpush.xpose.msra.mxu0 0.0
    %5118 = vmatpush.xpose.msra.mxu0 0.0
    %5119 = vmatpush.xpose.msra.mxu0 0.0
    %5120 = vmatpush.xpose.msra.mxu0 0.0
    %5121 = vmatpush.xpose.msra.mxu0 %v1157
    %5122 = vmatmul.f32.gmra.mxu0 %v5104
    %v5123 = vpop.f32.mrf.mxu0
    %v5124 = vadd.f32 0.0, %v5123
    %5125 = vdwg.mxu0
    %v5126 = vperm.slane %v4998, 0
    %5127 = vrot.lane.b32.xlu0 %v5126, 32
    %v5128 = vpop.permute.xlu0 %5127
    %v5129 = vsel %vm54, %v5128, 0
    %5131 = vmatpush.xpose.msra.mxu0 0.0
    %5132 = vmatpush.xpose.msra.mxu0 0.0
    %5133 = vmatpush.xpose.msra.mxu0 0.0
    %5134 = vmatpush.xpose.msra.mxu0 0.0
    %5135 = vmatpush.xpose.msra.mxu0 0.0
    %5136 = vmatpush.xpose.msra.mxu0 0.0
    %5137 = vmatpush.xpose.msra.mxu0 0.0
    %5138 = vmatpush.xpose.msra.mxu0 0.0
    %5139 = vmatpush.xpose.msra.mxu0 0.0
    %5140 = vmatpush.xpose.msra.mxu0 0.0
    %5141 = vmatpush.xpose.msra.mxu0 0.0
    %5142 = vmatpush.xpose.msra.mxu0 0.0
    %5143 = vmatpush.xpose.msra.mxu0 0.0
    %5144 = vmatpush.xpose.msra.mxu0 0.0
    %5145 = vmatpush.xpose.msra.mxu0 0.0
    %5146 = vmatpush.xpose.msra.mxu0 %v1187
    %5147 = vmatmul.f32.gmra.mxu0 %v5129
    %v5148 = vpop.f32.mrf.mxu0
    %v5149 = vadd.f32 0.0, %v5148
    %5150 = vdwg.mxu0
    %v5151 = vperm.slane %v4999, 0
    %5152 = vrot.lane.b32.xlu0 %v5151, 32
    %v5153 = vpop.permute.xlu0 %5152
    %v5154 = vsel %vm54, %v5153, 0
    %5156 = vmatpush.xpose.msra.mxu0 0.0
    %5157 = vmatpush.xpose.msra.mxu0 0.0
    %5158 = vmatpush.xpose.msra.mxu0 0.0
    %5159 = vmatpush.xpose.msra.mxu0 0.0
    %5160 = vmatpush.xpose.msra.mxu0 0.0
    %5161 = vmatpush.xpose.msra.mxu0 0.0
    %5162 = vmatpush.xpose.msra.mxu0 0.0
    %5163 = vmatpush.xpose.msra.mxu0 0.0
    %5164 = vmatpush.xpose.msra.mxu0 0.0
    %5165 = vmatpush.xpose.msra.mxu0 0.0
    %5166 = vmatpush.xpose.msra.mxu0 0.0
    %5167 = vmatpush.xpose.msra.mxu0 0.0
    %5168 = vmatpush.xpose.msra.mxu0 0.0
    %5169 = vmatpush.xpose.msra.mxu0 0.0
    %5170 = vmatpush.xpose.msra.mxu0 0.0
    %5171 = vmatpush.xpose.msra.mxu0 %v1217
    %5172 = vmatmul.f32.gmra.mxu0 %v5154
    %v5173 = vpop.f32.mrf.mxu0
    %v5174 = vadd.f32 0.0, %v5173
    %5175 = vdwg.mxu0
    %v5176 = vperm.slane %v5000, 0
    %5177 = vrot.lane.b32.xlu0 %v5176, 32
    %v5178 = vpop.permute.xlu0 %5177
    %v5179 = vsel %vm54, %v5178, 0
    %5181 = vmatpush.xpose.msra.mxu0 0.0
    %5182 = vmatpush.xpose.msra.mxu0 0.0
    %5183 = vmatpush.xpose.msra.mxu0 0.0
    %5184 = vmatpush.xpose.msra.mxu0 0.0
    %5185 = vmatpush.xpose.msra.mxu0 0.0
    %5186 = vmatpush.xpose.msra.mxu0 0.0
    %5187 = vmatpush.xpose.msra.mxu0 0.0
    %5188 = vmatpush.xpose.msra.mxu0 0.0
    %5189 = vmatpush.xpose.msra.mxu0 0.0
    %5190 = vmatpush.xpose.msra.mxu0 0.0
    %5191 = vmatpush.xpose.msra.mxu0 0.0
    %5192 = vmatpush.xpose.msra.mxu0 0.0
    %5193 = vmatpush.xpose.msra.mxu0 0.0
    %5194 = vmatpush.xpose.msra.mxu0 0.0
    %5195 = vmatpush.xpose.msra.mxu0 0.0
    %5196 = vmatpush.xpose.msra.mxu0 %v1247
    %5197 = vmatmul.f32.gmra.mxu0 %v5179
    %v5198 = vpop.f32.mrf.mxu0
    %v5199 = vadd.f32 0.0, %v5198
    %5200 = vdwg.mxu0
    %v5201 = vsel %vm1269, %v5024, -inf
    %5202 = vmax.xlane.f32.xlu0 %v5201
    %v5203 = vpop.xlane.xlu0 %5202
    %v5204 = vsel %vm1269, %v5049, -inf
    %5205 = vmax.xlane.f32.xlu0 %v5204
    %v5206 = vpop.xlane.xlu0 %5205
    %v5207 = vsel %vm1269, %v5074, -inf
    %5208 = vmax.xlane.f32.xlu0 %v5207
    %v5209 = vpop.xlane.xlu0 %5208
    %v5210 = vsel %vm1269, %v5099, -inf
    %5211 = vmax.xlane.f32.xlu0 %v5210
    %v5212 = vpop.xlane.xlu0 %5211
    %v5213 = vsel %vm1269, %v5124, -inf
    %5214 = vmax.xlane.f32.xlu0 %v5213
    %v5215 = vpop.xlane.xlu0 %5214
    %v5216 = vsel %vm1269, %v5149, -inf
    %5217 = vmax.xlane.f32.xlu0 %v5216
    %v5218 = vpop.xlane.xlu0 %5217
    %v5219 = vsel %vm1269, %v5174, -inf
    %5220 = vmax.xlane.f32.xlu0 %v5219
    %v5221 = vpop.xlane.xlu0 %5220
    %v5222 = vsel %vm1269, %v5199, -inf
    %5223 = vmax.xlane.f32.xlu0 %v5222
    %v5224 = vpop.xlane.xlu0 %5223
    %v5225 = vsub.f32 %v5024, %v5203
    %v5226 = vsub.f32 %v5049, %v5206
    %v5227 = vsub.f32 %v5074, %v5209
    %v5228 = vsub.f32 %v5099, %v5212
    %v5229 = vsub.f32 %v5124, %v5215
    %v5230 = vsub.f32 %v5149, %v5218
    %v5231 = vsub.f32 %v5174, %v5221
    %v5232 = vsub.f32 %v5199, %v5224
    %v5233 = vmul.f32 %v5225, 1.442695
    %v5234 = vpow.pop %v5233
    %v5235 = vmul.f32 %v5226, 1.442695
    %v5236 = vpow.pop %v5235
    %v5237 = vmul.f32 %v5227, 1.442695
    %v5238 = vpow.pop %v5237
    %v5239 = vmul.f32 %v5228, 1.442695
    %v5240 = vpow.pop %v5239
    %v5241 = vmul.f32 %v5229, 1.442695
    %v5242 = vpow.pop %v5241
    %v5243 = vmul.f32 %v5230, 1.442695
    %v5244 = vpow.pop %v5243
    %v5245 = vmul.f32 %v5231, 1.442695
    %v5246 = vpow.pop %v5245
    %v5247 = vmul.f32 %v5232, 1.442695
    %v5248 = vpow.pop %v5247
    %v5249 = vsel %vm1269, %v5234, 0.0
    %5250 = vadd.xlane.f32.xlu0 %v5249
    %v5251 = vpop.xlane.xlu0 %5250
    %v5252 = vsel %vm1269, %v5236, 0.0
    %5253 = vadd.xlane.f32.xlu0 %v5252
    %v5254 = vpop.xlane.xlu0 %5253
    %v5255 = vsel %vm1269, %v5238, 0.0
    %5256 = vadd.xlane.f32.xlu0 %v5255
    %v5257 = vpop.xlane.xlu0 %5256
    %v5258 = vsel %vm1269, %v5240, 0.0
    %5259 = vadd.xlane.f32.xlu0 %v5258
    %v5260 = vpop.xlane.xlu0 %5259
    %v5261 = vsel %vm1269, %v5242, 0.0
    %5262 = vadd.xlane.f32.xlu0 %v5261
    %v5263 = vpop.xlane.xlu0 %5262
    %v5264 = vsel %vm1269, %v5244, 0.0
    %5265 = vadd.xlane.f32.xlu0 %v5264
    %v5266 = vpop.xlane.xlu0 %5265
    %v5267 = vsel %vm1269, %v5246, 0.0
    %5268 = vadd.xlane.f32.xlu0 %v5267
    %v5269 = vpop.xlane.xlu0 %5268
    %v5270 = vsel %vm1269, %v5248, 0.0
    %5271 = vadd.xlane.f32.xlu0 %v5270
    %v5272 = vpop.xlane.xlu0 %5271
    %v5273 = vrcp.pop %v5251
    %v5274 = vmul.f32 %v5251, %v5273
    %v5275 = vsub.f32 1.0, %v5274
    %v5276 = vmul.f32 %v5273, %v5275
    %v5277 = vadd.f32 %v5273, %v5276
    %vm5278 = vweird.f32 %v5251
    %vm5279 = vweird.f32 %v5273
    %vm5280 = vmor %vm5278, %vm5279
    %v5281 = vsel %vm5280, %v5273, %v5277
    %v5282 = vand.u32 2147483647, %v5251
    %vm5283 = vcmp.eq.f32.partialorder %v5282, 8.507059e+37
    %v5284 = vand.u32 %v5251, 2147483648
    %v5285 = vor.u32 1.1754944e-38, %v5284
    %v5286 = vsel %vm5283, %v5285, %v5281
    %v5287 = vmul.f32 %v5234, %v5286
    %v5288 = vrcp.pop %v5254
    %v5289 = vmul.f32 %v5254, %v5288
    %v5290 = vsub.f32 1.0, %v5289
    %v5291 = vmul.f32 %v5288, %v5290
    %v5292 = vadd.f32 %v5288, %v5291
    %vm5293 = vweird.f32 %v5254
    %vm5294 = vweird.f32 %v5288
    %vm5295 = vmor %vm5293, %vm5294
    %v5296 = vsel %vm5295, %v5288, %v5292
    %v5297 = vand.u32 2147483647, %v5254
    %vm5298 = vcmp.eq.f32.partialorder %v5297, 8.507059e+37
    %v5299 = vand.u32 %v5254, 2147483648
    %v5300 = vor.u32 1.1754944e-38, %v5299
    %v5301 = vsel %vm5298, %v5300, %v5296
    %v5302 = vmul.f32 %v5236, %v5301
    %v5303 = vrcp.pop %v5257
    %v5304 = vmul.f32 %v5257, %v5303
    %v5305 = vsub.f32 1.0, %v5304
    %v5306 = vmul.f32 %v5303, %v5305
    %v5307 = vadd.f32 %v5303, %v5306
    %vm5308 = vweird.f32 %v5257
    %vm5309 = vweird.f32 %v5303
    %vm5310 = vmor %vm5308, %vm5309
    %v5311 = vsel %vm5310, %v5303, %v5307
    %v5312 = vand.u32 2147483647, %v5257
    %vm5313 = vcmp.eq.f32.partialorder %v5312, 8.507059e+37
    %v5314 = vand.u32 %v5257, 2147483648
    %v5315 = vor.u32 1.1754944e-38, %v5314
    %v5316 = vsel %vm5313, %v5315, %v5311
    %v5317 = vmul.f32 %v5238, %v5316
    %v5318 = vrcp.pop %v5260
    %v5319 = vmul.f32 %v5260, %v5318
    %v5320 = vsub.f32 1.0, %v5319
    %v5321 = vmul.f32 %v5318, %v5320
    %v5322 = vadd.f32 %v5318, %v5321
    %vm5323 = vweird.f32 %v5260
    %vm5324 = vweird.f32 %v5318
    %vm5325 = vmor %vm5323, %vm5324
    %v5326 = vsel %vm5325, %v5318, %v5322
    %v5327 = vand.u32 2147483647, %v5260
    %vm5328 = vcmp.eq.f32.partialorder %v5327, 8.507059e+37
    %v5329 = vand.u32 %v5260, 2147483648
    %v5330 = vor.u32 1.1754944e-38, %v5329
    %v5331 = vsel %vm5328, %v5330, %v5326
    %v5332 = vmul.f32 %v5240, %v5331
    %v5333 = vrcp.pop %v5263
    %v5334 = vmul.f32 %v5263, %v5333
    %v5335 = vsub.f32 1.0, %v5334
    %v5336 = vmul.f32 %v5333, %v5335
    %v5337 = vadd.f32 %v5333, %v5336
    %vm5338 = vweird.f32 %v5263
    %vm5339 = vweird.f32 %v5333
    %vm5340 = vmor %vm5338, %vm5339
    %v5341 = vsel %vm5340, %v5333, %v5337
    %v5342 = vand.u32 2147483647, %v5263
    %vm5343 = vcmp.eq.f32.partialorder %v5342, 8.507059e+37
    %v5344 = vand.u32 %v5263, 2147483648
    %v5345 = vor.u32 1.1754944e-38, %v5344
    %v5346 = vsel %vm5343, %v5345, %v5341
    %v5347 = vmul.f32 %v5242, %v5346
    %v5348 = vrcp.pop %v5266
    %v5349 = vmul.f32 %v5266, %v5348
    %v5350 = vsub.f32 1.0, %v5349
    %v5351 = vmul.f32 %v5348, %v5350
    %v5352 = vadd.f32 %v5348, %v5351
    %vm5353 = vweird.f32 %v5266
    %vm5354 = vweird.f32 %v5348
    %vm5355 = vmor %vm5353, %vm5354
    %v5356 = vsel %vm5355, %v5348, %v5352
    %v5357 = vand.u32 2147483647, %v5266
    %vm5358 = vcmp.eq.f32.partialorder %v5357, 8.507059e+37
    %v5359 = vand.u32 %v5266, 2147483648
    %v5360 = vor.u32 1.1754944e-38, %v5359
    %v5361 = vsel %vm5358, %v5360, %v5356
    %v5362 = vmul.f32 %v5244, %v5361
    %v5363 = vrcp.pop %v5269
    %v5364 = vmul.f32 %v5269, %v5363
    %v5365 = vsub.f32 1.0, %v5364
    %v5366 = vmul.f32 %v5363, %v5365
    %v5367 = vadd.f32 %v5363, %v5366
    %vm5368 = vweird.f32 %v5269
    %vm5369 = vweird.f32 %v5363
    %vm5370 = vmor %vm5368, %vm5369
    %v5371 = vsel %vm5370, %v5363, %v5367
    %v5372 = vand.u32 2147483647, %v5269
    %vm5373 = vcmp.eq.f32.partialorder %v5372, 8.507059e+37
    %v5374 = vand.u32 %v5269, 2147483648
    %v5375 = vor.u32 1.1754944e-38, %v5374
    %v5376 = vsel %vm5373, %v5375, %v5371
    %v5377 = vmul.f32 %v5246, %v5376
    %v5378 = vrcp.pop %v5272
    %v5379 = vmul.f32 %v5272, %v5378
    %v5380 = vsub.f32 1.0, %v5379
    %v5381 = vmul.f32 %v5378, %v5380
    %v5382 = vadd.f32 %v5378, %v5381
    %vm5383 = vweird.f32 %v5272
    %vm5384 = vweird.f32 %v5378
    %vm5385 = vmor %vm5383, %vm5384
    %v5386 = vsel %vm5385, %v5378, %v5382
    %v5387 = vand.u32 2147483647, %v5272
    %vm5388 = vcmp.eq.f32.partialorder %v5387, 8.507059e+37
    %v5389 = vand.u32 %v5272, 2147483648
    %v5390 = vor.u32 1.1754944e-38, %v5389
    %v5391 = vsel %vm5388, %v5390, %v5386
    %v5392 = vmul.f32 %v5248, %v5391
    %v5394 = vsel %vm1463, %v5287, 0
    %5396 = vmatpush.msra.mxu0 0.0
    %5397 = vmatpush.msra.mxu0 0.0
    %5398 = vmatpush.msra.mxu0 0.0
    %5399 = vmatpush.msra.mxu0 0.0
    %5400 = vmatpush.msra.mxu0 0.0
    %5401 = vmatpush.msra.mxu0 0.0
    %5402 = vmatpush.msra.mxu0 0.0
    %5403 = vmatpush.msra.mxu0 0.0
    %5404 = vmatpush.msra.mxu0 0.0
    %5405 = vmatpush.msra.mxu0 0.0
    %5406 = vmatpush.msra.mxu0 0.0
    %5407 = vmatpush.msra.mxu0 0.0
    %5408 = vmatpush.msra.mxu0 0.0
    %5409 = vmatpush.msra.mxu0 0.0
    %5410 = vmatpush.msra.mxu0 0.0
    %5411 = vmatpush.msra.mxu0 %v1034
    %5412 = vmatmul.f32.gmra.mxu0 %v5394
    %v5413 = vpop.f32.mrf.mxu0
    %v5414 = vadd.f32 0.0, %v5413
    %5415 = vdwg.mxu0
    %v5417 = vsel %vm1463, %v5302, 0
    %5419 = vmatpush.msra.mxu0 0.0
    %5420 = vmatpush.msra.mxu0 0.0
    %5421 = vmatpush.msra.mxu0 0.0
    %5422 = vmatpush.msra.mxu0 0.0
    %5423 = vmatpush.msra.mxu0 0.0
    %5424 = vmatpush.msra.mxu0 0.0
    %5425 = vmatpush.msra.mxu0 0.0
    %5426 = vmatpush.msra.mxu0 0.0
    %5427 = vmatpush.msra.mxu0 0.0
    %5428 = vmatpush.msra.mxu0 0.0
    %5429 = vmatpush.msra.mxu0 0.0
    %5430 = vmatpush.msra.mxu0 0.0
    %5431 = vmatpush.msra.mxu0 0.0
    %5432 = vmatpush.msra.mxu0 0.0
    %5433 = vmatpush.msra.mxu0 0.0
    %5434 = vmatpush.msra.mxu0 %v1064
    %5435 = vmatmul.f32.gmra.mxu0 %v5417
    %v5436 = vpop.f32.mrf.mxu0
    %v5437 = vadd.f32 0.0, %v5436
    %5438 = vdwg.mxu0
    %v5440 = vsel %vm1463, %v5317, 0
    %5442 = vmatpush.msra.mxu0 0.0
    %5443 = vmatpush.msra.mxu0 0.0
    %5444 = vmatpush.msra.mxu0 0.0
    %5445 = vmatpush.msra.mxu0 0.0
    %5446 = vmatpush.msra.mxu0 0.0
    %5447 = vmatpush.msra.mxu0 0.0
    %5448 = vmatpush.msra.mxu0 0.0
    %5449 = vmatpush.msra.mxu0 0.0
    %5450 = vmatpush.msra.mxu0 0.0
    %5451 = vmatpush.msra.mxu0 0.0
    %5452 = vmatpush.msra.mxu0 0.0
    %5453 = vmatpush.msra.mxu0 0.0
    %5454 = vmatpush.msra.mxu0 0.0
    %5455 = vmatpush.msra.mxu0 0.0
    %5456 = vmatpush.msra.mxu0 0.0
    %5457 = vmatpush.msra.mxu0 %v1094
    %5458 = vmatmul.f32.gmra.mxu0 %v5440
    %v5459 = vpop.f32.mrf.mxu0
    %v5460 = vadd.f32 0.0, %v5459
    %5461 = vdwg.mxu0
    %v5463 = vsel %vm1463, %v5332, 0
    %5465 = vmatpush.msra.mxu0 0.0
    %5466 = vmatpush.msra.mxu0 0.0
    %5467 = vmatpush.msra.mxu0 0.0
    %5468 = vmatpush.msra.mxu0 0.0
    %5469 = vmatpush.msra.mxu0 0.0
    %5470 = vmatpush.msra.mxu0 0.0
    %5471 = vmatpush.msra.mxu0 0.0
    %5472 = vmatpush.msra.mxu0 0.0
    %5473 = vmatpush.msra.mxu0 0.0
    %5474 = vmatpush.msra.mxu0 0.0
    %5475 = vmatpush.msra.mxu0 0.0
    %5476 = vmatpush.msra.mxu0 0.0
    %5477 = vmatpush.msra.mxu0 0.0
    %5478 = vmatpush.msra.mxu0 0.0
    %5479 = vmatpush.msra.mxu0 0.0
    %5480 = vmatpush.msra.mxu0 %v1124
    %5481 = vmatmul.f32.gmra.mxu0 %v5463
    %v5482 = vpop.f32.mrf.mxu0
    %v5483 = vadd.f32 0.0, %v5482
    %5484 = vdwg.mxu0
    %v5486 = vsel %vm1463, %v5347, 0
    %5488 = vmatpush.msra.mxu0 0.0
    %5489 = vmatpush.msra.mxu0 0.0
    %5490 = vmatpush.msra.mxu0 0.0
    %5491 = vmatpush.msra.mxu0 0.0
    %5492 = vmatpush.msra.mxu0 0.0
    %5493 = vmatpush.msra.mxu0 0.0
    %5494 = vmatpush.msra.mxu0 0.0
    %5495 = vmatpush.msra.mxu0 0.0
    %5496 = vmatpush.msra.mxu0 0.0
    %5497 = vmatpush.msra.mxu0 0.0
    %5498 = vmatpush.msra.mxu0 0.0
    %5499 = vmatpush.msra.mxu0 0.0
    %5500 = vmatpush.msra.mxu0 0.0
    %5501 = vmatpush.msra.mxu0 0.0
    %5502 = vmatpush.msra.mxu0 0.0
    %5503 = vmatpush.msra.mxu0 %v1154
    %5504 = vmatmul.f32.gmra.mxu0 %v5486
    %v5505 = vpop.f32.mrf.mxu0
    %v5506 = vadd.f32 0.0, %v5505
    %5507 = vdwg.mxu0
    %v5509 = vsel %vm1463, %v5362, 0
    %5511 = vmatpush.msra.mxu0 0.0
    %5512 = vmatpush.msra.mxu0 0.0
    %5513 = vmatpush.msra.mxu0 0.0
    %5514 = vmatpush.msra.mxu0 0.0
    %5515 = vmatpush.msra.mxu0 0.0
    %5516 = vmatpush.msra.mxu0 0.0
    %5517 = vmatpush.msra.mxu0 0.0
    %5518 = vmatpush.msra.mxu0 0.0
    %5519 = vmatpush.msra.mxu0 0.0
    %5520 = vmatpush.msra.mxu0 0.0
    %5521 = vmatpush.msra.mxu0 0.0
    %5522 = vmatpush.msra.mxu0 0.0
    %5523 = vmatpush.msra.mxu0 0.0
    %5524 = vmatpush.msra.mxu0 0.0
    %5525 = vmatpush.msra.mxu0 0.0
    %5526 = vmatpush.msra.mxu0 %v1184
    %5527 = vmatmul.f32.gmra.mxu0 %v5509
    %v5528 = vpop.f32.mrf.mxu0
    %v5529 = vadd.f32 0.0, %v5528
    %5530 = vdwg.mxu0
    %v5532 = vsel %vm1463, %v5377, 0
    %5534 = vmatpush.msra.mxu0 0.0
    %5535 = vmatpush.msra.mxu0 0.0
    %5536 = vmatpush.msra.mxu0 0.0
    %5537 = vmatpush.msra.mxu0 0.0
    %5538 = vmatpush.msra.mxu0 0.0
    %5539 = vmatpush.msra.mxu0 0.0
    %5540 = vmatpush.msra.mxu0 0.0
    %5541 = vmatpush.msra.mxu0 0.0
    %5542 = vmatpush.msra.mxu0 0.0
    %5543 = vmatpush.msra.mxu0 0.0
    %5544 = vmatpush.msra.mxu0 0.0
    %5545 = vmatpush.msra.mxu0 0.0
    %5546 = vmatpush.msra.mxu0 0.0
    %5547 = vmatpush.msra.mxu0 0.0
    %5548 = vmatpush.msra.mxu0 0.0
    %5549 = vmatpush.msra.mxu0 %v1214
    %5550 = vmatmul.f32.gmra.mxu0 %v5532
    %v5551 = vpop.f32.mrf.mxu0
    %v5552 = vadd.f32 0.0, %v5551
    %5553 = vdwg.mxu0
    %v5555 = vsel %vm1463, %v5392, 0
    %5557 = vmatpush.msra.mxu0 0.0
    %5558 = vmatpush.msra.mxu0 0.0
    %5559 = vmatpush.msra.mxu0 0.0
    %5560 = vmatpush.msra.mxu0 0.0
    %5561 = vmatpush.msra.mxu0 0.0
    %5562 = vmatpush.msra.mxu0 0.0
    %5563 = vmatpush.msra.mxu0 0.0
    %5564 = vmatpush.msra.mxu0 0.0
    %5565 = vmatpush.msra.mxu0 0.0
    %5566 = vmatpush.msra.mxu0 0.0
    %5567 = vmatpush.msra.mxu0 0.0
    %5568 = vmatpush.msra.mxu0 0.0
    %5569 = vmatpush.msra.mxu0 0.0
    %5570 = vmatpush.msra.mxu0 0.0
    %5571 = vmatpush.msra.mxu0 0.0
    %5572 = vmatpush.msra.mxu0 %v1244
    %5573 = vmatmul.f32.gmra.mxu0 %v5555
    %v5574 = vpop.f32.mrf.mxu0
    %v5575 = vadd.f32 0.0, %v5574
    %5576 = vdwg.mxu0
    %v5585 = vrot.slane %v5437, 7
    %v5586 = vsel %vm1667, %v5585, %v5414
    %v5587 = vrot.slane %v5460, 6
    %v5588 = vsel %vm1670, %v5587, %v5586
    %v5589 = vrot.slane %v5483, 5
    %v5590 = vsel %vm1673, %v5589, %v5588
    %v5591 = vrot.slane %v5506, 4
    %v5592 = vsel %vm1676, %v5591, %v5590
    %v5593 = vrot.slane %v5529, 3
    %v5594 = vsel %vm1679, %v5593, %v5592
    %v5595 = vrot.slane %v5552, 2
    %v5596 = vsel %vm1682, %v5595, %v5594
    %v5597 = vrot.slane %v5575, 1
    %v5598 = vsel %vm1685, %v5597, %v5596
    %v5599 = vsel %vm54, %v5598, 0
    %5601 = vmatpush.msra.mxu0 0.0
    %5602 = vmatpush.msra.mxu0 0.0
    %5603 = vmatpush.msra.mxu0 0.0
    %5604 = vmatpush.msra.mxu0 0.0
    %5605 = vmatpush.msra.mxu0 0.0
    %5606 = vmatpush.msra.mxu0 0.0
    %5607 = vmatpush.msra.mxu0 0.0
    %5608 = vmatpush.msra.mxu0 0.0
    %5609 = vmatpush.msra.mxu0 0.0
    %5610 = vmatpush.msra.mxu0 0.0
    %5611 = vmatpush.msra.mxu0 0.0
    %5612 = vmatpush.msra.mxu0 0.0
    %5613 = vmatpush.msra.mxu0 %v920
    %5614 = vmatpush.msra.mxu0 %v919
    %5615 = vmatpush.msra.mxu0 %v918
    %5616 = vmatpush.msra.mxu0 %v917
    %5617 = vmatmul.f32.gmra.mxu0 %v5599
    %v5618 = vpop.f32.mrf.mxu0
    %v5619 = vadd.f32 %v1656, %v5618
    %5620 = vdwg.mxu0
    %v5621 = vadd.f32 %v5619, %v927
    %v5622 = vmul.f32 %v5621, %v1716
    %v5623 = vsel %vm956, %v5622, -inf
    %5624 = vmax.xlane.f32.xlu0 %v5623
    %v5625 = vpop.xlane.xlu0 %5624
    %v5626 = vsub.f32 %v5622, %v5625
    %v5627 = vmul.f32 %v5626, 1.442695
    %v5628 = vpow.pop %v5627
    %v5629 = vsel %vm956, %v5628, 0.0
    %5630 = vadd.xlane.f32.xlu0 %v5629
    %v5631 = vpop.xlane.xlu0 %5630
    %v5632 = vrcp.pop %v5631
    %v5633 = vmul.f32 %v5631, %v5632
    %v5634 = vsub.f32 1.0, %v5633
    %v5635 = vmul.f32 %v5632, %v5634
    %v5636 = vadd.f32 %v5632, %v5635
    %vm5637 = vweird.f32 %v5631
    %vm5638 = vweird.f32 %v5632
    %vm5639 = vmor %vm5637, %vm5638
    %v5640 = vsel %vm5639, %v5632, %v5636
    %v5641 = vand.u32 2147483647, %v5631
    %vm5642 = vcmp.eq.f32.partialorder %v5641, 8.507059e+37
    %v5643 = vand.u32 %v5631, 2147483648
    %v5644 = vor.u32 1.1754944e-38, %v5643
    %v5645 = vsel %vm5642, %v5644, %v5640
    %v5646 = vmul.f32 %v5628, %v5645
    %v5647 = vsel %vm956, %v5646, -inf
    %5648 = vmax.xlane.f32.xlu0 %v5647
    %v5649 = vpop.xlane.xlu0 %5648
    %vm5650 = vcmp.eq.f32.partialorder %v5646, %v5649
    %v5651 = vsel %vm5650, %v929, 16
    %v5652 = vsel %vm956, %v5651, 2147483647
    %v5653 = vand.u32 %v5652, 65535
    %v5654 = vshra.s32 %v5652, 16
    %v5655 = vcvt.s32.f32 %v5653
    %v5656 = vcvt.s32.f32 %v5654
    %5657 = vmin.xlane.f32.xlu0 %v5656
    %v5658 = vpop.xlane.xlu0 %5657
    %vm5659 = vcmp.eq.f32.partialorder %v5656, %v5658
    %v5660 = vsel %vm5659, %v5655, inf
    %5661 = vmin.xlane.f32.xlu0 %v5660
    %v5662 = vpop.xlane.xlu0 %5661
    %v5663 = vcvt.f32.s32 %v5662
    %v5664 = vcvt.f32.s32 %v5658
    %v5665 = vshll.u32 %v5664, 16
    %v5666 = vadd.s32 %v5665, %v5663
    %vm5667 = vcmp.eq.s32.totalorder %v929, %v5666
    %v5668 = vsel %vm5667, 1, 0
    %v5669 = vcvt.s32.f32 %v5668
    %v5670 = vsub.f32 %v5669, %v5646
    %v5671 = vadd.f32 %v5670, %v5646
    %v5672 = vsel %vm956, %v5619, -inf
    %5673 = vmax.xlane.f32.xlu0 %v5672
    %v5674 = vpop.xlane.xlu0 %5673
    %v5675 = vsub.f32 %v5619, %v5674
    %v5676 = vmul.f32 %v5675, 1.442695
    %v5677 = vpow.pop %v5676
    %v5678 = vsel %vm956, %v5677, 0.0
    %5679 = vadd.xlane.f32.xlu0 %v5678
    %v5680 = vpop.xlane.xlu0 %5679
    %v5681 = vlog2.pop %v5680
    %v5682 = vmul.f32 %v5681, 0.6931472
    %v5683 = vadd.f32 %v5674, %v5682
    %v5684 = vmul.f32 %v5669, %v5619
    %v5685 = vsel %vm956, %v5684, 0.0
    %5686 = vadd.xlane.f32.xlu0 %v5685
    %v5687 = vpop.xlane.xlu0 %5686
    %v5688 = vsub.f32 %v5683, %v5687
    %5689 = vst.msk [vmem:[#allocation2] sm:$0xff] %vm956, %v1707
    %5690 = vst.msk [vmem:[#allocation2 + $0x8] sm:$0xff] %vm956, %v2495
    %5691 = vst.msk [vmem:[#allocation2 + $0x10] sm:$0xff] %vm956, %v3276
    %5692 = vst.msk [vmem:[#allocation2 + $0x18] sm:$0xff] %vm956, %v4057
    %5693 = vst.msk [vmem:[#allocation2 + $0x20] sm:$0xff] %vm956, %v4838
    %5694 = vst.msk [vmem:[#allocation2 + $0x28] sm:$0xff] %vm956, %v5619
    %5695 = vst.msk [vmem:[%s12] sm:$0xff] %vm956, %v1766
    %5696 = vst.msk [vmem:[%s12 + $0x8] sm:$0xff] %vm956, %v2547
    %5697 = vst.msk [vmem:[%s12 + $0x10] sm:$0xff] %vm956, %v3328
    %5698 = vst.msk [vmem:[%s12 + $0x18] sm:$0xff] %vm956, %v4109
    %5699 = vst.msk [vmem:[%s12 + $0x20] sm:$0xff] %vm956, %v4890
    %5700 = vst.msk [vmem:[%s12 + $0x28] sm:$0xff] %vm956, %v5671
    %vm5701 = vcmask 7168
    %5702 = vst.msk [vmem:[%s13] sm:$0xff] %vm5701, %v1783
    %5703 = vst.msk [vmem:[%s13 + $0x8] sm:$0xff] %vm5701, %v2564
    %5704 = vst.msk [vmem:[%s13 + $0x10] sm:$0xff] %vm5701, %v3345
    %5705 = vst.msk [vmem:[%s13 + $0x18] sm:$0xff] %vm5701, %v4126
    %5706 = vst.msk [vmem:[%s13 + $0x20] sm:$0xff] %vm5701, %v4907
    %5707 = vst.msk [vmem:[%s13 + $0x28] sm:$0xff] %vm5701, %v5688
    // Predicated region
    $region46: #{seq2seq_forward.1} parent=1 // pred_check
      _
    $region47: #{seq2seq_forward.1} parent=1 // pred_check_branch
      %5709 = sbr.rel (0) target = $region49
    $region48: #{seq2seq_forward.1} parent=1 // pred_region
      %5711 = vsyncadd [#allocation3], 0
      %s5712 = sshll.u32 [#allocation2], 4
      %s5713 = int_to_ptr.vmem [resolvable:$true] %s5712
      %s5714 = sshll.u32 %s11, 4
      %s5715 = int_to_ptr.hbm [resolvable:$true] %s5714
      %5720 = dma.vmem_to_hbm [thread:$0]  %s5713, 768, %s5715, [#allocation3], 128, 128, 8
    $region49: #{seq2seq_forward.1} parent=1 // pred_fallthru
      _
    // Predicated region
    $region50: #{seq2seq_forward.1} parent=1 // pred_check
      _
    $region51: #{seq2seq_forward.1} parent=1 // pred_check_branch
      %5722 = sbr.rel (0) target = $region53
    $region52: #{seq2seq_forward.1} parent=1 // pred_region
      _
    $region53: #{seq2seq_forward.1} parent=1 // pred_fallthru
      _
    // Predicated region
    $region54: #{seq2seq_forward.1} parent=1 // pred_check
      _
    $region55: #{seq2seq_forward.1} parent=1 // pred_check_branch
      %5724 = sbr.rel (0) target = $region57
    $region56: #{seq2seq_forward.1} parent=1 // pred_region
      _
    $region57: #{seq2seq_forward.1} parent=1 // pred_fallthru
      _
    // Predicated region
    $region58: #{seq2seq_forward.1} parent=1 // pred_check
      _
    $region59: #{seq2seq_forward.1} parent=1 // pred_check_branch
      %5726 = sbr.rel (0) target = $region61
    $region60: #{seq2seq_forward.1} parent=1 // pred_region
      %5728 = dma.done [#allocation3], 768
    $region61: #{seq2seq_forward.1} parent=1 // pred_fallthru
      _
    // Predicated region
    $region62: #{seq2seq_forward.1} parent=1 // pred_check
      _
    $region63: #{seq2seq_forward.1} parent=1 // pred_check_branch
      %5730 = sbr.rel (0) target = $region65
    $region64: #{seq2seq_forward.1} parent=1 // pred_region
      _
    $region65: #{seq2seq_forward.1} parent=1 // pred_fallthru
      _
    // Predicated region
    $region66: #{seq2seq_forward.1} parent=1 // pred_check
      _
    $region67: #{seq2seq_forward.1} parent=1 // pred_check_branch
      %5732 = sbr.rel (0) target = $region69
    $region68: #{seq2seq_forward.1} parent=1 // pred_region
      _
    $region69: #{seq2seq_forward.1} parent=1 // pred_fallthru
      _
    %5733 = vsyncpa [#allocation3], 1

</llo_original>
